<compile_context>
chip_gen: v6e
topology: v6e:2x2x1
jax: 0.10.0
libtpu: 0.0.40
codegen_flags: <defaults>
</compile_context>

<pallas_src>
import math
from functools import partial

import jax
import jax.numpy as jnp
from jax.experimental import pallas as pl
from jax.experimental.pallas import tpu as pltpu

D_MODEL = 32
N_HEAD = 4
HEAD_DIM = D_MODEL // N_HEAD
D_FF = 2048                  # PyTorch TransformerEncoderLayer default dim_feedforward
N_LAYERS = 12
N_TOKENS = 64                # 8x8 patches from a 32x32 image with 4x4/stride-4 conv
PATCH = 16                   # 4*4*1
HIDDEN = 256
N_CLASS = 10
LN_EPS = 1e-5

FFN_TILE_BYTES = 8 * 1024 * 1024      # bound on the (chunk_rows, 2048) f32 FFN intermediate
VMEM_LIMIT_BYTES = 32 * 1024 * 1024   # explicit scoped-VMEM limit (safe on v5e/v6e/v7x)


# ---------------- in-kernel helpers ----------------

def _layer_norm(x, w, b):
    mu = jnp.mean(x, axis=-1, keepdims=True)
    var = jnp.mean(jnp.square(x - mu), axis=-1, keepdims=True)
    return (x - mu) * jax.lax.rsqrt(var + LN_EPS) * w + b


def _erf_poly(x):
    # Abramowitz & Stegun 7.1.26 erf approximation (max abs err ~1.5e-7).
    a1, a2, a3, a4, a5 = (0.254829592, -0.284496736, 1.421413741,
                          -1.453152027, 1.061405429)
    p = 0.3275911
    s = jnp.where(x < 0.0, -1.0, 1.0)
    z = jnp.abs(x)
    t = 1.0 / (1.0 + p * z)
    poly = ((((a5 * t + a4) * t + a3) * t + a2) * t + a1) * t
    return s * (1.0 - poly * jnp.exp(-z * z))


def _gelu_erf(x):
    # erf-based GELU (PyTorch nn.GELU default), erf via polynomial approximation.
    return 0.5 * x * (1.0 + _erf_poly(x * (1.0 / math.sqrt(2.0))))


# ---------------- fused encoder kernel (grid axis = layer) ----------------

def _fused_encoder_kernel(patches_ref, cw_ref, cb_ref,
                          wq_ref, wk_ref, wv_ref, bq_ref, bk_ref, bv_ref,
                          wo_ref, bo_ref, ln1w_ref, ln1b_ref,
                          w1_ref, b1_ref, w2_ref, b2_ref, ln2w_ref, ln2b_ref,
                          lnfw_ref, lnfb_ref,
                          o_ref, x_vmem,
                          *, chunk_rows, num_chunks):
    """One grid step == one post-norm TransformerEncoderLayer (ReLU FFN)."""
    l = pl.program_id(0)
    rows = x_vmem.shape[0]

    # -- grid step 0: Conv2d(1, 32, 4, stride=4) patch embedding (im2col bf16 matmul) --
    @pl.when(l == 0)
    def _():
        x_vmem[...] = (jnp.dot(patches_ref[...], cw_ref[...],
                               preferred_element_type=jnp.float32) + cb_ref[...])

    x = x_vmem[...]                                   # (rows, 32) f32
    x_bf = x.astype(jnp.bfloat16)

    # Additive attention mask: rows are batch-major (row = b*64 + n); the attention
    # sequence axis is the image batch (batch_first=False), so row i attends to row j
    # iff they share the same patch position n = row % 64.
    ri = jax.lax.broadcasted_iota(jnp.int32, (rows, rows), 0)
    ci = jax.lax.broadcasted_iota(jnp.int32, (rows, rows), 1)
    mask_bias = jnp.where((ri % N_TOKENS) == (ci % N_TOKENS),
                          jnp.float32(0.0), jnp.float32(-1e30))
    scale = jnp.float32(1.0 / math.sqrt(HEAD_DIM))

    # -- multi-head self-attention: per-head weights pre-split host-side (no lane slices) --
    attn = jnp.zeros((rows, D_MODEL), jnp.float32)
    for h in range(N_HEAD):                           # static 4-way unroll
        q = jnp.dot(x_bf, wq_ref[0, h], preferred_element_type=jnp.float32) + bq_ref[0, h]
        k = jnp.dot(x_bf, wk_ref[0, h], preferred_element_type=jnp.float32) + bk_ref[0, h]
        v = jnp.dot(x_bf, wv_ref[0, h], preferred_element_type=jnp.float32) + bv_ref[0, h]
        # One (rows, rows) masked score matmul instead of 64 tiny per-position matmuls.
        s = jax.lax.dot_general(q.astype(jnp.bfloat16), k.astype(jnp.bfloat16),
                                (((1,), (1,)), ((), ())),
                                preferred_element_type=jnp.float32)
        s = s * scale + mask_bias
        m = jnp.max(s, axis=-1, keepdims=True)
        e = jnp.exp(s - m)
        p = e * pl.reciprocal(jnp.sum(e, axis=-1, keepdims=True), approx=True)
        ctx = jnp.dot(p.astype(jnp.bfloat16), v.astype(jnp.bfloat16),
                      preferred_element_type=jnp.float32)            # (rows, 8)
        # Accumulated output projection (replaces concat + full attn @ Wo).
        attn = attn + jnp.dot(ctx.astype(jnp.bfloat16), wo_ref[0, h],
                              preferred_element_type=jnp.float32)
    attn = attn + bo_ref[0]

    # post-norm residual (PyTorch default norm_first=False, activation=relu)
    x_vmem[...] = _layer_norm(x + attn, ln1w_ref[0], ln1b_ref[0])

    # -- ReLU FFN, row-chunked so the (chunk, 2048) f32 intermediate stays bounded --
    def ffn_body(r0):
        xc = x_vmem[pl.ds(r0, chunk_rows), :]
        h1 = jnp.maximum(
            jnp.dot(xc.astype(jnp.bfloat16), w1_ref[0],
                    preferred_element_type=jnp.float32) + b1_ref[0], 0.0)
        y = jnp.dot(h1.astype(jnp.bfloat16), w2_ref[0],
                    preferred_element_type=jnp.float32) + b2_ref[0]
        x_vmem[pl.ds(r0, chunk_rows), :] = _layer_norm(xc + y, ln2w_ref[0], ln2b_ref[0])

    if num_chunks == 1:
        ffn_body(0)
    else:
        def chunk_step(i, carry):
            ffn_body(pl.multiple_of(i * chunk_rows, 8))
            return carry
        jax.lax.fori_loop(0, num_chunks, chunk_step, 0)

    # -- grid step 11: final TransformerEncoder LayerNorm, single HBM writeback --
    @pl.when(l == N_LAYERS - 1)
    def _():
        o_ref[...] = _layer_norm(x_vmem[...], lnfw_ref[...], lnfb_ref[...])


# ---------------- MLP head kernel ----------------

def _head_kernel(x_ref, w1_ref, b1_ref, w2_ref, b2_ref, o_ref):
    h = (jnp.dot(x_ref[...].astype(jnp.bfloat16), w1_ref[...],
                 preferred_element_type=jnp.float32) + b1_ref[...])
    h = _gelu_erf(h)
    logits = (jnp.dot(h.astype(jnp.bfloat16), w2_ref[...],
                      preferred_element_type=jnp.float32) + b2_ref[...])
    m = jnp.max(logits, axis=-1, keepdims=True)
    e = jnp.exp(logits - m)
    o_ref[...] = e / jnp.sum(e, axis=-1, keepdims=True)      # Softmax(dim=-1), exact


# ---------------- pallas_call wrappers ----------------

def _fused_encoder(patches, cw, cb, stacks, lnfw, lnfb, *, rows):
    # FFN row chunk: rows is a multiple of 64; halve until the f32 intermediate fits.
    chunk_rows = rows
    while chunk_rows % 16 == 0 and chunk_rows * D_FF * 4 > FFN_TILE_BYTES:
        chunk_rows //= 2
    num_chunks = rows // chunk_rows

    def const2(r, c):
        return pl.BlockSpec((r, c), lambda l: (0, 0))

    def per_layer(*dims):
        nd = len(dims)
        return pl.BlockSpec((1,) + dims, lambda l: (l,) + (0,) * nd)

    in_specs = [
        const2(rows, PATCH),                        # im2col patches (bf16)
        const2(PATCH, D_MODEL),                     # conv weight (bf16)
        const2(1, D_MODEL),                         # conv bias
        per_layer(N_HEAD, D_MODEL, HEAD_DIM),       # wq  (12, 4, 32, 8) bf16
        per_layer(N_HEAD, D_MODEL, HEAD_DIM),       # wk
        per_layer(N_HEAD, D_MODEL, HEAD_DIM),       # wv
        per_layer(N_HEAD, 1, HEAD_DIM),             # bq  (12, 4, 1, 8)
        per_layer(N_HEAD, 1, HEAD_DIM),             # bk
        per_layer(N_HEAD, 1, HEAD_DIM),             # bv
        per_layer(N_HEAD, HEAD_DIM, D_MODEL),       # wo  (12, 4, 8, 32) bf16
        per_layer(1, D_MODEL),                      # bo
        per_layer(1, D_MODEL),                      # ln1w
        per_layer(1, D_MODEL),                      # ln1b
        per_layer(D_MODEL, D_FF),                   # w1 (bf16)
        per_layer(1, D_FF),                         # b1
        per_layer(D_FF, D_MODEL),                   # w2 (bf16)
        per_layer(1, D_MODEL),                      # b2
        per_layer(1, D_MODEL),                      # ln2w
        per_layer(1, D_MODEL),                      # ln2b
        const2(1, D_MODEL),                         # final norm weight
        const2(1, D_MODEL),                         # final norm bias
    ]

    kern = partial(_fused_encoder_kernel, chunk_rows=chunk_rows, num_chunks=num_chunks)
    return pl.pallas_call(
        kern,
        out_shape=jax.ShapeDtypeStruct((rows, D_MODEL), jnp.float32),
        grid_spec=pltpu.PrefetchScalarGridSpec(
            num_scalar_prefetch=0,
            grid=(N_LAYERS,),
            in_specs=in_specs,
            out_specs=pl.BlockSpec((rows, D_MODEL), lambda l: (0, 0)),
            scratch_shapes=[pltpu.VMEM((rows, D_MODEL), jnp.float32)],
        ),
        compiler_params=pltpu.CompilerParams(
            dimension_semantics=("arbitrary",),      # sequential layer dependency
            vmem_limit_bytes=VMEM_LIMIT_BYTES,
        ),
    )(patches, cw, cb, *stacks, lnfw, lnfb)


def _mlp_head(xflat, w1, b1, w2, b2):
    vmem = pl.BlockSpec(memory_space=pltpu.MemorySpace.VMEM)
    return pl.pallas_call(
        _head_kernel,
        out_shape=jax.ShapeDtypeStruct((xflat.shape[0], N_CLASS), jnp.float32),
        in_specs=[vmem] * 5,
        out_specs=vmem,
        compiler_params=pltpu.CompilerParams(vmem_limit_bytes=VMEM_LIMIT_BYTES),
    )(xflat, w1, b1, w2, b2)


# ---------------- parameters (deterministic, PyTorch layouts) ----------------

def init_params(key):
    keys = iter(jax.random.split(key, 200))

    def w(shape, fan_in):
        return jax.random.normal(next(keys), shape, dtype=jnp.float32) * (fan_in ** -0.5)

    def b(shape):
        return jax.random.normal(next(keys), shape, dtype=jnp.float32) * 0.01

    params = {
        "conv_w": w((D_MODEL, 1, 4, 4), 16),               # Conv2d(1, 32, 4, stride=4)
        "conv_b": b((D_MODEL,)),
        "layers": [],
        "lnf_w": jnp.ones((D_MODEL,), jnp.float32),        # TransformerEncoder final norm
        "lnf_b": jnp.zeros((D_MODEL,), jnp.float32),
        "head_w1": w((HIDDEN, N_TOKENS * D_MODEL), N_TOKENS * D_MODEL),  # Linear(2048, 256)
        "head_b1": b((HIDDEN,)),
        "head_w2": w((N_CLASS, HIDDEN), HIDDEN),           # Linear(256, 10)
        "head_b2": b((N_CLASS,)),
    }
    for _ in range(N_LAYERS):
        params["layers"].append({
            "wqkv": w((3 * D_MODEL, D_MODEL), D_MODEL),    # MHA in_proj_weight (3E, E)
            "bqkv": b((3 * D_MODEL,)),
            "wo":   w((D_MODEL, D_MODEL), D_MODEL),        # out_proj.weight (E, E)
            "bo":   b((D_MODEL,)),
            "ln1w": jnp.ones((D_MODEL,), jnp.float32),
            "ln1b": jnp.zeros((D_MODEL,), jnp.float32),
            "w1":   w((D_FF, D_MODEL), D_MODEL),           # linear1.weight (2048, 32)
            "b1":   b((D_FF,)),
            "w2":   w((D_MODEL, D_FF), D_FF),              # linear2.weight (32, 2048)
            "b2":   b((D_MODEL,)),
            "ln2w": jnp.ones((D_MODEL,), jnp.float32),
            "ln2b": jnp.zeros((D_MODEL,), jnp.float32),
        })
    return params


# ---------------- forward (glue in plain JAX, compute in 2 kernels) ----------------

@jax.jit
def attention_net_forward(x, params):
    B = x.shape[0]
    rows = N_TOKENS * B
    bf16 = jnp.bfloat16

    # im2col for Conv2d(1, 32, 4, stride=4) on NCHW (B, 1, 32, 32).
    # Rows are batch-major (row = b*64 + n): rows stay sublane-aligned for any B and the
    # final Flatten(start_dim=1) becomes a free reshape after the encoder kernel.
    xp = (x[:, 0].reshape(B, 8, 4, 8, 4).transpose(0, 1, 3, 2, 4)
          .reshape(rows, PATCH).astype(bf16))
    cw = params["conv_w"].reshape(D_MODEL, PATCH).T.astype(bf16)       # (16, 32)
    cb = params["conv_b"].reshape(1, D_MODEL)

    layers = params["layers"]

    def stack(name, fn, dtype=jnp.float32):
        return jnp.stack([fn(layer[name]) for layer in layers], 0).astype(dtype)

    def head_w(p, part):       # (32, 32) slab -> (4 heads, 32_in, 8_out)
        sl = p[part * D_MODEL:(part + 1) * D_MODEL]
        return sl.reshape(N_HEAD, HEAD_DIM, D_MODEL).transpose(0, 2, 1)

    def head_b(p, part):       # (32,) slab -> (4 heads, 1, 8)
        return p[part * D_MODEL:(part + 1) * D_MODEL].reshape(N_HEAD, 1, HEAD_DIM)

    stacks = (
        stack("wqkv", lambda p: head_w(p, 0), bf16),           # wq (12, 4, 32, 8)
        stack("wqkv", lambda p: head_w(p, 1), bf16),           # wk
        stack("wqkv", lambda p: head_w(p, 2), bf16),           # wv
        stack("bqkv", lambda p: head_b(p, 0)),                 # bq (12, 4, 1, 8)
        stack("bqkv", lambda p: head_b(p, 1)),                 # bk
        stack("bqkv", lambda p: head_b(p, 2)),                 # bv
        stack("wo",   lambda p: p.T.reshape(N_HEAD, HEAD_DIM, D_MODEL), bf16),  # (12,4,8,32)
        stack("bo",   lambda p: p.reshape(1, -1)),
        stack("ln1w", lambda p: p.reshape(1, -1)),
        stack("ln1b", lambda p: p.reshape(1, -1)),
        stack("w1",   lambda p: p.T, bf16),                    # (12, 32, 2048)
        stack("b1",   lambda p: p.reshape(1, -1)),
        stack("w2",   lambda p: p.T, bf16),                    # (12, 2048, 32)
        stack("b2",   lambda p: p.reshape(1, -1)),
        stack("ln2w", lambda p: p.reshape(1, -1)),
        stack("ln2b", lambda p: p.reshape(1, -1)),
    )

    # Patch embed + 12 encoder layers + final LayerNorm, one fused kernel launch.
    h = _fused_encoder(xp, cw, cb, stacks,
                       params["lnf_w"].reshape(1, -1),
                       params["lnf_b"].reshape(1, -1),
                       rows=rows)                              # (B*64, 32), batch-major

    # Flatten(start_dim=1): batch-major rows make this a pure row-major reshape.
    h = h.reshape(B, N_TOKENS * D_MODEL)

    # Linear(2048, 256) -> GELU -> Linear(256, 10) -> Softmax
    return _mlp_head(h,
                     params["head_w1"].T.astype(bf16), params["head_b1"].reshape(1, -1),
                     params["head_w2"].T.astype(bf16), params["head_b2"].reshape(1, -1))


if __name__ == "__main__":
    key = jax.random.PRNGKey(0)
    pkey, xkey = jax.random.split(key)
    params = init_params(pkey)
    x = jax.random.normal(xkey, (2, 1, 32, 32), dtype=jnp.float32)   # NCHW, B=2

    out = attention_net_forward(x, params)
    out = jax.block_until_ready(out)

    assert out.shape == (2, N_CLASS), out.shape
    assert bool(jnp.all(jnp.isfinite(out)))
    row_sums = jnp.sum(out, axis=-1)
    assert bool(jnp.all(jnp.abs(row_sums - 1.0) < 1e-3)), row_sums
    print("KERNEL_OK")
</pallas_src>

<mosaic_0001>
module attributes {stable_mosaic.version = 11 : i64} {
  func.func @_fused_encoder_kernel(%arg0: i32, %arg1: memref<128x16xbf16, #tpu.memory_space<vmem>>, %arg2: memref<16x32xbf16, #tpu.memory_space<vmem>>, %arg3: memref<1x32xf32, #tpu.memory_space<vmem>>, %arg4: memref<1x4x32x8xbf16, #tpu.memory_space<vmem>>, %arg5: memref<1x4x32x8xbf16, #tpu.memory_space<vmem>>, %arg6: memref<1x4x32x8xbf16, #tpu.memory_space<vmem>>, %arg7: memref<1x4x1x8xf32, #tpu.memory_space<vmem>>, %arg8: memref<1x4x1x8xf32, #tpu.memory_space<vmem>>, %arg9: memref<1x4x1x8xf32, #tpu.memory_space<vmem>>, %arg10: memref<1x4x8x32xbf16, #tpu.memory_space<vmem>>, %arg11: memref<1x1x32xf32, #tpu.memory_space<vmem>>, %arg12: memref<1x1x32xf32, #tpu.memory_space<vmem>>, %arg13: memref<1x1x32xf32, #tpu.memory_space<vmem>>, %arg14: memref<1x32x2048xbf16, #tpu.memory_space<vmem>>, %arg15: memref<1x1x2048xf32, #tpu.memory_space<vmem>>, %arg16: memref<1x2048x32xbf16, #tpu.memory_space<vmem>>, %arg17: memref<1x1x32xf32, #tpu.memory_space<vmem>>, %arg18: memref<1x1x32xf32, #tpu.memory_space<vmem>>, %arg19: memref<1x1x32xf32, #tpu.memory_space<vmem>>, %arg20: memref<1x32xf32, #tpu.memory_space<vmem>>, %arg21: memref<1x32xf32, #tpu.memory_space<vmem>>, %arg22: memref<128x32xf32, #tpu.memory_space<vmem>>, %arg23: memref<128x32xf32, #tpu.memory_space<vmem>>) attributes {dimension_semantics = [#tpu.dimension_semantics<arbitrary>], iteration_bounds = array<i64: 12>, scalar_prefetch = 0 : i64, scratch_operands = 1 : i64, tpu.core_type = #tpu.core_type<tc>, window_params = [{pipeline_mode = #tpu.pipeline_mode<synchronous>, transform_indices = @transform_0, window_bounds = array<i64: 128, 16>}, {pipeline_mode = #tpu.pipeline_mode<synchronous>, transform_indices = @transform_1, window_bounds = array<i64: 16, 32>}, {pipeline_mode = #tpu.pipeline_mode<synchronous>, transform_indices = @transform_2, window_bounds = array<i64: 1, 32>}, {transform_indices = @transform_3, window_bounds = array<i64: 1, 4, 32, 8>}, {transform_indices = @transform_4, window_bounds = array<i64: 1, 4, 32, 8>}, {transform_indices = @transform_5, window_bounds = array<i64: 1, 4, 32, 8>}, {transform_indices = @transform_6, window_bounds = array<i64: 1, 4, 1, 8>}, {transform_indices = @transform_7, window_bounds = array<i64: 1, 4, 1, 8>}, {transform_indices = @transform_8, window_bounds = array<i64: 1, 4, 1, 8>}, {transform_indices = @transform_9, window_bounds = array<i64: 1, 4, 8, 32>}, {transform_indices = @transform_10, window_bounds = array<i64: 1, 1, 32>}, {transform_indices = @transform_11, window_bounds = array<i64: 1, 1, 32>}, {transform_indices = @transform_12, window_bounds = array<i64: 1, 1, 32>}, {transform_indices = @transform_13, window_bounds = array<i64: 1, 32, 2048>}, {transform_indices = @transform_14, window_bounds = array<i64: 1, 1, 2048>}, {transform_indices = @transform_15, window_bounds = array<i64: 1, 2048, 32>}, {transform_indices = @transform_16, window_bounds = array<i64: 1, 1, 32>}, {transform_indices = @transform_17, window_bounds = array<i64: 1, 1, 32>}, {transform_indices = @transform_18, window_bounds = array<i64: 1, 1, 32>}, {pipeline_mode = #tpu.pipeline_mode<synchronous>, transform_indices = @transform_19, window_bounds = array<i64: 1, 32>}, {pipeline_mode = #tpu.pipeline_mode<synchronous>, transform_indices = @transform_20, window_bounds = array<i64: 1, 32>}, {pipeline_mode = #tpu.pipeline_mode<synchronous>, transform_indices = @transform_21, window_bounds = array<i64: 128, 32>}]} {
    %c0_i32 = arith.constant 0 : i32
    %0 = arith.cmpi eq, %arg0, %c0_i32 : i32
    %1 = arith.extui %0 : i1 to i32
    %c0_i32_0 = arith.constant 0 : i32
    %2 = arith.cmpi ne, %1, %c0_i32_0 : i32
    scf.if %2 {
      %c0_206 = arith.constant 0 : index
      %c0_207 = arith.constant 0 : index
      %306 = vector.load %arg1[%c0_206, %c0_207] : memref<128x16xbf16, #tpu.memory_space<vmem>>, vector<128x16xbf16>
      %c0_208 = arith.constant 0 : index
      %c0_209 = arith.constant 0 : index
      %307 = vector.load %arg2[%c0_208, %c0_209] : memref<16x32xbf16, #tpu.memory_space<vmem>>, vector<16x32xbf16>
      %cst_210 = arith.constant dense<0.000000e+00> : vector<128x32xf32>
      %308 = tpu.matmul %306, %307, %cst_210 {dimension_numbers = #tpu.dot_dimension_numbers<[1], [0], [0], [1], [0, 0, 1, 1], [], []>} : vector<128x16xbf16>, vector<16x32xbf16>, vector<128x32xf32> -> vector<128x32xf32>
      %c0_211 = arith.constant 0 : index
      %c0_212 = arith.constant 0 : index
      %309 = vector.load %arg3[%c0_211, %c0_212] : memref<1x32xf32, #tpu.memory_space<vmem>>, vector<1x32xf32>
      %310 = vector.broadcast %309 : vector<1x32xf32> to vector<128x32xf32>
      %311 = arith.addf %308, %310 : vector<128x32xf32>
      %c0_213 = arith.constant 0 : index
      %c0_214 = arith.constant 0 : index
      %312 = vector.load %arg23[%c0_213, %c0_214] : memref<128x32xf32, #tpu.memory_space<vmem>>, vector<128x32xf32>
      tpu.vector_store %arg23[%c0_213, %c0_214], %311 {strides = array<i32>} : memref<128x32xf32, #tpu.memory_space<vmem>>, vector<128x32xf32>,
    } else {
    }
    %c0 = arith.constant 0 : index
    %c0_1 = arith.constant 0 : index
    %3 = vector.load %arg23[%c0, %c0_1] : memref<128x32xf32, #tpu.memory_space<vmem>>, vector<128x32xf32>
    %4 = arith.truncf %3 : vector<128x32xf32> to vector<128x32xbf16>
    %5 = tpu.iota {dimensions = array<i32: 0>} : vector<128x128xi32>
    %6 = tpu.iota {dimensions = array<i32: 1>} : vector<128x128xi32>
    %c64_i32 = arith.constant 64 : i32
    %c0_i32_2 = arith.constant 0 : i32
    %7 = arith.cmpi eq, %c64_i32, %c0_i32_2 : i32
    %c1_i32 = arith.constant 1 : i32
    %8 = arith.select %7, %c1_i32, %c64_i32 : i32
    %9 = vector.broadcast %8 : i32 to vector<128x128xi32>
    %10 = arith.remsi %5, %9 : vector<128x128xi32>
    %c0_i32_3 = arith.constant 0 : i32
    %11 = vector.broadcast %c0_i32_3 : i32 to vector<128x128xi32>
    %12 = arith.cmpi ne, %10, %11 : vector<128x128xi32>
    %c0_i32_4 = arith.constant 0 : i32
    %13 = vector.broadcast %c0_i32_4 : i32 to vector<128x128xi32>
    %14 = arith.cmpi slt, %10, %13 : vector<128x128xi32>
    %c0_i32_5 = arith.constant 0 : i32
    %15 = arith.cmpi slt, %8, %c0_i32_5 : i32
    %16 = vector.broadcast %15 : i1 to vector<128x128xi1>
    %17 = vector.broadcast %16 : vector<128x128xi1> to vector<128x128xi1>
    %18 = arith.xori %14, %17 : vector<128x128xi1>
    %19 = arith.andi %18, %12 : vector<128x128xi1>
    %20 = vector.broadcast %8 : i32 to vector<128x128xi32>
    %21 = arith.addi %10, %20 : vector<128x128xi32>
    %22 = arith.select %19, %21, %10 : vector<128x128xi1>, vector<128x128xi32>
    %c64_i32_6 = arith.constant 64 : i32
    %c0_i32_7 = arith.constant 0 : i32
    %23 = arith.cmpi eq, %c64_i32_6, %c0_i32_7 : i32
    %c1_i32_8 = arith.constant 1 : i32
    %24 = arith.select %23, %c1_i32_8, %c64_i32_6 : i32
    %25 = vector.broadcast %24 : i32 to vector<128x128xi32>
    %26 = arith.remsi %6, %25 : vector<128x128xi32>
    %c0_i32_9 = arith.constant 0 : i32
    %27 = vector.broadcast %c0_i32_9 : i32 to vector<128x128xi32>
    %28 = arith.cmpi ne, %26, %27 : vector<128x128xi32>
    %c0_i32_10 = arith.constant 0 : i32
    %29 = vector.broadcast %c0_i32_10 : i32 to vector<128x128xi32>
    %30 = arith.cmpi slt, %26, %29 : vector<128x128xi32>
    %c0_i32_11 = arith.constant 0 : i32
    %31 = arith.cmpi slt, %24, %c0_i32_11 : i32
    %32 = vector.broadcast %31 : i1 to vector<128x128xi1>
    %33 = vector.broadcast %32 : vector<128x128xi1> to vector<128x128xi1>
    %34 = arith.xori %30, %33 : vector<128x128xi1>
    %35 = arith.andi %34, %28 : vector<128x128xi1>
    %36 = vector.broadcast %24 : i32 to vector<128x128xi32>
    %37 = arith.addi %26, %36 : vector<128x128xi32>
    %38 = arith.select %35, %37, %26 : vector<128x128xi1>, vector<128x128xi32>
    %39 = arith.cmpi eq, %22, %38 : vector<128x128xi32>
    %cst = arith.constant 0.000000e+00 : f32
    %cst_12 = arith.constant -1.000000e+30 : f32
    %40 = vector.broadcast %cst : f32 to vector<128x128xf32>
    %41 = vector.broadcast %cst_12 : f32 to vector<128x128xf32>
    %42 = arith.select %39, %40, %41 : vector<128x128xi1>, vector<128x128xf32>
    %cst_13 = arith.constant 0.000000e+00 : f32
    %43 = vector.broadcast %cst_13 : f32 to vector<128x32xf32>
    %c0_14 = arith.constant 0 : index
    %c0_15 = arith.constant 0 : index
    %c0_16 = arith.constant 0 : index
    %c0_17 = arith.constant 0 : index
    %44 = vector.load %arg4[%c0_14, %c0_15, %c0_16, %c0_17] : memref<1x4x32x8xbf16, #tpu.memory_space<vmem>>, vector<1x1x32x8xbf16>
    %45 = vector.shape_cast %44 : vector<1x1x32x8xbf16> to vector<32x8xbf16>
    %cst_18 = arith.constant dense<0.000000e+00> : vector<128x8xf32>
    %46 = tpu.matmul %4, %45, %cst_18 {dimension_numbers = #tpu.dot_dimension_numbers<[1], [0], [0], [1], [0, 0, 1, 1], [], []>} : vector<128x32xbf16>, vector<32x8xbf16>, vector<128x8xf32> -> vector<128x8xf32>
    %c0_19 = arith.constant 0 : index
    %c0_20 = arith.constant 0 : index
    %c0_21 = arith.constant 0 : index
    %c0_22 = arith.constant 0 : index
    %47 = vector.load %arg7[%c0_19, %c0_20, %c0_21, %c0_22] : memref<1x4x1x8xf32, #tpu.memory_space<vmem>>, vector<1x1x1x8xf32>
    %48 = vector.shape_cast %47 : vector<1x1x1x8xf32> to vector<1x8xf32>
    %49 = vector.broadcast %48 : vector<1x8xf32> to vector<128x8xf32>
    %50 = arith.addf %46, %49 : vector<128x8xf32>
    %c0_23 = arith.constant 0 : index
    %c0_24 = arith.constant 0 : index
    %c0_25 = arith.constant 0 : index
    %c0_26 = arith.constant 0 : index
    %51 = vector.load %arg5[%c0_23, %c0_24, %c0_25, %c0_26] : memref<1x4x32x8xbf16, #tpu.memory_space<vmem>>, vector<1x1x32x8xbf16>
    %52 = vector.shape_cast %51 : vector<1x1x32x8xbf16> to vector<32x8xbf16>
    %cst_27 = arith.constant dense<0.000000e+00> : vector<128x8xf32>
    %53 = tpu.matmul %4, %52, %cst_27 {dimension_numbers = #tpu.dot_dimension_numbers<[1], [0], [0], [1], [0, 0, 1, 1], [], []>} : vector<128x32xbf16>, vector<32x8xbf16>, vector<128x8xf32> -> vector<128x8xf32>
    %c0_28 = arith.constant 0 : index
    %c0_29 = arith.constant 0 : index
    %c0_30 = arith.constant 0 : index
    %c0_31 = arith.constant 0 : index
    %54 = vector.load %arg8[%c0_28, %c0_29, %c0_30, %c0_31] : memref<1x4x1x8xf32, #tpu.memory_space<vmem>>, vector<1x1x1x8xf32>
    %55 = vector.shape_cast %54 : vector<1x1x1x8xf32> to vector<1x8xf32>
    %56 = vector.broadcast %55 : vector<1x8xf32> to vector<128x8xf32>
    %57 = arith.addf %53, %56 : vector<128x8xf32>
    %c0_32 = arith.constant 0 : index
    %c0_33 = arith.constant 0 : index
    %c0_34 = arith.constant 0 : index
    %c0_35 = arith.constant 0 : index
    %58 = vector.load %arg6[%c0_32, %c0_33, %c0_34, %c0_35] : memref<1x4x32x8xbf16, #tpu.memory_space<vmem>>, vector<1x1x32x8xbf16>
    %59 = vector.shape_cast %58 : vector<1x1x32x8xbf16> to vector<32x8xbf16>
    %cst_36 = arith.constant dense<0.000000e+00> : vector<128x8xf32>
    %60 = tpu.matmul %4, %59, %cst_36 {dimension_numbers = #tpu.dot_dimension_numbers<[1], [0], [0], [1], [0, 0, 1, 1], [], []>} : vector<128x32xbf16>, vector<32x8xbf16>, vector<128x8xf32> -> vector<128x8xf32>
    %c0_37 = arith.constant 0 : index
    %c0_38 = arith.constant 0 : index
    %c0_39 = arith.constant 0 : index
    %c0_40 = arith.constant 0 : index
    %61 = vector.load %arg9[%c0_37, %c0_38, %c0_39, %c0_40] : memref<1x4x1x8xf32, #tpu.memory_space<vmem>>, vector<1x1x1x8xf32>
    %62 = vector.shape_cast %61 : vector<1x1x1x8xf32> to vector<1x8xf32>
    %63 = vector.broadcast %62 : vector<1x8xf32> to vector<128x8xf32>
    %64 = arith.addf %60, %63 : vector<128x8xf32>
    %65 = arith.truncf %50 : vector<128x8xf32> to vector<128x8xbf16>
    %66 = arith.truncf %57 : vector<128x8xf32> to vector<128x8xbf16>
    %cst_41 = arith.constant dense<0.000000e+00> : vector<128x128xf32>
    %67 = tpu.matmul %65, %66, %cst_41 {dimension_numbers = #tpu.dot_dimension_numbers<[1], [1], [0], [0], [0, 0, 1, 0], [], []>} : vector<128x8xbf16>, vector<128x8xbf16>, vector<128x128xf32> -> vector<128x128xf32>
    %cst_42 = arith.constant 0.353553385 : f32
    %68 = vector.broadcast %cst_42 : f32 to vector<128x128xf32>
    %69 = arith.mulf %67, %68 : vector<128x128xf32>
    %70 = arith.addf %69, %42 : vector<128x128xf32>
    %cst_43 = arith.constant dense<0xFF800000> : vector<128xf32>
    %71 = vector.multi_reduction <maximumf>, %70, %cst_43 [1] : vector<128x128xf32> to vector<128xf32>
    %72 = vector.shape_cast %71 : vector<128xf32> to vector<128x1xf32>
    %73 = vector.broadcast %72 : vector<128x1xf32> to vector<128x128xf32>
    %74 = arith.subf %70, %73 : vector<128x128xf32>
    %75 = math.exp %74 : vector<128x128xf32>
    %cst_44 = arith.constant dense<0.000000e+00> : vector<128xf32>
    %76 = vector.multi_reduction <add>, %75, %cst_44 [1] : vector<128x128xf32> to vector<128xf32>
    %77 = vector.shape_cast %76 : vector<128xf32> to vector<128x1xf32>
    %78 = tpu.reciprocal %77 {approx = true} : vector<128x1xf32> -> vector<128x1xf32>
    %79 = vector.broadcast %78 : vector<128x1xf32> to vector<128x128xf32>
    %80 = arith.mulf %75, %79 : vector<128x128xf32>
    %81 = arith.truncf %80 : vector<128x128xf32> to vector<128x128xbf16>
    %82 = arith.truncf %64 : vector<128x8xf32> to vector<128x8xbf16>
    %cst_45 = arith.constant dense<0.000000e+00> : vector<128x8xf32>
    %83 = tpu.matmul %81, %82, %cst_45 {dimension_numbers = #tpu.dot_dimension_numbers<[1], [0], [0], [1], [0, 0, 1, 1], [], []>} : vector<128x128xbf16>, vector<128x8xbf16>, vector<128x8xf32> -> vector<128x8xf32>
    %84 = arith.truncf %83 : vector<128x8xf32> to vector<128x8xbf16>
    %c0_46 = arith.constant 0 : index
    %c0_47 = arith.constant 0 : index
    %c0_48 = arith.constant 0 : index
    %c0_49 = arith.constant 0 : index
    %85 = vector.load %arg10[%c0_46, %c0_47, %c0_48, %c0_49] : memref<1x4x8x32xbf16, #tpu.memory_space<vmem>>, vector<1x1x8x32xbf16>
    %86 = vector.shape_cast %85 : vector<1x1x8x32xbf16> to vector<8x32xbf16>
    %cst_50 = arith.constant dense<0.000000e+00> : vector<128x32xf32>
    %87 = tpu.matmul %84, %86, %cst_50 {dimension_numbers = #tpu.dot_dimension_numbers<[1], [0], [0], [1], [0, 0, 1, 1], [], []>} : vector<128x8xbf16>, vector<8x32xbf16>, vector<128x32xf32> -> vector<128x32xf32>
    %88 = arith.addf %43, %87 : vector<128x32xf32>
    %c0_51 = arith.constant 0 : index
    %c1 = arith.constant 1 : index
    %c0_52 = arith.constant 0 : index
    %c0_53 = arith.constant 0 : index
    %89 = vector.load %arg4[%c0_51, %c1, %c0_52, %c0_53] : memref<1x4x32x8xbf16, #tpu.memory_space<vmem>>, vector<1x1x32x8xbf16>
    %90 = vector.shape_cast %89 : vector<1x1x32x8xbf16> to vector<32x8xbf16>
    %cst_54 = arith.constant dense<0.000000e+00> : vector<128x8xf32>
    %91 = tpu.matmul %4, %90, %cst_54 {dimension_numbers = #tpu.dot_dimension_numbers<[1], [0], [0], [1], [0, 0, 1, 1], [], []>} : vector<128x32xbf16>, vector<32x8xbf16>, vector<128x8xf32> -> vector<128x8xf32>
    %c0_55 = arith.constant 0 : index
    %c1_56 = arith.constant 1 : index
    %c0_57 = arith.constant 0 : index
    %c0_58 = arith.constant 0 : index
    %92 = vector.load %arg7[%c0_55, %c1_56, %c0_57, %c0_58] : memref<1x4x1x8xf32, #tpu.memory_space<vmem>>, vector<1x1x1x8xf32>
    %93 = vector.shape_cast %92 : vector<1x1x1x8xf32> to vector<1x8xf32>
    %94 = vector.broadcast %93 : vector<1x8xf32> to vector<128x8xf32>
    %95 = arith.addf %91, %94 : vector<128x8xf32>
    %c0_59 = arith.constant 0 : index
    %c1_60 = arith.constant 1 : index
    %c0_61 = arith.constant 0 : index
    %c0_62 = arith.constant 0 : index
    %96 = vector.load %arg5[%c0_59, %c1_60, %c0_61, %c0_62] : memref<1x4x32x8xbf16, #tpu.memory_space<vmem>>, vector<1x1x32x8xbf16>
    %97 = vector.shape_cast %96 : vector<1x1x32x8xbf16> to vector<32x8xbf16>
    %cst_63 = arith.constant dense<0.000000e+00> : vector<128x8xf32>
    %98 = tpu.matmul %4, %97, %cst_63 {dimension_numbers = #tpu.dot_dimension_numbers<[1], [0], [0], [1], [0, 0, 1, 1], [], []>} : vector<128x32xbf16>, vector<32x8xbf16>, vector<128x8xf32> -> vector<128x8xf32>
    %c0_64 = arith.constant 0 : index
    %c1_65 = arith.constant 1 : index
    %c0_66 = arith.constant 0 : index
    %c0_67 = arith.constant 0 : index
    %99 = vector.load %arg8[%c0_64, %c1_65, %c0_66, %c0_67] : memref<1x4x1x8xf32, #tpu.memory_space<vmem>>, vector<1x1x1x8xf32>
    %100 = vector.shape_cast %99 : vector<1x1x1x8xf32> to vector<1x8xf32>
    %101 = vector.broadcast %100 : vector<1x8xf32> to vector<128x8xf32>
    %102 = arith.addf %98, %101 : vector<128x8xf32>
    %c0_68 = arith.constant 0 : index
    %c1_69 = arith.constant 1 : index
    %c0_70 = arith.constant 0 : index
    %c0_71 = arith.constant 0 : index
    %103 = vector.load %arg6[%c0_68, %c1_69, %c0_70, %c0_71] : memref<1x4x32x8xbf16, #tpu.memory_space<vmem>>, vector<1x1x32x8xbf16>
    %104 = vector.shape_cast %103 : vector<1x1x32x8xbf16> to vector<32x8xbf16>
    %cst_72 = arith.constant dense<0.000000e+00> : vector<128x8xf32>
    %105 = tpu.matmul %4, %104, %cst_72 {dimension_numbers = #tpu.dot_dimension_numbers<[1], [0], [0], [1], [0, 0, 1, 1], [], []>} : vector<128x32xbf16>, vector<32x8xbf16>, vector<128x8xf32> -> vector<128x8xf32>
    %c0_73 = arith.constant 0 : index
    %c1_74 = arith.constant 1 : index
    %c0_75 = arith.constant 0 : index
    %c0_76 = arith.constant 0 : index
    %106 = vector.load %arg9[%c0_73, %c1_74, %c0_75, %c0_76] : memref<1x4x1x8xf32, #tpu.memory_space<vmem>>, vector<1x1x1x8xf32>
    %107 = vector.shape_cast %106 : vector<1x1x1x8xf32> to vector<1x8xf32>
    %108 = vector.broadcast %107 : vector<1x8xf32> to vector<128x8xf32>
    %109 = arith.addf %105, %108 : vector<128x8xf32>
    %110 = arith.truncf %95 : vector<128x8xf32> to vector<128x8xbf16>
    %111 = arith.truncf %102 : vector<128x8xf32> to vector<128x8xbf16>
    %cst_77 = arith.constant dense<0.000000e+00> : vector<128x128xf32>
    %112 = tpu.matmul %110, %111, %cst_77 {dimension_numbers = #tpu.dot_dimension_numbers<[1], [1], [0], [0], [0, 0, 1, 0], [], []>} : vector<128x8xbf16>, vector<128x8xbf16>, vector<128x128xf32> -> vector<128x128xf32>
    %cst_78 = arith.constant 0.353553385 : f32
    %113 = vector.broadcast %cst_78 : f32 to vector<128x128xf32>
    %114 = arith.mulf %112, %113 : vector<128x128xf32>
    %115 = arith.addf %114, %42 : vector<128x128xf32>
    %cst_79 = arith.constant dense<0xFF800000> : vector<128xf32>
    %116 = vector.multi_reduction <maximumf>, %115, %cst_79 [1] : vector<128x128xf32> to vector<128xf32>
    %117 = vector.shape_cast %116 : vector<128xf32> to vector<128x1xf32>
    %118 = vector.broadcast %117 : vector<128x1xf32> to vector<128x128xf32>
    %119 = arith.subf %115, %118 : vector<128x128xf32>
    %120 = math.exp %119 : vector<128x128xf32>
    %cst_80 = arith.constant dense<0.000000e+00> : vector<128xf32>
    %121 = vector.multi_reduction <add>, %120, %cst_80 [1] : vector<128x128xf32> to vector<128xf32>
    %122 = vector.shape_cast %121 : vector<128xf32> to vector<128x1xf32>
    %123 = tpu.reciprocal %122 {approx = true} : vector<128x1xf32> -> vector<128x1xf32>
    %124 = vector.broadcast %123 : vector<128x1xf32> to vector<128x128xf32>
    %125 = arith.mulf %120, %124 : vector<128x128xf32>
    %126 = arith.truncf %125 : vector<128x128xf32> to vector<128x128xbf16>
    %127 = arith.truncf %109 : vector<128x8xf32> to vector<128x8xbf16>
    %cst_81 = arith.constant dense<0.000000e+00> : vector<128x8xf32>
    %128 = tpu.matmul %126, %127, %cst_81 {dimension_numbers = #tpu.dot_dimension_numbers<[1], [0], [0], [1], [0, 0, 1, 1], [], []>} : vector<128x128xbf16>, vector<128x8xbf16>, vector<128x8xf32> -> vector<128x8xf32>
    %129 = arith.truncf %128 : vector<128x8xf32> to vector<128x8xbf16>
    %c0_82 = arith.constant 0 : index
    %c1_83 = arith.constant 1 : index
    %c0_84 = arith.constant 0 : index
    %c0_85 = arith.constant 0 : index
    %130 = vector.load %arg10[%c0_82, %c1_83, %c0_84, %c0_85] : memref<1x4x8x32xbf16, #tpu.memory_space<vmem>>, vector<1x1x8x32xbf16>
    %131 = vector.shape_cast %130 : vector<1x1x8x32xbf16> to vector<8x32xbf16>
    %cst_86 = arith.constant dense<0.000000e+00> : vector<128x32xf32>
    %132 = tpu.matmul %129, %131, %cst_86 {dimension_numbers = #tpu.dot_dimension_numbers<[1], [0], [0], [1], [0, 0, 1, 1], [], []>} : vector<128x8xbf16>, vector<8x32xbf16>, vector<128x32xf32> -> vector<128x32xf32>
    %133 = arith.addf %88, %132 : vector<128x32xf32>
    %c0_87 = arith.constant 0 : index
    %c2 = arith.constant 2 : index
    %c0_88 = arith.constant 0 : index
    %c0_89 = arith.constant 0 : index
    %134 = vector.load %arg4[%c0_87, %c2, %c0_88, %c0_89] : memref<1x4x32x8xbf16, #tpu.memory_space<vmem>>, vector<1x1x32x8xbf16>
    %135 = vector.shape_cast %134 : vector<1x1x32x8xbf16> to vector<32x8xbf16>
    %cst_90 = arith.constant dense<0.000000e+00> : vector<128x8xf32>
    %136 = tpu.matmul %4, %135, %cst_90 {dimension_numbers = #tpu.dot_dimension_numbers<[1], [0], [0], [1], [0, 0, 1, 1], [], []>} : vector<128x32xbf16>, vector<32x8xbf16>, vector<128x8xf32> -> vector<128x8xf32>
    %c0_91 = arith.constant 0 : index
    %c2_92 = arith.constant 2 : index
    %c0_93 = arith.constant 0 : index
    %c0_94 = arith.constant 0 : index
    %137 = vector.load %arg7[%c0_91, %c2_92, %c0_93, %c0_94] : memref<1x4x1x8xf32, #tpu.memory_space<vmem>>, vector<1x1x1x8xf32>
    %138 = vector.shape_cast %137 : vector<1x1x1x8xf32> to vector<1x8xf32>
    %139 = vector.broadcast %138 : vector<1x8xf32> to vector<128x8xf32>
    %140 = arith.addf %136, %139 : vector<128x8xf32>
    %c0_95 = arith.constant 0 : index
    %c2_96 = arith.constant 2 : index
    %c0_97 = arith.constant 0 : index
    %c0_98 = arith.constant 0 : index
    %141 = vector.load %arg5[%c0_95, %c2_96, %c0_97, %c0_98] : memref<1x4x32x8xbf16, #tpu.memory_space<vmem>>, vector<1x1x32x8xbf16>
    %142 = vector.shape_cast %141 : vector<1x1x32x8xbf16> to vector<32x8xbf16>
    %cst_99 = arith.constant dense<0.000000e+00> : vector<128x8xf32>
    %143 = tpu.matmul %4, %142, %cst_99 {dimension_numbers = #tpu.dot_dimension_numbers<[1], [0], [0], [1], [0, 0, 1, 1], [], []>} : vector<128x32xbf16>, vector<32x8xbf16>, vector<128x8xf32> -> vector<128x8xf32>
    %c0_100 = arith.constant 0 : index
    %c2_101 = arith.constant 2 : index
    %c0_102 = arith.constant 0 : index
    %c0_103 = arith.constant 0 : index
    %144 = vector.load %arg8[%c0_100, %c2_101, %c0_102, %c0_103] : memref<1x4x1x8xf32, #tpu.memory_space<vmem>>, vector<1x1x1x8xf32>
    %145 = vector.shape_cast %144 : vector<1x1x1x8xf32> to vector<1x8xf32>
    %146 = vector.broadcast %145 : vector<1x8xf32> to vector<128x8xf32>
    %147 = arith.addf %143, %146 : vector<128x8xf32>
    %c0_104 = arith.constant 0 : index
    %c2_105 = arith.constant 2 : index
    %c0_106 = arith.constant 0 : index
    %c0_107 = arith.constant 0 : index
    %148 = vector.load %arg6[%c0_104, %c2_105, %c0_106, %c0_107] : memref<1x4x32x8xbf16, #tpu.memory_space<vmem>>, vector<1x1x32x8xbf16>
    %149 = vector.shape_cast %148 : vector<1x1x32x8xbf16> to vector<32x8xbf16>
    %cst_108 = arith.constant dense<0.000000e+00> : vector<128x8xf32>
    %150 = tpu.matmul %4, %149, %cst_108 {dimension_numbers = #tpu.dot_dimension_numbers<[1], [0], [0], [1], [0, 0, 1, 1], [], []>} : vector<128x32xbf16>, vector<32x8xbf16>, vector<128x8xf32> -> vector<128x8xf32>
    %c0_109 = arith.constant 0 : index
    %c2_110 = arith.constant 2 : index
    %c0_111 = arith.constant 0 : index
    %c0_112 = arith.constant 0 : index
    %151 = vector.load %arg9[%c0_109, %c2_110, %c0_111, %c0_112] : memref<1x4x1x8xf32, #tpu.memory_space<vmem>>, vector<1x1x1x8xf32>
    %152 = vector.shape_cast %151 : vector<1x1x1x8xf32> to vector<1x8xf32>
    %153 = vector.broadcast %152 : vector<1x8xf32> to vector<128x8xf32>
    %154 = arith.addf %150, %153 : vector<128x8xf32>
    %155 = arith.truncf %140 : vector<128x8xf32> to vector<128x8xbf16>
    %156 = arith.truncf %147 : vector<128x8xf32> to vector<128x8xbf16>
    %cst_113 = arith.constant dense<0.000000e+00> : vector<128x128xf32>
    %157 = tpu.matmul %155, %156, %cst_113 {dimension_numbers = #tpu.dot_dimension_numbers<[1], [1], [0], [0], [0, 0, 1, 0], [], []>} : vector<128x8xbf16>, vector<128x8xbf16>, vector<128x128xf32> -> vector<128x128xf32>
    %cst_114 = arith.constant 0.353553385 : f32
    %158 = vector.broadcast %cst_114 : f32 to vector<128x128xf32>
    %159 = arith.mulf %157, %158 : vector<128x128xf32>
    %160 = arith.addf %159, %42 : vector<128x128xf32>
    %cst_115 = arith.constant dense<0xFF800000> : vector<128xf32>
    %161 = vector.multi_reduction <maximumf>, %160, %cst_115 [1] : vector<128x128xf32> to vector<128xf32>
    %162 = vector.shape_cast %161 : vector<128xf32> to vector<128x1xf32>
    %163 = vector.broadcast %162 : vector<128x1xf32> to vector<128x128xf32>
    %164 = arith.subf %160, %163 : vector<128x128xf32>
    %165 = math.exp %164 : vector<128x128xf32>
    %cst_116 = arith.constant dense<0.000000e+00> : vector<128xf32>
    %166 = vector.multi_reduction <add>, %165, %cst_116 [1] : vector<128x128xf32> to vector<128xf32>
    %167 = vector.shape_cast %166 : vector<128xf32> to vector<128x1xf32>
    %168 = tpu.reciprocal %167 {approx = true} : vector<128x1xf32> -> vector<128x1xf32>
    %169 = vector.broadcast %168 : vector<128x1xf32> to vector<128x128xf32>
    %170 = arith.mulf %165, %169 : vector<128x128xf32>
    %171 = arith.truncf %170 : vector<128x128xf32> to vector<128x128xbf16>
    %172 = arith.truncf %154 : vector<128x8xf32> to vector<128x8xbf16>
    %cst_117 = arith.constant dense<0.000000e+00> : vector<128x8xf32>
    %173 = tpu.matmul %171, %172, %cst_117 {dimension_numbers = #tpu.dot_dimension_numbers<[1], [0], [0], [1], [0, 0, 1, 1], [], []>} : vector<128x128xbf16>, vector<128x8xbf16>, vector<128x8xf32> -> vector<128x8xf32>
    %174 = arith.truncf %173 : vector<128x8xf32> to vector<128x8xbf16>
    %c0_118 = arith.constant 0 : index
    %c2_119 = arith.constant 2 : index
    %c0_120 = arith.constant 0 : index
    %c0_121 = arith.constant 0 : index
    %175 = vector.load %arg10[%c0_118, %c2_119, %c0_120, %c0_121] : memref<1x4x8x32xbf16, #tpu.memory_space<vmem>>, vector<1x1x8x32xbf16>
    %176 = vector.shape_cast %175 : vector<1x1x8x32xbf16> to vector<8x32xbf16>
    %cst_122 = arith.constant dense<0.000000e+00> : vector<128x32xf32>
    %177 = tpu.matmul %174, %176, %cst_122 {dimension_numbers = #tpu.dot_dimension_numbers<[1], [0], [0], [1], [0, 0, 1, 1], [], []>} : vector<128x8xbf16>, vector<8x32xbf16>, vector<128x32xf32> -> vector<128x32xf32>
    %178 = arith.addf %133, %177 : vector<128x32xf32>
    %c0_123 = arith.constant 0 : index
    %c3 = arith.constant 3 : index
    %c0_124 = arith.constant 0 : index
    %c0_125 = arith.constant 0 : index
    %179 = vector.load %arg4[%c0_123, %c3, %c0_124, %c0_125] : memref<1x4x32x8xbf16, #tpu.memory_space<vmem>>, vector<1x1x32x8xbf16>
    %180 = vector.shape_cast %179 : vector<1x1x32x8xbf16> to vector<32x8xbf16>
    %cst_126 = arith.constant dense<0.000000e+00> : vector<128x8xf32>
    %181 = tpu.matmul %4, %180, %cst_126 {dimension_numbers = #tpu.dot_dimension_numbers<[1], [0], [0], [1], [0, 0, 1, 1], [], []>} : vector<128x32xbf16>, vector<32x8xbf16>, vector<128x8xf32> -> vector<128x8xf32>
    %c0_127 = arith.constant 0 : index
    %c3_128 = arith.constant 3 : index
    %c0_129 = arith.constant 0 : index
    %c0_130 = arith.constant 0 : index
    %182 = vector.load %arg7[%c0_127, %c3_128, %c0_129, %c0_130] : memref<1x4x1x8xf32, #tpu.memory_space<vmem>>, vector<1x1x1x8xf32>
    %183 = vector.shape_cast %182 : vector<1x1x1x8xf32> to vector<1x8xf32>
    %184 = vector.broadcast %183 : vector<1x8xf32> to vector<128x8xf32>
    %185 = arith.addf %181, %184 : vector<128x8xf32>
    %c0_131 = arith.constant 0 : index
    %c3_132 = arith.constant 3 : index
    %c0_133 = arith.constant 0 : index
    %c0_134 = arith.constant 0 : index
    %186 = vector.load %arg5[%c0_131, %c3_132, %c0_133, %c0_134] : memref<1x4x32x8xbf16, #tpu.memory_space<vmem>>, vector<1x1x32x8xbf16>
    %187 = vector.shape_cast %186 : vector<1x1x32x8xbf16> to vector<32x8xbf16>
    %cst_135 = arith.constant dense<0.000000e+00> : vector<128x8xf32>
    %188 = tpu.matmul %4, %187, %cst_135 {dimension_numbers = #tpu.dot_dimension_numbers<[1], [0], [0], [1], [0, 0, 1, 1], [], []>} : vector<128x32xbf16>, vector<32x8xbf16>, vector<128x8xf32> -> vector<128x8xf32>
    %c0_136 = arith.constant 0 : index
    %c3_137 = arith.constant 3 : index
    %c0_138 = arith.constant 0 : index
    %c0_139 = arith.constant 0 : index
    %189 = vector.load %arg8[%c0_136, %c3_137, %c0_138, %c0_139] : memref<1x4x1x8xf32, #tpu.memory_space<vmem>>, vector<1x1x1x8xf32>
    %190 = vector.shape_cast %189 : vector<1x1x1x8xf32> to vector<1x8xf32>
    %191 = vector.broadcast %190 : vector<1x8xf32> to vector<128x8xf32>
    %192 = arith.addf %188, %191 : vector<128x8xf32>
    %c0_140 = arith.constant 0 : index
    %c3_141 = arith.constant 3 : index
    %c0_142 = arith.constant 0 : index
    %c0_143 = arith.constant 0 : index
    %193 = vector.load %arg6[%c0_140, %c3_141, %c0_142, %c0_143] : memref<1x4x32x8xbf16, #tpu.memory_space<vmem>>, vector<1x1x32x8xbf16>
    %194 = vector.shape_cast %193 : vector<1x1x32x8xbf16> to vector<32x8xbf16>
    %cst_144 = arith.constant dense<0.000000e+00> : vector<128x8xf32>
    %195 = tpu.matmul %4, %194, %cst_144 {dimension_numbers = #tpu.dot_dimension_numbers<[1], [0], [0], [1], [0, 0, 1, 1], [], []>} : vector<128x32xbf16>, vector<32x8xbf16>, vector<128x8xf32> -> vector<128x8xf32>
    %c0_145 = arith.constant 0 : index
    %c3_146 = arith.constant 3 : index
    %c0_147 = arith.constant 0 : index
    %c0_148 = arith.constant 0 : index
    %196 = vector.load %arg9[%c0_145, %c3_146, %c0_147, %c0_148] : memref<1x4x1x8xf32, #tpu.memory_space<vmem>>, vector<1x1x1x8xf32>
    %197 = vector.shape_cast %196 : vector<1x1x1x8xf32> to vector<1x8xf32>
    %198 = vector.broadcast %197 : vector<1x8xf32> to vector<128x8xf32>
    %199 = arith.addf %195, %198 : vector<128x8xf32>
    %200 = arith.truncf %185 : vector<128x8xf32> to vector<128x8xbf16>
    %201 = arith.truncf %192 : vector<128x8xf32> to vector<128x8xbf16>
    %cst_149 = arith.constant dense<0.000000e+00> : vector<128x128xf32>
    %202 = tpu.matmul %200, %201, %cst_149 {dimension_numbers = #tpu.dot_dimension_numbers<[1], [1], [0], [0], [0, 0, 1, 0], [], []>} : vector<128x8xbf16>, vector<128x8xbf16>, vector<128x128xf32> -> vector<128x128xf32>
    %cst_150 = arith.constant 0.353553385 : f32
    %203 = vector.broadcast %cst_150 : f32 to vector<128x128xf32>
    %204 = arith.mulf %202, %203 : vector<128x128xf32>
    %205 = arith.addf %204, %42 : vector<128x128xf32>
    %cst_151 = arith.constant dense<0xFF800000> : vector<128xf32>
    %206 = vector.multi_reduction <maximumf>, %205, %cst_151 [1] : vector<128x128xf32> to vector<128xf32>
    %207 = vector.shape_cast %206 : vector<128xf32> to vector<128x1xf32>
    %208 = vector.broadcast %207 : vector<128x1xf32> to vector<128x128xf32>
    %209 = arith.subf %205, %208 : vector<128x128xf32>
    %210 = math.exp %209 : vector<128x128xf32>
    %cst_152 = arith.constant dense<0.000000e+00> : vector<128xf32>
    %211 = vector.multi_reduction <add>, %210, %cst_152 [1] : vector<128x128xf32> to vector<128xf32>
    %212 = vector.shape_cast %211 : vector<128xf32> to vector<128x1xf32>
    %213 = tpu.reciprocal %212 {approx = true} : vector<128x1xf32> -> vector<128x1xf32>
    %214 = vector.broadcast %213 : vector<128x1xf32> to vector<128x128xf32>
    %215 = arith.mulf %210, %214 : vector<128x128xf32>
    %216 = arith.truncf %215 : vector<128x128xf32> to vector<128x128xbf16>
    %217 = arith.truncf %199 : vector<128x8xf32> to vector<128x8xbf16>
    %cst_153 = arith.constant dense<0.000000e+00> : vector<128x8xf32>
    %218 = tpu.matmul %216, %217, %cst_153 {dimension_numbers = #tpu.dot_dimension_numbers<[1], [0], [0], [1], [0, 0, 1, 1], [], []>} : vector<128x128xbf16>, vector<128x8xbf16>, vector<128x8xf32> -> vector<128x8xf32>
    %219 = arith.truncf %218 : vector<128x8xf32> to vector<128x8xbf16>
    %c0_154 = arith.constant 0 : index
    %c3_155 = arith.constant 3 : index
    %c0_156 = arith.constant 0 : index
    %c0_157 = arith.constant 0 : index
    %220 = vector.load %arg10[%c0_154, %c3_155, %c0_156, %c0_157] : memref<1x4x8x32xbf16, #tpu.memory_space<vmem>>, vector<1x1x8x32xbf16>
    %221 = vector.shape_cast %220 : vector<1x1x8x32xbf16> to vector<8x32xbf16>
    %cst_158 = arith.constant dense<0.000000e+00> : vector<128x32xf32>
    %222 = tpu.matmul %219, %221, %cst_158 {dimension_numbers = #tpu.dot_dimension_numbers<[1], [0], [0], [1], [0, 0, 1, 1], [], []>} : vector<128x8xbf16>, vector<8x32xbf16>, vector<128x32xf32> -> vector<128x32xf32>
    %223 = arith.addf %178, %222 : vector<128x32xf32>
    %c0_159 = arith.constant 0 : index
    %c0_160 = arith.constant 0 : index
    %c0_161 = arith.constant 0 : index
    %224 = vector.load %arg11[%c0_159, %c0_160, %c0_161] : memref<1x1x32xf32, #tpu.memory_space<vmem>>, vector<1x1x32xf32>
    %225 = vector.shape_cast %224 : vector<1x1x32xf32> to vector<1x32xf32>
    %226 = vector.broadcast %225 : vector<1x32xf32> to vector<128x32xf32>
    %227 = arith.addf %223, %226 : vector<128x32xf32>
    %228 = arith.addf %3, %227 : vector<128x32xf32>
    %c0_162 = arith.constant 0 : index
    %c0_163 = arith.constant 0 : index
    %c0_164 = arith.constant 0 : index
    %229 = vector.load %arg12[%c0_162, %c0_163, %c0_164] : memref<1x1x32xf32, #tpu.memory_space<vmem>>, vector<1x1x32xf32>
    %230 = vector.shape_cast %229 : vector<1x1x32xf32> to vector<1x32xf32>
    %c0_165 = arith.constant 0 : index
    %c0_166 = arith.constant 0 : index
    %c0_167 = arith.constant 0 : index
    %231 = vector.load %arg13[%c0_165, %c0_166, %c0_167] : memref<1x1x32xf32, #tpu.memory_space<vmem>>, vector<1x1x32xf32>
    %232 = vector.shape_cast %231 : vector<1x1x32xf32> to vector<1x32xf32>
    %cst_168 = arith.constant dense<0.000000e+00> : vector<128xf32>
    %233 = vector.multi_reduction <add>, %228, %cst_168 [1] : vector<128x32xf32> to vector<128xf32>
    %234 = vector.shape_cast %233 : vector<128xf32> to vector<128x1xf32>
    %cst_169 = arith.constant 3.200000e+01 : f32
    %235 = vector.broadcast %cst_169 : f32 to vector<128x1xf32>
    %236 = arith.divf %234, %235 : vector<128x1xf32>
    %237 = vector.broadcast %236 : vector<128x1xf32> to vector<128x32xf32>
    %238 = arith.subf %228, %237 : vector<128x32xf32>
    %239 = arith.mulf %238, %238 : vector<128x32xf32>
    %cst_170 = arith.constant dense<0.000000e+00> : vector<128xf32>
    %240 = vector.multi_reduction <add>, %239, %cst_170 [1] : vector<128x32xf32> to vector<128xf32>
    %241 = vector.shape_cast %240 : vector<128xf32> to vector<128x1xf32>
    %cst_171 = arith.constant 3.200000e+01 : f32
    %242 = vector.broadcast %cst_171 : f32 to vector<128x1xf32>
    %243 = arith.divf %241, %242 : vector<128x1xf32>
    %244 = vector.broadcast %236 : vector<128x1xf32> to vector<128x32xf32>
    %245 = arith.subf %228, %244 : vector<128x32xf32>
    %cst_172 = arith.constant 9.99999974E-6 : f32
    %246 = vector.broadcast %cst_172 : f32 to vector<128x1xf32>
    %247 = arith.addf %243, %246 : vector<128x1xf32>
    %248 = math.rsqrt %247 : vector<128x1xf32>
    %249 = vector.broadcast %248 : vector<128x1xf32> to vector<128x32xf32>
    %250 = arith.mulf %245, %249 : vector<128x32xf32>
    %251 = vector.broadcast %230 : vector<1x32xf32> to vector<128x32xf32>
    %252 = arith.mulf %250, %251 : vector<128x32xf32>
    %253 = vector.broadcast %232 : vector<1x32xf32> to vector<128x32xf32>
    %254 = arith.addf %252, %253 : vector<128x32xf32>
    %c0_173 = arith.constant 0 : index
    %c0_174 = arith.constant 0 : index
    %255 = vector.load %arg23[%c0_173, %c0_174] : memref<128x32xf32, #tpu.memory_space<vmem>>, vector<128x32xf32>
    tpu.vector_store %arg23[%c0_173, %c0_174], %254 {strides = array<i32>} : memref<128x32xf32, #tpu.memory_space<vmem>>, vector<128x32xf32>,
    %c0_175 = arith.constant 0 : index
    %c0_176 = arith.constant 0 : index
    %256 = vector.load %arg23[%c0_175, %c0_176] : memref<128x32xf32, #tpu.memory_space<vmem>>, vector<128x32xf32>
    %257 = arith.truncf %256 : vector<128x32xf32> to vector<128x32xbf16>
    %c0_177 = arith.constant 0 : index
    %c0_178 = arith.constant 0 : index
    %c0_179 = arith.constant 0 : index
    %258 = vector.load %arg14[%c0_177, %c0_178, %c0_179] : memref<1x32x2048xbf16, #tpu.memory_space<vmem>>, vector<1x32x2048xbf16>
    %259 = vector.shape_cast %258 : vector<1x32x2048xbf16> to vector<32x2048xbf16>
    %cst_180 = arith.constant dense<0.000000e+00> : vector<128x2048xf32>
    %260 = tpu.matmul %257, %259, %cst_180 {dimension_numbers = #tpu.dot_dimension_numbers<[1], [0], [0], [1], [0, 0, 1, 1], [], []>} : vector<128x32xbf16>, vector<32x2048xbf16>, vector<128x2048xf32> -> vector<128x2048xf32>
    %c0_181 = arith.constant 0 : index
    %c0_182 = arith.constant 0 : index
    %c0_183 = arith.constant 0 : index
    %261 = vector.load %arg15[%c0_181, %c0_182, %c0_183] : memref<1x1x2048xf32, #tpu.memory_space<vmem>>, vector<1x1x2048xf32>
    %262 = vector.shape_cast %261 : vector<1x1x2048xf32> to vector<1x2048xf32>
    %263 = vector.broadcast %262 : vector<1x2048xf32> to vector<128x2048xf32>
    %264 = arith.addf %260, %263 : vector<128x2048xf32>
    %cst_184 = arith.constant 0.000000e+00 : f32
    %265 = vector.broadcast %cst_184 : f32 to vector<128x2048xf32>
    %266 = arith.maximumf %264, %265 : vector<128x2048xf32>
    %267 = arith.truncf %266 : vector<128x2048xf32> to vector<128x2048xbf16>
    %c0_185 = arith.constant 0 : index
    %c0_186 = arith.constant 0 : index
    %c0_187 = arith.constant 0 : index
    %268 = vector.load %arg16[%c0_185, %c0_186, %c0_187] : memref<1x2048x32xbf16, #tpu.memory_space<vmem>>, vector<1x2048x32xbf16>
    %269 = vector.shape_cast %268 : vector<1x2048x32xbf16> to vector<2048x32xbf16>
    %cst_188 = arith.constant dense<0.000000e+00> : vector<128x32xf32>
    %270 = tpu.matmul %267, %269, %cst_188 {dimension_numbers = #tpu.dot_dimension_numbers<[1], [0], [0], [1], [0, 0, 1, 1], [], []>} : vector<128x2048xbf16>, vector<2048x32xbf16>, vector<128x32xf32> -> vector<128x32xf32>
    %c0_189 = arith.constant 0 : index
    %c0_190 = arith.constant 0 : index
    %c0_191 = arith.constant 0 : index
    %271 = vector.load %arg17[%c0_189, %c0_190, %c0_191] : memref<1x1x32xf32, #tpu.memory_space<vmem>>, vector<1x1x32xf32>
    %272 = vector.shape_cast %271 : vector<1x1x32xf32> to vector<1x32xf32>
    %273 = vector.broadcast %272 : vector<1x32xf32> to vector<128x32xf32>
    %274 = arith.addf %270, %273 : vector<128x32xf32>
    %275 = arith.addf %256, %274 : vector<128x32xf32>
    %c0_192 = arith.constant 0 : index
    %c0_193 = arith.constant 0 : index
    %c0_194 = arith.constant 0 : index
    %276 = vector.load %arg18[%c0_192, %c0_193, %c0_194] : memref<1x1x32xf32, #tpu.memory_space<vmem>>, vector<1x1x32xf32>
    %277 = vector.shape_cast %276 : vector<1x1x32xf32> to vector<1x32xf32>
    %c0_195 = arith.constant 0 : index
    %c0_196 = arith.constant 0 : index
    %c0_197 = arith.constant 0 : index
    %278 = vector.load %arg19[%c0_195, %c0_196, %c0_197] : memref<1x1x32xf32, #tpu.memory_space<vmem>>, vector<1x1x32xf32>
    %279 = vector.shape_cast %278 : vector<1x1x32xf32> to vector<1x32xf32>
    %cst_198 = arith.constant dense<0.000000e+00> : vector<128xf32>
    %280 = vector.multi_reduction <add>, %275, %cst_198 [1] : vector<128x32xf32> to vector<128xf32>
    %281 = vector.shape_cast %280 : vector<128xf32> to vector<128x1xf32>
    %cst_199 = arith.constant 3.200000e+01 : f32
    %282 = vector.broadcast %cst_199 : f32 to vector<128x1xf32>
    %283 = arith.divf %281, %282 : vector<128x1xf32>
    %284 = vector.broadcast %283 : vector<128x1xf32> to vector<128x32xf32>
    %285 = arith.subf %275, %284 : vector<128x32xf32>
    %286 = arith.mulf %285, %285 : vector<128x32xf32>
    %cst_200 = arith.constant dense<0.000000e+00> : vector<128xf32>
    %287 = vector.multi_reduction <add>, %286, %cst_200 [1] : vector<128x32xf32> to vector<128xf32>
    %288 = vector.shape_cast %287 : vector<128xf32> to vector<128x1xf32>
    %cst_201 = arith.constant 3.200000e+01 : f32
    %289 = vector.broadcast %cst_201 : f32 to vector<128x1xf32>
    %290 = arith.divf %288, %289 : vector<128x1xf32>
    %291 = vector.broadcast %283 : vector<128x1xf32> to vector<128x32xf32>
    %292 = arith.subf %275, %291 : vector<128x32xf32>
    %cst_202 = arith.constant 9.99999974E-6 : f32
    %293 = vector.broadcast %cst_202 : f32 to vector<128x1xf32>
    %294 = arith.addf %290, %293 : vector<128x1xf32>
    %295 = math.rsqrt %294 : vector<128x1xf32>
    %296 = vector.broadcast %295 : vector<128x1xf32> to vector<128x32xf32>
    %297 = arith.mulf %292, %296 : vector<128x32xf32>
    %298 = vector.broadcast %277 : vector<1x32xf32> to vector<128x32xf32>
    %299 = arith.mulf %297, %298 : vector<128x32xf32>
    %300 = vector.broadcast %279 : vector<1x32xf32> to vector<128x32xf32>
    %301 = arith.addf %299, %300 : vector<128x32xf32>
    %c0_203 = arith.constant 0 : index
    %c0_204 = arith.constant 0 : index
    %302 = vector.load %arg23[%c0_203, %c0_204] : memref<128x32xf32, #tpu.memory_space<vmem>>, vector<128x32xf32>
    tpu.vector_store %arg23[%c0_203, %c0_204], %301 {strides = array<i32>} : memref<128x32xf32, #tpu.memory_space<vmem>>, vector<128x32xf32>,
    %c11_i32 = arith.constant 11 : i32
    %303 = arith.cmpi eq, %arg0, %c11_i32 : i32
    %304 = arith.extui %303 : i1 to i32
    %c0_i32_205 = arith.constant 0 : i32
    %305 = arith.cmpi ne, %304, %c0_i32_205 : i32
    scf.if %305 {
      %c0_206 = arith.constant 0 : index
      %c0_207 = arith.constant 0 : index
      %306 = vector.load %arg23[%c0_206, %c0_207] : memref<128x32xf32, #tpu.memory_space<vmem>>, vector<128x32xf32>
      %c0_208 = arith.constant 0 : index
      %c0_209 = arith.constant 0 : index
      %307 = vector.load %arg20[%c0_208, %c0_209] : memref<1x32xf32, #tpu.memory_space<vmem>>, vector<1x32xf32>
      %c0_210 = arith.constant 0 : index
      %c0_211 = arith.constant 0 : index
      %308 = vector.load %arg21[%c0_210, %c0_211] : memref<1x32xf32, #tpu.memory_space<vmem>>, vector<1x32xf32>
      %cst_212 = arith.constant dense<0.000000e+00> : vector<128xf32>
      %309 = vector.multi_reduction <add>, %306, %cst_212 [1] : vector<128x32xf32> to vector<128xf32>
      %310 = vector.shape_cast %309 : vector<128xf32> to vector<128x1xf32>
      %cst_213 = arith.constant 3.200000e+01 : f32
      %311 = vector.broadcast %cst_213 : f32 to vector<128x1xf32>
      %312 = arith.divf %310, %311 : vector<128x1xf32>
      %313 = vector.broadcast %312 : vector<128x1xf32> to vector<128x32xf32>
      %314 = arith.subf %306, %313 : vector<128x32xf32>
      %315 = arith.mulf %314, %314 : vector<128x32xf32>
      %cst_214 = arith.constant dense<0.000000e+00> : vector<128xf32>
      %316 = vector.multi_reduction <add>, %315, %cst_214 [1] : vector<128x32xf32> to vector<128xf32>
      %317 = vector.shape_cast %316 : vector<128xf32> to vector<128x1xf32>
      %cst_215 = arith.constant 3.200000e+01 : f32
      %318 = vector.broadcast %cst_215 : f32 to vector<128x1xf32>
      %319 = arith.divf %317, %318 : vector<128x1xf32>
      %320 = vector.broadcast %312 : vector<128x1xf32> to vector<128x32xf32>
      %321 = arith.subf %306, %320 : vector<128x32xf32>
      %cst_216 = arith.constant 9.99999974E-6 : f32
      %322 = vector.broadcast %cst_216 : f32 to vector<128x1xf32>
      %323 = arith.addf %319, %322 : vector<128x1xf32>
      %324 = math.rsqrt %323 : vector<128x1xf32>
      %325 = vector.broadcast %324 : vector<128x1xf32> to vector<128x32xf32>
      %326 = arith.mulf %321, %325 : vector<128x32xf32>
      %327 = vector.broadcast %307 : vector<1x32xf32> to vector<128x32xf32>
      %328 = arith.mulf %326, %327 : vector<128x32xf32>
      %329 = vector.broadcast %308 : vector<1x32xf32> to vector<128x32xf32>
      %330 = arith.addf %328, %329 : vector<128x32xf32>
      %c0_217 = arith.constant 0 : index
      %c0_218 = arith.constant 0 : index
      %331 = vector.load %arg22[%c0_217, %c0_218] : memref<128x32xf32, #tpu.memory_space<vmem>>, vector<128x32xf32>
      tpu.vector_store %arg22[%c0_217, %c0_218], %330 {strides = array<i32>} : memref<128x32xf32, #tpu.memory_space<vmem>>, vector<128x32xf32>,
    } else {
    }
    return
  }
  func.func @transform_0(%arg0: i32) -> (i32, i32) {
    %c0_i32 = arith.constant 0 : i32
    %c0_i32_0 = arith.constant 0 : i32
    %c0_i32_1 = arith.constant 0 : i32
    return %c0_i32, %c0_i32_0 : i32, i32
  }
  func.func @transform_1(%arg0: i32) -> (i32, i32) {
    %c0_i32 = arith.constant 0 : i32
    %c0_i32_0 = arith.constant 0 : i32
    %c0_i32_1 = arith.constant 0 : i32
    return %c0_i32, %c0_i32_0 : i32, i32
  }
  func.func @transform_2(%arg0: i32) -> (i32, i32) {
    %c0_i32 = arith.constant 0 : i32
    %c0_i32_0 = arith.constant 0 : i32
    %c0_i32_1 = arith.constant 0 : i32
    return %c0_i32, %c0_i32_0 : i32, i32
  }
  func.func @transform_3(%arg0: i32) -> (i32, i32, i32, i32) {
    %c0_i32 = arith.constant 0 : i32
    %c0_i32_0 = arith.constant 0 : i32
    %c0_i32_1 = arith.constant 0 : i32
    %c0_i32_2 = arith.constant 0 : i32
    return %arg0, %c0_i32, %c0_i32_0, %c0_i32_1 : i32, i32, i32, i32
  }
  func.func @transform_4(%arg0: i32) -> (i32, i32, i32, i32) {
    %c0_i32 = arith.constant 0 : i32
    %c0_i32_0 = arith.constant 0 : i32
    %c0_i32_1 = arith.constant 0 : i32
    %c0_i32_2 = arith.constant 0 : i32
    return %arg0, %c0_i32, %c0_i32_0, %c0_i32_1 : i32, i32, i32, i32
  }
  func.func @transform_5(%arg0: i32) -> (i32, i32, i32, i32) {
    %c0_i32 = arith.constant 0 : i32
    %c0_i32_0 = arith.constant 0 : i32
    %c0_i32_1 = arith.constant 0 : i32
    %c0_i32_2 = arith.constant 0 : i32
    return %arg0, %c0_i32, %c0_i32_0, %c0_i32_1 : i32, i32, i32, i32
  }
  func.func @transform_6(%arg0: i32) -> (i32, i32, i32, i32) {
    %c0_i32 = arith.constant 0 : i32
    %c0_i32_0 = arith.constant 0 : i32
    %c0_i32_1 = arith.constant 0 : i32
    %c0_i32_2 = arith.constant 0 : i32
    return %arg0, %c0_i32, %c0_i32_0, %c0_i32_1 : i32, i32, i32, i32
  }
  func.func @transform_7(%arg0: i32) -> (i32, i32, i32, i32) {
    %c0_i32 = arith.constant 0 : i32
    %c0_i32_0 = arith.constant 0 : i32
    %c0_i32_1 = arith.constant 0 : i32
    %c0_i32_2 = arith.constant 0 : i32
    return %arg0, %c0_i32, %c0_i32_0, %c0_i32_1 : i32, i32, i32, i32
  }
  func.func @transform_8(%arg0: i32) -> (i32, i32, i32, i32) {
    %c0_i32 = arith.constant 0 : i32
    %c0_i32_0 = arith.constant 0 : i32
    %c0_i32_1 = arith.constant 0 : i32
    %c0_i32_2 = arith.constant 0 : i32
    return %arg0, %c0_i32, %c0_i32_0, %c0_i32_1 : i32, i32, i32, i32
  }
  func.func @transform_9(%arg0: i32) -> (i32, i32, i32, i32) {
    %c0_i32 = arith.constant 0 : i32
    %c0_i32_0 = arith.constant 0 : i32
    %c0_i32_1 = arith.constant 0 : i32
    %c0_i32_2 = arith.constant 0 : i32
    return %arg0, %c0_i32, %c0_i32_0, %c0_i32_1 : i32, i32, i32, i32
  }
  func.func @transform_10(%arg0: i32) -> (i32, i32, i32) {
    %c0_i32 = arith.constant 0 : i32
    %c0_i32_0 = arith.constant 0 : i32
    %c0_i32_1 = arith.constant 0 : i32
    return %arg0, %c0_i32, %c0_i32_0 : i32, i32, i32
  }
  func.func @transform_11(%arg0: i32) -> (i32, i32, i32) {
    %c0_i32 = arith.constant 0 : i32
    %c0_i32_0 = arith.constant 0 : i32
    %c0_i32_1 = arith.constant 0 : i32
    return %arg0, %c0_i32, %c0_i32_0 : i32, i32, i32
  }
  func.func @transform_12(%arg0: i32) -> (i32, i32, i32) {
    %c0_i32 = arith.constant 0 : i32
    %c0_i32_0 = arith.constant 0 : i32
    %c0_i32_1 = arith.constant 0 : i32
    return %arg0, %c0_i32, %c0_i32_0 : i32, i32, i32
  }
  func.func @transform_13(%arg0: i32) -> (i32, i32, i32) {
    %c0_i32 = arith.constant 0 : i32
    %c0_i32_0 = arith.constant 0 : i32
    %c0_i32_1 = arith.constant 0 : i32
    return %arg0, %c0_i32, %c0_i32_0 : i32, i32, i32
  }
  func.func @transform_14(%arg0: i32) -> (i32, i32, i32) {
    %c0_i32 = arith.constant 0 : i32
    %c0_i32_0 = arith.constant 0 : i32
    %c0_i32_1 = arith.constant 0 : i32
    return %arg0, %c0_i32, %c0_i32_0 : i32, i32, i32
  }
  func.func @transform_15(%arg0: i32) -> (i32, i32, i32) {
    %c0_i32 = arith.constant 0 : i32
    %c0_i32_0 = arith.constant 0 : i32
    %c0_i32_1 = arith.constant 0 : i32
    return %arg0, %c0_i32, %c0_i32_0 : i32, i32, i32
  }
  func.func @transform_16(%arg0: i32) -> (i32, i32, i32) {
    %c0_i32 = arith.constant 0 : i32
    %c0_i32_0 = arith.constant 0 : i32
    %c0_i32_1 = arith.constant 0 : i32
    return %arg0, %c0_i32, %c0_i32_0 : i32, i32, i32
  }
  func.func @transform_17(%arg0: i32) -> (i32, i32, i32) {
    %c0_i32 = arith.constant 0 : i32
    %c0_i32_0 = arith.constant 0 : i32
    %c0_i32_1 = arith.constant 0 : i32
    return %arg0, %c0_i32, %c0_i32_0 : i32, i32, i32
  }
  func.func @transform_18(%arg0: i32) -> (i32, i32, i32) {
    %c0_i32 = arith.constant 0 : i32
    %c0_i32_0 = arith.constant 0 : i32
    %c0_i32_1 = arith.constant 0 : i32
    return %arg0, %c0_i32, %c0_i32_0 : i32, i32, i32
  }
  func.func @transform_19(%arg0: i32) -> (i32, i32) {
    %c0_i32 = arith.constant 0 : i32
    %c0_i32_0 = arith.constant 0 : i32
    %c0_i32_1 = arith.constant 0 : i32
    return %c0_i32, %c0_i32_0 : i32, i32
  }
  func.func @transform_20(%arg0: i32) -> (i32, i32) {
    %c0_i32 = arith.constant 0 : i32
    %c0_i32_0 = arith.constant 0 : i32
    %c0_i32_1 = arith.constant 0 : i32
    return %c0_i32, %c0_i32_0 : i32, i32
  }
  func.func @transform_21(%arg0: i32) -> (i32, i32) {
    %c0_i32 = arith.constant 0 : i32
    %c0_i32_0 = arith.constant 0 : i32
    %c0_i32_1 = arith.constant 0 : i32
    return %c0_i32, %c0_i32_0 : i32, i32
  }
}

module attributes {stable_mosaic.version = 11 : i64} {
  func.func @_head_kernel(%arg0: memref<2x2048xf32, #tpu.memory_space<vmem>>, %arg1: memref<2048x256xbf16, #tpu.memory_space<vmem>>, %arg2: memref<1x256xf32, #tpu.memory_space<vmem>>, %arg3: memref<256x10xbf16, #tpu.memory_space<vmem>>, %arg4: memref<1x10xf32, #tpu.memory_space<vmem>>, %arg5: memref<2x10xf32, #tpu.memory_space<vmem>>) attributes {dimension_semantics = [], scalar_prefetch = 0 : i64, scratch_operands = 0 : i64, tpu.core_type = #tpu.core_type<tc>} {
    %c0 = arith.constant 0 : index
    %c0_0 = arith.constant 0 : index
    %0 = vector.load %arg0[%c0, %c0_0] : memref<2x2048xf32, #tpu.memory_space<vmem>>, vector<2x2048xf32>
    %1 = arith.truncf %0 : vector<2x2048xf32> to vector<2x2048xbf16>
    %c0_1 = arith.constant 0 : index
    %c0_2 = arith.constant 0 : index
    %2 = vector.load %arg1[%c0_1, %c0_2] : memref<2048x256xbf16, #tpu.memory_space<vmem>>, vector<2048x256xbf16>
    %cst = arith.constant dense<0.000000e+00> : vector<2x256xf32>
    %3 = tpu.matmul %1, %2, %cst {dimension_numbers = #tpu.dot_dimension_numbers<[1], [0], [0], [1], [0, 0, 1, 1], [], []>} : vector<2x2048xbf16>, vector<2048x256xbf16>, vector<2x256xf32> -> vector<2x256xf32>
    %c0_3 = arith.constant 0 : index
    %c0_4 = arith.constant 0 : index
    %4 = vector.load %arg2[%c0_3, %c0_4] : memref<1x256xf32, #tpu.memory_space<vmem>>, vector<1x256xf32>
    %5 = vector.broadcast %4 : vector<1x256xf32> to vector<2x256xf32>
    %6 = arith.addf %3, %5 : vector<2x256xf32>
    %cst_5 = arith.constant 5.000000e-01 : f32
    %7 = vector.broadcast %cst_5 : f32 to vector<2x256xf32>
    %8 = arith.mulf %7, %6 : vector<2x256xf32>
    %cst_6 = arith.constant 0.707106769 : f32
    %9 = vector.broadcast %cst_6 : f32 to vector<2x256xf32>
    %10 = arith.mulf %6, %9 : vector<2x256xf32>
    %cst_7 = arith.constant 0.000000e+00 : f32
    %11 = vector.broadcast %cst_7 : f32 to vector<2x256xf32>
    %12 = arith.cmpf olt, %10, %11 : vector<2x256xf32>
    %cst_8 = arith.constant -1.000000e+00 : f32
    %cst_9 = arith.constant 1.000000e+00 : f32
    %13 = vector.broadcast %cst_8 : f32 to vector<2x256xf32>
    %14 = vector.broadcast %cst_9 : f32 to vector<2x256xf32>
    %15 = arith.select %12, %13, %14 : vector<2x256xi1>, vector<2x256xf32>
    %16 = math.absf %10 : vector<2x256xf32>
    %cst_10 = arith.constant 0.327591091 : f32
    %17 = vector.broadcast %cst_10 : f32 to vector<2x256xf32>
    %18 = arith.mulf %17, %16 : vector<2x256xf32>
    %cst_11 = arith.constant 1.000000e+00 : f32
    %19 = vector.broadcast %cst_11 : f32 to vector<2x256xf32>
    %20 = arith.addf %19, %18 : vector<2x256xf32>
    %cst_12 = arith.constant 1.000000e+00 : f32
    %21 = vector.broadcast %cst_12 : f32 to vector<2x256xf32>
    %22 = arith.divf %21, %20 : vector<2x256xf32>
    %cst_13 = arith.constant 1.06140542 : f32
    %23 = vector.broadcast %cst_13 : f32 to vector<2x256xf32>
    %24 = arith.mulf %23, %22 : vector<2x256xf32>
    %cst_14 = arith.constant -1.45315206 : f32
    %25 = vector.broadcast %cst_14 : f32 to vector<2x256xf32>
    %26 = arith.addf %24, %25 : vector<2x256xf32>
    %27 = arith.mulf %26, %22 : vector<2x256xf32>
    %cst_15 = arith.constant 1.42141378 : f32
    %28 = vector.broadcast %cst_15 : f32 to vector<2x256xf32>
    %29 = arith.addf %27, %28 : vector<2x256xf32>
    %30 = arith.mulf %29, %22 : vector<2x256xf32>
    %cst_16 = arith.constant -0.284496725 : f32
    %31 = vector.broadcast %cst_16 : f32 to vector<2x256xf32>
    %32 = arith.addf %30, %31 : vector<2x256xf32>
    %33 = arith.mulf %32, %22 : vector<2x256xf32>
    %cst_17 = arith.constant 0.254829586 : f32
    %34 = vector.broadcast %cst_17 : f32 to vector<2x256xf32>
    %35 = arith.addf %33, %34 : vector<2x256xf32>
    %36 = arith.mulf %35, %22 : vector<2x256xf32>
    %cst_18 = arith.constant 0.000000e+00 : f32
    %37 = vector.broadcast %cst_18 : f32 to vector<2x256xf32>
    %38 = arith.subf %37, %16 : vector<2x256xf32>
    %39 = arith.mulf %38, %16 : vector<2x256xf32>
    %40 = math.exp %39 : vector<2x256xf32>
    %41 = arith.mulf %36, %40 : vector<2x256xf32>
    %cst_19 = arith.constant 1.000000e+00 : f32
    %42 = vector.broadcast %cst_19 : f32 to vector<2x256xf32>
    %43 = arith.subf %42, %41 : vector<2x256xf32>
    %44 = arith.mulf %15, %43 : vector<2x256xf32>
    %cst_20 = arith.constant 1.000000e+00 : f32
    %45 = vector.broadcast %cst_20 : f32 to vector<2x256xf32>
    %46 = arith.addf %45, %44 : vector<2x256xf32>
    %47 = arith.mulf %8, %46 : vector<2x256xf32>
    %48 = arith.truncf %47 : vector<2x256xf32> to vector<2x256xbf16>
    %c0_21 = arith.constant 0 : index
    %c0_22 = arith.constant 0 : index
    %49 = vector.load %arg3[%c0_21, %c0_22] : memref<256x10xbf16, #tpu.memory_space<vmem>>, vector<256x10xbf16>
    %cst_23 = arith.constant dense<0.000000e+00> : vector<2x10xf32>
    %50 = tpu.matmul %48, %49, %cst_23 {dimension_numbers = #tpu.dot_dimension_numbers<[1], [0], [0], [1], [0, 0, 1, 1], [], []>} : vector<2x256xbf16>, vector<256x10xbf16>, vector<2x10xf32> -> vector<2x10xf32>
    %c0_24 = arith.constant 0 : index
    %c0_25 = arith.constant 0 : index
    %51 = vector.load %arg4[%c0_24, %c0_25] : memref<1x10xf32, #tpu.memory_space<vmem>>, vector<1x10xf32>
    %52 = vector.broadcast %51 : vector<1x10xf32> to vector<2x10xf32>
    %53 = arith.addf %50, %52 : vector<2x10xf32>
    %cst_26 = arith.constant dense<0xFF800000> : vector<2xf32>
    %54 = vector.multi_reduction <maximumf>, %53, %cst_26 [1] : vector<2x10xf32> to vector<2xf32>
    %55 = vector.shape_cast %54 : vector<2xf32> to vector<2x1xf32>
    %56 = vector.broadcast %55 : vector<2x1xf32> to vector<2x10xf32>
    %57 = arith.subf %53, %56 : vector<2x10xf32>
    %58 = math.exp %57 : vector<2x10xf32>
    %cst_27 = arith.constant dense<0.000000e+00> : vector<2xf32>
    %59 = vector.multi_reduction <add>, %58, %cst_27 [1] : vector<2x10xf32> to vector<2xf32>
    %60 = vector.shape_cast %59 : vector<2xf32> to vector<2x1xf32>
    %61 = vector.broadcast %60 : vector<2x1xf32> to vector<2x10xf32>
    %62 = arith.divf %58, %61 : vector<2x10xf32>
    %c0_28 = arith.constant 0 : index
    %c0_29 = arith.constant 0 : index
    %63 = vector.load %arg5[%c0_28, %c0_29] : memref<2x10xf32, #tpu.memory_space<vmem>>, vector<2x10xf32>
    tpu.vector_store %arg5[%c0_28, %c0_29], %62 {strides = array<i32>} : memref<2x10xf32, #tpu.memory_space<vmem>>, vector<2x10xf32>,
    return
  }
}

</mosaic_0001>

<llo_original>
// kernel: attention_net_forward.3
$region0: #{attention_net_forward.3}
  #allocation0 [shape = 'u32[]', space=smem, size = 0x4, offset = 0x4, fixed_abs, tag = 'smem constant byte address 0x4 - core index']
  #allocation1 [shape = 'u32[144,128]{1,0:T(1,128)}', space=vmem, size = 0x12000, scoped, tag = 'internal scratch']
  %s0 = inlined_call_operand.vmem [shape: f32[2,2048], index: 0, kind: input, shape index: {}]
  %s1 = inlined_call_operand.vmem [shape: bf16[2048,256], index: 1, kind: input, shape index: {}]
  %s2 = inlined_call_operand.vmem [shape: f32[1,256], index: 2, kind: input, shape index: {}]
  %s3 = inlined_call_operand.vmem [shape: bf16[256,10], index: 3, kind: input, shape index: {}]
  %s4 = inlined_call_operand.vmem [shape: f32[1,10], index: 4, kind: input, shape index: {}]
  %s5 = inlined_call_operand.hbm [shape: f32[2,10], index: 5, kind: output, shape index: {}]
  %s6 = sld [smem:[#allocation0]]
  $region30: #{attention_net_forward.3} parent=0
    _
  %s8 = ssub.s32 1, %s6
  %s9 = scalar_select 0, %s8, %s6
  $region1: #{attention_net_forward.3} parent=0
    #allocation2 [shape = 'u8[1024]{0}', space=vmem, size = 0x400, scoped, tag = 'output window, operand 0, single buffered']
    #allocation3 [shape = 's32[1]{0}', space=sflag, size = 0x4, scoped, tag = 'scoped memory for attention_net_forward.3']
    %10 = vsyncpa [#allocation3], 0
    // Predicated region
    $region2: #{attention_net_forward.3} parent=1 // pred_check
      _
    $region3: #{attention_net_forward.3} parent=1 // pred_check_branch
      %12 = sbr.rel (0) target = $region5
    $region4: #{attention_net_forward.3} parent=1 // pred_region
      _
    $region5: #{attention_net_forward.3} parent=1 // pred_fallthru
      _
    // Predicated region
    $region6: #{attention_net_forward.3} parent=1 // pred_check
      _
    $region7: #{attention_net_forward.3} parent=1 // pred_check_branch
      %14 = sbr.rel (0) target = $region9
    $region8: #{attention_net_forward.3} parent=1 // pred_region
      _
    $region9: #{attention_net_forward.3} parent=1 // pred_fallthru
      _
    // Predicated region
    $region10: #{attention_net_forward.3} parent=1 // pred_check
      _
    $region11: #{attention_net_forward.3} parent=1 // pred_check_branch
      %16 = sbr.rel (0) target = $region13
    $region12: #{attention_net_forward.3} parent=1 // pred_region
      _
    $region13: #{attention_net_forward.3} parent=1 // pred_fallthru
      _
    // Predicated region
    $region14: #{attention_net_forward.3} parent=1 // pred_check
      _
    $region15: #{attention_net_forward.3} parent=1 // pred_check_branch
      %18 = sbr.rel (0) target = $region17
    $region16: #{attention_net_forward.3} parent=1 // pred_region
      _
    $region17: #{attention_net_forward.3} parent=1 // pred_fallthru
      _
    // Predicated region
    $region18: #{attention_net_forward.3} parent=1 // pred_check
      _
    $region19: #{attention_net_forward.3} parent=1 // pred_check_branch
      %20 = sbr.rel (0) target = $region21
    $region20: #{attention_net_forward.3} parent=1 // pred_region
      _
    $region21: #{attention_net_forward.3} parent=1 // pred_fallthru
      _
    %v22 = vld [vmem:[%s0] sm:$0xff]
    %v23 = vld [vmem:[%s0 + $0x8] sm:$0xff]
    %v24 = vld [vmem:[%s0 + $0x10] sm:$0xff]
    %v25 = vld [vmem:[%s0 + $0x18] sm:$0xff]
    %v30 = vcombine.high %v22, %v22
    %v32 = vunpack.c.l.s4 1983009808
    %v33 = vunpack.c.0.s8 %v32
    %v34 = vlaneseq
    %v35 = vshrl.u32 %v34, 7
    %v36 = vsub.s32 %v33, %v35
    %v37 = vrot.slane %v22, %v36
    %v39 = vunpack.c.l.s4 1983009808
    %v40 = vunpack.c.0.s8 %v39
    %v41 = vlaneseq
    %v42 = vshrl.u32 %v41, 7
    %v43 = vsub.s32 %v40, %v42
    %v44 = vrot.slane %v30, %v43
    %v45 = vcombine.high %v37, %v37
    %v46 = vcombine.high %v44, %v44
    %v47 = vcombine.high %v23, %v23
    %v49 = vunpack.c.l.s4 1983009808
    %v50 = vunpack.c.0.s8 %v49
    %v51 = vlaneseq
    %v52 = vshrl.u32 %v51, 7
    %v53 = vsub.s32 %v50, %v52
    %v54 = vrot.slane %v23, %v53
    %v56 = vunpack.c.l.s4 1983009808
    %v57 = vunpack.c.0.s8 %v56
    %v58 = vlaneseq
    %v59 = vshrl.u32 %v58, 7
    %v60 = vsub.s32 %v57, %v59
    %v61 = vrot.slane %v47, %v60
    %v62 = vcombine.high %v54, %v54
    %v63 = vcombine.high %v61, %v61
    %v64 = vcombine.high %v24, %v24
    %v66 = vunpack.c.l.s4 1983009808
    %v67 = vunpack.c.0.s8 %v66
    %v68 = vlaneseq
    %v69 = vshrl.u32 %v68, 7
    %v70 = vsub.s32 %v67, %v69
    %v71 = vrot.slane %v24, %v70
    %v73 = vunpack.c.l.s4 1983009808
    %v74 = vunpack.c.0.s8 %v73
    %v75 = vlaneseq
    %v76 = vshrl.u32 %v75, 7
    %v77 = vsub.s32 %v74, %v76
    %v78 = vrot.slane %v64, %v77
    %v79 = vcombine.high %v71, %v71
    %v80 = vcombine.high %v78, %v78
    %v81 = vcombine.high %v25, %v25
    %v83 = vunpack.c.l.s4 1983009808
    %v84 = vunpack.c.0.s8 %v83
    %v85 = vlaneseq
    %v86 = vshrl.u32 %v85, 7
    %v87 = vsub.s32 %v84, %v86
    %v88 = vrot.slane %v25, %v87
    %v90 = vunpack.c.l.s4 1983009808
    %v91 = vunpack.c.0.s8 %v90
    %v92 = vlaneseq
    %v93 = vshrl.u32 %v92, 7
    %v94 = vsub.s32 %v91, %v93
    %v95 = vrot.slane %v81, %v94
    %v96 = vcombine.high %v88, %v88
    %v97 = vcombine.high %v95, %v95
    %v114 = vpack.c.bf16 %v37, %v37
    %v115 = vpack.c.bf16 %v45, %v45
    %v116 = vpack.c.bf16 %v44, %v44
    %v117 = vpack.c.bf16 %v46, %v46
    %v118 = vpack.c.bf16 %v54, %v54
    %v119 = vpack.c.bf16 %v62, %v62
    %v120 = vpack.c.bf16 %v61, %v61
    %v121 = vpack.c.bf16 %v63, %v63
    %v122 = vpack.c.bf16 %v71, %v71
    %v123 = vpack.c.bf16 %v79, %v79
    %v124 = vpack.c.bf16 %v78, %v78
    %v125 = vpack.c.bf16 %v80, %v80
    %v126 = vpack.c.bf16 %v88, %v88
    %v127 = vpack.c.bf16 %v96, %v96
    %v128 = vpack.c.bf16 %v95, %v95
    %v129 = vpack.c.bf16 %v97, %v97
    %v130 = vld [vmem:[%s1] sm:$0xff]
    %v131 = vld [vmem:[%s1 + $0x8] sm:$0xff]
    %v132 = vld [vmem:[%s1 + $0x10] sm:$0xff]
    %v133 = vld [vmem:[%s1 + $0x18] sm:$0xff]
    %v134 = vld [vmem:[%s1 + $0x20] sm:$0xff]
    %v135 = vld [vmem:[%s1 + $0x28] sm:$0xff]
    %v136 = vld [vmem:[%s1 + $0x30] sm:$0xff]
    %v137 = vld [vmem:[%s1 + $0x38] sm:$0xff]
    %v138 = vld [vmem:[%s1 + $0x40] sm:$0xff]
    %v139 = vld [vmem:[%s1 + $0x48] sm:$0xff]
    %v140 = vld [vmem:[%s1 + $0x50] sm:$0xff]
    %v141 = vld [vmem:[%s1 + $0x58] sm:$0xff]
    %v142 = vld [vmem:[%s1 + $0x60] sm:$0xff]
    %v143 = vld [vmem:[%s1 + $0x68] sm:$0xff]
    %v144 = vld [vmem:[%s1 + $0x70] sm:$0xff]
    %v145 = vld [vmem:[%s1 + $0x78] sm:$0xff]
    %v146 = vld [vmem:[%s1 + $0x80] sm:$0xff]
    %v147 = vld [vmem:[%s1 + $0x88] sm:$0xff]
    %v148 = vld [vmem:[%s1 + $0x90] sm:$0xff]
    %v149 = vld [vmem:[%s1 + $0x98] sm:$0xff]
    %v150 = vld [vmem:[%s1 + $0xa0] sm:$0xff]
    %v151 = vld [vmem:[%s1 + $0xa8] sm:$0xff]
    %v152 = vld [vmem:[%s1 + $0xb0] sm:$0xff]
    %v153 = vld [vmem:[%s1 + $0xb8] sm:$0xff]
    %v154 = vld [vmem:[%s1 + $0xc0] sm:$0xff]
    %v155 = vld [vmem:[%s1 + $0xc8] sm:$0xff]
    %v156 = vld [vmem:[%s1 + $0xd0] sm:$0xff]
    %v157 = vld [vmem:[%s1 + $0xd8] sm:$0xff]
    %v158 = vld [vmem:[%s1 + $0xe0] sm:$0xff]
    %v159 = vld [vmem:[%s1 + $0xe8] sm:$0xff]
    %v160 = vld [vmem:[%s1 + $0xf0] sm:$0xff]
    %v161 = vld [vmem:[%s1 + $0xf8] sm:$0xff]
    %v162 = vld [vmem:[%s1 + $0x100] sm:$0xff]
    %v163 = vld [vmem:[%s1 + $0x108] sm:$0xff]
    %v164 = vld [vmem:[%s1 + $0x110] sm:$0xff]
    %v165 = vld [vmem:[%s1 + $0x118] sm:$0xff]
    %v166 = vld [vmem:[%s1 + $0x120] sm:$0xff]
    %v167 = vld [vmem:[%s1 + $0x128] sm:$0xff]
    %v168 = vld [vmem:[%s1 + $0x130] sm:$0xff]
    %v169 = vld [vmem:[%s1 + $0x138] sm:$0xff]
    %v170 = vld [vmem:[%s1 + $0x140] sm:$0xff]
    %v171 = vld [vmem:[%s1 + $0x148] sm:$0xff]
    %v172 = vld [vmem:[%s1 + $0x150] sm:$0xff]
    %v173 = vld [vmem:[%s1 + $0x158] sm:$0xff]
    %v174 = vld [vmem:[%s1 + $0x160] sm:$0xff]
    %v175 = vld [vmem:[%s1 + $0x168] sm:$0xff]
    %v176 = vld [vmem:[%s1 + $0x170] sm:$0xff]
    %v177 = vld [vmem:[%s1 + $0x178] sm:$0xff]
    %v178 = vld [vmem:[%s1 + $0x180] sm:$0xff]
    %v179 = vld [vmem:[%s1 + $0x188] sm:$0xff]
    %v180 = vld [vmem:[%s1 + $0x190] sm:$0xff]
    %v181 = vld [vmem:[%s1 + $0x198] sm:$0xff]
    %v182 = vld [vmem:[%s1 + $0x1a0] sm:$0xff]
    %v183 = vld [vmem:[%s1 + $0x1a8] sm:$0xff]
    %v184 = vld [vmem:[%s1 + $0x1b0] sm:$0xff]
    %v185 = vld [vmem:[%s1 + $0x1b8] sm:$0xff]
    %v186 = vld [vmem:[%s1 + $0x1c0] sm:$0xff]
    %v187 = vld [vmem:[%s1 + $0x1c8] sm:$0xff]
    %v188 = vld [vmem:[%s1 + $0x1d0] sm:$0xff]
    %v189 = vld [vmem:[%s1 + $0x1d8] sm:$0xff]
    %v190 = vld [vmem:[%s1 + $0x1e0] sm:$0xff]
    %v191 = vld [vmem:[%s1 + $0x1e8] sm:$0xff]
    %v192 = vld [vmem:[%s1 + $0x1f0] sm:$0xff]
    %v193 = vld [vmem:[%s1 + $0x1f8] sm:$0xff]
    %v194 = vld [vmem:[%s1 + $0x200] sm:$0xff]
    %v195 = vld [vmem:[%s1 + $0x208] sm:$0xff]
    %v196 = vld [vmem:[%s1 + $0x210] sm:$0xff]
    %v197 = vld [vmem:[%s1 + $0x218] sm:$0xff]
    %v198 = vld [vmem:[%s1 + $0x220] sm:$0xff]
    %v199 = vld [vmem:[%s1 + $0x228] sm:$0xff]
    %v200 = vld [vmem:[%s1 + $0x230] sm:$0xff]
    %v201 = vld [vmem:[%s1 + $0x238] sm:$0xff]
    %v202 = vld [vmem:[%s1 + $0x240] sm:$0xff]
    %v203 = vld [vmem:[%s1 + $0x248] sm:$0xff]
    %v204 = vld [vmem:[%s1 + $0x250] sm:$0xff]
    %v205 = vld [vmem:[%s1 + $0x258] sm:$0xff]
    %v206 = vld [vmem:[%s1 + $0x260] sm:$0xff]
    %v207 = vld [vmem:[%s1 + $0x268] sm:$0xff]
    %v208 = vld [vmem:[%s1 + $0x270] sm:$0xff]
    %v209 = vld [vmem:[%s1 + $0x278] sm:$0xff]
    %v210 = vld [vmem:[%s1 + $0x280] sm:$0xff]
    %v211 = vld [vmem:[%s1 + $0x288] sm:$0xff]
    %v212 = vld [vmem:[%s1 + $0x290] sm:$0xff]
    %v213 = vld [vmem:[%s1 + $0x298] sm:$0xff]
    %v214 = vld [vmem:[%s1 + $0x2a0] sm:$0xff]
    %v215 = vld [vmem:[%s1 + $0x2a8] sm:$0xff]
    %v216 = vld [vmem:[%s1 + $0x2b0] sm:$0xff]
    %v217 = vld [vmem:[%s1 + $0x2b8] sm:$0xff]
    %v218 = vld [vmem:[%s1 + $0x2c0] sm:$0xff]
    %v219 = vld [vmem:[%s1 + $0x2c8] sm:$0xff]
    %v220 = vld [vmem:[%s1 + $0x2d0] sm:$0xff]
    %v221 = vld [vmem:[%s1 + $0x2d8] sm:$0xff]
    %v222 = vld [vmem:[%s1 + $0x2e0] sm:$0xff]
    %v223 = vld [vmem:[%s1 + $0x2e8] sm:$0xff]
    %v224 = vld [vmem:[%s1 + $0x2f0] sm:$0xff]
    %v225 = vld [vmem:[%s1 + $0x2f8] sm:$0xff]
    %v226 = vld [vmem:[%s1 + $0x300] sm:$0xff]
    %v227 = vld [vmem:[%s1 + $0x308] sm:$0xff]
    %v228 = vld [vmem:[%s1 + $0x310] sm:$0xff]
    %v229 = vld [vmem:[%s1 + $0x318] sm:$0xff]
    %v230 = vld [vmem:[%s1 + $0x320] sm:$0xff]
    %v231 = vld [vmem:[%s1 + $0x328] sm:$0xff]
    %v232 = vld [vmem:[%s1 + $0x330] sm:$0xff]
    %v233 = vld [vmem:[%s1 + $0x338] sm:$0xff]
    %v234 = vld [vmem:[%s1 + $0x340] sm:$0xff]
    %v235 = vld [vmem:[%s1 + $0x348] sm:$0xff]
    %v236 = vld [vmem:[%s1 + $0x350] sm:$0xff]
    %v237 = vld [vmem:[%s1 + $0x358] sm:$0xff]
    %v238 = vld [vmem:[%s1 + $0x360] sm:$0xff]
    %v239 = vld [vmem:[%s1 + $0x368] sm:$0xff]
    %v240 = vld [vmem:[%s1 + $0x370] sm:$0xff]
    %v241 = vld [vmem:[%s1 + $0x378] sm:$0xff]
    %v242 = vld [vmem:[%s1 + $0x380] sm:$0xff]
    %v243 = vld [vmem:[%s1 + $0x388] sm:$0xff]
    %v244 = vld [vmem:[%s1 + $0x390] sm:$0xff]
    %v245 = vld [vmem:[%s1 + $0x398] sm:$0xff]
    %v246 = vld [vmem:[%s1 + $0x3a0] sm:$0xff]
    %v247 = vld [vmem:[%s1 + $0x3a8] sm:$0xff]
    %v248 = vld [vmem:[%s1 + $0x3b0] sm:$0xff]
    %v249 = vld [vmem:[%s1 + $0x3b8] sm:$0xff]
    %v250 = vld [vmem:[%s1 + $0x3c0] sm:$0xff]
    %v251 = vld [vmem:[%s1 + $0x3c8] sm:$0xff]
    %v252 = vld [vmem:[%s1 + $0x3d0] sm:$0xff]
    %v253 = vld [vmem:[%s1 + $0x3d8] sm:$0xff]
    %v254 = vld [vmem:[%s1 + $0x3e0] sm:$0xff]
    %v255 = vld [vmem:[%s1 + $0x3e8] sm:$0xff]
    %v256 = vld [vmem:[%s1 + $0x3f0] sm:$0xff]
    %v257 = vld [vmem:[%s1 + $0x3f8] sm:$0xff]
    %v258 = vld [vmem:[%s1 + $0x400] sm:$0xff]
    %v259 = vld [vmem:[%s1 + $0x408] sm:$0xff]
    %v260 = vld [vmem:[%s1 + $0x410] sm:$0xff]
    %v261 = vld [vmem:[%s1 + $0x418] sm:$0xff]
    %v262 = vld [vmem:[%s1 + $0x420] sm:$0xff]
    %v263 = vld [vmem:[%s1 + $0x428] sm:$0xff]
    %v264 = vld [vmem:[%s1 + $0x430] sm:$0xff]
    %v265 = vld [vmem:[%s1 + $0x438] sm:$0xff]
    %v266 = vld [vmem:[%s1 + $0x440] sm:$0xff]
    %v267 = vld [vmem:[%s1 + $0x448] sm:$0xff]
    %v268 = vld [vmem:[%s1 + $0x450] sm:$0xff]
    %v269 = vld [vmem:[%s1 + $0x458] sm:$0xff]
    %v270 = vld [vmem:[%s1 + $0x460] sm:$0xff]
    %v271 = vld [vmem:[%s1 + $0x468] sm:$0xff]
    %v272 = vld [vmem:[%s1 + $0x470] sm:$0xff]
    %v273 = vld [vmem:[%s1 + $0x478] sm:$0xff]
    %v274 = vld [vmem:[%s1 + $0x480] sm:$0xff]
    %v275 = vld [vmem:[%s1 + $0x488] sm:$0xff]
    %v276 = vld [vmem:[%s1 + $0x490] sm:$0xff]
    %v277 = vld [vmem:[%s1 + $0x498] sm:$0xff]
    %v278 = vld [vmem:[%s1 + $0x4a0] sm:$0xff]
    %v279 = vld [vmem:[%s1 + $0x4a8] sm:$0xff]
    %v280 = vld [vmem:[%s1 + $0x4b0] sm:$0xff]
    %v281 = vld [vmem:[%s1 + $0x4b8] sm:$0xff]
    %v282 = vld [vmem:[%s1 + $0x4c0] sm:$0xff]
    %v283 = vld [vmem:[%s1 + $0x4c8] sm:$0xff]
    %v284 = vld [vmem:[%s1 + $0x4d0] sm:$0xff]
    %v285 = vld [vmem:[%s1 + $0x4d8] sm:$0xff]
    %v286 = vld [vmem:[%s1 + $0x4e0] sm:$0xff]
    %v287 = vld [vmem:[%s1 + $0x4e8] sm:$0xff]
    %v288 = vld [vmem:[%s1 + $0x4f0] sm:$0xff]
    %v289 = vld [vmem:[%s1 + $0x4f8] sm:$0xff]
    %v290 = vld [vmem:[%s1 + $0x500] sm:$0xff]
    %v291 = vld [vmem:[%s1 + $0x508] sm:$0xff]
    %v292 = vld [vmem:[%s1 + $0x510] sm:$0xff]
    %v293 = vld [vmem:[%s1 + $0x518] sm:$0xff]
    %v294 = vld [vmem:[%s1 + $0x520] sm:$0xff]
    %v295 = vld [vmem:[%s1 + $0x528] sm:$0xff]
    %v296 = vld [vmem:[%s1 + $0x530] sm:$0xff]
    %v297 = vld [vmem:[%s1 + $0x538] sm:$0xff]
    %v298 = vld [vmem:[%s1 + $0x540] sm:$0xff]
    %v299 = vld [vmem:[%s1 + $0x548] sm:$0xff]
    %v300 = vld [vmem:[%s1 + $0x550] sm:$0xff]
    %v301 = vld [vmem:[%s1 + $0x558] sm:$0xff]
    %v302 = vld [vmem:[%s1 + $0x560] sm:$0xff]
    %v303 = vld [vmem:[%s1 + $0x568] sm:$0xff]
    %v304 = vld [vmem:[%s1 + $0x570] sm:$0xff]
    %v305 = vld [vmem:[%s1 + $0x578] sm:$0xff]
    %v306 = vld [vmem:[%s1 + $0x580] sm:$0xff]
    %v307 = vld [vmem:[%s1 + $0x588] sm:$0xff]
    %v308 = vld [vmem:[%s1 + $0x590] sm:$0xff]
    %v309 = vld [vmem:[%s1 + $0x598] sm:$0xff]
    %v310 = vld [vmem:[%s1 + $0x5a0] sm:$0xff]
    %v311 = vld [vmem:[%s1 + $0x5a8] sm:$0xff]
    %v312 = vld [vmem:[%s1 + $0x5b0] sm:$0xff]
    %v313 = vld [vmem:[%s1 + $0x5b8] sm:$0xff]
    %v314 = vld [vmem:[%s1 + $0x5c0] sm:$0xff]
    %v315 = vld [vmem:[%s1 + $0x5c8] sm:$0xff]
    %v316 = vld [vmem:[%s1 + $0x5d0] sm:$0xff]
    %v317 = vld [vmem:[%s1 + $0x5d8] sm:$0xff]
    %v318 = vld [vmem:[%s1 + $0x5e0] sm:$0xff]
    %v319 = vld [vmem:[%s1 + $0x5e8] sm:$0xff]
    %v320 = vld [vmem:[%s1 + $0x5f0] sm:$0xff]
    %v321 = vld [vmem:[%s1 + $0x5f8] sm:$0xff]
    %v322 = vld [vmem:[%s1 + $0x600] sm:$0xff]
    %v323 = vld [vmem:[%s1 + $0x608] sm:$0xff]
    %v324 = vld [vmem:[%s1 + $0x610] sm:$0xff]
    %v325 = vld [vmem:[%s1 + $0x618] sm:$0xff]
    %v326 = vld [vmem:[%s1 + $0x620] sm:$0xff]
    %v327 = vld [vmem:[%s1 + $0x628] sm:$0xff]
    %v328 = vld [vmem:[%s1 + $0x630] sm:$0xff]
    %v329 = vld [vmem:[%s1 + $0x638] sm:$0xff]
    %v330 = vld [vmem:[%s1 + $0x640] sm:$0xff]
    %v331 = vld [vmem:[%s1 + $0x648] sm:$0xff]
    %v332 = vld [vmem:[%s1 + $0x650] sm:$0xff]
    %v333 = vld [vmem:[%s1 + $0x658] sm:$0xff]
    %v334 = vld [vmem:[%s1 + $0x660] sm:$0xff]
    %v335 = vld [vmem:[%s1 + $0x668] sm:$0xff]
    %v336 = vld [vmem:[%s1 + $0x670] sm:$0xff]
    %v337 = vld [vmem:[%s1 + $0x678] sm:$0xff]
    %v338 = vld [vmem:[%s1 + $0x680] sm:$0xff]
    %v339 = vld [vmem:[%s1 + $0x688] sm:$0xff]
    %v340 = vld [vmem:[%s1 + $0x690] sm:$0xff]
    %v341 = vld [vmem:[%s1 + $0x698] sm:$0xff]
    %v342 = vld [vmem:[%s1 + $0x6a0] sm:$0xff]
    %v343 = vld [vmem:[%s1 + $0x6a8] sm:$0xff]
    %v344 = vld [vmem:[%s1 + $0x6b0] sm:$0xff]
    %v345 = vld [vmem:[%s1 + $0x6b8] sm:$0xff]
    %v346 = vld [vmem:[%s1 + $0x6c0] sm:$0xff]
    %v347 = vld [vmem:[%s1 + $0x6c8] sm:$0xff]
    %v348 = vld [vmem:[%s1 + $0x6d0] sm:$0xff]
    %v349 = vld [vmem:[%s1 + $0x6d8] sm:$0xff]
    %v350 = vld [vmem:[%s1 + $0x6e0] sm:$0xff]
    %v351 = vld [vmem:[%s1 + $0x6e8] sm:$0xff]
    %v352 = vld [vmem:[%s1 + $0x6f0] sm:$0xff]
    %v353 = vld [vmem:[%s1 + $0x6f8] sm:$0xff]
    %v354 = vld [vmem:[%s1 + $0x700] sm:$0xff]
    %v355 = vld [vmem:[%s1 + $0x708] sm:$0xff]
    %v356 = vld [vmem:[%s1 + $0x710] sm:$0xff]
    %v357 = vld [vmem:[%s1 + $0x718] sm:$0xff]
    %v358 = vld [vmem:[%s1 + $0x720] sm:$0xff]
    %v359 = vld [vmem:[%s1 + $0x728] sm:$0xff]
    %v360 = vld [vmem:[%s1 + $0x730] sm:$0xff]
    %v361 = vld [vmem:[%s1 + $0x738] sm:$0xff]
    %v362 = vld [vmem:[%s1 + $0x740] sm:$0xff]
    %v363 = vld [vmem:[%s1 + $0x748] sm:$0xff]
    %v364 = vld [vmem:[%s1 + $0x750] sm:$0xff]
    %v365 = vld [vmem:[%s1 + $0x758] sm:$0xff]
    %v366 = vld [vmem:[%s1 + $0x760] sm:$0xff]
    %v367 = vld [vmem:[%s1 + $0x768] sm:$0xff]
    %v368 = vld [vmem:[%s1 + $0x770] sm:$0xff]
    %v369 = vld [vmem:[%s1 + $0x778] sm:$0xff]
    %v370 = vld [vmem:[%s1 + $0x780] sm:$0xff]
    %v371 = vld [vmem:[%s1 + $0x788] sm:$0xff]
    %v372 = vld [vmem:[%s1 + $0x790] sm:$0xff]
    %v373 = vld [vmem:[%s1 + $0x798] sm:$0xff]
    %v374 = vld [vmem:[%s1 + $0x7a0] sm:$0xff]
    %v375 = vld [vmem:[%s1 + $0x7a8] sm:$0xff]
    %v376 = vld [vmem:[%s1 + $0x7b0] sm:$0xff]
    %v377 = vld [vmem:[%s1 + $0x7b8] sm:$0xff]
    %v378 = vld [vmem:[%s1 + $0x7c0] sm:$0xff]
    %v379 = vld [vmem:[%s1 + $0x7c8] sm:$0xff]
    %v380 = vld [vmem:[%s1 + $0x7d0] sm:$0xff]
    %v381 = vld [vmem:[%s1 + $0x7d8] sm:$0xff]
    %v382 = vld [vmem:[%s1 + $0x7e0] sm:$0xff]
    %v383 = vld [vmem:[%s1 + $0x7e8] sm:$0xff]
    %v384 = vld [vmem:[%s1 + $0x7f0] sm:$0xff]
    %v385 = vld [vmem:[%s1 + $0x7f8] sm:$0xff]
    %v386 = vld [vmem:[%s2] sm:$0x3]
    %v388 = vlaneseq
    %v389 = vshrl.u32 %v388, 7
    %v390 = vsub.s32 0, %v389
    %v391 = vrot.slane %v386, %v390
    %v392 = vlaneseq
    %v393 = vshrl.u32 %v392, 7
    %v394 = vsub.s32 1, %v393
    %v395 = vrot.slane %v386, %v394
    %v654 = vunpack.c.l.b16 %v130
    %v655 = vunpack.c.h.b16 %v130
    %v656 = vunpack.c.l.b16 %v131
    %v657 = vunpack.c.h.b16 %v131
    %v658 = vunpack.c.l.b16 %v132
    %v659 = vunpack.c.h.b16 %v132
    %v660 = vunpack.c.l.b16 %v133
    %v661 = vunpack.c.h.b16 %v133
    %v662 = vunpack.c.l.b16 %v134
    %v663 = vunpack.c.h.b16 %v134
    %v664 = vunpack.c.l.b16 %v135
    %v665 = vunpack.c.h.b16 %v135
    %v666 = vunpack.c.l.b16 %v136
    %v667 = vunpack.c.h.b16 %v136
    %v668 = vunpack.c.l.b16 %v137
    %v669 = vunpack.c.h.b16 %v137
    %v670 = vunpack.c.l.b16 %v138
    %v671 = vunpack.c.h.b16 %v138
    %v672 = vunpack.c.l.b16 %v139
    %v673 = vunpack.c.h.b16 %v139
    %v674 = vunpack.c.l.b16 %v140
    %v675 = vunpack.c.h.b16 %v140
    %v676 = vunpack.c.l.b16 %v141
    %v677 = vunpack.c.h.b16 %v141
    %v678 = vunpack.c.l.b16 %v142
    %v679 = vunpack.c.h.b16 %v142
    %v680 = vunpack.c.l.b16 %v143
    %v681 = vunpack.c.h.b16 %v143
    %v682 = vunpack.c.l.b16 %v144
    %v683 = vunpack.c.h.b16 %v144
    %v684 = vunpack.c.l.b16 %v145
    %v685 = vunpack.c.h.b16 %v145
    %v686 = vunpack.c.l.b16 %v146
    %v687 = vunpack.c.h.b16 %v146
    %v688 = vunpack.c.l.b16 %v147
    %v689 = vunpack.c.h.b16 %v147
    %v690 = vunpack.c.l.b16 %v148
    %v691 = vunpack.c.h.b16 %v148
    %v692 = vunpack.c.l.b16 %v149
    %v693 = vunpack.c.h.b16 %v149
    %v694 = vunpack.c.l.b16 %v150
    %v695 = vunpack.c.h.b16 %v150
    %v696 = vunpack.c.l.b16 %v151
    %v697 = vunpack.c.h.b16 %v151
    %v698 = vunpack.c.l.b16 %v152
    %v699 = vunpack.c.h.b16 %v152
    %v700 = vunpack.c.l.b16 %v153
    %v701 = vunpack.c.h.b16 %v153
    %v702 = vunpack.c.l.b16 %v154
    %v703 = vunpack.c.h.b16 %v154
    %v704 = vunpack.c.l.b16 %v155
    %v705 = vunpack.c.h.b16 %v155
    %v706 = vunpack.c.l.b16 %v156
    %v707 = vunpack.c.h.b16 %v156
    %v708 = vunpack.c.l.b16 %v157
    %v709 = vunpack.c.h.b16 %v157
    %v710 = vunpack.c.l.b16 %v158
    %v711 = vunpack.c.h.b16 %v158
    %v712 = vunpack.c.l.b16 %v159
    %v713 = vunpack.c.h.b16 %v159
    %v714 = vunpack.c.l.b16 %v160
    %v715 = vunpack.c.h.b16 %v160
    %v716 = vunpack.c.l.b16 %v161
    %v717 = vunpack.c.h.b16 %v161
    %v718 = vunpack.c.l.b16 %v162
    %v719 = vunpack.c.h.b16 %v162
    %v720 = vunpack.c.l.b16 %v163
    %v721 = vunpack.c.h.b16 %v163
    %v722 = vunpack.c.l.b16 %v164
    %v723 = vunpack.c.h.b16 %v164
    %v724 = vunpack.c.l.b16 %v165
    %v725 = vunpack.c.h.b16 %v165
    %v726 = vunpack.c.l.b16 %v166
    %v727 = vunpack.c.h.b16 %v166
    %v728 = vunpack.c.l.b16 %v167
    %v729 = vunpack.c.h.b16 %v167
    %v730 = vunpack.c.l.b16 %v168
    %v731 = vunpack.c.h.b16 %v168
    %v732 = vunpack.c.l.b16 %v169
    %v733 = vunpack.c.h.b16 %v169
    %v734 = vunpack.c.l.b16 %v170
    %v735 = vunpack.c.h.b16 %v170
    %v736 = vunpack.c.l.b16 %v171
    %v737 = vunpack.c.h.b16 %v171
    %v738 = vunpack.c.l.b16 %v172
    %v739 = vunpack.c.h.b16 %v172
    %v740 = vunpack.c.l.b16 %v173
    %v741 = vunpack.c.h.b16 %v173
    %v742 = vunpack.c.l.b16 %v174
    %v743 = vunpack.c.h.b16 %v174
    %v744 = vunpack.c.l.b16 %v175
    %v745 = vunpack.c.h.b16 %v175
    %v746 = vunpack.c.l.b16 %v176
    %v747 = vunpack.c.h.b16 %v176
    %v748 = vunpack.c.l.b16 %v177
    %v749 = vunpack.c.h.b16 %v177
    %v750 = vunpack.c.l.b16 %v178
    %v751 = vunpack.c.h.b16 %v178
    %v752 = vunpack.c.l.b16 %v179
    %v753 = vunpack.c.h.b16 %v179
    %v754 = vunpack.c.l.b16 %v180
    %v755 = vunpack.c.h.b16 %v180
    %v756 = vunpack.c.l.b16 %v181
    %v757 = vunpack.c.h.b16 %v181
    %v758 = vunpack.c.l.b16 %v182
    %v759 = vunpack.c.h.b16 %v182
    %v760 = vunpack.c.l.b16 %v183
    %v761 = vunpack.c.h.b16 %v183
    %v762 = vunpack.c.l.b16 %v184
    %v763 = vunpack.c.h.b16 %v184
    %v764 = vunpack.c.l.b16 %v185
    %v765 = vunpack.c.h.b16 %v185
    %v766 = vunpack.c.l.b16 %v186
    %v767 = vunpack.c.h.b16 %v186
    %v768 = vunpack.c.l.b16 %v187
    %v769 = vunpack.c.h.b16 %v187
    %v770 = vunpack.c.l.b16 %v188
    %v771 = vunpack.c.h.b16 %v188
    %v772 = vunpack.c.l.b16 %v189
    %v773 = vunpack.c.h.b16 %v189
    %v774 = vunpack.c.l.b16 %v190
    %v775 = vunpack.c.h.b16 %v190
    %v776 = vunpack.c.l.b16 %v191
    %v777 = vunpack.c.h.b16 %v191
    %v778 = vunpack.c.l.b16 %v192
    %v779 = vunpack.c.h.b16 %v192
    %v780 = vunpack.c.l.b16 %v193
    %v781 = vunpack.c.h.b16 %v193
    %v782 = vunpack.c.l.b16 %v194
    %v783 = vunpack.c.h.b16 %v194
    %v784 = vunpack.c.l.b16 %v195
    %v785 = vunpack.c.h.b16 %v195
    %v786 = vunpack.c.l.b16 %v196
    %v787 = vunpack.c.h.b16 %v196
    %v788 = vunpack.c.l.b16 %v197
    %v789 = vunpack.c.h.b16 %v197
    %v790 = vunpack.c.l.b16 %v198
    %v791 = vunpack.c.h.b16 %v198
    %v792 = vunpack.c.l.b16 %v199
    %v793 = vunpack.c.h.b16 %v199
    %v794 = vunpack.c.l.b16 %v200
    %v795 = vunpack.c.h.b16 %v200
    %v796 = vunpack.c.l.b16 %v201
    %v797 = vunpack.c.h.b16 %v201
    %v798 = vunpack.c.l.b16 %v202
    %v799 = vunpack.c.h.b16 %v202
    %v800 = vunpack.c.l.b16 %v203
    %v801 = vunpack.c.h.b16 %v203
    %v802 = vunpack.c.l.b16 %v204
    %v803 = vunpack.c.h.b16 %v204
    %v804 = vunpack.c.l.b16 %v205
    %v805 = vunpack.c.h.b16 %v205
    %v806 = vunpack.c.l.b16 %v206
    %v807 = vunpack.c.h.b16 %v206
    %v808 = vunpack.c.l.b16 %v207
    %v809 = vunpack.c.h.b16 %v207
    %v810 = vunpack.c.l.b16 %v208
    %v811 = vunpack.c.h.b16 %v208
    %v812 = vunpack.c.l.b16 %v209
    %v813 = vunpack.c.h.b16 %v209
    %v814 = vunpack.c.l.b16 %v210
    %v815 = vunpack.c.h.b16 %v210
    %v816 = vunpack.c.l.b16 %v211
    %v817 = vunpack.c.h.b16 %v211
    %v818 = vunpack.c.l.b16 %v212
    %v819 = vunpack.c.h.b16 %v212
    %v820 = vunpack.c.l.b16 %v213
    %v821 = vunpack.c.h.b16 %v213
    %v822 = vunpack.c.l.b16 %v214
    %v823 = vunpack.c.h.b16 %v214
    %v824 = vunpack.c.l.b16 %v215
    %v825 = vunpack.c.h.b16 %v215
    %v826 = vunpack.c.l.b16 %v216
    %v827 = vunpack.c.h.b16 %v216
    %v828 = vunpack.c.l.b16 %v217
    %v829 = vunpack.c.h.b16 %v217
    %v830 = vunpack.c.l.b16 %v218
    %v831 = vunpack.c.h.b16 %v218
    %v832 = vunpack.c.l.b16 %v219
    %v833 = vunpack.c.h.b16 %v219
    %v834 = vunpack.c.l.b16 %v220
    %v835 = vunpack.c.h.b16 %v220
    %v836 = vunpack.c.l.b16 %v221
    %v837 = vunpack.c.h.b16 %v221
    %v838 = vunpack.c.l.b16 %v222
    %v839 = vunpack.c.h.b16 %v222
    %v840 = vunpack.c.l.b16 %v223
    %v841 = vunpack.c.h.b16 %v223
    %v842 = vunpack.c.l.b16 %v224
    %v843 = vunpack.c.h.b16 %v224
    %v844 = vunpack.c.l.b16 %v225
    %v845 = vunpack.c.h.b16 %v225
    %v846 = vunpack.c.l.b16 %v226
    %v847 = vunpack.c.h.b16 %v226
    %v848 = vunpack.c.l.b16 %v227
    %v849 = vunpack.c.h.b16 %v227
    %v850 = vunpack.c.l.b16 %v228
    %v851 = vunpack.c.h.b16 %v228
    %v852 = vunpack.c.l.b16 %v229
    %v853 = vunpack.c.h.b16 %v229
    %v854 = vunpack.c.l.b16 %v230
    %v855 = vunpack.c.h.b16 %v230
    %v856 = vunpack.c.l.b16 %v231
    %v857 = vunpack.c.h.b16 %v231
    %v858 = vunpack.c.l.b16 %v232
    %v859 = vunpack.c.h.b16 %v232
    %v860 = vunpack.c.l.b16 %v233
    %v861 = vunpack.c.h.b16 %v233
    %v862 = vunpack.c.l.b16 %v234
    %v863 = vunpack.c.h.b16 %v234
    %v864 = vunpack.c.l.b16 %v235
    %v865 = vunpack.c.h.b16 %v235
    %v866 = vunpack.c.l.b16 %v236
    %v867 = vunpack.c.h.b16 %v236
    %v868 = vunpack.c.l.b16 %v237
    %v869 = vunpack.c.h.b16 %v237
    %v870 = vunpack.c.l.b16 %v238
    %v871 = vunpack.c.h.b16 %v238
    %v872 = vunpack.c.l.b16 %v239
    %v873 = vunpack.c.h.b16 %v239
    %v874 = vunpack.c.l.b16 %v240
    %v875 = vunpack.c.h.b16 %v240
    %v876 = vunpack.c.l.b16 %v241
    %v877 = vunpack.c.h.b16 %v241
    %v878 = vunpack.c.l.b16 %v242
    %v879 = vunpack.c.h.b16 %v242
    %v880 = vunpack.c.l.b16 %v243
    %v881 = vunpack.c.h.b16 %v243
    %v882 = vunpack.c.l.b16 %v244
    %v883 = vunpack.c.h.b16 %v244
    %v884 = vunpack.c.l.b16 %v245
    %v885 = vunpack.c.h.b16 %v245
    %v886 = vunpack.c.l.b16 %v246
    %v887 = vunpack.c.h.b16 %v246
    %v888 = vunpack.c.l.b16 %v247
    %v889 = vunpack.c.h.b16 %v247
    %v890 = vunpack.c.l.b16 %v248
    %v891 = vunpack.c.h.b16 %v248
    %v892 = vunpack.c.l.b16 %v249
    %v893 = vunpack.c.h.b16 %v249
    %v894 = vunpack.c.l.b16 %v250
    %v895 = vunpack.c.h.b16 %v250
    %v896 = vunpack.c.l.b16 %v251
    %v897 = vunpack.c.h.b16 %v251
    %v898 = vunpack.c.l.b16 %v252
    %v899 = vunpack.c.h.b16 %v252
    %v900 = vunpack.c.l.b16 %v253
    %v901 = vunpack.c.h.b16 %v253
    %v902 = vunpack.c.l.b16 %v254
    %v903 = vunpack.c.h.b16 %v254
    %v904 = vunpack.c.l.b16 %v255
    %v905 = vunpack.c.h.b16 %v255
    %v906 = vunpack.c.l.b16 %v256
    %v907 = vunpack.c.h.b16 %v256
    %v908 = vunpack.c.l.b16 %v257
    %v909 = vunpack.c.h.b16 %v257
    %v910 = vunpack.c.l.b16 %v258
    %v911 = vunpack.c.h.b16 %v258
    %v912 = vunpack.c.l.b16 %v259
    %v913 = vunpack.c.h.b16 %v259
    %v914 = vunpack.c.l.b16 %v260
    %v915 = vunpack.c.h.b16 %v260
    %v916 = vunpack.c.l.b16 %v261
    %v917 = vunpack.c.h.b16 %v261
    %v918 = vunpack.c.l.b16 %v262
    %v919 = vunpack.c.h.b16 %v262
    %v920 = vunpack.c.l.b16 %v263
    %v921 = vunpack.c.h.b16 %v263
    %v922 = vunpack.c.l.b16 %v264
    %v923 = vunpack.c.h.b16 %v264
    %v924 = vunpack.c.l.b16 %v265
    %v925 = vunpack.c.h.b16 %v265
    %v926 = vunpack.c.l.b16 %v266
    %v927 = vunpack.c.h.b16 %v266
    %v928 = vunpack.c.l.b16 %v267
    %v929 = vunpack.c.h.b16 %v267
    %v930 = vunpack.c.l.b16 %v268
    %v931 = vunpack.c.h.b16 %v268
    %v932 = vunpack.c.l.b16 %v269
    %v933 = vunpack.c.h.b16 %v269
    %v934 = vunpack.c.l.b16 %v270
    %v935 = vunpack.c.h.b16 %v270
    %v936 = vunpack.c.l.b16 %v271
    %v937 = vunpack.c.h.b16 %v271
    %v938 = vunpack.c.l.b16 %v272
    %v939 = vunpack.c.h.b16 %v272
    %v940 = vunpack.c.l.b16 %v273
    %v941 = vunpack.c.h.b16 %v273
    %v942 = vunpack.c.l.b16 %v274
    %v943 = vunpack.c.h.b16 %v274
    %v944 = vunpack.c.l.b16 %v275
    %v945 = vunpack.c.h.b16 %v275
    %v946 = vunpack.c.l.b16 %v276
    %v947 = vunpack.c.h.b16 %v276
    %v948 = vunpack.c.l.b16 %v277
    %v949 = vunpack.c.h.b16 %v277
    %v950 = vunpack.c.l.b16 %v278
    %v951 = vunpack.c.h.b16 %v278
    %v952 = vunpack.c.l.b16 %v279
    %v953 = vunpack.c.h.b16 %v279
    %v954 = vunpack.c.l.b16 %v280
    %v955 = vunpack.c.h.b16 %v280
    %v956 = vunpack.c.l.b16 %v281
    %v957 = vunpack.c.h.b16 %v281
    %v958 = vunpack.c.l.b16 %v282
    %v959 = vunpack.c.h.b16 %v282
    %v960 = vunpack.c.l.b16 %v283
    %v961 = vunpack.c.h.b16 %v283
    %v962 = vunpack.c.l.b16 %v284
    %v963 = vunpack.c.h.b16 %v284
    %v964 = vunpack.c.l.b16 %v285
    %v965 = vunpack.c.h.b16 %v285
    %v966 = vunpack.c.l.b16 %v286
    %v967 = vunpack.c.h.b16 %v286
    %v968 = vunpack.c.l.b16 %v287
    %v969 = vunpack.c.h.b16 %v287
    %v970 = vunpack.c.l.b16 %v288
    %v971 = vunpack.c.h.b16 %v288
    %v972 = vunpack.c.l.b16 %v289
    %v973 = vunpack.c.h.b16 %v289
    %v974 = vunpack.c.l.b16 %v290
    %v975 = vunpack.c.h.b16 %v290
    %v976 = vunpack.c.l.b16 %v291
    %v977 = vunpack.c.h.b16 %v291
    %v978 = vunpack.c.l.b16 %v292
    %v979 = vunpack.c.h.b16 %v292
    %v980 = vunpack.c.l.b16 %v293
    %v981 = vunpack.c.h.b16 %v293
    %v982 = vunpack.c.l.b16 %v294
    %v983 = vunpack.c.h.b16 %v294
    %v984 = vunpack.c.l.b16 %v295
    %v985 = vunpack.c.h.b16 %v295
    %v986 = vunpack.c.l.b16 %v296
    %v987 = vunpack.c.h.b16 %v296
    %v988 = vunpack.c.l.b16 %v297
    %v989 = vunpack.c.h.b16 %v297
    %v990 = vunpack.c.l.b16 %v298
    %v991 = vunpack.c.h.b16 %v298
    %v992 = vunpack.c.l.b16 %v299
    %v993 = vunpack.c.h.b16 %v299
    %v994 = vunpack.c.l.b16 %v300
    %v995 = vunpack.c.h.b16 %v300
    %v996 = vunpack.c.l.b16 %v301
    %v997 = vunpack.c.h.b16 %v301
    %v998 = vunpack.c.l.b16 %v302
    %v999 = vunpack.c.h.b16 %v302
    %v1000 = vunpack.c.l.b16 %v303
    %v1001 = vunpack.c.h.b16 %v303
    %v1002 = vunpack.c.l.b16 %v304
    %v1003 = vunpack.c.h.b16 %v304
    %v1004 = vunpack.c.l.b16 %v305
    %v1005 = vunpack.c.h.b16 %v305
    %v1006 = vunpack.c.l.b16 %v306
    %v1007 = vunpack.c.h.b16 %v306
    %v1008 = vunpack.c.l.b16 %v307
    %v1009 = vunpack.c.h.b16 %v307
    %v1010 = vunpack.c.l.b16 %v308
    %v1011 = vunpack.c.h.b16 %v308
    %v1012 = vunpack.c.l.b16 %v309
    %v1013 = vunpack.c.h.b16 %v309
    %v1014 = vunpack.c.l.b16 %v310
    %v1015 = vunpack.c.h.b16 %v310
    %v1016 = vunpack.c.l.b16 %v311
    %v1017 = vunpack.c.h.b16 %v311
    %v1018 = vunpack.c.l.b16 %v312
    %v1019 = vunpack.c.h.b16 %v312
    %v1020 = vunpack.c.l.b16 %v313
    %v1021 = vunpack.c.h.b16 %v313
    %v1022 = vunpack.c.l.b16 %v314
    %v1023 = vunpack.c.h.b16 %v314
    %v1024 = vunpack.c.l.b16 %v315
    %v1025 = vunpack.c.h.b16 %v315
    %v1026 = vunpack.c.l.b16 %v316
    %v1027 = vunpack.c.h.b16 %v316
    %v1028 = vunpack.c.l.b16 %v317
    %v1029 = vunpack.c.h.b16 %v317
    %v1030 = vunpack.c.l.b16 %v318
    %v1031 = vunpack.c.h.b16 %v318
    %v1032 = vunpack.c.l.b16 %v319
    %v1033 = vunpack.c.h.b16 %v319
    %v1034 = vunpack.c.l.b16 %v320
    %v1035 = vunpack.c.h.b16 %v320
    %v1036 = vunpack.c.l.b16 %v321
    %v1037 = vunpack.c.h.b16 %v321
    %v1038 = vunpack.c.l.b16 %v322
    %v1039 = vunpack.c.h.b16 %v322
    %v1040 = vunpack.c.l.b16 %v323
    %v1041 = vunpack.c.h.b16 %v323
    %v1042 = vunpack.c.l.b16 %v324
    %v1043 = vunpack.c.h.b16 %v324
    %v1044 = vunpack.c.l.b16 %v325
    %v1045 = vunpack.c.h.b16 %v325
    %v1046 = vunpack.c.l.b16 %v326
    %v1047 = vunpack.c.h.b16 %v326
    %v1048 = vunpack.c.l.b16 %v327
    %v1049 = vunpack.c.h.b16 %v327
    %v1050 = vunpack.c.l.b16 %v328
    %v1051 = vunpack.c.h.b16 %v328
    %v1052 = vunpack.c.l.b16 %v329
    %v1053 = vunpack.c.h.b16 %v329
    %v1054 = vunpack.c.l.b16 %v330
    %v1055 = vunpack.c.h.b16 %v330
    %v1056 = vunpack.c.l.b16 %v331
    %v1057 = vunpack.c.h.b16 %v331
    %v1058 = vunpack.c.l.b16 %v332
    %v1059 = vunpack.c.h.b16 %v332
    %v1060 = vunpack.c.l.b16 %v333
    %v1061 = vunpack.c.h.b16 %v333
    %v1062 = vunpack.c.l.b16 %v334
    %v1063 = vunpack.c.h.b16 %v334
    %v1064 = vunpack.c.l.b16 %v335
    %v1065 = vunpack.c.h.b16 %v335
    %v1066 = vunpack.c.l.b16 %v336
    %v1067 = vunpack.c.h.b16 %v336
    %v1068 = vunpack.c.l.b16 %v337
    %v1069 = vunpack.c.h.b16 %v337
    %v1070 = vunpack.c.l.b16 %v338
    %v1071 = vunpack.c.h.b16 %v338
    %v1072 = vunpack.c.l.b16 %v339
    %v1073 = vunpack.c.h.b16 %v339
    %v1074 = vunpack.c.l.b16 %v340
    %v1075 = vunpack.c.h.b16 %v340
    %v1076 = vunpack.c.l.b16 %v341
    %v1077 = vunpack.c.h.b16 %v341
    %v1078 = vunpack.c.l.b16 %v342
    %v1079 = vunpack.c.h.b16 %v342
    %v1080 = vunpack.c.l.b16 %v343
    %v1081 = vunpack.c.h.b16 %v343
    %v1082 = vunpack.c.l.b16 %v344
    %v1083 = vunpack.c.h.b16 %v344
    %v1084 = vunpack.c.l.b16 %v345
    %v1085 = vunpack.c.h.b16 %v345
    %v1086 = vunpack.c.l.b16 %v346
    %v1087 = vunpack.c.h.b16 %v346
    %v1088 = vunpack.c.l.b16 %v347
    %v1089 = vunpack.c.h.b16 %v347
    %v1090 = vunpack.c.l.b16 %v348
    %v1091 = vunpack.c.h.b16 %v348
    %v1092 = vunpack.c.l.b16 %v349
    %v1093 = vunpack.c.h.b16 %v349
    %v1094 = vunpack.c.l.b16 %v350
    %v1095 = vunpack.c.h.b16 %v350
    %v1096 = vunpack.c.l.b16 %v351
    %v1097 = vunpack.c.h.b16 %v351
    %v1098 = vunpack.c.l.b16 %v352
    %v1099 = vunpack.c.h.b16 %v352
    %v1100 = vunpack.c.l.b16 %v353
    %v1101 = vunpack.c.h.b16 %v353
    %v1102 = vunpack.c.l.b16 %v354
    %v1103 = vunpack.c.h.b16 %v354
    %v1104 = vunpack.c.l.b16 %v355
    %v1105 = vunpack.c.h.b16 %v355
    %v1106 = vunpack.c.l.b16 %v356
    %v1107 = vunpack.c.h.b16 %v356
    %v1108 = vunpack.c.l.b16 %v357
    %v1109 = vunpack.c.h.b16 %v357
    %v1110 = vunpack.c.l.b16 %v358
    %v1111 = vunpack.c.h.b16 %v358
    %v1112 = vunpack.c.l.b16 %v359
    %v1113 = vunpack.c.h.b16 %v359
    %v1114 = vunpack.c.l.b16 %v360
    %v1115 = vunpack.c.h.b16 %v360
    %v1116 = vunpack.c.l.b16 %v361
    %v1117 = vunpack.c.h.b16 %v361
    %v1118 = vunpack.c.l.b16 %v362
    %v1119 = vunpack.c.h.b16 %v362
    %v1120 = vunpack.c.l.b16 %v363
    %v1121 = vunpack.c.h.b16 %v363
    %v1122 = vunpack.c.l.b16 %v364
    %v1123 = vunpack.c.h.b16 %v364
    %v1124 = vunpack.c.l.b16 %v365
    %v1125 = vunpack.c.h.b16 %v365
    %v1126 = vunpack.c.l.b16 %v366
    %v1127 = vunpack.c.h.b16 %v366
    %v1128 = vunpack.c.l.b16 %v367
    %v1129 = vunpack.c.h.b16 %v367
    %v1130 = vunpack.c.l.b16 %v368
    %v1131 = vunpack.c.h.b16 %v368
    %v1132 = vunpack.c.l.b16 %v369
    %v1133 = vunpack.c.h.b16 %v369
    %v1134 = vunpack.c.l.b16 %v370
    %v1135 = vunpack.c.h.b16 %v370
    %v1136 = vunpack.c.l.b16 %v371
    %v1137 = vunpack.c.h.b16 %v371
    %v1138 = vunpack.c.l.b16 %v372
    %v1139 = vunpack.c.h.b16 %v372
    %v1140 = vunpack.c.l.b16 %v373
    %v1141 = vunpack.c.h.b16 %v373
    %v1142 = vunpack.c.l.b16 %v374
    %v1143 = vunpack.c.h.b16 %v374
    %v1144 = vunpack.c.l.b16 %v375
    %v1145 = vunpack.c.h.b16 %v375
    %v1146 = vunpack.c.l.b16 %v376
    %v1147 = vunpack.c.h.b16 %v376
    %v1148 = vunpack.c.l.b16 %v377
    %v1149 = vunpack.c.h.b16 %v377
    %v1150 = vunpack.c.l.b16 %v378
    %v1151 = vunpack.c.h.b16 %v378
    %v1152 = vunpack.c.l.b16 %v379
    %v1153 = vunpack.c.h.b16 %v379
    %v1154 = vunpack.c.l.b16 %v380
    %v1155 = vunpack.c.h.b16 %v380
    %v1156 = vunpack.c.l.b16 %v381
    %v1157 = vunpack.c.h.b16 %v381
    %v1158 = vunpack.c.l.b16 %v382
    %v1159 = vunpack.c.h.b16 %v382
    %v1160 = vunpack.c.l.b16 %v383
    %v1161 = vunpack.c.h.b16 %v383
    %v1162 = vunpack.c.l.b16 %v384
    %v1163 = vunpack.c.h.b16 %v384
    %v1164 = vunpack.c.l.b16 %v385
    %v1165 = vunpack.c.h.b16 %v385
    %v1166 = vpack.c.b16 %v656, %v654
    %v1167 = vpack.c.b16 %v657, %v655
    %v1168 = vpack.c.b16 %v660, %v658
    %v1169 = vpack.c.b16 %v661, %v659
    %v1170 = vpack.c.b16 %v664, %v662
    %v1171 = vpack.c.b16 %v665, %v663
    %v1172 = vpack.c.b16 %v668, %v666
    %v1173 = vpack.c.b16 %v669, %v667
    %v1174 = vpack.c.b16 %v672, %v670
    %v1175 = vpack.c.b16 %v673, %v671
    %v1176 = vpack.c.b16 %v676, %v674
    %v1177 = vpack.c.b16 %v677, %v675
    %v1178 = vpack.c.b16 %v680, %v678
    %v1179 = vpack.c.b16 %v681, %v679
    %v1180 = vpack.c.b16 %v684, %v682
    %v1181 = vpack.c.b16 %v685, %v683
    %v1182 = vpack.c.b16 %v688, %v686
    %v1183 = vpack.c.b16 %v689, %v687
    %v1184 = vpack.c.b16 %v692, %v690
    %v1185 = vpack.c.b16 %v693, %v691
    %v1186 = vpack.c.b16 %v696, %v694
    %v1187 = vpack.c.b16 %v697, %v695
    %v1188 = vpack.c.b16 %v700, %v698
    %v1189 = vpack.c.b16 %v701, %v699
    %v1190 = vpack.c.b16 %v704, %v702
    %v1191 = vpack.c.b16 %v705, %v703
    %v1192 = vpack.c.b16 %v708, %v706
    %v1193 = vpack.c.b16 %v709, %v707
    %v1194 = vpack.c.b16 %v712, %v710
    %v1195 = vpack.c.b16 %v713, %v711
    %v1196 = vpack.c.b16 %v716, %v714
    %v1197 = vpack.c.b16 %v717, %v715
    %v1198 = vpack.c.b16 %v720, %v718
    %v1199 = vpack.c.b16 %v721, %v719
    %v1200 = vpack.c.b16 %v724, %v722
    %v1201 = vpack.c.b16 %v725, %v723
    %v1202 = vpack.c.b16 %v728, %v726
    %v1203 = vpack.c.b16 %v729, %v727
    %v1204 = vpack.c.b16 %v732, %v730
    %v1205 = vpack.c.b16 %v733, %v731
    %v1206 = vpack.c.b16 %v736, %v734
    %v1207 = vpack.c.b16 %v737, %v735
    %v1208 = vpack.c.b16 %v740, %v738
    %v1209 = vpack.c.b16 %v741, %v739
    %v1210 = vpack.c.b16 %v744, %v742
    %v1211 = vpack.c.b16 %v745, %v743
    %v1212 = vpack.c.b16 %v748, %v746
    %v1213 = vpack.c.b16 %v749, %v747
    %v1214 = vpack.c.b16 %v752, %v750
    %v1215 = vpack.c.b16 %v753, %v751
    %v1216 = vpack.c.b16 %v756, %v754
    %v1217 = vpack.c.b16 %v757, %v755
    %v1218 = vpack.c.b16 %v760, %v758
    %v1219 = vpack.c.b16 %v761, %v759
    %v1220 = vpack.c.b16 %v764, %v762
    %v1221 = vpack.c.b16 %v765, %v763
    %v1222 = vpack.c.b16 %v768, %v766
    %v1223 = vpack.c.b16 %v769, %v767
    %v1224 = vpack.c.b16 %v772, %v770
    %v1225 = vpack.c.b16 %v773, %v771
    %v1226 = vpack.c.b16 %v776, %v774
    %v1227 = vpack.c.b16 %v777, %v775
    %v1228 = vpack.c.b16 %v780, %v778
    %v1229 = vpack.c.b16 %v781, %v779
    %v1230 = vpack.c.b16 %v784, %v782
    %v1231 = vpack.c.b16 %v785, %v783
    %v1232 = vpack.c.b16 %v788, %v786
    %v1233 = vpack.c.b16 %v789, %v787
    %v1234 = vpack.c.b16 %v792, %v790
    %v1235 = vpack.c.b16 %v793, %v791
    %v1236 = vpack.c.b16 %v796, %v794
    %v1237 = vpack.c.b16 %v797, %v795
    %v1238 = vpack.c.b16 %v800, %v798
    %v1239 = vpack.c.b16 %v801, %v799
    %v1240 = vpack.c.b16 %v804, %v802
    %v1241 = vpack.c.b16 %v805, %v803
    %v1242 = vpack.c.b16 %v808, %v806
    %v1243 = vpack.c.b16 %v809, %v807
    %v1244 = vpack.c.b16 %v812, %v810
    %v1245 = vpack.c.b16 %v813, %v811
    %v1246 = vpack.c.b16 %v816, %v814
    %v1247 = vpack.c.b16 %v817, %v815
    %v1248 = vpack.c.b16 %v820, %v818
    %v1249 = vpack.c.b16 %v821, %v819
    %v1250 = vpack.c.b16 %v824, %v822
    %v1251 = vpack.c.b16 %v825, %v823
    %v1252 = vpack.c.b16 %v828, %v826
    %v1253 = vpack.c.b16 %v829, %v827
    %v1254 = vpack.c.b16 %v832, %v830
    %v1255 = vpack.c.b16 %v833, %v831
    %v1256 = vpack.c.b16 %v836, %v834
    %v1257 = vpack.c.b16 %v837, %v835
    %v1258 = vpack.c.b16 %v840, %v838
    %v1259 = vpack.c.b16 %v841, %v839
    %v1260 = vpack.c.b16 %v844, %v842
    %v1261 = vpack.c.b16 %v845, %v843
    %v1262 = vpack.c.b16 %v848, %v846
    %v1263 = vpack.c.b16 %v849, %v847
    %v1264 = vpack.c.b16 %v852, %v850
    %v1265 = vpack.c.b16 %v853, %v851
    %v1266 = vpack.c.b16 %v856, %v854
    %v1267 = vpack.c.b16 %v857, %v855
    %v1268 = vpack.c.b16 %v860, %v858
    %v1269 = vpack.c.b16 %v861, %v859
    %v1270 = vpack.c.b16 %v864, %v862
    %v1271 = vpack.c.b16 %v865, %v863
    %v1272 = vpack.c.b16 %v868, %v866
    %v1273 = vpack.c.b16 %v869, %v867
    %v1274 = vpack.c.b16 %v872, %v870
    %v1275 = vpack.c.b16 %v873, %v871
    %v1276 = vpack.c.b16 %v876, %v874
    %v1277 = vpack.c.b16 %v877, %v875
    %v1278 = vpack.c.b16 %v880, %v878
    %v1279 = vpack.c.b16 %v881, %v879
    %v1280 = vpack.c.b16 %v884, %v882
    %v1281 = vpack.c.b16 %v885, %v883
    %v1282 = vpack.c.b16 %v888, %v886
    %v1283 = vpack.c.b16 %v889, %v887
    %v1284 = vpack.c.b16 %v892, %v890
    %v1285 = vpack.c.b16 %v893, %v891
    %v1286 = vpack.c.b16 %v896, %v894
    %v1287 = vpack.c.b16 %v897, %v895
    %v1288 = vpack.c.b16 %v900, %v898
    %v1289 = vpack.c.b16 %v901, %v899
    %v1290 = vpack.c.b16 %v904, %v902
    %v1291 = vpack.c.b16 %v905, %v903
    %v1292 = vpack.c.b16 %v908, %v906
    %v1293 = vpack.c.b16 %v909, %v907
    %v1294 = vpack.c.b16 %v912, %v910
    %v1295 = vpack.c.b16 %v913, %v911
    %v1296 = vpack.c.b16 %v916, %v914
    %v1297 = vpack.c.b16 %v917, %v915
    %v1298 = vpack.c.b16 %v920, %v918
    %v1299 = vpack.c.b16 %v921, %v919
    %v1300 = vpack.c.b16 %v924, %v922
    %v1301 = vpack.c.b16 %v925, %v923
    %v1302 = vpack.c.b16 %v928, %v926
    %v1303 = vpack.c.b16 %v929, %v927
    %v1304 = vpack.c.b16 %v932, %v930
    %v1305 = vpack.c.b16 %v933, %v931
    %v1306 = vpack.c.b16 %v936, %v934
    %v1307 = vpack.c.b16 %v937, %v935
    %v1308 = vpack.c.b16 %v940, %v938
    %v1309 = vpack.c.b16 %v941, %v939
    %v1310 = vpack.c.b16 %v944, %v942
    %v1311 = vpack.c.b16 %v945, %v943
    %v1312 = vpack.c.b16 %v948, %v946
    %v1313 = vpack.c.b16 %v949, %v947
    %v1314 = vpack.c.b16 %v952, %v950
    %v1315 = vpack.c.b16 %v953, %v951
    %v1316 = vpack.c.b16 %v956, %v954
    %v1317 = vpack.c.b16 %v957, %v955
    %v1318 = vpack.c.b16 %v960, %v958
    %v1319 = vpack.c.b16 %v961, %v959
    %v1320 = vpack.c.b16 %v964, %v962
    %v1321 = vpack.c.b16 %v965, %v963
    %v1322 = vpack.c.b16 %v968, %v966
    %v1323 = vpack.c.b16 %v969, %v967
    %v1324 = vpack.c.b16 %v972, %v970
    %v1325 = vpack.c.b16 %v973, %v971
    %v1326 = vpack.c.b16 %v976, %v974
    %v1327 = vpack.c.b16 %v977, %v975
    %v1328 = vpack.c.b16 %v980, %v978
    %v1329 = vpack.c.b16 %v981, %v979
    %v1330 = vpack.c.b16 %v984, %v982
    %v1331 = vpack.c.b16 %v985, %v983
    %v1332 = vpack.c.b16 %v988, %v986
    %v1333 = vpack.c.b16 %v989, %v987
    %v1334 = vpack.c.b16 %v992, %v990
    %v1335 = vpack.c.b16 %v993, %v991
    %v1336 = vpack.c.b16 %v996, %v994
    %v1337 = vpack.c.b16 %v997, %v995
    %v1338 = vpack.c.b16 %v1000, %v998
    %v1339 = vpack.c.b16 %v1001, %v999
    %v1340 = vpack.c.b16 %v1004, %v1002
    %v1341 = vpack.c.b16 %v1005, %v1003
    %v1342 = vpack.c.b16 %v1008, %v1006
    %v1343 = vpack.c.b16 %v1009, %v1007
    %v1344 = vpack.c.b16 %v1012, %v1010
    %v1345 = vpack.c.b16 %v1013, %v1011
    %v1346 = vpack.c.b16 %v1016, %v1014
    %v1347 = vpack.c.b16 %v1017, %v1015
    %v1348 = vpack.c.b16 %v1020, %v1018
    %v1349 = vpack.c.b16 %v1021, %v1019
    %v1350 = vpack.c.b16 %v1024, %v1022
    %v1351 = vpack.c.b16 %v1025, %v1023
    %v1352 = vpack.c.b16 %v1028, %v1026
    %v1353 = vpack.c.b16 %v1029, %v1027
    %v1354 = vpack.c.b16 %v1032, %v1030
    %v1355 = vpack.c.b16 %v1033, %v1031
    %v1356 = vpack.c.b16 %v1036, %v1034
    %v1357 = vpack.c.b16 %v1037, %v1035
    %v1358 = vpack.c.b16 %v1040, %v1038
    %v1359 = vpack.c.b16 %v1041, %v1039
    %v1360 = vpack.c.b16 %v1044, %v1042
    %v1361 = vpack.c.b16 %v1045, %v1043
    %v1362 = vpack.c.b16 %v1048, %v1046
    %v1363 = vpack.c.b16 %v1049, %v1047
    %v1364 = vpack.c.b16 %v1052, %v1050
    %v1365 = vpack.c.b16 %v1053, %v1051
    %v1366 = vpack.c.b16 %v1056, %v1054
    %v1367 = vpack.c.b16 %v1057, %v1055
    %v1368 = vpack.c.b16 %v1060, %v1058
    %v1369 = vpack.c.b16 %v1061, %v1059
    %v1370 = vpack.c.b16 %v1064, %v1062
    %v1371 = vpack.c.b16 %v1065, %v1063
    %v1372 = vpack.c.b16 %v1068, %v1066
    %v1373 = vpack.c.b16 %v1069, %v1067
    %v1374 = vpack.c.b16 %v1072, %v1070
    %v1375 = vpack.c.b16 %v1073, %v1071
    %v1376 = vpack.c.b16 %v1076, %v1074
    %v1377 = vpack.c.b16 %v1077, %v1075
    %v1378 = vpack.c.b16 %v1080, %v1078
    %v1379 = vpack.c.b16 %v1081, %v1079
    %v1380 = vpack.c.b16 %v1084, %v1082
    %v1381 = vpack.c.b16 %v1085, %v1083
    %v1382 = vpack.c.b16 %v1088, %v1086
    %v1383 = vpack.c.b16 %v1089, %v1087
    %v1384 = vpack.c.b16 %v1092, %v1090
    %v1385 = vpack.c.b16 %v1093, %v1091
    %v1386 = vpack.c.b16 %v1096, %v1094
    %v1387 = vpack.c.b16 %v1097, %v1095
    %v1388 = vpack.c.b16 %v1100, %v1098
    %v1389 = vpack.c.b16 %v1101, %v1099
    %v1390 = vpack.c.b16 %v1104, %v1102
    %v1391 = vpack.c.b16 %v1105, %v1103
    %v1392 = vpack.c.b16 %v1108, %v1106
    %v1393 = vpack.c.b16 %v1109, %v1107
    %v1394 = vpack.c.b16 %v1112, %v1110
    %v1395 = vpack.c.b16 %v1113, %v1111
    %v1396 = vpack.c.b16 %v1116, %v1114
    %v1397 = vpack.c.b16 %v1117, %v1115
    %v1398 = vpack.c.b16 %v1120, %v1118
    %v1399 = vpack.c.b16 %v1121, %v1119
    %v1400 = vpack.c.b16 %v1124, %v1122
    %v1401 = vpack.c.b16 %v1125, %v1123
    %v1402 = vpack.c.b16 %v1128, %v1126
    %v1403 = vpack.c.b16 %v1129, %v1127
    %v1404 = vpack.c.b16 %v1132, %v1130
    %v1405 = vpack.c.b16 %v1133, %v1131
    %v1406 = vpack.c.b16 %v1136, %v1134
    %v1407 = vpack.c.b16 %v1137, %v1135
    %v1408 = vpack.c.b16 %v1140, %v1138
    %v1409 = vpack.c.b16 %v1141, %v1139
    %v1410 = vpack.c.b16 %v1144, %v1142
    %v1411 = vpack.c.b16 %v1145, %v1143
    %v1412 = vpack.c.b16 %v1148, %v1146
    %v1413 = vpack.c.b16 %v1149, %v1147
    %v1414 = vpack.c.b16 %v1152, %v1150
    %v1415 = vpack.c.b16 %v1153, %v1151
    %v1416 = vpack.c.b16 %v1156, %v1154
    %v1417 = vpack.c.b16 %v1157, %v1155
    %v1418 = vpack.c.b16 %v1160, %v1158
    %v1419 = vpack.c.b16 %v1161, %v1159
    %v1420 = vpack.c.b16 %v1164, %v1162
    %v1421 = vpack.c.b16 %v1165, %v1163
    %1678 = vmatprep.subr.bf16.mxu0 %v1181
    %1679 = vmatpush1.bf16.msra.mxu0 %v1180
    %1680 = vmatprep.subr.bf16.mxu0 %v1179
    %1681 = vmatpush1.bf16.msra.mxu0 %v1178
    %1682 = vmatprep.subr.bf16.mxu0 %v1177
    %1683 = vmatpush1.bf16.msra.mxu0 %v1176
    %1684 = vmatprep.subr.bf16.mxu0 %v1175
    %1685 = vmatpush1.bf16.msra.mxu0 %v1174
    %1686 = vmatprep.subr.bf16.mxu0 %v1173
    %1687 = vmatpush1.bf16.msra.mxu0 %v1172
    %1688 = vmatprep.subr.bf16.mxu0 %v1171
    %1689 = vmatpush1.bf16.msra.mxu0 %v1170
    %1690 = vmatprep.subr.bf16.mxu0 %v1169
    %1691 = vmatpush1.bf16.msra.mxu0 %v1168
    %1692 = vmatprep.subr.bf16.mxu0 %v1167
    %1693 = vmatpush1.bf16.msra.mxu0 %v1166
    %1694 = vmatprep.subr.bf16.mxu0 %v1197
    %1695 = vmatpush2.bf16.msra.mxu0 %v1196
    %1696 = vmatprep.subr.bf16.mxu0 %v1195
    %1697 = vmatpush2.bf16.msra.mxu0 %v1194
    %1698 = vmatprep.subr.bf16.mxu0 %v1193
    %1699 = vmatpush2.bf16.msra.mxu0 %v1192
    %1700 = vmatprep.subr.bf16.mxu0 %v1191
    %1701 = vmatpush2.bf16.msra.mxu0 %v1190
    %1702 = vmatprep.subr.bf16.mxu0 %v1189
    %1703 = vmatpush2.bf16.msra.mxu0 %v1188
    %1704 = vmatprep.subr.bf16.mxu0 %v1187
    %1705 = vmatpush2.bf16.msra.mxu0 %v1186
    %1706 = vmatprep.subr.bf16.mxu0 %v1185
    %1707 = vmatpush2.bf16.msra.mxu0 %v1184
    %1708 = vmatprep.subr.bf16.mxu0 %v1183
    %1709 = vmatpush2.bf16.msra.mxu0 %v1182
    %1710 = vmatprep.mubr.bf16.mxu0 %v115
    %1711 = vmatmul.mubr.bf16.gmra.mxu0 %v114
    %v1712 = vpop.f32.mrf.mxu0
    %v1713 = vadd.f32 %v391, %v1712
    %v1714 = vpop.f32.mrf.mxu0
    %v1715 = vadd.f32 %v395, %v1714
    %v1716 = vpop.f32.mrf.mxu0
    %v1717 = vpop.f32.mrf.mxu0
    %1718 = vdwg.mxu0
    %1719 = vmatprep.subr.bf16.mxu0 %v1213
    %1720 = vmatpush1.bf16.msra.mxu0 %v1212
    %1721 = vmatprep.subr.bf16.mxu0 %v1211
    %1722 = vmatpush1.bf16.msra.mxu0 %v1210
    %1723 = vmatprep.subr.bf16.mxu0 %v1209
    %1724 = vmatpush1.bf16.msra.mxu0 %v1208
    %1725 = vmatprep.subr.bf16.mxu0 %v1207
    %1726 = vmatpush1.bf16.msra.mxu0 %v1206
    %1727 = vmatprep.subr.bf16.mxu0 %v1205
    %1728 = vmatpush1.bf16.msra.mxu0 %v1204
    %1729 = vmatprep.subr.bf16.mxu0 %v1203
    %1730 = vmatpush1.bf16.msra.mxu0 %v1202
    %1731 = vmatprep.subr.bf16.mxu0 %v1201
    %1732 = vmatpush1.bf16.msra.mxu0 %v1200
    %1733 = vmatprep.subr.bf16.mxu0 %v1199
    %1734 = vmatpush1.bf16.msra.mxu0 %v1198
    %1735 = vmatprep.subr.bf16.mxu0 %v1229
    %1736 = vmatpush2.bf16.msra.mxu0 %v1228
    %1737 = vmatprep.subr.bf16.mxu0 %v1227
    %1738 = vmatpush2.bf16.msra.mxu0 %v1226
    %1739 = vmatprep.subr.bf16.mxu0 %v1225
    %1740 = vmatpush2.bf16.msra.mxu0 %v1224
    %1741 = vmatprep.subr.bf16.mxu0 %v1223
    %1742 = vmatpush2.bf16.msra.mxu0 %v1222
    %1743 = vmatprep.subr.bf16.mxu0 %v1221
    %1744 = vmatpush2.bf16.msra.mxu0 %v1220
    %1745 = vmatprep.subr.bf16.mxu0 %v1219
    %1746 = vmatpush2.bf16.msra.mxu0 %v1218
    %1747 = vmatprep.subr.bf16.mxu0 %v1217
    %1748 = vmatpush2.bf16.msra.mxu0 %v1216
    %1749 = vmatprep.subr.bf16.mxu0 %v1215
    %1750 = vmatpush2.bf16.msra.mxu0 %v1214
    %1751 = vmatprep.mubr.bf16.mxu0 %v117
    %1752 = vmatmul.mubr.bf16.gmra.mxu0 %v116
    %v1753 = vpop.f32.mrf.mxu0
    %v1754 = vadd.f32 %v1713, %v1753
    %v1755 = vpop.f32.mrf.mxu0
    %v1756 = vadd.f32 %v1715, %v1755
    %v1757 = vpop.f32.mrf.mxu0
    %v1758 = vpop.f32.mrf.mxu0
    %1759 = vdwg.mxu0
    %1760 = vmatprep.subr.bf16.mxu0 %v1245
    %1761 = vmatpush1.bf16.msra.mxu0 %v1244
    %1762 = vmatprep.subr.bf16.mxu0 %v1243
    %1763 = vmatpush1.bf16.msra.mxu0 %v1242
    %1764 = vmatprep.subr.bf16.mxu0 %v1241
    %1765 = vmatpush1.bf16.msra.mxu0 %v1240
    %1766 = vmatprep.subr.bf16.mxu0 %v1239
    %1767 = vmatpush1.bf16.msra.mxu0 %v1238
    %1768 = vmatprep.subr.bf16.mxu0 %v1237
    %1769 = vmatpush1.bf16.msra.mxu0 %v1236
    %1770 = vmatprep.subr.bf16.mxu0 %v1235
    %1771 = vmatpush1.bf16.msra.mxu0 %v1234
    %1772 = vmatprep.subr.bf16.mxu0 %v1233
    %1773 = vmatpush1.bf16.msra.mxu0 %v1232
    %1774 = vmatprep.subr.bf16.mxu0 %v1231
    %1775 = vmatpush1.bf16.msra.mxu0 %v1230
    %1776 = vmatprep.subr.bf16.mxu0 %v1261
    %1777 = vmatpush2.bf16.msra.mxu0 %v1260
    %1778 = vmatprep.subr.bf16.mxu0 %v1259
    %1779 = vmatpush2.bf16.msra.mxu0 %v1258
    %1780 = vmatprep.subr.bf16.mxu0 %v1257
    %1781 = vmatpush2.bf16.msra.mxu0 %v1256
    %1782 = vmatprep.subr.bf16.mxu0 %v1255
    %1783 = vmatpush2.bf16.msra.mxu0 %v1254
    %1784 = vmatprep.subr.bf16.mxu0 %v1253
    %1785 = vmatpush2.bf16.msra.mxu0 %v1252
    %1786 = vmatprep.subr.bf16.mxu0 %v1251
    %1787 = vmatpush2.bf16.msra.mxu0 %v1250
    %1788 = vmatprep.subr.bf16.mxu0 %v1249
    %1789 = vmatpush2.bf16.msra.mxu0 %v1248
    %1790 = vmatprep.subr.bf16.mxu0 %v1247
    %1791 = vmatpush2.bf16.msra.mxu0 %v1246
    %1792 = vmatprep.mubr.bf16.mxu0 %v119
    %1793 = vmatmul.mubr.bf16.gmra.mxu0 %v118
    %v1794 = vpop.f32.mrf.mxu0
    %v1795 = vadd.f32 %v1754, %v1794
    %v1796 = vpop.f32.mrf.mxu0
    %v1797 = vadd.f32 %v1756, %v1796
    %v1798 = vpop.f32.mrf.mxu0
    %v1799 = vpop.f32.mrf.mxu0
    %1800 = vdwg.mxu0
    %1801 = vmatprep.subr.bf16.mxu0 %v1277
    %1802 = vmatpush1.bf16.msra.mxu0 %v1276
    %1803 = vmatprep.subr.bf16.mxu0 %v1275
    %1804 = vmatpush1.bf16.msra.mxu0 %v1274
    %1805 = vmatprep.subr.bf16.mxu0 %v1273
    %1806 = vmatpush1.bf16.msra.mxu0 %v1272
    %1807 = vmatprep.subr.bf16.mxu0 %v1271
    %1808 = vmatpush1.bf16.msra.mxu0 %v1270
    %1809 = vmatprep.subr.bf16.mxu0 %v1269
    %1810 = vmatpush1.bf16.msra.mxu0 %v1268
    %1811 = vmatprep.subr.bf16.mxu0 %v1267
    %1812 = vmatpush1.bf16.msra.mxu0 %v1266
    %1813 = vmatprep.subr.bf16.mxu0 %v1265
    %1814 = vmatpush1.bf16.msra.mxu0 %v1264
    %1815 = vmatprep.subr.bf16.mxu0 %v1263
    %1816 = vmatpush1.bf16.msra.mxu0 %v1262
    %1817 = vmatprep.subr.bf16.mxu0 %v1293
    %1818 = vmatpush2.bf16.msra.mxu0 %v1292
    %1819 = vmatprep.subr.bf16.mxu0 %v1291
    %1820 = vmatpush2.bf16.msra.mxu0 %v1290
    %1821 = vmatprep.subr.bf16.mxu0 %v1289
    %1822 = vmatpush2.bf16.msra.mxu0 %v1288
    %1823 = vmatprep.subr.bf16.mxu0 %v1287
    %1824 = vmatpush2.bf16.msra.mxu0 %v1286
    %1825 = vmatprep.subr.bf16.mxu0 %v1285
    %1826 = vmatpush2.bf16.msra.mxu0 %v1284
    %1827 = vmatprep.subr.bf16.mxu0 %v1283
    %1828 = vmatpush2.bf16.msra.mxu0 %v1282
    %1829 = vmatprep.subr.bf16.mxu0 %v1281
    %1830 = vmatpush2.bf16.msra.mxu0 %v1280
    %1831 = vmatprep.subr.bf16.mxu0 %v1279
    %1832 = vmatpush2.bf16.msra.mxu0 %v1278
    %1833 = vmatprep.mubr.bf16.mxu0 %v121
    %1834 = vmatmul.mubr.bf16.gmra.mxu0 %v120
    %v1835 = vpop.f32.mrf.mxu0
    %v1836 = vadd.f32 %v1795, %v1835
    %v1837 = vpop.f32.mrf.mxu0
    %v1838 = vadd.f32 %v1797, %v1837
    %v1839 = vpop.f32.mrf.mxu0
    %v1840 = vpop.f32.mrf.mxu0
    %1841 = vdwg.mxu0
    %1842 = vmatprep.subr.bf16.mxu0 %v1309
    %1843 = vmatpush1.bf16.msra.mxu0 %v1308
    %1844 = vmatprep.subr.bf16.mxu0 %v1307
    %1845 = vmatpush1.bf16.msra.mxu0 %v1306
    %1846 = vmatprep.subr.bf16.mxu0 %v1305
    %1847 = vmatpush1.bf16.msra.mxu0 %v1304
    %1848 = vmatprep.subr.bf16.mxu0 %v1303
    %1849 = vmatpush1.bf16.msra.mxu0 %v1302
    %1850 = vmatprep.subr.bf16.mxu0 %v1301
    %1851 = vmatpush1.bf16.msra.mxu0 %v1300
    %1852 = vmatprep.subr.bf16.mxu0 %v1299
    %1853 = vmatpush1.bf16.msra.mxu0 %v1298
    %1854 = vmatprep.subr.bf16.mxu0 %v1297
    %1855 = vmatpush1.bf16.msra.mxu0 %v1296
    %1856 = vmatprep.subr.bf16.mxu0 %v1295
    %1857 = vmatpush1.bf16.msra.mxu0 %v1294
    %1858 = vmatprep.subr.bf16.mxu0 %v1325
    %1859 = vmatpush2.bf16.msra.mxu0 %v1324
    %1860 = vmatprep.subr.bf16.mxu0 %v1323
    %1861 = vmatpush2.bf16.msra.mxu0 %v1322
    %1862 = vmatprep.subr.bf16.mxu0 %v1321
    %1863 = vmatpush2.bf16.msra.mxu0 %v1320
    %1864 = vmatprep.subr.bf16.mxu0 %v1319
    %1865 = vmatpush2.bf16.msra.mxu0 %v1318
    %1866 = vmatprep.subr.bf16.mxu0 %v1317
    %1867 = vmatpush2.bf16.msra.mxu0 %v1316
    %1868 = vmatprep.subr.bf16.mxu0 %v1315
    %1869 = vmatpush2.bf16.msra.mxu0 %v1314
    %1870 = vmatprep.subr.bf16.mxu0 %v1313
    %1871 = vmatpush2.bf16.msra.mxu0 %v1312
    %1872 = vmatprep.subr.bf16.mxu0 %v1311
    %1873 = vmatpush2.bf16.msra.mxu0 %v1310
    %1874 = vmatprep.mubr.bf16.mxu0 %v123
    %1875 = vmatmul.mubr.bf16.gmra.mxu0 %v122
    %v1876 = vpop.f32.mrf.mxu0
    %v1877 = vadd.f32 %v1836, %v1876
    %v1878 = vpop.f32.mrf.mxu0
    %v1879 = vadd.f32 %v1838, %v1878
    %v1880 = vpop.f32.mrf.mxu0
    %v1881 = vpop.f32.mrf.mxu0
    %1882 = vdwg.mxu0
    %1883 = vmatprep.subr.bf16.mxu0 %v1341
    %1884 = vmatpush1.bf16.msra.mxu0 %v1340
    %1885 = vmatprep.subr.bf16.mxu0 %v1339
    %1886 = vmatpush1.bf16.msra.mxu0 %v1338
    %1887 = vmatprep.subr.bf16.mxu0 %v1337
    %1888 = vmatpush1.bf16.msra.mxu0 %v1336
    %1889 = vmatprep.subr.bf16.mxu0 %v1335
    %1890 = vmatpush1.bf16.msra.mxu0 %v1334
    %1891 = vmatprep.subr.bf16.mxu0 %v1333
    %1892 = vmatpush1.bf16.msra.mxu0 %v1332
    %1893 = vmatprep.subr.bf16.mxu0 %v1331
    %1894 = vmatpush1.bf16.msra.mxu0 %v1330
    %1895 = vmatprep.subr.bf16.mxu0 %v1329
    %1896 = vmatpush1.bf16.msra.mxu0 %v1328
    %1897 = vmatprep.subr.bf16.mxu0 %v1327
    %1898 = vmatpush1.bf16.msra.mxu0 %v1326
    %1899 = vmatprep.subr.bf16.mxu0 %v1357
    %1900 = vmatpush2.bf16.msra.mxu0 %v1356
    %1901 = vmatprep.subr.bf16.mxu0 %v1355
    %1902 = vmatpush2.bf16.msra.mxu0 %v1354
    %1903 = vmatprep.subr.bf16.mxu0 %v1353
    %1904 = vmatpush2.bf16.msra.mxu0 %v1352
    %1905 = vmatprep.subr.bf16.mxu0 %v1351
    %1906 = vmatpush2.bf16.msra.mxu0 %v1350
    %1907 = vmatprep.subr.bf16.mxu0 %v1349
    %1908 = vmatpush2.bf16.msra.mxu0 %v1348
    %1909 = vmatprep.subr.bf16.mxu0 %v1347
    %1910 = vmatpush2.bf16.msra.mxu0 %v1346
    %1911 = vmatprep.subr.bf16.mxu0 %v1345
    %1912 = vmatpush2.bf16.msra.mxu0 %v1344
    %1913 = vmatprep.subr.bf16.mxu0 %v1343
    %1914 = vmatpush2.bf16.msra.mxu0 %v1342
    %1915 = vmatprep.mubr.bf16.mxu0 %v125
    %1916 = vmatmul.mubr.bf16.gmra.mxu0 %v124
    %v1917 = vpop.f32.mrf.mxu0
    %v1918 = vadd.f32 %v1877, %v1917
    %v1919 = vpop.f32.mrf.mxu0
    %v1920 = vadd.f32 %v1879, %v1919
    %v1921 = vpop.f32.mrf.mxu0
    %v1922 = vpop.f32.mrf.mxu0
    %1923 = vdwg.mxu0
    %1924 = vmatprep.subr.bf16.mxu0 %v1373
    %1925 = vmatpush1.bf16.msra.mxu0 %v1372
    %1926 = vmatprep.subr.bf16.mxu0 %v1371
    %1927 = vmatpush1.bf16.msra.mxu0 %v1370
    %1928 = vmatprep.subr.bf16.mxu0 %v1369
    %1929 = vmatpush1.bf16.msra.mxu0 %v1368
    %1930 = vmatprep.subr.bf16.mxu0 %v1367
    %1931 = vmatpush1.bf16.msra.mxu0 %v1366
    %1932 = vmatprep.subr.bf16.mxu0 %v1365
    %1933 = vmatpush1.bf16.msra.mxu0 %v1364
    %1934 = vmatprep.subr.bf16.mxu0 %v1363
    %1935 = vmatpush1.bf16.msra.mxu0 %v1362
    %1936 = vmatprep.subr.bf16.mxu0 %v1361
    %1937 = vmatpush1.bf16.msra.mxu0 %v1360
    %1938 = vmatprep.subr.bf16.mxu0 %v1359
    %1939 = vmatpush1.bf16.msra.mxu0 %v1358
    %1940 = vmatprep.subr.bf16.mxu0 %v1389
    %1941 = vmatpush2.bf16.msra.mxu0 %v1388
    %1942 = vmatprep.subr.bf16.mxu0 %v1387
    %1943 = vmatpush2.bf16.msra.mxu0 %v1386
    %1944 = vmatprep.subr.bf16.mxu0 %v1385
    %1945 = vmatpush2.bf16.msra.mxu0 %v1384
    %1946 = vmatprep.subr.bf16.mxu0 %v1383
    %1947 = vmatpush2.bf16.msra.mxu0 %v1382
    %1948 = vmatprep.subr.bf16.mxu0 %v1381
    %1949 = vmatpush2.bf16.msra.mxu0 %v1380
    %1950 = vmatprep.subr.bf16.mxu0 %v1379
    %1951 = vmatpush2.bf16.msra.mxu0 %v1378
    %1952 = vmatprep.subr.bf16.mxu0 %v1377
    %1953 = vmatpush2.bf16.msra.mxu0 %v1376
    %1954 = vmatprep.subr.bf16.mxu0 %v1375
    %1955 = vmatpush2.bf16.msra.mxu0 %v1374
    %1956 = vmatprep.mubr.bf16.mxu0 %v127
    %1957 = vmatmul.mubr.bf16.gmra.mxu0 %v126
    %v1958 = vpop.f32.mrf.mxu0
    %v1959 = vadd.f32 %v1918, %v1958
    %v1960 = vpop.f32.mrf.mxu0
    %v1961 = vadd.f32 %v1920, %v1960
    %v1962 = vpop.f32.mrf.mxu0
    %v1963 = vpop.f32.mrf.mxu0
    %1964 = vdwg.mxu0
    %1965 = vmatprep.subr.bf16.mxu0 %v1405
    %1966 = vmatpush1.bf16.msra.mxu0 %v1404
    %1967 = vmatprep.subr.bf16.mxu0 %v1403
    %1968 = vmatpush1.bf16.msra.mxu0 %v1402
    %1969 = vmatprep.subr.bf16.mxu0 %v1401
    %1970 = vmatpush1.bf16.msra.mxu0 %v1400
    %1971 = vmatprep.subr.bf16.mxu0 %v1399
    %1972 = vmatpush1.bf16.msra.mxu0 %v1398
    %1973 = vmatprep.subr.bf16.mxu0 %v1397
    %1974 = vmatpush1.bf16.msra.mxu0 %v1396
    %1975 = vmatprep.subr.bf16.mxu0 %v1395
    %1976 = vmatpush1.bf16.msra.mxu0 %v1394
    %1977 = vmatprep.subr.bf16.mxu0 %v1393
    %1978 = vmatpush1.bf16.msra.mxu0 %v1392
    %1979 = vmatprep.subr.bf16.mxu0 %v1391
    %1980 = vmatpush1.bf16.msra.mxu0 %v1390
    %1981 = vmatprep.subr.bf16.mxu0 %v1421
    %1982 = vmatpush2.bf16.msra.mxu0 %v1420
    %1983 = vmatprep.subr.bf16.mxu0 %v1419
    %1984 = vmatpush2.bf16.msra.mxu0 %v1418
    %1985 = vmatprep.subr.bf16.mxu0 %v1417
    %1986 = vmatpush2.bf16.msra.mxu0 %v1416
    %1987 = vmatprep.subr.bf16.mxu0 %v1415
    %1988 = vmatpush2.bf16.msra.mxu0 %v1414
    %1989 = vmatprep.subr.bf16.mxu0 %v1413
    %1990 = vmatpush2.bf16.msra.mxu0 %v1412
    %1991 = vmatprep.subr.bf16.mxu0 %v1411
    %1992 = vmatpush2.bf16.msra.mxu0 %v1410
    %1993 = vmatprep.subr.bf16.mxu0 %v1409
    %1994 = vmatpush2.bf16.msra.mxu0 %v1408
    %1995 = vmatprep.subr.bf16.mxu0 %v1407
    %1996 = vmatpush2.bf16.msra.mxu0 %v1406
    %1997 = vmatprep.mubr.bf16.mxu0 %v129
    %1998 = vmatmul.mubr.bf16.gmra.mxu0 %v128
    %v1999 = vpop.f32.mrf.mxu0
    %v2000 = vadd.f32 %v1959, %v1999
    %v2001 = vpop.f32.mrf.mxu0
    %v2002 = vadd.f32 %v1961, %v2001
    %v2003 = vpop.f32.mrf.mxu0
    %v2004 = vpop.f32.mrf.mxu0
    %2005 = vdwg.mxu0
    %v2006 = vmul.f32 %v2000, 0.5
    %v2007 = vmul.f32 %v2002, 0.5
    %v2008 = vmul.f32 %v2000, 0.70710677
    %v2009 = vmul.f32 %v2002, 0.70710677
    %vm2010 = vcmp.lt.f32.partialorder %v2008, 0.0
    %vm2011 = vcmp.lt.f32.partialorder %v2009, 0.0
    %v2012 = vsel %vm2010, -1.0, 1.0
    %v2013 = vsel %vm2011, -1.0, 1.0
    %v2014 = vand.u32 2147483647, %v2008
    %v2015 = vand.u32 2147483647, %v2009
    %v2016 = vmul.f32 %v2014, 0.3275911
    %v2017 = vmul.f32 %v2015, 0.3275911
    %v2018 = vadd.f32 %v2016, 1.0
    %v2019 = vadd.f32 %v2017, 1.0
    %v2020 = vrcp.pop %v2018
    %v2021 = vmul.f32 1.0, %v2020
    %v2022 = vrcp.pop %v2019
    %v2023 = vmul.f32 1.0, %v2022
    %v2024 = vmul.f32 %v2021, 1.0614054
    %v2025 = vmul.f32 %v2023, 1.0614054
    %v2026 = vadd.f32 %v2024, -1.4531521
    %v2027 = vadd.f32 %v2025, -1.4531521
    %v2028 = vmul.f32 %v2026, %v2021
    %v2029 = vmul.f32 %v2027, %v2023
    %v2030 = vadd.f32 %v2028, 1.4214138
    %v2031 = vadd.f32 %v2029, 1.4214138
    %v2032 = vmul.f32 %v2030, %v2021
    %v2033 = vmul.f32 %v2031, %v2023
    %v2034 = vadd.f32 %v2032, -0.28449672
    %v2035 = vadd.f32 %v2033, -0.28449672
    %v2036 = vmul.f32 %v2034, %v2021
    %v2037 = vmul.f32 %v2035, %v2023
    %v2038 = vadd.f32 %v2036, 0.2548296
    %v2039 = vadd.f32 %v2037, 0.2548296
    %v2040 = vmul.f32 %v2038, %v2021
    %v2041 = vmul.f32 %v2039, %v2023
    %v2042 = vsub.f32 0.0, %v2014
    %v2043 = vsub.f32 0.0, %v2015
    %v2044 = vmul.f32 %v2042, %v2014
    %v2045 = vmul.f32 %v2043, %v2015
    %v2046 = vmul.f32 %v2044, 1.442695
    %v2047 = vpow.pop %v2046
    %v2048 = vmul.f32 %v2045, 1.442695
    %v2049 = vpow.pop %v2048
    %v2050 = vmul.f32 %v2040, %v2047
    %v2051 = vmul.f32 %v2041, %v2049
    %v2052 = vsub.f32 1.0, %v2050
    %v2053 = vsub.f32 1.0, %v2051
    %v2054 = vmul.f32 %v2012, %v2052
    %v2055 = vmul.f32 %v2013, %v2053
    %v2056 = vadd.f32 %v2054, 1.0
    %v2057 = vadd.f32 %v2055, 1.0
    %v2058 = vmul.f32 %v2006, %v2056
    %v2059 = vmul.f32 %v2007, %v2057
    %v2060 = vpack.c.bf16 %v2058, %v2058
    %v2061 = vpack.c.bf16 %v2059, %v2059
    %v2062 = vld [vmem:[%s3] sm:$0xf]
    %v2063 = vld [vmem:[%s3 + $0x4] sm:$0xf]
    %v2064 = vld [vmem:[%s3 + $0x8] sm:$0xf]
    %v2065 = vld [vmem:[%s3 + $0xc] sm:$0xf]
    %v2066 = vld [vmem:[%s3 + $0x10] sm:$0xf]
    %v2067 = vld [vmem:[%s3 + $0x14] sm:$0xf]
    %v2068 = vld [vmem:[%s3 + $0x18] sm:$0xf]
    %v2069 = vld [vmem:[%s3 + $0x1c] sm:$0xf]
    %v2070 = vld [vmem:[%s3 + $0x20] sm:$0xf]
    %v2071 = vld [vmem:[%s3 + $0x24] sm:$0xf]
    %v2072 = vld [vmem:[%s3 + $0x28] sm:$0xf]
    %v2073 = vld [vmem:[%s3 + $0x2c] sm:$0xf]
    %v2074 = vld [vmem:[%s3 + $0x30] sm:$0xf]
    %v2075 = vld [vmem:[%s3 + $0x34] sm:$0xf]
    %v2076 = vld [vmem:[%s3 + $0x38] sm:$0xf]
    %v2077 = vld [vmem:[%s3 + $0x3c] sm:$0xf]
    %v2078 = vld [vmem:[%s3 + $0x40] sm:$0xf]
    %v2079 = vld [vmem:[%s3 + $0x44] sm:$0xf]
    %v2080 = vld [vmem:[%s3 + $0x48] sm:$0xf]
    %v2081 = vld [vmem:[%s3 + $0x4c] sm:$0xf]
    %v2082 = vld [vmem:[%s3 + $0x50] sm:$0xf]
    %v2083 = vld [vmem:[%s3 + $0x54] sm:$0xf]
    %v2084 = vld [vmem:[%s3 + $0x58] sm:$0xf]
    %v2085 = vld [vmem:[%s3 + $0x5c] sm:$0xf]
    %v2086 = vld [vmem:[%s3 + $0x60] sm:$0xf]
    %v2087 = vld [vmem:[%s3 + $0x64] sm:$0xf]
    %v2088 = vld [vmem:[%s3 + $0x68] sm:$0xf]
    %v2089 = vld [vmem:[%s3 + $0x6c] sm:$0xf]
    %v2090 = vld [vmem:[%s3 + $0x70] sm:$0xf]
    %v2091 = vld [vmem:[%s3 + $0x74] sm:$0xf]
    %v2092 = vld [vmem:[%s3 + $0x78] sm:$0xf]
    %v2093 = vld [vmem:[%s3 + $0x7c] sm:$0xf]
    %v2094 = vld [vmem:[%s4] sm:$0x1]
    %v2096 = vlaneseq
    %v2097 = vshrl.u32 %v2096, 7
    %v2098 = vsub.s32 0, %v2097
    %v2099 = vrot.slane %v2094, %v2098
    %v2133 = vunpack.c.l.b16 %v2062
    %v2134 = vunpack.c.l.b16 %v2063
    %v2135 = vunpack.c.l.b16 %v2064
    %v2136 = vunpack.c.l.b16 %v2065
    %v2137 = vunpack.c.l.b16 %v2066
    %v2138 = vunpack.c.l.b16 %v2067
    %v2139 = vunpack.c.l.b16 %v2068
    %v2140 = vunpack.c.l.b16 %v2069
    %v2141 = vunpack.c.l.b16 %v2070
    %v2142 = vunpack.c.l.b16 %v2071
    %v2143 = vunpack.c.l.b16 %v2072
    %v2144 = vunpack.c.l.b16 %v2073
    %v2145 = vunpack.c.l.b16 %v2074
    %v2146 = vunpack.c.l.b16 %v2075
    %v2147 = vunpack.c.l.b16 %v2076
    %v2148 = vunpack.c.l.b16 %v2077
    %v2149 = vunpack.c.l.b16 %v2078
    %v2150 = vunpack.c.l.b16 %v2079
    %v2151 = vunpack.c.l.b16 %v2080
    %v2152 = vunpack.c.l.b16 %v2081
    %v2153 = vunpack.c.l.b16 %v2082
    %v2154 = vunpack.c.l.b16 %v2083
    %v2155 = vunpack.c.l.b16 %v2084
    %v2156 = vunpack.c.l.b16 %v2085
    %v2157 = vunpack.c.l.b16 %v2086
    %v2158 = vunpack.c.l.b16 %v2087
    %v2159 = vunpack.c.l.b16 %v2088
    %v2160 = vunpack.c.l.b16 %v2089
    %v2161 = vunpack.c.l.b16 %v2090
    %v2162 = vunpack.c.l.b16 %v2091
    %v2163 = vunpack.c.l.b16 %v2092
    %v2164 = vunpack.c.l.b16 %v2093
    %v2165 = vpack.c.b16 %v2134, %v2133
    %v2166 = vpack.c.b16 %v2136, %v2135
    %v2167 = vpack.c.b16 %v2138, %v2137
    %v2168 = vpack.c.b16 %v2140, %v2139
    %v2169 = vpack.c.b16 %v2142, %v2141
    %v2170 = vpack.c.b16 %v2144, %v2143
    %v2171 = vpack.c.b16 %v2146, %v2145
    %v2172 = vpack.c.b16 %v2148, %v2147
    %v2173 = vpack.c.b16 %v2150, %v2149
    %v2174 = vpack.c.b16 %v2152, %v2151
    %v2175 = vpack.c.b16 %v2154, %v2153
    %v2176 = vpack.c.b16 %v2156, %v2155
    %v2177 = vpack.c.b16 %v2158, %v2157
    %v2178 = vpack.c.b16 %v2160, %v2159
    %v2179 = vpack.c.b16 %v2162, %v2161
    %v2180 = vpack.c.b16 %v2164, %v2163
    %2197 = vmatprep.subr.bf16.mxu0 0
    %2198 = vmatpush1.bf16.msra.mxu0 %v2172
    %2199 = vmatprep.subr.bf16.mxu0 0
    %2200 = vmatpush1.bf16.msra.mxu0 %v2171
    %2201 = vmatprep.subr.bf16.mxu0 0
    %2202 = vmatpush1.bf16.msra.mxu0 %v2170
    %2203 = vmatprep.subr.bf16.mxu0 0
    %2204 = vmatpush1.bf16.msra.mxu0 %v2169
    %2205 = vmatprep.subr.bf16.mxu0 0
    %2206 = vmatpush1.bf16.msra.mxu0 %v2168
    %2207 = vmatprep.subr.bf16.mxu0 0
    %2208 = vmatpush1.bf16.msra.mxu0 %v2167
    %2209 = vmatprep.subr.bf16.mxu0 0
    %2210 = vmatpush1.bf16.msra.mxu0 %v2166
    %2211 = vmatprep.subr.bf16.mxu0 0
    %2212 = vmatpush1.bf16.msra.mxu0 %v2165
    %2213 = vmatprep.subr.bf16.mxu0 0
    %2214 = vmatpush2.bf16.msra.mxu0 %v2180
    %2215 = vmatprep.subr.bf16.mxu0 0
    %2216 = vmatpush2.bf16.msra.mxu0 %v2179
    %2217 = vmatprep.subr.bf16.mxu0 0
    %2218 = vmatpush2.bf16.msra.mxu0 %v2178
    %2219 = vmatprep.subr.bf16.mxu0 0
    %2220 = vmatpush2.bf16.msra.mxu0 %v2177
    %2221 = vmatprep.subr.bf16.mxu0 0
    %2222 = vmatpush2.bf16.msra.mxu0 %v2176
    %2223 = vmatprep.subr.bf16.mxu0 0
    %2224 = vmatpush2.bf16.msra.mxu0 %v2175
    %2225 = vmatprep.subr.bf16.mxu0 0
    %2226 = vmatpush2.bf16.msra.mxu0 %v2174
    %2227 = vmatprep.subr.bf16.mxu0 0
    %2228 = vmatpush2.bf16.msra.mxu0 %v2173
    %2229 = vmatprep.mubr.bf16.mxu0 %v2061
    %2230 = vmatmul.mubr.bf16.gmra.mxu0 %v2060
    %v2231 = vpop.f32.mrf.mxu0
    %v2232 = vadd.f32 %v2099, %v2231
    %v2233 = vpop.f32.mrf.mxu0
    %v2234 = vpop.f32.mrf.mxu0
    %v2235 = vpop.f32.mrf.mxu0
    %2236 = vdwg.mxu0
    %vm2237 = vcmask 74752
    %v2238 = vsel %vm2237, %v2232, -inf
    %2239 = vmax.xlane.f32.xlu0 %v2238
    %v2240 = vpop.xlane.xlu0 %2239
    %v2241 = vsub.f32 %v2232, %v2240
    %v2242 = vmul.f32 %v2241, 1.442695
    %v2243 = vpow.pop %v2242
    %v2244 = vsel %vm2237, %v2243, 0.0
    %2245 = vadd.xlane.f32.xlu0 %v2244
    %v2246 = vpop.xlane.xlu0 %2245
    %v2247 = vrcp.pop %v2246
    %v2248 = vmul.f32 %v2243, %v2247
    %2249 = vst.msk [vmem:[#allocation2] sm:$0x3] %vm2237, %v2248
    // Predicated region
    $region22: #{attention_net_forward.3} parent=1 // pred_check
      _
    $region23: #{attention_net_forward.3} parent=1 // pred_check_branch
      %2251 = sbr.rel (0) target = $region25
    $region24: #{attention_net_forward.3} parent=1 // pred_region
      %s2253 = ssub.s32 32, 32
      %2254 = vsyncadd [#allocation3], %s2253
      %s2256 = sshll.u32 [#allocation2], 4
      %s2257 = int_to_ptr.vmem [resolvable:$true] %s2256
      %2259 = dma.vmem_to_hbm [thread:$0]  %s2257, 32, %s5, [#allocation3]
    $region25: #{attention_net_forward.3} parent=1 // pred_fallthru
      _
    // Predicated region
    $region26: #{attention_net_forward.3} parent=1 // pred_check
      _
    $region27: #{attention_net_forward.3} parent=1 // pred_check_branch
      %2261 = sbr.rel (0) target = $region29
    $region28: #{attention_net_forward.3} parent=1 // pred_region
      %2262 = dma.done [#allocation3], 32
    $region29: #{attention_net_forward.3} parent=1 // pred_fallthru
      _
    %2263 = vsyncpa [#allocation3], 1

// kernel: attention_net_forward.2
$region0: #{attention_net_forward.2}
  #allocation0 [shape = 'u32[]', space=smem, size = 0x4, offset = 0x4, fixed_abs, tag = 'smem constant byte address 0x4 - core index']
  #allocation1 [shape = 'u32[144,128]{1,0:T(1,128)}', space=vmem, size = 0x12000, scoped, tag = 'internal scratch']
  #allocation2 [shape = 'f32[128,32]{1,0:T(8,128)}', space=vmem, size = 0x10000, scoped, tag = 'scratch operand']
  %s0 = inlined_call_operand.vmem [shape: bf16[128,16], index: 0, kind: input, shape index: {}]
  %s1 = inlined_call_operand.vmem [shape: bf16[16,32], index: 1, kind: input, shape index: {}]
  %s2 = inlined_call_operand.vmem [shape: f32[1,32], index: 2, kind: input, shape index: {}]
  %s3 = inlined_call_operand.vmem [shape: bf16[12,4,32,8], index: 3, kind: input, shape index: {}]
  %s4 = inlined_call_operand.vmem [shape: bf16[12,4,32,8], index: 4, kind: input, shape index: {}]
  %s5 = inlined_call_operand.vmem [shape: bf16[12,4,32,8], index: 5, kind: input, shape index: {}]
  %s6 = inlined_call_operand.vmem [shape: f32[12,4,1,8], index: 6, kind: input, shape index: {}]
  %s7 = inlined_call_operand.vmem [shape: f32[12,4,1,8], index: 7, kind: input, shape index: {}]
  %s8 = inlined_call_operand.vmem [shape: f32[12,4,1,8], index: 8, kind: input, shape index: {}]
  %s9 = inlined_call_operand.vmem [shape: bf16[12,4,8,32], index: 9, kind: input, shape index: {}]
  %s10 = inlined_call_operand.vmem [shape: f32[12,1,32], index: 10, kind: input, shape index: {}]
  %s11 = inlined_call_operand.vmem [shape: f32[12,1,32], index: 11, kind: input, shape index: {}]
  %s12 = inlined_call_operand.vmem [shape: f32[12,1,32], index: 12, kind: input, shape index: {}]
  %s13 = inlined_call_operand.vmem [shape: bf16[12,32,2048], index: 13, kind: input, shape index: {}]
  %s14 = inlined_call_operand.vmem [shape: f32[12,1,2048], index: 14, kind: input, shape index: {}]
  %s15 = inlined_call_operand.vmem [shape: bf16[12,2048,32], index: 15, kind: input, shape index: {}]
  %s16 = inlined_call_operand.vmem [shape: f32[12,1,32], index: 16, kind: input, shape index: {}]
  %s17 = inlined_call_operand.vmem [shape: f32[12,1,32], index: 17, kind: input, shape index: {}]
  %s18 = inlined_call_operand.vmem [shape: f32[12,1,32], index: 18, kind: input, shape index: {}]
  %s19 = inlined_call_operand.vmem [shape: f32[1,32], index: 19, kind: input, shape index: {}]
  %s20 = inlined_call_operand.vmem [shape: f32[1,32], index: 20, kind: input, shape index: {}]
  %s21 = inlined_call_operand.vmem [shape: f32[128,32], index: 21, kind: output, shape index: {}]
  %s22 = sld [smem:[#allocation0]]
  $region125: #{attention_net_forward.2} parent=0
    _
  %s24 = ssub.s32 1, %s22
  %s25 = scalar_select 0, %s24, %s22
  loop: start=0, step=1, limit=14
  $region2: #{attention_net_forward.2} parent=0 // loop_pre_header
    _
  $region3: #{attention_net_forward.2} parent=0 // loop_header
    %s27 = sphi 0, %s31
    %p28 = scmp.ge.s32.totalorder %s27, 14
    %s35 = sphi 0, %s35
    %s37 = sphi 0, %s35
    %s38 = sphi 0, %s37
    %s52 = sphi 0, %s38
    %s56 = sphi 0, %s56
    %s58 = sphi 0, %s56
    %s59 = sphi 0, %s58
    %s73 = sphi 0, %s59
    %s77 = sphi 0, %s77
    %s79 = sphi 0, %s77
    %s80 = sphi 0, %s79
    %s94 = sphi 0, %s80
    %s100 = sphi 0, %s102
    %s103 = sphi 0, %s100
    %s104 = sphi 0, %s103
    %s120 = sphi 0, %s104
    %s126 = sphi 0, %s128
    %s129 = sphi 0, %s126
    %s130 = sphi 0, %s129
    %s146 = sphi 0, %s130
    %s152 = sphi 0, %s154
    %s155 = sphi 0, %s152
    %s156 = sphi 0, %s155
    %s172 = sphi 0, %s156
    %s178 = sphi 0, %s180
    %s181 = sphi 0, %s178
    %s182 = sphi 0, %s181
    %s198 = sphi 0, %s182
    %s204 = sphi 0, %s206
    %s207 = sphi 0, %s204
    %s208 = sphi 0, %s207
    %s224 = sphi 0, %s208
    %s230 = sphi 0, %s232
    %s233 = sphi 0, %s230
    %s234 = sphi 0, %s233
    %s250 = sphi 0, %s234
    %s256 = sphi 0, %s258
    %s259 = sphi 0, %s256
    %s260 = sphi 0, %s259
    %s276 = sphi 0, %s260
    %s282 = sphi 0, %s284
    %s285 = sphi 0, %s282
    %s286 = sphi 0, %s285
    %s302 = sphi 0, %s286
    %s308 = sphi 0, %s310
    %s311 = sphi 0, %s308
    %s312 = sphi 0, %s311
    %s328 = sphi 0, %s312
    %s334 = sphi 0, %s336
    %s337 = sphi 0, %s334
    %s338 = sphi 0, %s337
    %s354 = sphi 0, %s338
    %s360 = sphi 0, %s362
    %s363 = sphi 0, %s360
    %s364 = sphi 0, %s363
    %s380 = sphi 0, %s364
    %s386 = sphi 0, %s388
    %s389 = sphi 0, %s386
    %s390 = sphi 0, %s389
    %s406 = sphi 0, %s390
    %s412 = sphi 0, %s414
    %s415 = sphi 0, %s412
    %s416 = sphi 0, %s415
    %s432 = sphi 0, %s416
    %s438 = sphi 0, %s440
    %s441 = sphi 0, %s438
    %s442 = sphi 0, %s441
    %s458 = sphi 0, %s442
    %s464 = sphi 0, %s466
    %s467 = sphi 0, %s464
    %s468 = sphi 0, %s467
    %s484 = sphi 0, %s468
    %s490 = sphi 0, %s492
    %s493 = sphi 0, %s490
    %s494 = sphi 0, %s493
    %s510 = sphi 0, %s494
    %s514 = sphi 0, %s514
    %s516 = sphi 0, %s514
    %s517 = sphi 0, %s516
    %s531 = sphi 0, %s517
    %s535 = sphi 0, %s535
    %s537 = sphi 0, %s535
    %s538 = sphi 0, %s537
    %s552 = sphi 0, %s538
    %s556 = sphi 0, %s556
    %s558 = sphi 0, %s556
    %s559 = sphi 0, %s558
    %s573 = sphi 0, %s559
  $region4: #{attention_net_forward.2} parent=0 // loop_header_branch
    %30 = sbr.rel (%p28) target = $region8
  $region5: #{attention_net_forward.2} parent=0 // loop_body
    %s32 = ssub.s32 %s27, 1
    %s33 = ssub.s32 %s27, 2
    %s34 = sadd.s32 %s27, 1
    %s36 = sadd.s32 %s35, 1
    %p39 = scmp.eq.s32.totalorder %s27, 11
    %p40 = scmp.ne.s32.totalorder %s35, %s37
    %p41 = scmp.eq.s32.totalorder %s27, 0
    %p42 = por %p40, %p41
    %p43 = scmp.ne.s32.totalorder %s35, %s37
    %p44 = scmp.eq.s32.totalorder %s32, 11
    %p45 = por %p43, %p44
    %p46 = scmp.ne.s32.totalorder %s37, %s38
    %p47 = scmp.eq.s32.totalorder %s32, 0
    %p48 = por %p46, %p47
    %p49 = scmp.ne.s32.totalorder %s37, %s38
    %p50 = scmp.eq.s32.totalorder %s33, 11
    %p51 = por %p49, %p50
    %p53 = scmp.ne.s32.totalorder %s38, %s52
    %p54 = scmp.eq.s32.totalorder %s33, 0
    %p55 = por %p53, %p54
    %s57 = sadd.s32 %s56, 1
    %p60 = scmp.eq.s32.totalorder %s27, 11
    %p61 = scmp.ne.s32.totalorder %s56, %s58
    %p62 = scmp.eq.s32.totalorder %s27, 0
    %p63 = por %p61, %p62
    %p64 = scmp.ne.s32.totalorder %s56, %s58
    %p65 = scmp.eq.s32.totalorder %s32, 11
    %p66 = por %p64, %p65
    %p67 = scmp.ne.s32.totalorder %s58, %s59
    %p68 = scmp.eq.s32.totalorder %s32, 0
    %p69 = por %p67, %p68
    %p70 = scmp.ne.s32.totalorder %s58, %s59
    %p71 = scmp.eq.s32.totalorder %s33, 11
    %p72 = por %p70, %p71
    %p74 = scmp.ne.s32.totalorder %s59, %s73
    %p75 = scmp.eq.s32.totalorder %s33, 0
    %p76 = por %p74, %p75
    %s78 = sadd.s32 %s77, 1
    %p81 = scmp.eq.s32.totalorder %s27, 11
    %p82 = scmp.ne.s32.totalorder %s77, %s79
    %p83 = scmp.eq.s32.totalorder %s27, 0
    %p84 = por %p82, %p83
    %p85 = scmp.ne.s32.totalorder %s77, %s79
    %p86 = scmp.eq.s32.totalorder %s32, 11
    %p87 = por %p85, %p86
    %p88 = scmp.ne.s32.totalorder %s79, %s80
    %p89 = scmp.eq.s32.totalorder %s32, 0
    %p90 = por %p88, %p89
    %p91 = scmp.ne.s32.totalorder %s79, %s80
    %p92 = scmp.eq.s32.totalorder %s33, 11
    %p93 = por %p91, %p92
    %p95 = scmp.ne.s32.totalorder %s80, %s94
    %p96 = scmp.eq.s32.totalorder %s33, 0
    %p97 = por %p95, %p96
    %s98 = ssub.s32 %s27, %s34
    %p99 = scmp.eq.s32.totalorder %s98, 0
    %s101 = sadd.s32 %s100, 1
    %s102 = scalar_select %p99, %s100, %s101
    %p105 = pneg %p99
    %p106 = scmp.eq.s32.totalorder %s27, 11
    %p107 = por %p105, %p106
    %p108 = scmp.ne.s32.totalorder %s100, %s103
    %p109 = scmp.eq.s32.totalorder %s27, 0
    %p110 = por %p108, %p109
    %p111 = scmp.ne.s32.totalorder %s100, %s103
    %p112 = scmp.eq.s32.totalorder %s32, 11
    %p113 = por %p111, %p112
    %p114 = scmp.ne.s32.totalorder %s103, %s104
    %p115 = scmp.eq.s32.totalorder %s32, 0
    %p116 = por %p114, %p115
    %p117 = scmp.ne.s32.totalorder %s103, %s104
    %p118 = scmp.eq.s32.totalorder %s33, 11
    %p119 = por %p117, %p118
    %p121 = scmp.ne.s32.totalorder %s104, %s120
    %p122 = scmp.eq.s32.totalorder %s33, 0
    %p123 = por %p121, %p122
    %s124 = ssub.s32 %s27, %s34
    %p125 = scmp.eq.s32.totalorder %s124, 0
    %s127 = sadd.s32 %s126, 1
    %s128 = scalar_select %p125, %s126, %s127
    %p131 = pneg %p125
    %p132 = scmp.eq.s32.totalorder %s27, 11
    %p133 = por %p131, %p132
    %p134 = scmp.ne.s32.totalorder %s126, %s129
    %p135 = scmp.eq.s32.totalorder %s27, 0
    %p136 = por %p134, %p135
    %p137 = scmp.ne.s32.totalorder %s126, %s129
    %p138 = scmp.eq.s32.totalorder %s32, 11
    %p139 = por %p137, %p138
    %p140 = scmp.ne.s32.totalorder %s129, %s130
    %p141 = scmp.eq.s32.totalorder %s32, 0
    %p142 = por %p140, %p141
    %p143 = scmp.ne.s32.totalorder %s129, %s130
    %p144 = scmp.eq.s32.totalorder %s33, 11
    %p145 = por %p143, %p144
    %p147 = scmp.ne.s32.totalorder %s130, %s146
    %p148 = scmp.eq.s32.totalorder %s33, 0
    %p149 = por %p147, %p148
    %s150 = ssub.s32 %s27, %s34
    %p151 = scmp.eq.s32.totalorder %s150, 0
    %s153 = sadd.s32 %s152, 1
    %s154 = scalar_select %p151, %s152, %s153
    %p157 = pneg %p151
    %p158 = scmp.eq.s32.totalorder %s27, 11
    %p159 = por %p157, %p158
    %p160 = scmp.ne.s32.totalorder %s152, %s155
    %p161 = scmp.eq.s32.totalorder %s27, 0
    %p162 = por %p160, %p161
    %p163 = scmp.ne.s32.totalorder %s152, %s155
    %p164 = scmp.eq.s32.totalorder %s32, 11
    %p165 = por %p163, %p164
    %p166 = scmp.ne.s32.totalorder %s155, %s156
    %p167 = scmp.eq.s32.totalorder %s32, 0
    %p168 = por %p166, %p167
    %p169 = scmp.ne.s32.totalorder %s155, %s156
    %p170 = scmp.eq.s32.totalorder %s33, 11
    %p171 = por %p169, %p170
    %p173 = scmp.ne.s32.totalorder %s156, %s172
    %p174 = scmp.eq.s32.totalorder %s33, 0
    %p175 = por %p173, %p174
    %s176 = ssub.s32 %s27, %s34
    %p177 = scmp.eq.s32.totalorder %s176, 0
    %s179 = sadd.s32 %s178, 1
    %s180 = scalar_select %p177, %s178, %s179
    %p183 = pneg %p177
    %p184 = scmp.eq.s32.totalorder %s27, 11
    %p185 = por %p183, %p184
    %p186 = scmp.ne.s32.totalorder %s178, %s181
    %p187 = scmp.eq.s32.totalorder %s27, 0
    %p188 = por %p186, %p187
    %p189 = scmp.ne.s32.totalorder %s178, %s181
    %p190 = scmp.eq.s32.totalorder %s32, 11
    %p191 = por %p189, %p190
    %p192 = scmp.ne.s32.totalorder %s181, %s182
    %p193 = scmp.eq.s32.totalorder %s32, 0
    %p194 = por %p192, %p193
    %p195 = scmp.ne.s32.totalorder %s181, %s182
    %p196 = scmp.eq.s32.totalorder %s33, 11
    %p197 = por %p195, %p196
    %p199 = scmp.ne.s32.totalorder %s182, %s198
    %p200 = scmp.eq.s32.totalorder %s33, 0
    %p201 = por %p199, %p200
    %s202 = ssub.s32 %s27, %s34
    %p203 = scmp.eq.s32.totalorder %s202, 0
    %s205 = sadd.s32 %s204, 1
    %s206 = scalar_select %p203, %s204, %s205
    %p209 = pneg %p203
    %p210 = scmp.eq.s32.totalorder %s27, 11
    %p211 = por %p209, %p210
    %p212 = scmp.ne.s32.totalorder %s204, %s207
    %p213 = scmp.eq.s32.totalorder %s27, 0
    %p214 = por %p212, %p213
    %p215 = scmp.ne.s32.totalorder %s204, %s207
    %p216 = scmp.eq.s32.totalorder %s32, 11
    %p217 = por %p215, %p216
    %p218 = scmp.ne.s32.totalorder %s207, %s208
    %p219 = scmp.eq.s32.totalorder %s32, 0
    %p220 = por %p218, %p219
    %p221 = scmp.ne.s32.totalorder %s207, %s208
    %p222 = scmp.eq.s32.totalorder %s33, 11
    %p223 = por %p221, %p222
    %p225 = scmp.ne.s32.totalorder %s208, %s224
    %p226 = scmp.eq.s32.totalorder %s33, 0
    %p227 = por %p225, %p226
    %s228 = ssub.s32 %s27, %s34
    %p229 = scmp.eq.s32.totalorder %s228, 0
    %s231 = sadd.s32 %s230, 1
    %s232 = scalar_select %p229, %s230, %s231
    %p235 = pneg %p229
    %p236 = scmp.eq.s32.totalorder %s27, 11
    %p237 = por %p235, %p236
    %p238 = scmp.ne.s32.totalorder %s230, %s233
    %p239 = scmp.eq.s32.totalorder %s27, 0
    %p240 = por %p238, %p239
    %p241 = scmp.ne.s32.totalorder %s230, %s233
    %p242 = scmp.eq.s32.totalorder %s32, 11
    %p243 = por %p241, %p242
    %p244 = scmp.ne.s32.totalorder %s233, %s234
    %p245 = scmp.eq.s32.totalorder %s32, 0
    %p246 = por %p244, %p245
    %p247 = scmp.ne.s32.totalorder %s233, %s234
    %p248 = scmp.eq.s32.totalorder %s33, 11
    %p249 = por %p247, %p248
    %p251 = scmp.ne.s32.totalorder %s234, %s250
    %p252 = scmp.eq.s32.totalorder %s33, 0
    %p253 = por %p251, %p252
    %s254 = ssub.s32 %s27, %s34
    %p255 = scmp.eq.s32.totalorder %s254, 0
    %s257 = sadd.s32 %s256, 1
    %s258 = scalar_select %p255, %s256, %s257
    %p261 = pneg %p255
    %p262 = scmp.eq.s32.totalorder %s27, 11
    %p263 = por %p261, %p262
    %p264 = scmp.ne.s32.totalorder %s256, %s259
    %p265 = scmp.eq.s32.totalorder %s27, 0
    %p266 = por %p264, %p265
    %p267 = scmp.ne.s32.totalorder %s256, %s259
    %p268 = scmp.eq.s32.totalorder %s32, 11
    %p269 = por %p267, %p268
    %p270 = scmp.ne.s32.totalorder %s259, %s260
    %p271 = scmp.eq.s32.totalorder %s32, 0
    %p272 = por %p270, %p271
    %p273 = scmp.ne.s32.totalorder %s259, %s260
    %p274 = scmp.eq.s32.totalorder %s33, 11
    %p275 = por %p273, %p274
    %p277 = scmp.ne.s32.totalorder %s260, %s276
    %p278 = scmp.eq.s32.totalorder %s33, 0
    %p279 = por %p277, %p278
    %s280 = ssub.s32 %s27, %s34
    %p281 = scmp.eq.s32.totalorder %s280, 0
    %s283 = sadd.s32 %s282, 1
    %s284 = scalar_select %p281, %s282, %s283
    %p287 = pneg %p281
    %p288 = scmp.eq.s32.totalorder %s27, 11
    %p289 = por %p287, %p288
    %p290 = scmp.ne.s32.totalorder %s282, %s285
    %p291 = scmp.eq.s32.totalorder %s27, 0
    %p292 = por %p290, %p291
    %p293 = scmp.ne.s32.totalorder %s282, %s285
    %p294 = scmp.eq.s32.totalorder %s32, 11
    %p295 = por %p293, %p294
    %p296 = scmp.ne.s32.totalorder %s285, %s286
    %p297 = scmp.eq.s32.totalorder %s32, 0
    %p298 = por %p296, %p297
    %p299 = scmp.ne.s32.totalorder %s285, %s286
    %p300 = scmp.eq.s32.totalorder %s33, 11
    %p301 = por %p299, %p300
    %p303 = scmp.ne.s32.totalorder %s286, %s302
    %p304 = scmp.eq.s32.totalorder %s33, 0
    %p305 = por %p303, %p304
    %s306 = ssub.s32 %s27, %s34
    %p307 = scmp.eq.s32.totalorder %s306, 0
    %s309 = sadd.s32 %s308, 1
    %s310 = scalar_select %p307, %s308, %s309
    %p313 = pneg %p307
    %p314 = scmp.eq.s32.totalorder %s27, 11
    %p315 = por %p313, %p314
    %p316 = scmp.ne.s32.totalorder %s308, %s311
    %p317 = scmp.eq.s32.totalorder %s27, 0
    %p318 = por %p316, %p317
    %p319 = scmp.ne.s32.totalorder %s308, %s311
    %p320 = scmp.eq.s32.totalorder %s32, 11
    %p321 = por %p319, %p320
    %p322 = scmp.ne.s32.totalorder %s311, %s312
    %p323 = scmp.eq.s32.totalorder %s32, 0
    %p324 = por %p322, %p323
    %p325 = scmp.ne.s32.totalorder %s311, %s312
    %p326 = scmp.eq.s32.totalorder %s33, 11
    %p327 = por %p325, %p326
    %p329 = scmp.ne.s32.totalorder %s312, %s328
    %p330 = scmp.eq.s32.totalorder %s33, 0
    %p331 = por %p329, %p330
    %s332 = ssub.s32 %s27, %s34
    %p333 = scmp.eq.s32.totalorder %s332, 0
    %s335 = sadd.s32 %s334, 1
    %s336 = scalar_select %p333, %s334, %s335
    %p339 = pneg %p333
    %p340 = scmp.eq.s32.totalorder %s27, 11
    %p341 = por %p339, %p340
    %p342 = scmp.ne.s32.totalorder %s334, %s337
    %p343 = scmp.eq.s32.totalorder %s27, 0
    %p344 = por %p342, %p343
    %p345 = scmp.ne.s32.totalorder %s334, %s337
    %p346 = scmp.eq.s32.totalorder %s32, 11
    %p347 = por %p345, %p346
    %p348 = scmp.ne.s32.totalorder %s337, %s338
    %p349 = scmp.eq.s32.totalorder %s32, 0
    %p350 = por %p348, %p349
    %p351 = scmp.ne.s32.totalorder %s337, %s338
    %p352 = scmp.eq.s32.totalorder %s33, 11
    %p353 = por %p351, %p352
    %p355 = scmp.ne.s32.totalorder %s338, %s354
    %p356 = scmp.eq.s32.totalorder %s33, 0
    %p357 = por %p355, %p356
    %s358 = ssub.s32 %s27, %s34
    %p359 = scmp.eq.s32.totalorder %s358, 0
    %s361 = sadd.s32 %s360, 1
    %s362 = scalar_select %p359, %s360, %s361
    %p365 = pneg %p359
    %p366 = scmp.eq.s32.totalorder %s27, 11
    %p367 = por %p365, %p366
    %p368 = scmp.ne.s32.totalorder %s360, %s363
    %p369 = scmp.eq.s32.totalorder %s27, 0
    %p370 = por %p368, %p369
    %p371 = scmp.ne.s32.totalorder %s360, %s363
    %p372 = scmp.eq.s32.totalorder %s32, 11
    %p373 = por %p371, %p372
    %p374 = scmp.ne.s32.totalorder %s363, %s364
    %p375 = scmp.eq.s32.totalorder %s32, 0
    %p376 = por %p374, %p375
    %p377 = scmp.ne.s32.totalorder %s363, %s364
    %p378 = scmp.eq.s32.totalorder %s33, 11
    %p379 = por %p377, %p378
    %p381 = scmp.ne.s32.totalorder %s364, %s380
    %p382 = scmp.eq.s32.totalorder %s33, 0
    %p383 = por %p381, %p382
    %s384 = ssub.s32 %s27, %s34
    %p385 = scmp.eq.s32.totalorder %s384, 0
    %s387 = sadd.s32 %s386, 1
    %s388 = scalar_select %p385, %s386, %s387
    %p391 = pneg %p385
    %p392 = scmp.eq.s32.totalorder %s27, 11
    %p393 = por %p391, %p392
    %p394 = scmp.ne.s32.totalorder %s386, %s389
    %p395 = scmp.eq.s32.totalorder %s27, 0
    %p396 = por %p394, %p395
    %p397 = scmp.ne.s32.totalorder %s386, %s389
    %p398 = scmp.eq.s32.totalorder %s32, 11
    %p399 = por %p397, %p398
    %p400 = scmp.ne.s32.totalorder %s389, %s390
    %p401 = scmp.eq.s32.totalorder %s32, 0
    %p402 = por %p400, %p401
    %p403 = scmp.ne.s32.totalorder %s389, %s390
    %p404 = scmp.eq.s32.totalorder %s33, 11
    %p405 = por %p403, %p404
    %p407 = scmp.ne.s32.totalorder %s390, %s406
    %p408 = scmp.eq.s32.totalorder %s33, 0
    %p409 = por %p407, %p408
    %s410 = ssub.s32 %s27, %s34
    %p411 = scmp.eq.s32.totalorder %s410, 0
    %s413 = sadd.s32 %s412, 1
    %s414 = scalar_select %p411, %s412, %s413
    %p417 = pneg %p411
    %p418 = scmp.eq.s32.totalorder %s27, 11
    %p419 = por %p417, %p418
    %p420 = scmp.ne.s32.totalorder %s412, %s415
    %p421 = scmp.eq.s32.totalorder %s27, 0
    %p422 = por %p420, %p421
    %p423 = scmp.ne.s32.totalorder %s412, %s415
    %p424 = scmp.eq.s32.totalorder %s32, 11
    %p425 = por %p423, %p424
    %p426 = scmp.ne.s32.totalorder %s415, %s416
    %p427 = scmp.eq.s32.totalorder %s32, 0
    %p428 = por %p426, %p427
    %p429 = scmp.ne.s32.totalorder %s415, %s416
    %p430 = scmp.eq.s32.totalorder %s33, 11
    %p431 = por %p429, %p430
    %p433 = scmp.ne.s32.totalorder %s416, %s432
    %p434 = scmp.eq.s32.totalorder %s33, 0
    %p435 = por %p433, %p434
    %s436 = ssub.s32 %s27, %s34
    %p437 = scmp.eq.s32.totalorder %s436, 0
    %s439 = sadd.s32 %s438, 1
    %s440 = scalar_select %p437, %s438, %s439
    %p443 = pneg %p437
    %p444 = scmp.eq.s32.totalorder %s27, 11
    %p445 = por %p443, %p444
    %p446 = scmp.ne.s32.totalorder %s438, %s441
    %p447 = scmp.eq.s32.totalorder %s27, 0
    %p448 = por %p446, %p447
    %p449 = scmp.ne.s32.totalorder %s438, %s441
    %p450 = scmp.eq.s32.totalorder %s32, 11
    %p451 = por %p449, %p450
    %p452 = scmp.ne.s32.totalorder %s441, %s442
    %p453 = scmp.eq.s32.totalorder %s32, 0
    %p454 = por %p452, %p453
    %p455 = scmp.ne.s32.totalorder %s441, %s442
    %p456 = scmp.eq.s32.totalorder %s33, 11
    %p457 = por %p455, %p456
    %p459 = scmp.ne.s32.totalorder %s442, %s458
    %p460 = scmp.eq.s32.totalorder %s33, 0
    %p461 = por %p459, %p460
    %s462 = ssub.s32 %s27, %s34
    %p463 = scmp.eq.s32.totalorder %s462, 0
    %s465 = sadd.s32 %s464, 1
    %s466 = scalar_select %p463, %s464, %s465
    %p469 = pneg %p463
    %p470 = scmp.eq.s32.totalorder %s27, 11
    %p471 = por %p469, %p470
    %p472 = scmp.ne.s32.totalorder %s464, %s467
    %p473 = scmp.eq.s32.totalorder %s27, 0
    %p474 = por %p472, %p473
    %p475 = scmp.ne.s32.totalorder %s464, %s467
    %p476 = scmp.eq.s32.totalorder %s32, 11
    %p477 = por %p475, %p476
    %p478 = scmp.ne.s32.totalorder %s467, %s468
    %p479 = scmp.eq.s32.totalorder %s32, 0
    %p480 = por %p478, %p479
    %p481 = scmp.ne.s32.totalorder %s467, %s468
    %p482 = scmp.eq.s32.totalorder %s33, 11
    %p483 = por %p481, %p482
    %p485 = scmp.ne.s32.totalorder %s468, %s484
    %p486 = scmp.eq.s32.totalorder %s33, 0
    %p487 = por %p485, %p486
    %s488 = ssub.s32 %s27, %s34
    %p489 = scmp.eq.s32.totalorder %s488, 0
    %s491 = sadd.s32 %s490, 1
    %s492 = scalar_select %p489, %s490, %s491
    %p495 = pneg %p489
    %p496 = scmp.eq.s32.totalorder %s27, 11
    %p497 = por %p495, %p496
    %p498 = scmp.ne.s32.totalorder %s490, %s493
    %p499 = scmp.eq.s32.totalorder %s27, 0
    %p500 = por %p498, %p499
    %p501 = scmp.ne.s32.totalorder %s490, %s493
    %p502 = scmp.eq.s32.totalorder %s32, 11
    %p503 = por %p501, %p502
    %p504 = scmp.ne.s32.totalorder %s493, %s494
    %p505 = scmp.eq.s32.totalorder %s32, 0
    %p506 = por %p504, %p505
    %p507 = scmp.ne.s32.totalorder %s493, %s494
    %p508 = scmp.eq.s32.totalorder %s33, 11
    %p509 = por %p507, %p508
    %p511 = scmp.ne.s32.totalorder %s494, %s510
    %p512 = scmp.eq.s32.totalorder %s33, 0
    %p513 = por %p511, %p512
    %s515 = sadd.s32 %s514, 1
    %p518 = scmp.eq.s32.totalorder %s27, 11
    %p519 = scmp.ne.s32.totalorder %s514, %s516
    %p520 = scmp.eq.s32.totalorder %s27, 0
    %p521 = por %p519, %p520
    %p522 = scmp.ne.s32.totalorder %s514, %s516
    %p523 = scmp.eq.s32.totalorder %s32, 11
    %p524 = por %p522, %p523
    %p525 = scmp.ne.s32.totalorder %s516, %s517
    %p526 = scmp.eq.s32.totalorder %s32, 0
    %p527 = por %p525, %p526
    %p528 = scmp.ne.s32.totalorder %s516, %s517
    %p529 = scmp.eq.s32.totalorder %s33, 11
    %p530 = por %p528, %p529
    %p532 = scmp.ne.s32.totalorder %s517, %s531
    %p533 = scmp.eq.s32.totalorder %s33, 0
    %p534 = por %p532, %p533
    %s536 = sadd.s32 %s535, 1
    %p539 = scmp.eq.s32.totalorder %s27, 11
    %p540 = scmp.ne.s32.totalorder %s535, %s537
    %p541 = scmp.eq.s32.totalorder %s27, 0
    %p542 = por %p540, %p541
    %p543 = scmp.ne.s32.totalorder %s535, %s537
    %p544 = scmp.eq.s32.totalorder %s32, 11
    %p545 = por %p543, %p544
    %p546 = scmp.ne.s32.totalorder %s537, %s538
    %p547 = scmp.eq.s32.totalorder %s32, 0
    %p548 = por %p546, %p547
    %p549 = scmp.ne.s32.totalorder %s537, %s538
    %p550 = scmp.eq.s32.totalorder %s33, 11
    %p551 = por %p549, %p550
    %p553 = scmp.ne.s32.totalorder %s538, %s552
    %p554 = scmp.eq.s32.totalorder %s33, 0
    %p555 = por %p553, %p554
    %s557 = sadd.s32 %s556, 1
    %p560 = scmp.eq.s32.totalorder %s27, 11
    %p561 = scmp.ne.s32.totalorder %s556, %s558
    %p562 = scmp.eq.s32.totalorder %s27, 0
    %p563 = por %p561, %p562
    %p564 = scmp.ne.s32.totalorder %s556, %s558
    %p565 = scmp.eq.s32.totalorder %s32, 11
    %p566 = por %p564, %p565
    %p567 = scmp.ne.s32.totalorder %s558, %s559
    %p568 = scmp.eq.s32.totalorder %s32, 0
    %p569 = por %p567, %p568
    %p570 = scmp.ne.s32.totalorder %s558, %s559
    %p571 = scmp.eq.s32.totalorder %s33, 11
    %p572 = por %p570, %p571
    %p574 = scmp.ne.s32.totalorder %s559, %s573
    %p575 = scmp.eq.s32.totalorder %s33, 0
    %p576 = por %p574, %p575
    %p577 = scmp.le.s32.totalorder 1, %s27
    %p578 = scmp.lt.s32.totalorder %s27, 13
    %p579 = pnand %p577, %p578
    %p580 = pneg %p579
    // Predicated region
    $region9: #{attention_net_forward.2} parent=5 // pred_check
      _
    $region10: #{attention_net_forward.2} parent=5 // pred_check_branch
      %582 = sbr.rel (%p579) target = $region12
    $region11: #{attention_net_forward.2} parent=5 // pred_region
      %s583 = ssub.s32 %s27, 1
      // Predicated region
      $region13: #{attention_net_forward.2} parent=11 // pred_check
        %p584 = pneg %p48
      $region14: #{attention_net_forward.2} parent=11 // pred_check_branch
        %586 = sbr.rel (%p584) target = $region16
      $region15: #{attention_net_forward.2} parent=11 // pred_region
        _
      $region16: #{attention_net_forward.2} parent=11 // pred_fallthru
        _
      // Predicated region
      $region17: #{attention_net_forward.2} parent=11 // pred_check
        %p587 = pneg %p69
      $region18: #{attention_net_forward.2} parent=11 // pred_check_branch
        %589 = sbr.rel (%p587) target = $region20
      $region19: #{attention_net_forward.2} parent=11 // pred_region
        _
      $region20: #{attention_net_forward.2} parent=11 // pred_fallthru
        _
      // Predicated region
      $region21: #{attention_net_forward.2} parent=11 // pred_check
        %p590 = pneg %p90
      $region22: #{attention_net_forward.2} parent=11 // pred_check_branch
        %592 = sbr.rel (%p590) target = $region24
      $region23: #{attention_net_forward.2} parent=11 // pred_region
        _
      $region24: #{attention_net_forward.2} parent=11 // pred_fallthru
        _
      // Predicated region
      $region25: #{attention_net_forward.2} parent=11 // pred_check
        %p593 = pneg %p527
      $region26: #{attention_net_forward.2} parent=11 // pred_check_branch
        %595 = sbr.rel (%p593) target = $region28
      $region27: #{attention_net_forward.2} parent=11 // pred_region
        _
      $region28: #{attention_net_forward.2} parent=11 // pred_fallthru
        _
      // Predicated region
      $region29: #{attention_net_forward.2} parent=11 // pred_check
        %p596 = pneg %p548
      $region30: #{attention_net_forward.2} parent=11 // pred_check_branch
        %598 = sbr.rel (%p596) target = $region32
      $region31: #{attention_net_forward.2} parent=11 // pred_region
        _
      $region32: #{attention_net_forward.2} parent=11 // pred_fallthru
        _
    $region12: #{attention_net_forward.2} parent=5 // pred_fallthru
      _
    %p599 = scmp.lt.s32.totalorder %s27, 12
    // Predicated region
    $region33: #{attention_net_forward.2} parent=5 // pred_check
      %p600 = pneg %p599
    $region34: #{attention_net_forward.2} parent=5 // pred_check_branch
      %602 = sbr.rel (%p600) target = $region36
    $region35: #{attention_net_forward.2} parent=5 // pred_region
      // Predicated region
      $region37: #{attention_net_forward.2} parent=35 // pred_check
        %p603 = pneg %p110
      $region38: #{attention_net_forward.2} parent=35 // pred_check_branch
        %605 = sbr.rel (%p603) target = $region40
      $region39: #{attention_net_forward.2} parent=35 // pred_region
        %p606 = scmp.lt.s32.totalorder %s27, 11
        %s607 = scalar_select %p606, %s27, 11
        %s608 = smul.addr %s607, 16
        %s609 = smul.addr %s608, 4
        %s610 = scalar_lea.vmem %s3, %s609
      $region40: #{attention_net_forward.2} parent=35 // pred_fallthru
        _
      // Predicated region
      $region41: #{attention_net_forward.2} parent=35 // pred_check
        %p611 = pneg %p136
      $region42: #{attention_net_forward.2} parent=35 // pred_check_branch
        %613 = sbr.rel (%p611) target = $region44
      $region43: #{attention_net_forward.2} parent=35 // pred_region
        %p614 = scmp.lt.s32.totalorder %s27, 11
        %s615 = scalar_select %p614, %s27, 11
        %s616 = smul.addr %s615, 16
        %s617 = smul.addr %s616, 4
        %s618 = scalar_lea.vmem %s4, %s617
      $region44: #{attention_net_forward.2} parent=35 // pred_fallthru
        _
      // Predicated region
      $region45: #{attention_net_forward.2} parent=35 // pred_check
        %p619 = pneg %p162
      $region46: #{attention_net_forward.2} parent=35 // pred_check_branch
        %621 = sbr.rel (%p619) target = $region48
      $region47: #{attention_net_forward.2} parent=35 // pred_region
        %p622 = scmp.lt.s32.totalorder %s27, 11
        %s623 = scalar_select %p622, %s27, 11
        %s624 = smul.addr %s623, 16
        %s625 = smul.addr %s624, 4
        %s626 = scalar_lea.vmem %s5, %s625
      $region48: #{attention_net_forward.2} parent=35 // pred_fallthru
        _
      // Predicated region
      $region49: #{attention_net_forward.2} parent=35 // pred_check
        %p627 = pneg %p188
      $region50: #{attention_net_forward.2} parent=35 // pred_check_branch
        %629 = sbr.rel (%p627) target = $region52
      $region51: #{attention_net_forward.2} parent=35 // pred_region
        %p630 = scmp.lt.s32.totalorder %s27, 11
        %s631 = scalar_select %p630, %s27, 11
        %s632 = smul.addr %s631, 4
        %s633 = scalar_lea.vmem %s6, %s632
      $region52: #{attention_net_forward.2} parent=35 // pred_fallthru
        _
      // Predicated region
      $region53: #{attention_net_forward.2} parent=35 // pred_check
        %p634 = pneg %p214
      $region54: #{attention_net_forward.2} parent=35 // pred_check_branch
        %636 = sbr.rel (%p634) target = $region56
      $region55: #{attention_net_forward.2} parent=35 // pred_region
        %p637 = scmp.lt.s32.totalorder %s27, 11
        %s638 = scalar_select %p637, %s27, 11
        %s639 = smul.addr %s638, 4
        %s640 = scalar_lea.vmem %s7, %s639
      $region56: #{attention_net_forward.2} parent=35 // pred_fallthru
        _
      // Predicated region
      $region57: #{attention_net_forward.2} parent=35 // pred_check
        %p641 = pneg %p240
      $region58: #{attention_net_forward.2} parent=35 // pred_check_branch
        %643 = sbr.rel (%p641) target = $region60
      $region59: #{attention_net_forward.2} parent=35 // pred_region
        %p644 = scmp.lt.s32.totalorder %s27, 11
        %s645 = scalar_select %p644, %s27, 11
        %s646 = smul.addr %s645, 4
        %s647 = scalar_lea.vmem %s8, %s646
      $region60: #{attention_net_forward.2} parent=35 // pred_fallthru
        _
      // Predicated region
      $region61: #{attention_net_forward.2} parent=35 // pred_check
        %p648 = pneg %p266
      $region62: #{attention_net_forward.2} parent=35 // pred_check_branch
        %650 = sbr.rel (%p648) target = $region64
      $region63: #{attention_net_forward.2} parent=35 // pred_region
        %p651 = scmp.lt.s32.totalorder %s27, 11
        %s652 = scalar_select %p651, %s27, 11
        %s653 = smul.addr %s652, 4
        %s654 = smul.addr %s653, 4
        %s655 = scalar_lea.vmem %s9, %s654
      $region64: #{attention_net_forward.2} parent=35 // pred_fallthru
        _
      // Predicated region
      $region65: #{attention_net_forward.2} parent=35 // pred_check
        %p656 = pneg %p292
      $region66: #{attention_net_forward.2} parent=35 // pred_check_branch
        %658 = sbr.rel (%p656) target = $region68
      $region67: #{attention_net_forward.2} parent=35 // pred_region
        %p659 = scmp.lt.s32.totalorder %s27, 11
        %s660 = scalar_select %p659, %s27, 11
        %s661 = scalar_lea.vmem %s10, %s660
      $region68: #{attention_net_forward.2} parent=35 // pred_fallthru
        _
      // Predicated region
      $region69: #{attention_net_forward.2} parent=35 // pred_check
        %p662 = pneg %p318
      $region70: #{attention_net_forward.2} parent=35 // pred_check_branch
        %664 = sbr.rel (%p662) target = $region72
      $region71: #{attention_net_forward.2} parent=35 // pred_region
        %p665 = scmp.lt.s32.totalorder %s27, 11
        %s666 = scalar_select %p665, %s27, 11
        %s667 = scalar_lea.vmem %s11, %s666
      $region72: #{attention_net_forward.2} parent=35 // pred_fallthru
        _
      // Predicated region
      $region73: #{attention_net_forward.2} parent=35 // pred_check
        %p668 = pneg %p344
      $region74: #{attention_net_forward.2} parent=35 // pred_check_branch
        %670 = sbr.rel (%p668) target = $region76
      $region75: #{attention_net_forward.2} parent=35 // pred_region
        %p671 = scmp.lt.s32.totalorder %s27, 11
        %s672 = scalar_select %p671, %s27, 11
        %s673 = scalar_lea.vmem %s12, %s672
      $region76: #{attention_net_forward.2} parent=35 // pred_fallthru
        _
      // Predicated region
      $region77: #{attention_net_forward.2} parent=35 // pred_check
        %p674 = pneg %p370
      $region78: #{attention_net_forward.2} parent=35 // pred_check_branch
        %676 = sbr.rel (%p674) target = $region80
      $region79: #{attention_net_forward.2} parent=35 // pred_region
        %p677 = scmp.lt.s32.totalorder %s27, 11
        %s678 = scalar_select %p677, %s27, 11
        %s679 = smul.addr %s678, 64
        %s680 = smul.addr %s679, 4
        %s681 = scalar_lea.vmem %s13, %s680
      $region80: #{attention_net_forward.2} parent=35 // pred_fallthru
        _
      // Predicated region
      $region81: #{attention_net_forward.2} parent=35 // pred_check
        %p682 = pneg %p396
      $region82: #{attention_net_forward.2} parent=35 // pred_check_branch
        %684 = sbr.rel (%p682) target = $region84
      $region83: #{attention_net_forward.2} parent=35 // pred_region
        %p685 = scmp.lt.s32.totalorder %s27, 11
        %s686 = scalar_select %p685, %s27, 11
        %s687 = smul.addr %s686, 16
        %s688 = scalar_lea.vmem %s14, %s687
      $region84: #{attention_net_forward.2} parent=35 // pred_fallthru
        _
      // Predicated region
      $region85: #{attention_net_forward.2} parent=35 // pred_check
        %p689 = pneg %p422
      $region86: #{attention_net_forward.2} parent=35 // pred_check_branch
        %691 = sbr.rel (%p689) target = $region88
      $region87: #{attention_net_forward.2} parent=35 // pred_region
        %p692 = scmp.lt.s32.totalorder %s27, 11
        %s693 = scalar_select %p692, %s27, 11
        %s694 = smul.addr %s693, 256
        %s695 = smul.addr %s694, 4
        %s696 = scalar_lea.vmem %s15, %s695
      $region88: #{attention_net_forward.2} parent=35 // pred_fallthru
        _
      // Predicated region
      $region89: #{attention_net_forward.2} parent=35 // pred_check
        %p697 = pneg %p448
      $region90: #{attention_net_forward.2} parent=35 // pred_check_branch
        %699 = sbr.rel (%p697) target = $region92
      $region91: #{attention_net_forward.2} parent=35 // pred_region
        %p700 = scmp.lt.s32.totalorder %s27, 11
        %s701 = scalar_select %p700, %s27, 11
        %s702 = scalar_lea.vmem %s16, %s701
      $region92: #{attention_net_forward.2} parent=35 // pred_fallthru
        _
      // Predicated region
      $region93: #{attention_net_forward.2} parent=35 // pred_check
        %p703 = pneg %p474
      $region94: #{attention_net_forward.2} parent=35 // pred_check_branch
        %705 = sbr.rel (%p703) target = $region96
      $region95: #{attention_net_forward.2} parent=35 // pred_region
        %p706 = scmp.lt.s32.totalorder %s27, 11
        %s707 = scalar_select %p706, %s27, 11
        %s708 = scalar_lea.vmem %s17, %s707
      $region96: #{attention_net_forward.2} parent=35 // pred_fallthru
        _
      // Predicated region
      $region97: #{attention_net_forward.2} parent=35 // pred_check
        %p709 = pneg %p500
      $region98: #{attention_net_forward.2} parent=35 // pred_check_branch
        %711 = sbr.rel (%p709) target = $region100
      $region99: #{attention_net_forward.2} parent=35 // pred_region
        %p712 = scmp.lt.s32.totalorder %s27, 11
        %s713 = scalar_select %p712, %s27, 11
        %s714 = scalar_lea.vmem %s18, %s713
      $region100: #{attention_net_forward.2} parent=35 // pred_fallthru
        _
    $region36: #{attention_net_forward.2} parent=5 // pred_fallthru
      _
    %p715 = scmp.le.s32.totalorder 1, %s27
    %p716 = scmp.lt.s32.totalorder %s27, 13
    %p717 = pnand %p715, %p716
    %p718 = pneg %p717
    // Predicated region
    $region101: #{attention_net_forward.2} parent=5 // pred_check
      _
    $region102: #{attention_net_forward.2} parent=5 // pred_check_branch
      %720 = sbr.rel (%p717) target = $region104
    $region103: #{attention_net_forward.2} parent=5 // pred_region
      %s721 = ssub.s32 %s27, 1
      %p722 = pneg %p48
      %p723 = pneg %p45
      %p724 = pneg %p69
      %p725 = pneg %p66
      %p726 = pneg %p90
      %p727 = pneg %p87
      %p728 = scmp.lt.s32.totalorder %s32, 11
      %s729 = scalar_select %p728, %s32, 11
      %s730 = smul.addr %s729, 16
      %s731 = smul.addr %s730, 4
      %s732 = scalar_lea.vmem %s3, %s731
      %p733 = pneg %p116
      %p734 = pneg %p113
      %p735 = scmp.lt.s32.totalorder %s32, 11
      %s736 = scalar_select %p735, %s32, 11
      %s737 = smul.addr %s736, 16
      %s738 = smul.addr %s737, 4
      %s739 = scalar_lea.vmem %s4, %s738
      %p740 = pneg %p142
      %p741 = pneg %p139
      %p742 = scmp.lt.s32.totalorder %s32, 11
      %s743 = scalar_select %p742, %s32, 11
      %s744 = smul.addr %s743, 16
      %s745 = smul.addr %s744, 4
      %s746 = scalar_lea.vmem %s5, %s745
      %p747 = pneg %p168
      %p748 = pneg %p165
      %p749 = scmp.lt.s32.totalorder %s32, 11
      %s750 = scalar_select %p749, %s32, 11
      %s751 = smul.addr %s750, 4
      %s752 = scalar_lea.vmem %s6, %s751
      %p753 = pneg %p194
      %p754 = pneg %p191
      %p755 = scmp.lt.s32.totalorder %s32, 11
      %s756 = scalar_select %p755, %s32, 11
      %s757 = smul.addr %s756, 4
      %s758 = scalar_lea.vmem %s7, %s757
      %p759 = pneg %p220
      %p760 = pneg %p217
      %p761 = scmp.lt.s32.totalorder %s32, 11
      %s762 = scalar_select %p761, %s32, 11
      %s763 = smul.addr %s762, 4
      %s764 = scalar_lea.vmem %s8, %s763
      %p765 = pneg %p246
      %p766 = pneg %p243
      %p767 = scmp.lt.s32.totalorder %s32, 11
      %s768 = scalar_select %p767, %s32, 11
      %s769 = smul.addr %s768, 4
      %s770 = smul.addr %s769, 4
      %s771 = scalar_lea.vmem %s9, %s770
      %p772 = pneg %p272
      %p773 = pneg %p269
      %p774 = scmp.lt.s32.totalorder %s32, 11
      %s775 = scalar_select %p774, %s32, 11
      %s776 = scalar_lea.vmem %s10, %s775
      %p777 = pneg %p298
      %p778 = pneg %p295
      %p779 = scmp.lt.s32.totalorder %s32, 11
      %s780 = scalar_select %p779, %s32, 11
      %s781 = scalar_lea.vmem %s11, %s780
      %p782 = pneg %p324
      %p783 = pneg %p321
      %p784 = scmp.lt.s32.totalorder %s32, 11
      %s785 = scalar_select %p784, %s32, 11
      %s786 = scalar_lea.vmem %s12, %s785
      %p787 = pneg %p350
      %p788 = pneg %p347
      %p789 = scmp.lt.s32.totalorder %s32, 11
      %s790 = scalar_select %p789, %s32, 11
      %s791 = smul.addr %s790, 64
      %s792 = smul.addr %s791, 4
      %s793 = scalar_lea.vmem %s13, %s792
      %p794 = pneg %p376
      %p795 = pneg %p373
      %p796 = scmp.lt.s32.totalorder %s32, 11
      %s797 = scalar_select %p796, %s32, 11
      %s798 = smul.addr %s797, 16
      %s799 = scalar_lea.vmem %s14, %s798
      %p800 = pneg %p402
      %p801 = pneg %p399
      %p802 = scmp.lt.s32.totalorder %s32, 11
      %s803 = scalar_select %p802, %s32, 11
      %s804 = smul.addr %s803, 256
      %s805 = smul.addr %s804, 4
      %s806 = scalar_lea.vmem %s15, %s805
      %p807 = pneg %p428
      %p808 = pneg %p425
      %p809 = scmp.lt.s32.totalorder %s32, 11
      %s810 = scalar_select %p809, %s32, 11
      %s811 = scalar_lea.vmem %s16, %s810
      %p812 = pneg %p454
      %p813 = pneg %p451
      %p814 = scmp.lt.s32.totalorder %s32, 11
      %s815 = scalar_select %p814, %s32, 11
      %s816 = scalar_lea.vmem %s17, %s815
      %p817 = pneg %p480
      %p818 = pneg %p477
      %p819 = scmp.lt.s32.totalorder %s32, 11
      %s820 = scalar_select %p819, %s32, 11
      %s821 = scalar_lea.vmem %s18, %s820
      %p822 = pneg %p506
      %p823 = pneg %p503
      %p824 = pneg %p527
      %p825 = pneg %p524
      %p826 = pneg %p548
      %p827 = pneg %p545
      %p828 = pneg %p569
      %p829 = pneg %p566
      %p830 = scmp.lt.s32.totalorder %s32, 11
      %s831 = scalar_select %p830, %s32, 11
      %s832 = smul.addr %s831, 16
      %s833 = smul.addr %s832, 4
      %s834 = scalar_lea.vmem %s3, %s833
      %p835 = scmp.lt.s32.totalorder %s32, 11
      %s836 = scalar_select %p835, %s32, 11
      %s837 = smul.addr %s836, 16
      %s838 = smul.addr %s837, 4
      %s839 = scalar_lea.vmem %s4, %s838
      %p840 = scmp.lt.s32.totalorder %s32, 11
      %s841 = scalar_select %p840, %s32, 11
      %s842 = smul.addr %s841, 16
      %s843 = smul.addr %s842, 4
      %s844 = scalar_lea.vmem %s5, %s843
      %p845 = scmp.lt.s32.totalorder %s32, 11
      %s846 = scalar_select %p845, %s32, 11
      %s847 = smul.addr %s846, 4
      %s848 = scalar_lea.vmem %s6, %s847
      %p849 = scmp.lt.s32.totalorder %s32, 11
      %s850 = scalar_select %p849, %s32, 11
      %s851 = smul.addr %s850, 4
      %s852 = scalar_lea.vmem %s7, %s851
      %p853 = scmp.lt.s32.totalorder %s32, 11
      %s854 = scalar_select %p853, %s32, 11
      %s855 = smul.addr %s854, 4
      %s856 = scalar_lea.vmem %s8, %s855
      %p857 = scmp.lt.s32.totalorder %s32, 11
      %s858 = scalar_select %p857, %s32, 11
      %s859 = smul.addr %s858, 4
      %s860 = smul.addr %s859, 4
      %s861 = scalar_lea.vmem %s9, %s860
      %p862 = scmp.lt.s32.totalorder %s32, 11
      %s863 = scalar_select %p862, %s32, 11
      %s864 = scalar_lea.vmem %s10, %s863
      %p865 = scmp.lt.s32.totalorder %s32, 11
      %s866 = scalar_select %p865, %s32, 11
      %s867 = scalar_lea.vmem %s11, %s866
      %p868 = scmp.lt.s32.totalorder %s32, 11
      %s869 = scalar_select %p868, %s32, 11
      %s870 = scalar_lea.vmem %s12, %s869
      %p871 = scmp.lt.s32.totalorder %s32, 11
      %s872 = scalar_select %p871, %s32, 11
      %s873 = smul.addr %s872, 64
      %s874 = smul.addr %s873, 4
      %s875 = scalar_lea.vmem %s13, %s874
      %p876 = scmp.lt.s32.totalorder %s32, 11
      %s877 = scalar_select %p876, %s32, 11
      %s878 = smul.addr %s877, 16
      %s879 = scalar_lea.vmem %s14, %s878
      %p880 = scmp.lt.s32.totalorder %s32, 11
      %s881 = scalar_select %p880, %s32, 11
      %s882 = smul.addr %s881, 256
      %s883 = smul.addr %s882, 4
      %s884 = scalar_lea.vmem %s15, %s883
      %p885 = scmp.lt.s32.totalorder %s32, 11
      %s886 = scalar_select %p885, %s32, 11
      %s887 = scalar_lea.vmem %s16, %s886
      %p888 = scmp.lt.s32.totalorder %s32, 11
      %s889 = scalar_select %p888, %s32, 11
      %s890 = scalar_lea.vmem %s17, %s889
      %p891 = scmp.lt.s32.totalorder %s32, 11
      %s892 = scalar_select %p891, %s32, 11
      %s893 = scalar_lea.vmem %s18, %s892
      %p895 = scmp.eq.s32.totalorder %s32, 0
      // Predicated region
      $region105: #{attention_net_forward.2} parent=103 // pred_check
        %p896 = pneg %p895
      $region106: #{attention_net_forward.2} parent=103 // pred_check_branch
        %898 = sbr.rel (%p896) target = $region108
      $region107: #{attention_net_forward.2} parent=103 // pred_region
        %v899 = vld [vmem:[%s0] sm:$0xf]
        %v900 = vld [vmem:[%s0 + $0x4] sm:$0xf]
        %v901 = vld [vmem:[%s0 + $0x8] sm:$0xf]
        %v902 = vld [vmem:[%s0 + $0xc] sm:$0xf]
        %v903 = vld [vmem:[%s0 + $0x10] sm:$0xf]
        %v904 = vld [vmem:[%s0 + $0x14] sm:$0xf]
        %v905 = vld [vmem:[%s0 + $0x18] sm:$0xf]
        %v906 = vld [vmem:[%s0 + $0x1c] sm:$0xf]
        %v907 = vld [vmem:[%s0 + $0x20] sm:$0xf]
        %v908 = vld [vmem:[%s0 + $0x24] sm:$0xf]
        %v909 = vld [vmem:[%s0 + $0x28] sm:$0xf]
        %v910 = vld [vmem:[%s0 + $0x2c] sm:$0xf]
        %v911 = vld [vmem:[%s0 + $0x30] sm:$0xf]
        %v912 = vld [vmem:[%s0 + $0x34] sm:$0xf]
        %v913 = vld [vmem:[%s0 + $0x38] sm:$0xf]
        %v914 = vld [vmem:[%s0 + $0x3c] sm:$0xf]
        %v915 = vld [vmem:[%s1] sm:$0xf]
        %v916 = vld [vmem:[%s1 + $0x4] sm:$0xf]
        %v917 = vld [vmem:[%s2] sm:$0x1]
        %v919 = vlaneseq
        %v920 = vshrl.u32 %v919, 7
        %v921 = vsub.s32 0, %v920
        %v922 = vrot.slane %v917, %v921
        %v940 = vunpack.c.l.b16 %v899
        %v941 = vunpack.c.l.b16 %v900
        %v942 = vunpack.c.l.b16 %v901
        %v943 = vunpack.c.l.b16 %v902
        %v944 = vunpack.c.l.b16 %v903
        %v945 = vunpack.c.l.b16 %v904
        %v946 = vunpack.c.l.b16 %v905
        %v947 = vunpack.c.l.b16 %v906
        %v948 = vunpack.c.l.b16 %v907
        %v949 = vunpack.c.l.b16 %v908
        %v950 = vunpack.c.l.b16 %v909
        %v951 = vunpack.c.l.b16 %v910
        %v952 = vunpack.c.l.b16 %v911
        %v953 = vunpack.c.l.b16 %v912
        %v954 = vunpack.c.l.b16 %v913
        %v955 = vunpack.c.l.b16 %v914
        %v956 = vpack.c.b16 %v941, %v940
        %v957 = vpack.c.b16 %v943, %v942
        %v958 = vpack.c.b16 %v945, %v944
        %v959 = vpack.c.b16 %v947, %v946
        %v960 = vpack.c.b16 %v949, %v948
        %v961 = vpack.c.b16 %v951, %v950
        %v962 = vpack.c.b16 %v953, %v952
        %v963 = vpack.c.b16 %v955, %v954
        %v966 = vunpack.c.l.b16 %v915
        %v967 = vunpack.c.l.b16 %v916
        %v968 = vpack.c.b16 %v967, %v966
        %vm970 = vcmask 130048
        %v972 = vsel %vm970, %v956, 0
        %v975 = vsel %vm970, %v957, 0
        %v978 = vsel %vm970, %v958, 0
        %v981 = vsel %vm970, %v959, 0
        %v984 = vsel %vm970, %v960, 0
        %v987 = vsel %vm970, %v961, 0
        %v990 = vsel %vm970, %v962, 0
        %v993 = vsel %vm970, %v963, 0
        %995 = vmatprep.subr.bf16.mxu0 0
        %996 = vmatpush1.bf16.msra.mxu0 0
        %997 = vmatprep.subr.bf16.mxu0 0
        %998 = vmatpush1.bf16.msra.mxu0 0
        %999 = vmatprep.subr.bf16.mxu0 0
        %1000 = vmatpush1.bf16.msra.mxu0 0
        %1001 = vmatprep.subr.bf16.mxu0 0
        %1002 = vmatpush1.bf16.msra.mxu0 0
        %1003 = vmatprep.subr.bf16.mxu0 0
        %1004 = vmatpush1.bf16.msra.mxu0 0
        %1005 = vmatprep.subr.bf16.mxu0 0
        %1006 = vmatpush1.bf16.msra.mxu0 0
        %1007 = vmatprep.subr.bf16.mxu0 0
        %1008 = vmatpush1.bf16.msra.mxu0 0
        %1009 = vmatprep.subr.bf16.mxu0 0
        %1010 = vmatpush1.bf16.msra.mxu0 %v968
        %1011 = vmatprep.subr.bf16.mxu0 0
        %1012 = vmatpush2.bf16.msra.mxu0 0
        %1013 = vmatprep.subr.bf16.mxu0 0
        %1014 = vmatpush2.bf16.msra.mxu0 0
        %1015 = vmatprep.subr.bf16.mxu0 0
        %1016 = vmatpush2.bf16.msra.mxu0 0
        %1017 = vmatprep.subr.bf16.mxu0 0
        %1018 = vmatpush2.bf16.msra.mxu0 0
        %1019 = vmatprep.subr.bf16.mxu0 0
        %1020 = vmatpush2.bf16.msra.mxu0 0
        %1021 = vmatprep.subr.bf16.mxu0 0
        %1022 = vmatpush2.bf16.msra.mxu0 0
        %1023 = vmatprep.subr.bf16.mxu0 0
        %1024 = vmatpush2.bf16.msra.mxu0 0
        %1025 = vmatprep.subr.bf16.mxu0 0
        %1026 = vmatpush2.bf16.msra.mxu0 0
        %1027 = vmatprep.mubr.bf16.mxu0 0
        %1028 = vmatmul.mubr.bf16.gmra.mxu0 %v972
        %v1029 = vpop.f32.mrf.mxu0
        %v1030 = vadd.f32 %v922, %v1029
        %v1031 = vpop.f32.mrf.mxu0
        %v1032 = vpop.f32.mrf.mxu0
        %v1033 = vadd.f32 %v922, %v1032
        %v1034 = vpop.f32.mrf.mxu0
        %1035 = vmatprep.mubr.bf16.mxu0 0
        %1036 = vmatmul.mubr.bf16.gmra.mxu0 %v975
        %v1037 = vpop.f32.mrf.mxu0
        %v1038 = vadd.f32 %v922, %v1037
        %v1039 = vpop.f32.mrf.mxu0
        %v1040 = vpop.f32.mrf.mxu0
        %v1041 = vadd.f32 %v922, %v1040
        %v1042 = vpop.f32.mrf.mxu0
        %1043 = vmatprep.mubr.bf16.mxu0 0
        %1044 = vmatmul.mubr.bf16.gmra.mxu0 %v978
        %v1045 = vpop.f32.mrf.mxu0
        %v1046 = vadd.f32 %v922, %v1045
        %v1047 = vpop.f32.mrf.mxu0
        %v1048 = vpop.f32.mrf.mxu0
        %v1049 = vadd.f32 %v922, %v1048
        %v1050 = vpop.f32.mrf.mxu0
        %1051 = vmatprep.mubr.bf16.mxu0 0
        %1052 = vmatmul.mubr.bf16.gmra.mxu0 %v981
        %v1053 = vpop.f32.mrf.mxu0
        %v1054 = vadd.f32 %v922, %v1053
        %v1055 = vpop.f32.mrf.mxu0
        %v1056 = vpop.f32.mrf.mxu0
        %v1057 = vadd.f32 %v922, %v1056
        %v1058 = vpop.f32.mrf.mxu0
        %1059 = vmatprep.mubr.bf16.mxu0 0
        %1060 = vmatmul.mubr.bf16.gmra.mxu0 %v984
        %v1061 = vpop.f32.mrf.mxu0
        %v1062 = vadd.f32 %v922, %v1061
        %v1063 = vpop.f32.mrf.mxu0
        %v1064 = vpop.f32.mrf.mxu0
        %v1065 = vadd.f32 %v922, %v1064
        %v1066 = vpop.f32.mrf.mxu0
        %1067 = vmatprep.mubr.bf16.mxu0 0
        %1068 = vmatmul.mubr.bf16.gmra.mxu0 %v987
        %v1069 = vpop.f32.mrf.mxu0
        %v1070 = vadd.f32 %v922, %v1069
        %v1071 = vpop.f32.mrf.mxu0
        %v1072 = vpop.f32.mrf.mxu0
        %v1073 = vadd.f32 %v922, %v1072
        %v1074 = vpop.f32.mrf.mxu0
        %1075 = vmatprep.mubr.bf16.mxu0 0
        %1076 = vmatmul.mubr.bf16.gmra.mxu0 %v990
        %v1077 = vpop.f32.mrf.mxu0
        %v1078 = vadd.f32 %v922, %v1077
        %v1079 = vpop.f32.mrf.mxu0
        %v1080 = vpop.f32.mrf.mxu0
        %v1081 = vadd.f32 %v922, %v1080
        %v1082 = vpop.f32.mrf.mxu0
        %1083 = vmatprep.mubr.bf16.mxu0 0
        %1084 = vmatmul.mubr.bf16.gmra.mxu0 %v993
        %v1085 = vpop.f32.mrf.mxu0
        %v1086 = vadd.f32 %v922, %v1085
        %v1087 = vpop.f32.mrf.mxu0
        %v1088 = vpop.f32.mrf.mxu0
        %v1089 = vadd.f32 %v922, %v1088
        %v1090 = vpop.f32.mrf.mxu0
        %1091 = vdwg.mxu0
        %vm1092 = vcmask 261120
        %1093 = vst.msk [vmem:[#allocation2] sm:$0xff] %vm1092, %v1030
        %1094 = vst.msk [vmem:[#allocation2 + $0x8] sm:$0xff] %vm1092, %v1033
        %1095 = vst.msk [vmem:[#allocation2 + $0x10] sm:$0xff] %vm1092, %v1038
        %1096 = vst.msk [vmem:[#allocation2 + $0x18] sm:$0xff] %vm1092, %v1041
        %1097 = vst.msk [vmem:[#allocation2 + $0x20] sm:$0xff] %vm1092, %v1046
        %1098 = vst.msk [vmem:[#allocation2 + $0x28] sm:$0xff] %vm1092, %v1049
        %1099 = vst.msk [vmem:[#allocation2 + $0x30] sm:$0xff] %vm1092, %v1054
        %1100 = vst.msk [vmem:[#allocation2 + $0x38] sm:$0xff] %vm1092, %v1057
        %1101 = vst.msk [vmem:[#allocation2 + $0x40] sm:$0xff] %vm1092, %v1062
        %1102 = vst.msk [vmem:[#allocation2 + $0x48] sm:$0xff] %vm1092, %v1065
        %1103 = vst.msk [vmem:[#allocation2 + $0x50] sm:$0xff] %vm1092, %v1070
        %1104 = vst.msk [vmem:[#allocation2 + $0x58] sm:$0xff] %vm1092, %v1073
        %1105 = vst.msk [vmem:[#allocation2 + $0x60] sm:$0xff] %vm1092, %v1078
        %1106 = vst.msk [vmem:[#allocation2 + $0x68] sm:$0xff] %vm1092, %v1081
        %1107 = vst.msk [vmem:[#allocation2 + $0x70] sm:$0xff] %vm1092, %v1086
        %1108 = vst.msk [vmem:[#allocation2 + $0x78] sm:$0xff] %vm1092, %v1089
      $region108: #{attention_net_forward.2} parent=103 // pred_fallthru
        _
      %v1109 = vld [vmem:[#allocation2] sm:$0xff]
      %v1110 = vld [vmem:[#allocation2 + $0x8] sm:$0xff]
      %v1111 = vld [vmem:[#allocation2 + $0x10] sm:$0xff]
      %v1112 = vld [vmem:[#allocation2 + $0x18] sm:$0xff]
      %v1113 = vld [vmem:[#allocation2 + $0x20] sm:$0xff]
      %v1114 = vld [vmem:[#allocation2 + $0x28] sm:$0xff]
      %v1115 = vld [vmem:[#allocation2 + $0x30] sm:$0xff]
      %v1116 = vld [vmem:[#allocation2 + $0x38] sm:$0xff]
      %v1117 = vld [vmem:[#allocation2 + $0x40] sm:$0xff]
      %v1118 = vld [vmem:[#allocation2 + $0x48] sm:$0xff]
      %v1119 = vld [vmem:[#allocation2 + $0x50] sm:$0xff]
      %v1120 = vld [vmem:[#allocation2 + $0x58] sm:$0xff]
      %v1121 = vld [vmem:[#allocation2 + $0x60] sm:$0xff]
      %v1122 = vld [vmem:[#allocation2 + $0x68] sm:$0xff]
      %v1123 = vld [vmem:[#allocation2 + $0x70] sm:$0xff]
      %v1124 = vld [vmem:[#allocation2 + $0x78] sm:$0xff]
      %v1125 = vpack.c.bf16 %v1110, %v1109
      %v1126 = vpack.c.bf16 %v1112, %v1111
      %v1127 = vpack.c.bf16 %v1114, %v1113
      %v1128 = vpack.c.bf16 %v1116, %v1115
      %v1129 = vpack.c.bf16 %v1118, %v1117
      %v1130 = vpack.c.bf16 %v1120, %v1119
      %v1131 = vpack.c.bf16 %v1122, %v1121
      %v1132 = vpack.c.bf16 %v1124, %v1123
      %v1133 = vlaneseq
      %v1134 = vshrl.u32 %v1133, 7
      %v1135 = vadd.s32 %v1134, 8
      %v1136 = vadd.s32 %v1134, 16
      %v1137 = vadd.s32 %v1134, 24
      %v1138 = vadd.s32 %v1134, 32
      %v1139 = vadd.s32 %v1134, 40
      %v1140 = vadd.s32 %v1134, 48
      %v1141 = vadd.s32 %v1134, 56
      %v1142 = vadd.s32 %v1134, 64
      %v1143 = vadd.s32 %v1134, 72
      %v1144 = vadd.s32 %v1134, 80
      %v1145 = vadd.s32 %v1134, 88
      %v1146 = vadd.s32 %v1134, 96
      %v1147 = vadd.s32 %v1134, 104
      %v1148 = vadd.s32 %v1134, 112
      %v1149 = vadd.s32 %v1134, 120
      %v1150 = vlaneseq
      %v1151 = vand.u32 %v1150, 127
      %vm1152 = vcmp.lt.s32.totalorder %v1134, 0
      %v1153 = vsub.s32 0, %v1134
      %v1154 = vsel %vm1152, %v1153, %v1134
      %v1155 = vshrl.u32 %v1154, 6
      %v1156 = vand.u32 %v1154, 63
      %v1157 = vsub.s32 0, %v1156
      %v1158 = vsel %vm1152, %v1157, %v1156
      %vm1159 = vcmp.lt.s32.totalorder %v1135, 0
      %v1160 = vsub.s32 0, %v1135
      %v1161 = vsel %vm1159, %v1160, %v1135
      %v1162 = vshrl.u32 %v1161, 6
      %v1163 = vand.u32 %v1161, 63
      %v1164 = vsub.s32 0, %v1163
      %v1165 = vsel %vm1159, %v1164, %v1163
      %vm1166 = vcmp.lt.s32.totalorder %v1136, 0
      %v1167 = vsub.s32 0, %v1136
      %v1168 = vsel %vm1166, %v1167, %v1136
      %v1169 = vshrl.u32 %v1168, 6
      %v1170 = vand.u32 %v1168, 63
      %v1171 = vsub.s32 0, %v1170
      %v1172 = vsel %vm1166, %v1171, %v1170
      %vm1173 = vcmp.lt.s32.totalorder %v1137, 0
      %v1174 = vsub.s32 0, %v1137
      %v1175 = vsel %vm1173, %v1174, %v1137
      %v1176 = vshrl.u32 %v1175, 6
      %v1177 = vand.u32 %v1175, 63
      %v1178 = vsub.s32 0, %v1177
      %v1179 = vsel %vm1173, %v1178, %v1177
      %vm1180 = vcmp.lt.s32.totalorder %v1138, 0
      %v1181 = vsub.s32 0, %v1138
      %v1182 = vsel %vm1180, %v1181, %v1138
      %v1183 = vshrl.u32 %v1182, 6
      %v1184 = vand.u32 %v1182, 63
      %v1185 = vsub.s32 0, %v1184
      %v1186 = vsel %vm1180, %v1185, %v1184
      %vm1187 = vcmp.lt.s32.totalorder %v1139, 0
      %v1188 = vsub.s32 0, %v1139
      %v1189 = vsel %vm1187, %v1188, %v1139
      %v1190 = vshrl.u32 %v1189, 6
      %v1191 = vand.u32 %v1189, 63
      %v1192 = vsub.s32 0, %v1191
      %v1193 = vsel %vm1187, %v1192, %v1191
      %vm1194 = vcmp.lt.s32.totalorder %v1140, 0
      %v1195 = vsub.s32 0, %v1140
      %v1196 = vsel %vm1194, %v1195, %v1140
      %v1197 = vshrl.u32 %v1196, 6
      %v1198 = vand.u32 %v1196, 63
      %v1199 = vsub.s32 0, %v1198
      %v1200 = vsel %vm1194, %v1199, %v1198
      %vm1201 = vcmp.lt.s32.totalorder %v1141, 0
      %v1202 = vsub.s32 0, %v1141
      %v1203 = vsel %vm1201, %v1202, %v1141
      %v1204 = vshrl.u32 %v1203, 6
      %v1205 = vand.u32 %v1203, 63
      %v1206 = vsub.s32 0, %v1205
      %v1207 = vsel %vm1201, %v1206, %v1205
      %vm1208 = vcmp.lt.s32.totalorder %v1142, 0
      %v1209 = vsub.s32 0, %v1142
      %v1210 = vsel %vm1208, %v1209, %v1142
      %v1211 = vshrl.u32 %v1210, 6
      %v1212 = vand.u32 %v1210, 63
      %v1213 = vsub.s32 0, %v1212
      %v1214 = vsel %vm1208, %v1213, %v1212
      %vm1215 = vcmp.lt.s32.totalorder %v1143, 0
      %v1216 = vsub.s32 0, %v1143
      %v1217 = vsel %vm1215, %v1216, %v1143
      %v1218 = vshrl.u32 %v1217, 6
      %v1219 = vand.u32 %v1217, 63
      %v1220 = vsub.s32 0, %v1219
      %v1221 = vsel %vm1215, %v1220, %v1219
      %vm1222 = vcmp.lt.s32.totalorder %v1144, 0
      %v1223 = vsub.s32 0, %v1144
      %v1224 = vsel %vm1222, %v1223, %v1144
      %v1225 = vshrl.u32 %v1224, 6
      %v1226 = vand.u32 %v1224, 63
      %v1227 = vsub.s32 0, %v1226
      %v1228 = vsel %vm1222, %v1227, %v1226
      %vm1229 = vcmp.lt.s32.totalorder %v1145, 0
      %v1230 = vsub.s32 0, %v1145
      %v1231 = vsel %vm1229, %v1230, %v1145
      %v1232 = vshrl.u32 %v1231, 6
      %v1233 = vand.u32 %v1231, 63
      %v1234 = vsub.s32 0, %v1233
      %v1235 = vsel %vm1229, %v1234, %v1233
      %vm1236 = vcmp.lt.s32.totalorder %v1146, 0
      %v1237 = vsub.s32 0, %v1146
      %v1238 = vsel %vm1236, %v1237, %v1146
      %v1239 = vshrl.u32 %v1238, 6
      %v1240 = vand.u32 %v1238, 63
      %v1241 = vsub.s32 0, %v1240
      %v1242 = vsel %vm1236, %v1241, %v1240
      %vm1243 = vcmp.lt.s32.totalorder %v1147, 0
      %v1244 = vsub.s32 0, %v1147
      %v1245 = vsel %vm1243, %v1244, %v1147
      %v1246 = vshrl.u32 %v1245, 6
      %v1247 = vand.u32 %v1245, 63
      %v1248 = vsub.s32 0, %v1247
      %v1249 = vsel %vm1243, %v1248, %v1247
      %vm1250 = vcmp.lt.s32.totalorder %v1148, 0
      %v1251 = vsub.s32 0, %v1148
      %v1252 = vsel %vm1250, %v1251, %v1148
      %v1253 = vshrl.u32 %v1252, 6
      %v1254 = vand.u32 %v1252, 63
      %v1255 = vsub.s32 0, %v1254
      %v1256 = vsel %vm1250, %v1255, %v1254
      %vm1257 = vcmp.lt.s32.totalorder %v1149, 0
      %v1258 = vsub.s32 0, %v1149
      %v1259 = vsel %vm1257, %v1258, %v1149
      %v1260 = vshrl.u32 %v1259, 6
      %v1261 = vand.u32 %v1259, 63
      %v1262 = vsub.s32 0, %v1261
      %v1263 = vsel %vm1257, %v1262, %v1261
      %vm1264 = vcmp.ne.s32.totalorder %v1158, 0
      %vm1265 = vcmp.ne.s32.totalorder %v1165, 0
      %vm1266 = vcmp.ne.s32.totalorder %v1172, 0
      %vm1267 = vcmp.ne.s32.totalorder %v1179, 0
      %vm1268 = vcmp.ne.s32.totalorder %v1186, 0
      %vm1269 = vcmp.ne.s32.totalorder %v1193, 0
      %vm1270 = vcmp.ne.s32.totalorder %v1200, 0
      %vm1271 = vcmp.ne.s32.totalorder %v1207, 0
      %vm1272 = vcmp.ne.s32.totalorder %v1214, 0
      %vm1273 = vcmp.ne.s32.totalorder %v1221, 0
      %vm1274 = vcmp.ne.s32.totalorder %v1228, 0
      %vm1275 = vcmp.ne.s32.totalorder %v1235, 0
      %vm1276 = vcmp.ne.s32.totalorder %v1242, 0
      %vm1277 = vcmp.ne.s32.totalorder %v1249, 0
      %vm1278 = vcmp.ne.s32.totalorder %v1256, 0
      %vm1279 = vcmp.ne.s32.totalorder %v1263, 0
      %vm1280 = vcmp.lt.s32.totalorder %v1158, 0
      %vm1281 = vcmp.lt.s32.totalorder %v1165, 0
      %vm1282 = vcmp.lt.s32.totalorder %v1172, 0
      %vm1283 = vcmp.lt.s32.totalorder %v1179, 0
      %vm1284 = vcmp.lt.s32.totalorder %v1186, 0
      %vm1285 = vcmp.lt.s32.totalorder %v1193, 0
      %vm1286 = vcmp.lt.s32.totalorder %v1200, 0
      %vm1287 = vcmp.lt.s32.totalorder %v1207, 0
      %vm1288 = vcmp.lt.s32.totalorder %v1214, 0
      %vm1289 = vcmp.lt.s32.totalorder %v1221, 0
      %vm1290 = vcmp.lt.s32.totalorder %v1228, 0
      %vm1291 = vcmp.lt.s32.totalorder %v1235, 0
      %vm1292 = vcmp.lt.s32.totalorder %v1242, 0
      %vm1293 = vcmp.lt.s32.totalorder %v1249, 0
      %vm1294 = vcmp.lt.s32.totalorder %v1256, 0
      %vm1295 = vcmp.lt.s32.totalorder %v1263, 0
      %vm1296 = vmand %vm1280, %vm1264
      %vm1297 = vmand %vm1281, %vm1265
      %vm1298 = vmand %vm1282, %vm1266
      %vm1299 = vmand %vm1283, %vm1267
      %vm1300 = vmand %vm1284, %vm1268
      %vm1301 = vmand %vm1285, %vm1269
      %vm1302 = vmand %vm1286, %vm1270
      %vm1303 = vmand %vm1287, %vm1271
      %vm1304 = vmand %vm1288, %vm1272
      %vm1305 = vmand %vm1289, %vm1273
      %vm1306 = vmand %vm1290, %vm1274
      %vm1307 = vmand %vm1291, %vm1275
      %vm1308 = vmand %vm1292, %vm1276
      %vm1309 = vmand %vm1293, %vm1277
      %vm1310 = vmand %vm1294, %vm1278
      %vm1311 = vmand %vm1295, %vm1279
      %v1312 = vadd.s32 %v1158, 64
      %v1313 = vadd.s32 %v1165, 64
      %v1314 = vadd.s32 %v1172, 64
      %v1315 = vadd.s32 %v1179, 64
      %v1316 = vadd.s32 %v1186, 64
      %v1317 = vadd.s32 %v1193, 64
      %v1318 = vadd.s32 %v1200, 64
      %v1319 = vadd.s32 %v1207, 64
      %v1320 = vadd.s32 %v1214, 64
      %v1321 = vadd.s32 %v1221, 64
      %v1322 = vadd.s32 %v1228, 64
      %v1323 = vadd.s32 %v1235, 64
      %v1324 = vadd.s32 %v1242, 64
      %v1325 = vadd.s32 %v1249, 64
      %v1326 = vadd.s32 %v1256, 64
      %v1327 = vadd.s32 %v1263, 64
      %v1328 = vsel %vm1296, %v1312, %v1158
      %v1329 = vsel %vm1297, %v1313, %v1165
      %v1330 = vsel %vm1298, %v1314, %v1172
      %v1331 = vsel %vm1299, %v1315, %v1179
      %v1332 = vsel %vm1300, %v1316, %v1186
      %v1333 = vsel %vm1301, %v1317, %v1193
      %v1334 = vsel %vm1302, %v1318, %v1200
      %v1335 = vsel %vm1303, %v1319, %v1207
      %v1336 = vsel %vm1304, %v1320, %v1214
      %v1337 = vsel %vm1305, %v1321, %v1221
      %v1338 = vsel %vm1306, %v1322, %v1228
      %v1339 = vsel %vm1307, %v1323, %v1235
      %v1340 = vsel %vm1308, %v1324, %v1242
      %v1341 = vsel %vm1309, %v1325, %v1249
      %v1342 = vsel %vm1310, %v1326, %v1256
      %v1343 = vsel %vm1311, %v1327, %v1263
      %vm1344 = vcmp.lt.s32.totalorder %v1151, 0
      %v1345 = vsub.s32 0, %v1151
      %v1346 = vsel %vm1344, %v1345, %v1151
      %v1347 = vshrl.u32 %v1346, 6
      %v1348 = vand.u32 %v1346, 63
      %v1349 = vsub.s32 0, %v1348
      %v1350 = vsel %vm1344, %v1349, %v1348
      %vm1351 = vcmp.ne.s32.totalorder %v1350, 0
      %vm1352 = vcmp.lt.s32.totalorder %v1350, 0
      %vm1353 = vmand %vm1352, %vm1351
      %v1354 = vadd.s32 %v1350, 64
      %v1355 = vsel %vm1353, %v1354, %v1350
      %vm1356 = vcmp.eq.s32.totalorder %v1328, %v1355
      %vm1357 = vcmp.eq.s32.totalorder %v1329, %v1355
      %vm1358 = vcmp.eq.s32.totalorder %v1330, %v1355
      %vm1359 = vcmp.eq.s32.totalorder %v1331, %v1355
      %vm1360 = vcmp.eq.s32.totalorder %v1332, %v1355
      %vm1361 = vcmp.eq.s32.totalorder %v1333, %v1355
      %vm1362 = vcmp.eq.s32.totalorder %v1334, %v1355
      %vm1363 = vcmp.eq.s32.totalorder %v1335, %v1355
      %vm1364 = vcmp.eq.s32.totalorder %v1336, %v1355
      %vm1365 = vcmp.eq.s32.totalorder %v1337, %v1355
      %vm1366 = vcmp.eq.s32.totalorder %v1338, %v1355
      %vm1367 = vcmp.eq.s32.totalorder %v1339, %v1355
      %vm1368 = vcmp.eq.s32.totalorder %v1340, %v1355
      %vm1369 = vcmp.eq.s32.totalorder %v1341, %v1355
      %vm1370 = vcmp.eq.s32.totalorder %v1342, %v1355
      %vm1371 = vcmp.eq.s32.totalorder %v1343, %v1355
      %v1372 = vsel %vm1356, 0.0, -1e+30
      %v1373 = vsel %vm1357, 0.0, -1e+30
      %v1374 = vsel %vm1358, 0.0, -1e+30
      %v1375 = vsel %vm1359, 0.0, -1e+30
      %v1376 = vsel %vm1360, 0.0, -1e+30
      %v1377 = vsel %vm1361, 0.0, -1e+30
      %v1378 = vsel %vm1362, 0.0, -1e+30
      %v1379 = vsel %vm1363, 0.0, -1e+30
      %v1380 = vsel %vm1364, 0.0, -1e+30
      %v1381 = vsel %vm1365, 0.0, -1e+30
      %v1382 = vsel %vm1366, 0.0, -1e+30
      %v1383 = vsel %vm1367, 0.0, -1e+30
      %v1384 = vsel %vm1368, 0.0, -1e+30
      %v1385 = vsel %vm1369, 0.0, -1e+30
      %v1386 = vsel %vm1370, 0.0, -1e+30
      %v1387 = vsel %vm1371, 0.0, -1e+30
      %v1388 = vld [vmem:[%s834] sm:$0xf]
      %v1389 = vld [vmem:[%s834 + $0x4] sm:$0xf]
      %v1390 = vld [vmem:[%s834 + $0x8] sm:$0xf]
      %v1391 = vld [vmem:[%s834 + $0xc] sm:$0xf]
      %v1392 = vld [vmem:[%s848] sm:$0x1]
      %v1394 = vlaneseq
      %v1395 = vshrl.u32 %v1394, 7
      %v1396 = vsub.s32 0, %v1395
      %v1397 = vrot.slane %v1392, %v1396
      %v1403 = vunpack.c.l.b16 %v1388
      %v1404 = vunpack.c.l.b16 %v1389
      %v1405 = vunpack.c.l.b16 %v1390
      %v1406 = vunpack.c.l.b16 %v1391
      %v1407 = vpack.c.b16 %v1404, %v1403
      %v1408 = vpack.c.b16 %v1406, %v1405
      %vm1411 = vcmask 261120
      %v1413 = vsel %vm1411, %v1125, 0
      %v1416 = vsel %vm1411, %v1126, 0
      %v1419 = vsel %vm1411, %v1127, 0
      %v1422 = vsel %vm1411, %v1128, 0
      %v1425 = vsel %vm1411, %v1129, 0
      %v1428 = vsel %vm1411, %v1130, 0
      %v1431 = vsel %vm1411, %v1131, 0
      %v1434 = vsel %vm1411, %v1132, 0
      %1436 = vmatprep.subr.bf16.mxu0 0
      %1437 = vmatpush1.bf16.msra.mxu0 0
      %1438 = vmatprep.subr.bf16.mxu0 0
      %1439 = vmatpush1.bf16.msra.mxu0 0
      %1440 = vmatprep.subr.bf16.mxu0 0
      %1441 = vmatpush1.bf16.msra.mxu0 0
      %1442 = vmatprep.subr.bf16.mxu0 0
      %1443 = vmatpush1.bf16.msra.mxu0 0
      %1444 = vmatprep.subr.bf16.mxu0 0
      %1445 = vmatpush1.bf16.msra.mxu0 0
      %1446 = vmatprep.subr.bf16.mxu0 0
      %1447 = vmatpush1.bf16.msra.mxu0 0
      %1448 = vmatprep.subr.bf16.mxu0 0
      %1449 = vmatpush1.bf16.msra.mxu0 %v1408
      %1450 = vmatprep.subr.bf16.mxu0 0
      %1451 = vmatpush1.bf16.msra.mxu0 %v1407
      %1452 = vmatprep.subr.bf16.mxu0 0
      %1453 = vmatpush2.bf16.msra.mxu0 0
      %1454 = vmatprep.subr.bf16.mxu0 0
      %1455 = vmatpush2.bf16.msra.mxu0 0
      %1456 = vmatprep.subr.bf16.mxu0 0
      %1457 = vmatpush2.bf16.msra.mxu0 0
      %1458 = vmatprep.subr.bf16.mxu0 0
      %1459 = vmatpush2.bf16.msra.mxu0 0
      %1460 = vmatprep.subr.bf16.mxu0 0
      %1461 = vmatpush2.bf16.msra.mxu0 0
      %1462 = vmatprep.subr.bf16.mxu0 0
      %1463 = vmatpush2.bf16.msra.mxu0 0
      %1464 = vmatprep.subr.bf16.mxu0 0
      %1465 = vmatpush2.bf16.msra.mxu0 0
      %1466 = vmatprep.subr.bf16.mxu0 0
      %1467 = vmatpush2.bf16.msra.mxu0 0
      %1468 = vmatprep.mubr.bf16.mxu0 0
      %1469 = vmatmul.mubr.bf16.gmra.mxu0 %v1413
      %v1470 = vpop.f32.mrf.mxu0
      %v1471 = vadd.f32 %v1397, %v1470
      %v1472 = vpop.f32.mrf.mxu0
      %v1473 = vpop.f32.mrf.mxu0
      %v1474 = vadd.f32 %v1397, %v1473
      %v1475 = vpop.f32.mrf.mxu0
      %1476 = vmatprep.mubr.bf16.mxu0 0
      %1477 = vmatmul.mubr.bf16.gmra.mxu0 %v1416
      %v1478 = vpop.f32.mrf.mxu0
      %v1479 = vadd.f32 %v1397, %v1478
      %v1480 = vpop.f32.mrf.mxu0
      %v1481 = vpop.f32.mrf.mxu0
      %v1482 = vadd.f32 %v1397, %v1481
      %v1483 = vpop.f32.mrf.mxu0
      %1484 = vmatprep.mubr.bf16.mxu0 0
      %1485 = vmatmul.mubr.bf16.gmra.mxu0 %v1419
      %v1486 = vpop.f32.mrf.mxu0
      %v1487 = vadd.f32 %v1397, %v1486
      %v1488 = vpop.f32.mrf.mxu0
      %v1489 = vpop.f32.mrf.mxu0
      %v1490 = vadd.f32 %v1397, %v1489
      %v1491 = vpop.f32.mrf.mxu0
      %1492 = vmatprep.mubr.bf16.mxu0 0
      %1493 = vmatmul.mubr.bf16.gmra.mxu0 %v1422
      %v1494 = vpop.f32.mrf.mxu0
      %v1495 = vadd.f32 %v1397, %v1494
      %v1496 = vpop.f32.mrf.mxu0
      %v1497 = vpop.f32.mrf.mxu0
      %v1498 = vadd.f32 %v1397, %v1497
      %v1499 = vpop.f32.mrf.mxu0
      %1500 = vmatprep.mubr.bf16.mxu0 0
      %1501 = vmatmul.mubr.bf16.gmra.mxu0 %v1425
      %v1502 = vpop.f32.mrf.mxu0
      %v1503 = vadd.f32 %v1397, %v1502
      %v1504 = vpop.f32.mrf.mxu0
      %v1505 = vpop.f32.mrf.mxu0
      %v1506 = vadd.f32 %v1397, %v1505
      %v1507 = vpop.f32.mrf.mxu0
      %1508 = vmatprep.mubr.bf16.mxu0 0
      %1509 = vmatmul.mubr.bf16.gmra.mxu0 %v1428
      %v1510 = vpop.f32.mrf.mxu0
      %v1511 = vadd.f32 %v1397, %v1510
      %v1512 = vpop.f32.mrf.mxu0
      %v1513 = vpop.f32.mrf.mxu0
      %v1514 = vadd.f32 %v1397, %v1513
      %v1515 = vpop.f32.mrf.mxu0
      %1516 = vmatprep.mubr.bf16.mxu0 0
      %1517 = vmatmul.mubr.bf16.gmra.mxu0 %v1431
      %v1518 = vpop.f32.mrf.mxu0
      %v1519 = vadd.f32 %v1397, %v1518
      %v1520 = vpop.f32.mrf.mxu0
      %v1521 = vpop.f32.mrf.mxu0
      %v1522 = vadd.f32 %v1397, %v1521
      %v1523 = vpop.f32.mrf.mxu0
      %1524 = vmatprep.mubr.bf16.mxu0 0
      %1525 = vmatmul.mubr.bf16.gmra.mxu0 %v1434
      %v1526 = vpop.f32.mrf.mxu0
      %v1527 = vadd.f32 %v1397, %v1526
      %v1528 = vpop.f32.mrf.mxu0
      %v1529 = vpop.f32.mrf.mxu0
      %v1530 = vadd.f32 %v1397, %v1529
      %v1531 = vpop.f32.mrf.mxu0
      %1532 = vdwg.mxu0
      %v1533 = vld [vmem:[%s839] sm:$0xf]
      %v1534 = vld [vmem:[%s839 + $0x4] sm:$0xf]
      %v1535 = vld [vmem:[%s839 + $0x8] sm:$0xf]
      %v1536 = vld [vmem:[%s839 + $0xc] sm:$0xf]
      %v1537 = vld [vmem:[%s852] sm:$0x1]
      %v1539 = vlaneseq
      %v1540 = vshrl.u32 %v1539, 7
      %v1541 = vsub.s32 0, %v1540
      %v1542 = vrot.slane %v1537, %v1541
      %v1548 = vunpack.c.l.b16 %v1533
      %v1549 = vunpack.c.l.b16 %v1534
      %v1550 = vunpack.c.l.b16 %v1535
      %v1551 = vunpack.c.l.b16 %v1536
      %v1552 = vpack.c.b16 %v1549, %v1548
      %v1553 = vpack.c.b16 %v1551, %v1550
      %1556 = vmatprep.subr.bf16.mxu0 0
      %1557 = vmatpush1.bf16.msra.mxu0 0
      %1558 = vmatprep.subr.bf16.mxu0 0
      %1559 = vmatpush1.bf16.msra.mxu0 0
      %1560 = vmatprep.subr.bf16.mxu0 0
      %1561 = vmatpush1.bf16.msra.mxu0 0
      %1562 = vmatprep.subr.bf16.mxu0 0
      %1563 = vmatpush1.bf16.msra.mxu0 0
      %1564 = vmatprep.subr.bf16.mxu0 0
      %1565 = vmatpush1.bf16.msra.mxu0 0
      %1566 = vmatprep.subr.bf16.mxu0 0
      %1567 = vmatpush1.bf16.msra.mxu0 0
      %1568 = vmatprep.subr.bf16.mxu0 0
      %1569 = vmatpush1.bf16.msra.mxu0 %v1553
      %1570 = vmatprep.subr.bf16.mxu0 0
      %1571 = vmatpush1.bf16.msra.mxu0 %v1552
      %1572 = vmatprep.subr.bf16.mxu0 0
      %1573 = vmatpush2.bf16.msra.mxu0 0
      %1574 = vmatprep.subr.bf16.mxu0 0
      %1575 = vmatpush2.bf16.msra.mxu0 0
      %1576 = vmatprep.subr.bf16.mxu0 0
      %1577 = vmatpush2.bf16.msra.mxu0 0
      %1578 = vmatprep.subr.bf16.mxu0 0
      %1579 = vmatpush2.bf16.msra.mxu0 0
      %1580 = vmatprep.subr.bf16.mxu0 0
      %1581 = vmatpush2.bf16.msra.mxu0 0
      %1582 = vmatprep.subr.bf16.mxu0 0
      %1583 = vmatpush2.bf16.msra.mxu0 0
      %1584 = vmatprep.subr.bf16.mxu0 0
      %1585 = vmatpush2.bf16.msra.mxu0 0
      %1586 = vmatprep.subr.bf16.mxu0 0
      %1587 = vmatpush2.bf16.msra.mxu0 0
      %1588 = vmatprep.mubr.bf16.mxu0 0
      %1589 = vmatmul.mubr.bf16.gmra.mxu0 %v1413
      %v1590 = vpop.f32.mrf.mxu0
      %v1591 = vadd.f32 %v1542, %v1590
      %v1592 = vpop.f32.mrf.mxu0
      %v1593 = vpop.f32.mrf.mxu0
      %v1594 = vadd.f32 %v1542, %v1593
      %v1595 = vpop.f32.mrf.mxu0
      %1596 = vmatprep.mubr.bf16.mxu0 0
      %1597 = vmatmul.mubr.bf16.gmra.mxu0 %v1416
      %v1598 = vpop.f32.mrf.mxu0
      %v1599 = vadd.f32 %v1542, %v1598
      %v1600 = vpop.f32.mrf.mxu0
      %v1601 = vpop.f32.mrf.mxu0
      %v1602 = vadd.f32 %v1542, %v1601
      %v1603 = vpop.f32.mrf.mxu0
      %1604 = vmatprep.mubr.bf16.mxu0 0
      %1605 = vmatmul.mubr.bf16.gmra.mxu0 %v1419
      %v1606 = vpop.f32.mrf.mxu0
      %v1607 = vadd.f32 %v1542, %v1606
      %v1608 = vpop.f32.mrf.mxu0
      %v1609 = vpop.f32.mrf.mxu0
      %v1610 = vadd.f32 %v1542, %v1609
      %v1611 = vpop.f32.mrf.mxu0
      %1612 = vmatprep.mubr.bf16.mxu0 0
      %1613 = vmatmul.mubr.bf16.gmra.mxu0 %v1422
      %v1614 = vpop.f32.mrf.mxu0
      %v1615 = vadd.f32 %v1542, %v1614
      %v1616 = vpop.f32.mrf.mxu0
      %v1617 = vpop.f32.mrf.mxu0
      %v1618 = vadd.f32 %v1542, %v1617
      %v1619 = vpop.f32.mrf.mxu0
      %1620 = vmatprep.mubr.bf16.mxu0 0
      %1621 = vmatmul.mubr.bf16.gmra.mxu0 %v1425
      %v1622 = vpop.f32.mrf.mxu0
      %v1623 = vadd.f32 %v1542, %v1622
      %v1624 = vpop.f32.mrf.mxu0
      %v1625 = vpop.f32.mrf.mxu0
      %v1626 = vadd.f32 %v1542, %v1625
      %v1627 = vpop.f32.mrf.mxu0
      %1628 = vmatprep.mubr.bf16.mxu0 0
      %1629 = vmatmul.mubr.bf16.gmra.mxu0 %v1428
      %v1630 = vpop.f32.mrf.mxu0
      %v1631 = vadd.f32 %v1542, %v1630
      %v1632 = vpop.f32.mrf.mxu0
      %v1633 = vpop.f32.mrf.mxu0
      %v1634 = vadd.f32 %v1542, %v1633
      %v1635 = vpop.f32.mrf.mxu0
      %1636 = vmatprep.mubr.bf16.mxu0 0
      %1637 = vmatmul.mubr.bf16.gmra.mxu0 %v1431
      %v1638 = vpop.f32.mrf.mxu0
      %v1639 = vadd.f32 %v1542, %v1638
      %v1640 = vpop.f32.mrf.mxu0
      %v1641 = vpop.f32.mrf.mxu0
      %v1642 = vadd.f32 %v1542, %v1641
      %v1643 = vpop.f32.mrf.mxu0
      %1644 = vmatprep.mubr.bf16.mxu0 0
      %1645 = vmatmul.mubr.bf16.gmra.mxu0 %v1434
      %v1646 = vpop.f32.mrf.mxu0
      %v1647 = vadd.f32 %v1542, %v1646
      %v1648 = vpop.f32.mrf.mxu0
      %v1649 = vpop.f32.mrf.mxu0
      %v1650 = vadd.f32 %v1542, %v1649
      %v1651 = vpop.f32.mrf.mxu0
      %1652 = vdwg.mxu0
      %v1653 = vld [vmem:[%s844] sm:$0xf]
      %v1654 = vld [vmem:[%s844 + $0x4] sm:$0xf]
      %v1655 = vld [vmem:[%s844 + $0x8] sm:$0xf]
      %v1656 = vld [vmem:[%s844 + $0xc] sm:$0xf]
      %v1657 = vld [vmem:[%s856] sm:$0x1]
      %v1659 = vlaneseq
      %v1660 = vshrl.u32 %v1659, 7
      %v1661 = vsub.s32 0, %v1660
      %v1662 = vrot.slane %v1657, %v1661
      %v1668 = vunpack.c.l.b16 %v1653
      %v1669 = vunpack.c.l.b16 %v1654
      %v1670 = vunpack.c.l.b16 %v1655
      %v1671 = vunpack.c.l.b16 %v1656
      %v1672 = vpack.c.b16 %v1669, %v1668
      %v1673 = vpack.c.b16 %v1671, %v1670
      %1676 = vmatprep.subr.bf16.mxu0 0
      %1677 = vmatpush1.bf16.msra.mxu0 0
      %1678 = vmatprep.subr.bf16.mxu0 0
      %1679 = vmatpush1.bf16.msra.mxu0 0
      %1680 = vmatprep.subr.bf16.mxu0 0
      %1681 = vmatpush1.bf16.msra.mxu0 0
      %1682 = vmatprep.subr.bf16.mxu0 0
      %1683 = vmatpush1.bf16.msra.mxu0 0
      %1684 = vmatprep.subr.bf16.mxu0 0
      %1685 = vmatpush1.bf16.msra.mxu0 0
      %1686 = vmatprep.subr.bf16.mxu0 0
      %1687 = vmatpush1.bf16.msra.mxu0 0
      %1688 = vmatprep.subr.bf16.mxu0 0
      %1689 = vmatpush1.bf16.msra.mxu0 %v1673
      %1690 = vmatprep.subr.bf16.mxu0 0
      %1691 = vmatpush1.bf16.msra.mxu0 %v1672
      %1692 = vmatprep.subr.bf16.mxu0 0
      %1693 = vmatpush2.bf16.msra.mxu0 0
      %1694 = vmatprep.subr.bf16.mxu0 0
      %1695 = vmatpush2.bf16.msra.mxu0 0
      %1696 = vmatprep.subr.bf16.mxu0 0
      %1697 = vmatpush2.bf16.msra.mxu0 0
      %1698 = vmatprep.subr.bf16.mxu0 0
      %1699 = vmatpush2.bf16.msra.mxu0 0
      %1700 = vmatprep.subr.bf16.mxu0 0
      %1701 = vmatpush2.bf16.msra.mxu0 0
      %1702 = vmatprep.subr.bf16.mxu0 0
      %1703 = vmatpush2.bf16.msra.mxu0 0
      %1704 = vmatprep.subr.bf16.mxu0 0
      %1705 = vmatpush2.bf16.msra.mxu0 0
      %1706 = vmatprep.subr.bf16.mxu0 0
      %1707 = vmatpush2.bf16.msra.mxu0 0
      %1708 = vmatprep.mubr.bf16.mxu0 0
      %1709 = vmatmul.mubr.bf16.gmra.mxu0 %v1413
      %v1710 = vpop.f32.mrf.mxu0
      %v1711 = vadd.f32 %v1662, %v1710
      %v1712 = vpop.f32.mrf.mxu0
      %v1713 = vpop.f32.mrf.mxu0
      %v1714 = vadd.f32 %v1662, %v1713
      %v1715 = vpop.f32.mrf.mxu0
      %1716 = vmatprep.mubr.bf16.mxu0 0
      %1717 = vmatmul.mubr.bf16.gmra.mxu0 %v1416
      %v1718 = vpop.f32.mrf.mxu0
      %v1719 = vadd.f32 %v1662, %v1718
      %v1720 = vpop.f32.mrf.mxu0
      %v1721 = vpop.f32.mrf.mxu0
      %v1722 = vadd.f32 %v1662, %v1721
      %v1723 = vpop.f32.mrf.mxu0
      %1724 = vmatprep.mubr.bf16.mxu0 0
      %1725 = vmatmul.mubr.bf16.gmra.mxu0 %v1419
      %v1726 = vpop.f32.mrf.mxu0
      %v1727 = vadd.f32 %v1662, %v1726
      %v1728 = vpop.f32.mrf.mxu0
      %v1729 = vpop.f32.mrf.mxu0
      %v1730 = vadd.f32 %v1662, %v1729
      %v1731 = vpop.f32.mrf.mxu0
      %1732 = vmatprep.mubr.bf16.mxu0 0
      %1733 = vmatmul.mubr.bf16.gmra.mxu0 %v1422
      %v1734 = vpop.f32.mrf.mxu0
      %v1735 = vadd.f32 %v1662, %v1734
      %v1736 = vpop.f32.mrf.mxu0
      %v1737 = vpop.f32.mrf.mxu0
      %v1738 = vadd.f32 %v1662, %v1737
      %v1739 = vpop.f32.mrf.mxu0
      %1740 = vmatprep.mubr.bf16.mxu0 0
      %1741 = vmatmul.mubr.bf16.gmra.mxu0 %v1425
      %v1742 = vpop.f32.mrf.mxu0
      %v1743 = vadd.f32 %v1662, %v1742
      %v1744 = vpop.f32.mrf.mxu0
      %v1745 = vpop.f32.mrf.mxu0
      %v1746 = vadd.f32 %v1662, %v1745
      %v1747 = vpop.f32.mrf.mxu0
      %1748 = vmatprep.mubr.bf16.mxu0 0
      %1749 = vmatmul.mubr.bf16.gmra.mxu0 %v1428
      %v1750 = vpop.f32.mrf.mxu0
      %v1751 = vadd.f32 %v1662, %v1750
      %v1752 = vpop.f32.mrf.mxu0
      %v1753 = vpop.f32.mrf.mxu0
      %v1754 = vadd.f32 %v1662, %v1753
      %v1755 = vpop.f32.mrf.mxu0
      %1756 = vmatprep.mubr.bf16.mxu0 0
      %1757 = vmatmul.mubr.bf16.gmra.mxu0 %v1431
      %v1758 = vpop.f32.mrf.mxu0
      %v1759 = vadd.f32 %v1662, %v1758
      %v1760 = vpop.f32.mrf.mxu0
      %v1761 = vpop.f32.mrf.mxu0
      %v1762 = vadd.f32 %v1662, %v1761
      %v1763 = vpop.f32.mrf.mxu0
      %1764 = vmatprep.mubr.bf16.mxu0 0
      %1765 = vmatmul.mubr.bf16.gmra.mxu0 %v1434
      %v1766 = vpop.f32.mrf.mxu0
      %v1767 = vadd.f32 %v1662, %v1766
      %v1768 = vpop.f32.mrf.mxu0
      %v1769 = vpop.f32.mrf.mxu0
      %v1770 = vadd.f32 %v1662, %v1769
      %v1771 = vpop.f32.mrf.mxu0
      %1772 = vdwg.mxu0
      %v1773 = vpack.c.bf16 %v1474, %v1471
      %v1774 = vpack.c.bf16 %v1482, %v1479
      %v1775 = vpack.c.bf16 %v1490, %v1487
      %v1776 = vpack.c.bf16 %v1498, %v1495
      %v1777 = vpack.c.bf16 %v1506, %v1503
      %v1778 = vpack.c.bf16 %v1514, %v1511
      %v1779 = vpack.c.bf16 %v1522, %v1519
      %v1780 = vpack.c.bf16 %v1530, %v1527
      %v1781 = vpack.c.bf16 %v1594, %v1591
      %v1782 = vpack.c.bf16 %v1602, %v1599
      %v1783 = vpack.c.bf16 %v1610, %v1607
      %v1784 = vpack.c.bf16 %v1618, %v1615
      %v1785 = vpack.c.bf16 %v1626, %v1623
      %v1786 = vpack.c.bf16 %v1634, %v1631
      %v1787 = vpack.c.bf16 %v1642, %v1639
      %v1788 = vpack.c.bf16 %v1650, %v1647
      %vm1789 = vcmask 64512
      %v1791 = vsel %vm1789, %v1773, 0
      %v1794 = vsel %vm1789, %v1774, 0
      %v1797 = vsel %vm1789, %v1775, 0
      %v1800 = vsel %vm1789, %v1776, 0
      %v1803 = vsel %vm1789, %v1777, 0
      %v1806 = vsel %vm1789, %v1778, 0
      %v1809 = vsel %vm1789, %v1779, 0
      %v1812 = vsel %vm1789, %v1780, 0
      %v1815 = vsel %vm1789, %v1781, 0
      %v1818 = vsel %vm1789, %v1782, 0
      %v1821 = vsel %vm1789, %v1783, 0
      %v1824 = vsel %vm1789, %v1784, 0
      %v1827 = vsel %vm1789, %v1785, 0
      %v1830 = vsel %vm1789, %v1786, 0
      %v1833 = vsel %vm1789, %v1787, 0
      %v1836 = vsel %vm1789, %v1788, 0
      %1838 = vmatprep.subr.bf16.mxu0 0
      %1839 = vmatpush1.bf16.xpose.msra.mxu0 %v1836
      %1840 = vmatprep.subr.bf16.mxu0 0
      %1841 = vmatpush1.bf16.xpose.msra.mxu0 %v1833
      %1842 = vmatprep.subr.bf16.mxu0 0
      %1843 = vmatpush1.bf16.xpose.msra.mxu0 %v1830
      %1844 = vmatprep.subr.bf16.mxu0 0
      %1845 = vmatpush1.bf16.xpose.msra.mxu0 %v1827
      %1846 = vmatprep.subr.bf16.mxu0 0
      %1847 = vmatpush1.bf16.xpose.msra.mxu0 %v1824
      %1848 = vmatprep.subr.bf16.mxu0 0
      %1849 = vmatpush1.bf16.xpose.msra.mxu0 %v1821
      %1850 = vmatprep.subr.bf16.mxu0 0
      %1851 = vmatpush1.bf16.xpose.msra.mxu0 %v1818
      %1852 = vmatprep.subr.bf16.mxu0 0
      %1853 = vmatpush1.bf16.xpose.msra.mxu0 %v1815
      %1854 = vmatprep.subr.bf16.mxu0 0
      %1855 = vmatpush2.bf16.xpose.msra.mxu0 0
      %1856 = vmatprep.subr.bf16.mxu0 0
      %1857 = vmatpush2.bf16.xpose.msra.mxu0 0
      %1858 = vmatprep.subr.bf16.mxu0 0
      %1859 = vmatpush2.bf16.xpose.msra.mxu0 0
      %1860 = vmatprep.subr.bf16.mxu0 0
      %1861 = vmatpush2.bf16.xpose.msra.mxu0 0
      %1862 = vmatprep.subr.bf16.mxu0 0
      %1863 = vmatpush2.bf16.xpose.msra.mxu0 0
      %1864 = vmatprep.subr.bf16.mxu0 0
      %1865 = vmatpush2.bf16.xpose.msra.mxu0 0
      %1866 = vmatprep.subr.bf16.mxu0 0
      %1867 = vmatpush2.bf16.xpose.msra.mxu0 0
      %1868 = vmatprep.subr.bf16.mxu0 0
      %1869 = vmatpush2.bf16.xpose.msra.mxu0 0
      %1870 = vmatprep.mubr.bf16.mxu0 0
      %1871 = vmatmul.mubr.bf16.gmra.mxu0 %v1791
      %v1872 = vpop.f32.mrf.mxu0
      %v1873 = vadd.f32 0.0, %v1872
      %v1874 = vpop.f32.mrf.mxu0
      %v1875 = vpop.f32.mrf.mxu0
      %v1876 = vadd.f32 0.0, %v1875
      %v1877 = vpop.f32.mrf.mxu0
      %1878 = vmatprep.mubr.bf16.mxu0 0
      %1879 = vmatmul.mubr.bf16.gmra.mxu0 %v1794
      %v1880 = vpop.f32.mrf.mxu0
      %v1881 = vadd.f32 0.0, %v1880
      %v1882 = vpop.f32.mrf.mxu0
      %v1883 = vpop.f32.mrf.mxu0
      %v1884 = vadd.f32 0.0, %v1883
      %v1885 = vpop.f32.mrf.mxu0
      %1886 = vmatprep.mubr.bf16.mxu0 0
      %1887 = vmatmul.mubr.bf16.gmra.mxu0 %v1797
      %v1888 = vpop.f32.mrf.mxu0
      %v1889 = vadd.f32 0.0, %v1888
      %v1890 = vpop.f32.mrf.mxu0
      %v1891 = vpop.f32.mrf.mxu0
      %v1892 = vadd.f32 0.0, %v1891
      %v1893 = vpop.f32.mrf.mxu0
      %1894 = vmatprep.mubr.bf16.mxu0 0
      %1895 = vmatmul.mubr.bf16.gmra.mxu0 %v1800
      %v1896 = vpop.f32.mrf.mxu0
      %v1897 = vadd.f32 0.0, %v1896
      %v1898 = vpop.f32.mrf.mxu0
      %v1899 = vpop.f32.mrf.mxu0
      %v1900 = vadd.f32 0.0, %v1899
      %v1901 = vpop.f32.mrf.mxu0
      %1902 = vmatprep.mubr.bf16.mxu0 0
      %1903 = vmatmul.mubr.bf16.gmra.mxu0 %v1803
      %v1904 = vpop.f32.mrf.mxu0
      %v1905 = vadd.f32 0.0, %v1904
      %v1906 = vpop.f32.mrf.mxu0
      %v1907 = vpop.f32.mrf.mxu0
      %v1908 = vadd.f32 0.0, %v1907
      %v1909 = vpop.f32.mrf.mxu0
      %1910 = vmatprep.mubr.bf16.mxu0 0
      %1911 = vmatmul.mubr.bf16.gmra.mxu0 %v1806
      %v1912 = vpop.f32.mrf.mxu0
      %v1913 = vadd.f32 0.0, %v1912
      %v1914 = vpop.f32.mrf.mxu0
      %v1915 = vpop.f32.mrf.mxu0
      %v1916 = vadd.f32 0.0, %v1915
      %v1917 = vpop.f32.mrf.mxu0
      %1918 = vmatprep.mubr.bf16.mxu0 0
      %1919 = vmatmul.mubr.bf16.gmra.mxu0 %v1809
      %v1920 = vpop.f32.mrf.mxu0
      %v1921 = vadd.f32 0.0, %v1920
      %v1922 = vpop.f32.mrf.mxu0
      %v1923 = vpop.f32.mrf.mxu0
      %v1924 = vadd.f32 0.0, %v1923
      %v1925 = vpop.f32.mrf.mxu0
      %1926 = vmatprep.mubr.bf16.mxu0 0
      %1927 = vmatmul.mubr.bf16.gmra.mxu0 %v1812
      %v1928 = vpop.f32.mrf.mxu0
      %v1929 = vadd.f32 0.0, %v1928
      %v1930 = vpop.f32.mrf.mxu0
      %v1931 = vpop.f32.mrf.mxu0
      %v1932 = vadd.f32 0.0, %v1931
      %v1933 = vpop.f32.mrf.mxu0
      %1934 = vdwg.mxu0
      %v1935 = vmul.f32 %v1873, 0.35355338
      %v1936 = vmul.f32 %v1876, 0.35355338
      %v1937 = vmul.f32 %v1881, 0.35355338
      %v1938 = vmul.f32 %v1884, 0.35355338
      %v1939 = vmul.f32 %v1889, 0.35355338
      %v1940 = vmul.f32 %v1892, 0.35355338
      %v1941 = vmul.f32 %v1897, 0.35355338
      %v1942 = vmul.f32 %v1900, 0.35355338
      %v1943 = vmul.f32 %v1905, 0.35355338
      %v1944 = vmul.f32 %v1908, 0.35355338
      %v1945 = vmul.f32 %v1913, 0.35355338
      %v1946 = vmul.f32 %v1916, 0.35355338
      %v1947 = vmul.f32 %v1921, 0.35355338
      %v1948 = vmul.f32 %v1924, 0.35355338
      %v1949 = vmul.f32 %v1929, 0.35355338
      %v1950 = vmul.f32 %v1932, 0.35355338
      %v1951 = vadd.f32 %v1935, %v1372
      %v1952 = vadd.f32 %v1936, %v1373
      %v1953 = vadd.f32 %v1937, %v1374
      %v1954 = vadd.f32 %v1938, %v1375
      %v1955 = vadd.f32 %v1939, %v1376
      %v1956 = vadd.f32 %v1940, %v1377
      %v1957 = vadd.f32 %v1941, %v1378
      %v1958 = vadd.f32 %v1942, %v1379
      %v1959 = vadd.f32 %v1943, %v1380
      %v1960 = vadd.f32 %v1944, %v1381
      %v1961 = vadd.f32 %v1945, %v1382
      %v1962 = vadd.f32 %v1946, %v1383
      %v1963 = vadd.f32 %v1947, %v1384
      %v1964 = vadd.f32 %v1948, %v1385
      %v1965 = vadd.f32 %v1949, %v1386
      %v1966 = vadd.f32 %v1950, %v1387
      %1967 = vmax.xlane.f32.xlu0 %v1951
      %v1968 = vpop.xlane.xlu0 %1967
      %1969 = vmax.xlane.f32.xlu0 %v1952
      %v1970 = vpop.xlane.xlu0 %1969
      %1971 = vmax.xlane.f32.xlu0 %v1953
      %v1972 = vpop.xlane.xlu0 %1971
      %1973 = vmax.xlane.f32.xlu0 %v1954
      %v1974 = vpop.xlane.xlu0 %1973
      %1975 = vmax.xlane.f32.xlu0 %v1955
      %v1976 = vpop.xlane.xlu0 %1975
      %1977 = vmax.xlane.f32.xlu0 %v1956
      %v1978 = vpop.xlane.xlu0 %1977
      %1979 = vmax.xlane.f32.xlu0 %v1957
      %v1980 = vpop.xlane.xlu0 %1979
      %1981 = vmax.xlane.f32.xlu0 %v1958
      %v1982 = vpop.xlane.xlu0 %1981
      %1983 = vmax.xlane.f32.xlu0 %v1959
      %v1984 = vpop.xlane.xlu0 %1983
      %1985 = vmax.xlane.f32.xlu0 %v1960
      %v1986 = vpop.xlane.xlu0 %1985
      %1987 = vmax.xlane.f32.xlu0 %v1961
      %v1988 = vpop.xlane.xlu0 %1987
      %1989 = vmax.xlane.f32.xlu0 %v1962
      %v1990 = vpop.xlane.xlu0 %1989
      %1991 = vmax.xlane.f32.xlu0 %v1963
      %v1992 = vpop.xlane.xlu0 %1991
      %1993 = vmax.xlane.f32.xlu0 %v1964
      %v1994 = vpop.xlane.xlu0 %1993
      %1995 = vmax.xlane.f32.xlu0 %v1965
      %v1996 = vpop.xlane.xlu0 %1995
      %1997 = vmax.xlane.f32.xlu0 %v1966
      %v1998 = vpop.xlane.xlu0 %1997
      %v1999 = vsub.f32 %v1951, %v1968
      %v2000 = vsub.f32 %v1952, %v1970
      %v2001 = vsub.f32 %v1953, %v1972
      %v2002 = vsub.f32 %v1954, %v1974
      %v2003 = vsub.f32 %v1955, %v1976
      %v2004 = vsub.f32 %v1956, %v1978
      %v2005 = vsub.f32 %v1957, %v1980
      %v2006 = vsub.f32 %v1958, %v1982
      %v2007 = vsub.f32 %v1959, %v1984
      %v2008 = vsub.f32 %v1960, %v1986
      %v2009 = vsub.f32 %v1961, %v1988
      %v2010 = vsub.f32 %v1962, %v1990
      %v2011 = vsub.f32 %v1963, %v1992
      %v2012 = vsub.f32 %v1964, %v1994
      %v2013 = vsub.f32 %v1965, %v1996
      %v2014 = vsub.f32 %v1966, %v1998
      %v2015 = vmul.f32 %v1999, 1.442695
      %v2016 = vpow.pop %v2015
      %v2017 = vmul.f32 %v2000, 1.442695
      %v2018 = vpow.pop %v2017
      %v2019 = vmul.f32 %v2001, 1.442695
      %v2020 = vpow.pop %v2019
      %v2021 = vmul.f32 %v2002, 1.442695
      %v2022 = vpow.pop %v2021
      %v2023 = vmul.f32 %v2003, 1.442695
      %v2024 = vpow.pop %v2023
      %v2025 = vmul.f32 %v2004, 1.442695
      %v2026 = vpow.pop %v2025
      %v2027 = vmul.f32 %v2005, 1.442695
      %v2028 = vpow.pop %v2027
      %v2029 = vmul.f32 %v2006, 1.442695
      %v2030 = vpow.pop %v2029
      %v2031 = vmul.f32 %v2007, 1.442695
      %v2032 = vpow.pop %v2031
      %v2033 = vmul.f32 %v2008, 1.442695
      %v2034 = vpow.pop %v2033
      %v2035 = vmul.f32 %v2009, 1.442695
      %v2036 = vpow.pop %v2035
      %v2037 = vmul.f32 %v2010, 1.442695
      %v2038 = vpow.pop %v2037
      %v2039 = vmul.f32 %v2011, 1.442695
      %v2040 = vpow.pop %v2039
      %v2041 = vmul.f32 %v2012, 1.442695
      %v2042 = vpow.pop %v2041
      %v2043 = vmul.f32 %v2013, 1.442695
      %v2044 = vpow.pop %v2043
      %v2045 = vmul.f32 %v2014, 1.442695
      %v2046 = vpow.pop %v2045
      %2047 = vadd.xlane.f32.xlu0 %v2016
      %v2048 = vpop.xlane.xlu0 %2047
      %2049 = vadd.xlane.f32.xlu0 %v2018
      %v2050 = vpop.xlane.xlu0 %2049
      %2051 = vadd.xlane.f32.xlu0 %v2020
      %v2052 = vpop.xlane.xlu0 %2051
      %2053 = vadd.xlane.f32.xlu0 %v2022
      %v2054 = vpop.xlane.xlu0 %2053
      %2055 = vadd.xlane.f32.xlu0 %v2024
      %v2056 = vpop.xlane.xlu0 %2055
      %2057 = vadd.xlane.f32.xlu0 %v2026
      %v2058 = vpop.xlane.xlu0 %2057
      %2059 = vadd.xlane.f32.xlu0 %v2028
      %v2060 = vpop.xlane.xlu0 %2059
      %2061 = vadd.xlane.f32.xlu0 %v2030
      %v2062 = vpop.xlane.xlu0 %2061
      %2063 = vadd.xlane.f32.xlu0 %v2032
      %v2064 = vpop.xlane.xlu0 %2063
      %2065 = vadd.xlane.f32.xlu0 %v2034
      %v2066 = vpop.xlane.xlu0 %2065
      %2067 = vadd.xlane.f32.xlu0 %v2036
      %v2068 = vpop.xlane.xlu0 %2067
      %2069 = vadd.xlane.f32.xlu0 %v2038
      %v2070 = vpop.xlane.xlu0 %2069
      %2071 = vadd.xlane.f32.xlu0 %v2040
      %v2072 = vpop.xlane.xlu0 %2071
      %2073 = vadd.xlane.f32.xlu0 %v2042
      %v2074 = vpop.xlane.xlu0 %2073
      %2075 = vadd.xlane.f32.xlu0 %v2044
      %v2076 = vpop.xlane.xlu0 %2075
      %2077 = vadd.xlane.f32.xlu0 %v2046
      %v2078 = vpop.xlane.xlu0 %2077
      %v2079 = vrcp.pop %v2048
      %v2080 = vrcp.pop %v2050
      %v2081 = vrcp.pop %v2052
      %v2082 = vrcp.pop %v2054
      %v2083 = vrcp.pop %v2056
      %v2084 = vrcp.pop %v2058
      %v2085 = vrcp.pop %v2060
      %v2086 = vrcp.pop %v2062
      %v2087 = vrcp.pop %v2064
      %v2088 = vrcp.pop %v2066
      %v2089 = vrcp.pop %v2068
      %v2090 = vrcp.pop %v2070
      %v2091 = vrcp.pop %v2072
      %v2092 = vrcp.pop %v2074
      %v2093 = vrcp.pop %v2076
      %v2094 = vrcp.pop %v2078
      %v2095 = vmul.f32 %v2016, %v2079
      %v2096 = vmul.f32 %v2018, %v2080
      %v2097 = vmul.f32 %v2020, %v2081
      %v2098 = vmul.f32 %v2022, %v2082
      %v2099 = vmul.f32 %v2024, %v2083
      %v2100 = vmul.f32 %v2026, %v2084
      %v2101 = vmul.f32 %v2028, %v2085
      %v2102 = vmul.f32 %v2030, %v2086
      %v2103 = vmul.f32 %v2032, %v2087
      %v2104 = vmul.f32 %v2034, %v2088
      %v2105 = vmul.f32 %v2036, %v2089
      %v2106 = vmul.f32 %v2038, %v2090
      %v2107 = vmul.f32 %v2040, %v2091
      %v2108 = vmul.f32 %v2042, %v2092
      %v2109 = vmul.f32 %v2044, %v2093
      %v2110 = vmul.f32 %v2046, %v2094
      %v2111 = vpack.c.bf16 %v2096, %v2095
      %v2112 = vpack.c.bf16 %v2098, %v2097
      %v2113 = vpack.c.bf16 %v2100, %v2099
      %v2114 = vpack.c.bf16 %v2102, %v2101
      %v2115 = vpack.c.bf16 %v2104, %v2103
      %v2116 = vpack.c.bf16 %v2106, %v2105
      %v2117 = vpack.c.bf16 %v2108, %v2107
      %v2118 = vpack.c.bf16 %v2110, %v2109
      %v2119 = vpack.c.bf16 %v1714, %v1711
      %v2120 = vpack.c.bf16 %v1722, %v1719
      %v2121 = vpack.c.bf16 %v1730, %v1727
      %v2122 = vpack.c.bf16 %v1738, %v1735
      %v2123 = vpack.c.bf16 %v1746, %v1743
      %v2124 = vpack.c.bf16 %v1754, %v1751
      %v2125 = vpack.c.bf16 %v1762, %v1759
      %v2126 = vpack.c.bf16 %v1770, %v1767
      %2127 = vmatprep.subr.bf16.mxu0 0
      %2128 = vmatpush1.bf16.msra.mxu0 %v2126
      %2129 = vmatprep.subr.bf16.mxu0 0
      %2130 = vmatpush1.bf16.msra.mxu0 %v2125
      %2131 = vmatprep.subr.bf16.mxu0 0
      %2132 = vmatpush1.bf16.msra.mxu0 %v2124
      %2133 = vmatprep.subr.bf16.mxu0 0
      %2134 = vmatpush1.bf16.msra.mxu0 %v2123
      %2135 = vmatprep.subr.bf16.mxu0 0
      %2136 = vmatpush1.bf16.msra.mxu0 %v2122
      %2137 = vmatprep.subr.bf16.mxu0 0
      %2138 = vmatpush1.bf16.msra.mxu0 %v2121
      %2139 = vmatprep.subr.bf16.mxu0 0
      %2140 = vmatpush1.bf16.msra.mxu0 %v2120
      %2141 = vmatprep.subr.bf16.mxu0 0
      %2142 = vmatpush1.bf16.msra.mxu0 %v2119
      %2143 = vmatprep.subr.bf16.mxu0 0
      %2144 = vmatpush2.bf16.msra.mxu0 0
      %2145 = vmatprep.subr.bf16.mxu0 0
      %2146 = vmatpush2.bf16.msra.mxu0 0
      %2147 = vmatprep.subr.bf16.mxu0 0
      %2148 = vmatpush2.bf16.msra.mxu0 0
      %2149 = vmatprep.subr.bf16.mxu0 0
      %2150 = vmatpush2.bf16.msra.mxu0 0
      %2151 = vmatprep.subr.bf16.mxu0 0
      %2152 = vmatpush2.bf16.msra.mxu0 0
      %2153 = vmatprep.subr.bf16.mxu0 0
      %2154 = vmatpush2.bf16.msra.mxu0 0
      %2155 = vmatprep.subr.bf16.mxu0 0
      %2156 = vmatpush2.bf16.msra.mxu0 0
      %2157 = vmatprep.subr.bf16.mxu0 0
      %2158 = vmatpush2.bf16.msra.mxu0 0
      %2159 = vmatprep.mubr.bf16.mxu0 0
      %2160 = vmatmul.mubr.bf16.gmra.mxu0 %v2111
      %v2161 = vpop.f32.mrf.mxu0
      %v2162 = vadd.f32 0.0, %v2161
      %v2163 = vpop.f32.mrf.mxu0
      %v2164 = vpop.f32.mrf.mxu0
      %v2165 = vadd.f32 0.0, %v2164
      %v2166 = vpop.f32.mrf.mxu0
      %2167 = vmatprep.mubr.bf16.mxu0 0
      %2168 = vmatmul.mubr.bf16.gmra.mxu0 %v2112
      %v2169 = vpop.f32.mrf.mxu0
      %v2170 = vadd.f32 0.0, %v2169
      %v2171 = vpop.f32.mrf.mxu0
      %v2172 = vpop.f32.mrf.mxu0
      %v2173 = vadd.f32 0.0, %v2172
      %v2174 = vpop.f32.mrf.mxu0
      %2175 = vmatprep.mubr.bf16.mxu0 0
      %2176 = vmatmul.mubr.bf16.gmra.mxu0 %v2113
      %v2177 = vpop.f32.mrf.mxu0
      %v2178 = vadd.f32 0.0, %v2177
      %v2179 = vpop.f32.mrf.mxu0
      %v2180 = vpop.f32.mrf.mxu0
      %v2181 = vadd.f32 0.0, %v2180
      %v2182 = vpop.f32.mrf.mxu0
      %2183 = vmatprep.mubr.bf16.mxu0 0
      %2184 = vmatmul.mubr.bf16.gmra.mxu0 %v2114
      %v2185 = vpop.f32.mrf.mxu0
      %v2186 = vadd.f32 0.0, %v2185
      %v2187 = vpop.f32.mrf.mxu0
      %v2188 = vpop.f32.mrf.mxu0
      %v2189 = vadd.f32 0.0, %v2188
      %v2190 = vpop.f32.mrf.mxu0
      %2191 = vmatprep.mubr.bf16.mxu0 0
      %2192 = vmatmul.mubr.bf16.gmra.mxu0 %v2115
      %v2193 = vpop.f32.mrf.mxu0
      %v2194 = vadd.f32 0.0, %v2193
      %v2195 = vpop.f32.mrf.mxu0
      %v2196 = vpop.f32.mrf.mxu0
      %v2197 = vadd.f32 0.0, %v2196
      %v2198 = vpop.f32.mrf.mxu0
      %2199 = vmatprep.mubr.bf16.mxu0 0
      %2200 = vmatmul.mubr.bf16.gmra.mxu0 %v2116
      %v2201 = vpop.f32.mrf.mxu0
      %v2202 = vadd.f32 0.0, %v2201
      %v2203 = vpop.f32.mrf.mxu0
      %v2204 = vpop.f32.mrf.mxu0
      %v2205 = vadd.f32 0.0, %v2204
      %v2206 = vpop.f32.mrf.mxu0
      %2207 = vmatprep.mubr.bf16.mxu0 0
      %2208 = vmatmul.mubr.bf16.gmra.mxu0 %v2117
      %v2209 = vpop.f32.mrf.mxu0
      %v2210 = vadd.f32 0.0, %v2209
      %v2211 = vpop.f32.mrf.mxu0
      %v2212 = vpop.f32.mrf.mxu0
      %v2213 = vadd.f32 0.0, %v2212
      %v2214 = vpop.f32.mrf.mxu0
      %2215 = vmatprep.mubr.bf16.mxu0 0
      %2216 = vmatmul.mubr.bf16.gmra.mxu0 %v2118
      %v2217 = vpop.f32.mrf.mxu0
      %v2218 = vadd.f32 0.0, %v2217
      %v2219 = vpop.f32.mrf.mxu0
      %v2220 = vpop.f32.mrf.mxu0
      %v2221 = vadd.f32 0.0, %v2220
      %v2222 = vpop.f32.mrf.mxu0
      %2223 = vdwg.mxu0
      %v2224 = vpack.c.bf16 %v2165, %v2162
      %v2225 = vpack.c.bf16 %v2173, %v2170
      %v2226 = vpack.c.bf16 %v2181, %v2178
      %v2227 = vpack.c.bf16 %v2189, %v2186
      %v2228 = vpack.c.bf16 %v2197, %v2194
      %v2229 = vpack.c.bf16 %v2205, %v2202
      %v2230 = vpack.c.bf16 %v2213, %v2210
      %v2231 = vpack.c.bf16 %v2221, %v2218
      %v2232 = vld [vmem:[%s861] sm:$0xf]
      %s2233 = scalar_lea.vmem %s834, 16
      %v2234 = vld [vmem:[%s2233] sm:$0xf]
      %v2235 = vld [vmem:[%s2233 + $0x4] sm:$0xf]
      %v2236 = vld [vmem:[%s2233 + $0x8] sm:$0xf]
      %v2237 = vld [vmem:[%s2233 + $0xc] sm:$0xf]
      %s2238 = scalar_lea.vmem %s848, 1
      %v2239 = vld [vmem:[%s2238] sm:$0x1]
      %v2241 = vlaneseq
      %v2242 = vshrl.u32 %v2241, 7
      %v2243 = vsub.s32 0, %v2242
      %v2244 = vrot.slane %v2239, %v2243
      %v2250 = vunpack.c.l.b16 %v2234
      %v2251 = vunpack.c.l.b16 %v2235
      %v2252 = vunpack.c.l.b16 %v2236
      %v2253 = vunpack.c.l.b16 %v2237
      %v2254 = vpack.c.b16 %v2251, %v2250
      %v2255 = vpack.c.b16 %v2253, %v2252
      %2258 = vmatprep.subr.bf16.mxu0 0
      %2259 = vmatpush1.bf16.msra.mxu0 0
      %2260 = vmatprep.subr.bf16.mxu0 0
      %2261 = vmatpush1.bf16.msra.mxu0 0
      %2262 = vmatprep.subr.bf16.mxu0 0
      %2263 = vmatpush1.bf16.msra.mxu0 0
      %2264 = vmatprep.subr.bf16.mxu0 0
      %2265 = vmatpush1.bf16.msra.mxu0 0
      %2266 = vmatprep.subr.bf16.mxu0 0
      %2267 = vmatpush1.bf16.msra.mxu0 0
      %2268 = vmatprep.subr.bf16.mxu0 0
      %2269 = vmatpush1.bf16.msra.mxu0 0
      %2270 = vmatprep.subr.bf16.mxu0 0
      %2271 = vmatpush1.bf16.msra.mxu0 %v2255
      %2272 = vmatprep.subr.bf16.mxu0 0
      %2273 = vmatpush1.bf16.msra.mxu0 %v2254
      %2274 = vmatprep.subr.bf16.mxu0 0
      %2275 = vmatpush2.bf16.msra.mxu0 0
      %2276 = vmatprep.subr.bf16.mxu0 0
      %2277 = vmatpush2.bf16.msra.mxu0 0
      %2278 = vmatprep.subr.bf16.mxu0 0
      %2279 = vmatpush2.bf16.msra.mxu0 0
      %2280 = vmatprep.subr.bf16.mxu0 0
      %2281 = vmatpush2.bf16.msra.mxu0 0
      %2282 = vmatprep.subr.bf16.mxu0 0
      %2283 = vmatpush2.bf16.msra.mxu0 0
      %2284 = vmatprep.subr.bf16.mxu0 0
      %2285 = vmatpush2.bf16.msra.mxu0 0
      %2286 = vmatprep.subr.bf16.mxu0 0
      %2287 = vmatpush2.bf16.msra.mxu0 0
      %2288 = vmatprep.subr.bf16.mxu0 0
      %2289 = vmatpush2.bf16.msra.mxu0 0
      %2290 = vmatprep.mubr.bf16.mxu0 0
      %2291 = vmatmul.mubr.bf16.gmra.mxu0 %v1413
      %v2292 = vpop.f32.mrf.mxu0
      %v2293 = vadd.f32 %v2244, %v2292
      %v2294 = vpop.f32.mrf.mxu0
      %v2295 = vpop.f32.mrf.mxu0
      %v2296 = vadd.f32 %v2244, %v2295
      %v2297 = vpop.f32.mrf.mxu0
      %2298 = vmatprep.mubr.bf16.mxu0 0
      %2299 = vmatmul.mubr.bf16.gmra.mxu0 %v1416
      %v2300 = vpop.f32.mrf.mxu0
      %v2301 = vadd.f32 %v2244, %v2300
      %v2302 = vpop.f32.mrf.mxu0
      %v2303 = vpop.f32.mrf.mxu0
      %v2304 = vadd.f32 %v2244, %v2303
      %v2305 = vpop.f32.mrf.mxu0
      %2306 = vmatprep.mubr.bf16.mxu0 0
      %2307 = vmatmul.mubr.bf16.gmra.mxu0 %v1419
      %v2308 = vpop.f32.mrf.mxu0
      %v2309 = vadd.f32 %v2244, %v2308
      %v2310 = vpop.f32.mrf.mxu0
      %v2311 = vpop.f32.mrf.mxu0
      %v2312 = vadd.f32 %v2244, %v2311
      %v2313 = vpop.f32.mrf.mxu0
      %2314 = vmatprep.mubr.bf16.mxu0 0
      %2315 = vmatmul.mubr.bf16.gmra.mxu0 %v1422
      %v2316 = vpop.f32.mrf.mxu0
      %v2317 = vadd.f32 %v2244, %v2316
      %v2318 = vpop.f32.mrf.mxu0
      %v2319 = vpop.f32.mrf.mxu0
      %v2320 = vadd.f32 %v2244, %v2319
      %v2321 = vpop.f32.mrf.mxu0
      %2322 = vmatprep.mubr.bf16.mxu0 0
      %2323 = vmatmul.mubr.bf16.gmra.mxu0 %v1425
      %v2324 = vpop.f32.mrf.mxu0
      %v2325 = vadd.f32 %v2244, %v2324
      %v2326 = vpop.f32.mrf.mxu0
      %v2327 = vpop.f32.mrf.mxu0
      %v2328 = vadd.f32 %v2244, %v2327
      %v2329 = vpop.f32.mrf.mxu0
      %2330 = vmatprep.mubr.bf16.mxu0 0
      %2331 = vmatmul.mubr.bf16.gmra.mxu0 %v1428
      %v2332 = vpop.f32.mrf.mxu0
      %v2333 = vadd.f32 %v2244, %v2332
      %v2334 = vpop.f32.mrf.mxu0
      %v2335 = vpop.f32.mrf.mxu0
      %v2336 = vadd.f32 %v2244, %v2335
      %v2337 = vpop.f32.mrf.mxu0
      %2338 = vmatprep.mubr.bf16.mxu0 0
      %2339 = vmatmul.mubr.bf16.gmra.mxu0 %v1431
      %v2340 = vpop.f32.mrf.mxu0
      %v2341 = vadd.f32 %v2244, %v2340
      %v2342 = vpop.f32.mrf.mxu0
      %v2343 = vpop.f32.mrf.mxu0
      %v2344 = vadd.f32 %v2244, %v2343
      %v2345 = vpop.f32.mrf.mxu0
      %2346 = vmatprep.mubr.bf16.mxu0 0
      %2347 = vmatmul.mubr.bf16.gmra.mxu0 %v1434
      %v2348 = vpop.f32.mrf.mxu0
      %v2349 = vadd.f32 %v2244, %v2348
      %v2350 = vpop.f32.mrf.mxu0
      %v2351 = vpop.f32.mrf.mxu0
      %v2352 = vadd.f32 %v2244, %v2351
      %v2353 = vpop.f32.mrf.mxu0
      %2354 = vdwg.mxu0
      %s2355 = scalar_lea.vmem %s839, 16
      %v2356 = vld [vmem:[%s2355] sm:$0xf]
      %v2357 = vld [vmem:[%s2355 + $0x4] sm:$0xf]
      %v2358 = vld [vmem:[%s2355 + $0x8] sm:$0xf]
      %v2359 = vld [vmem:[%s2355 + $0xc] sm:$0xf]
      %s2360 = scalar_lea.vmem %s852, 1
      %v2361 = vld [vmem:[%s2360] sm:$0x1]
      %v2363 = vlaneseq
      %v2364 = vshrl.u32 %v2363, 7
      %v2365 = vsub.s32 0, %v2364
      %v2366 = vrot.slane %v2361, %v2365
      %v2372 = vunpack.c.l.b16 %v2356
      %v2373 = vunpack.c.l.b16 %v2357
      %v2374 = vunpack.c.l.b16 %v2358
      %v2375 = vunpack.c.l.b16 %v2359
      %v2376 = vpack.c.b16 %v2373, %v2372
      %v2377 = vpack.c.b16 %v2375, %v2374
      %2380 = vmatprep.subr.bf16.mxu0 0
      %2381 = vmatpush1.bf16.msra.mxu0 0
      %2382 = vmatprep.subr.bf16.mxu0 0
      %2383 = vmatpush1.bf16.msra.mxu0 0
      %2384 = vmatprep.subr.bf16.mxu0 0
      %2385 = vmatpush1.bf16.msra.mxu0 0
      %2386 = vmatprep.subr.bf16.mxu0 0
      %2387 = vmatpush1.bf16.msra.mxu0 0
      %2388 = vmatprep.subr.bf16.mxu0 0
      %2389 = vmatpush1.bf16.msra.mxu0 0
      %2390 = vmatprep.subr.bf16.mxu0 0
      %2391 = vmatpush1.bf16.msra.mxu0 0
      %2392 = vmatprep.subr.bf16.mxu0 0
      %2393 = vmatpush1.bf16.msra.mxu0 %v2377
      %2394 = vmatprep.subr.bf16.mxu0 0
      %2395 = vmatpush1.bf16.msra.mxu0 %v2376
      %2396 = vmatprep.subr.bf16.mxu0 0
      %2397 = vmatpush2.bf16.msra.mxu0 0
      %2398 = vmatprep.subr.bf16.mxu0 0
      %2399 = vmatpush2.bf16.msra.mxu0 0
      %2400 = vmatprep.subr.bf16.mxu0 0
      %2401 = vmatpush2.bf16.msra.mxu0 0
      %2402 = vmatprep.subr.bf16.mxu0 0
      %2403 = vmatpush2.bf16.msra.mxu0 0
      %2404 = vmatprep.subr.bf16.mxu0 0
      %2405 = vmatpush2.bf16.msra.mxu0 0
      %2406 = vmatprep.subr.bf16.mxu0 0
      %2407 = vmatpush2.bf16.msra.mxu0 0
      %2408 = vmatprep.subr.bf16.mxu0 0
      %2409 = vmatpush2.bf16.msra.mxu0 0
      %2410 = vmatprep.subr.bf16.mxu0 0
      %2411 = vmatpush2.bf16.msra.mxu0 0
      %2412 = vmatprep.mubr.bf16.mxu0 0
      %2413 = vmatmul.mubr.bf16.gmra.mxu0 %v1413
      %v2414 = vpop.f32.mrf.mxu0
      %v2415 = vadd.f32 %v2366, %v2414
      %v2416 = vpop.f32.mrf.mxu0
      %v2417 = vpop.f32.mrf.mxu0
      %v2418 = vadd.f32 %v2366, %v2417
      %v2419 = vpop.f32.mrf.mxu0
      %2420 = vmatprep.mubr.bf16.mxu0 0
      %2421 = vmatmul.mubr.bf16.gmra.mxu0 %v1416
      %v2422 = vpop.f32.mrf.mxu0
      %v2423 = vadd.f32 %v2366, %v2422
      %v2424 = vpop.f32.mrf.mxu0
      %v2425 = vpop.f32.mrf.mxu0
      %v2426 = vadd.f32 %v2366, %v2425
      %v2427 = vpop.f32.mrf.mxu0
      %2428 = vmatprep.mubr.bf16.mxu0 0
      %2429 = vmatmul.mubr.bf16.gmra.mxu0 %v1419
      %v2430 = vpop.f32.mrf.mxu0
      %v2431 = vadd.f32 %v2366, %v2430
      %v2432 = vpop.f32.mrf.mxu0
      %v2433 = vpop.f32.mrf.mxu0
      %v2434 = vadd.f32 %v2366, %v2433
      %v2435 = vpop.f32.mrf.mxu0
      %2436 = vmatprep.mubr.bf16.mxu0 0
      %2437 = vmatmul.mubr.bf16.gmra.mxu0 %v1422
      %v2438 = vpop.f32.mrf.mxu0
      %v2439 = vadd.f32 %v2366, %v2438
      %v2440 = vpop.f32.mrf.mxu0
      %v2441 = vpop.f32.mrf.mxu0
      %v2442 = vadd.f32 %v2366, %v2441
      %v2443 = vpop.f32.mrf.mxu0
      %2444 = vmatprep.mubr.bf16.mxu0 0
      %2445 = vmatmul.mubr.bf16.gmra.mxu0 %v1425
      %v2446 = vpop.f32.mrf.mxu0
      %v2447 = vadd.f32 %v2366, %v2446
      %v2448 = vpop.f32.mrf.mxu0
      %v2449 = vpop.f32.mrf.mxu0
      %v2450 = vadd.f32 %v2366, %v2449
      %v2451 = vpop.f32.mrf.mxu0
      %2452 = vmatprep.mubr.bf16.mxu0 0
      %2453 = vmatmul.mubr.bf16.gmra.mxu0 %v1428
      %v2454 = vpop.f32.mrf.mxu0
      %v2455 = vadd.f32 %v2366, %v2454
      %v2456 = vpop.f32.mrf.mxu0
      %v2457 = vpop.f32.mrf.mxu0
      %v2458 = vadd.f32 %v2366, %v2457
      %v2459 = vpop.f32.mrf.mxu0
      %2460 = vmatprep.mubr.bf16.mxu0 0
      %2461 = vmatmul.mubr.bf16.gmra.mxu0 %v1431
      %v2462 = vpop.f32.mrf.mxu0
      %v2463 = vadd.f32 %v2366, %v2462
      %v2464 = vpop.f32.mrf.mxu0
      %v2465 = vpop.f32.mrf.mxu0
      %v2466 = vadd.f32 %v2366, %v2465
      %v2467 = vpop.f32.mrf.mxu0
      %2468 = vmatprep.mubr.bf16.mxu0 0
      %2469 = vmatmul.mubr.bf16.gmra.mxu0 %v1434
      %v2470 = vpop.f32.mrf.mxu0
      %v2471 = vadd.f32 %v2366, %v2470
      %v2472 = vpop.f32.mrf.mxu0
      %v2473 = vpop.f32.mrf.mxu0
      %v2474 = vadd.f32 %v2366, %v2473
      %v2475 = vpop.f32.mrf.mxu0
      %2476 = vdwg.mxu0
      %s2477 = scalar_lea.vmem %s844, 16
      %v2478 = vld [vmem:[%s2477] sm:$0xf]
      %v2479 = vld [vmem:[%s2477 + $0x4] sm:$0xf]
      %v2480 = vld [vmem:[%s2477 + $0x8] sm:$0xf]
      %v2481 = vld [vmem:[%s2477 + $0xc] sm:$0xf]
      %s2482 = scalar_lea.vmem %s856, 1
      %v2483 = vld [vmem:[%s2482] sm:$0x1]
      %v2485 = vlaneseq
      %v2486 = vshrl.u32 %v2485, 7
      %v2487 = vsub.s32 0, %v2486
      %v2488 = vrot.slane %v2483, %v2487
      %v2494 = vunpack.c.l.b16 %v2478
      %v2495 = vunpack.c.l.b16 %v2479
      %v2496 = vunpack.c.l.b16 %v2480
      %v2497 = vunpack.c.l.b16 %v2481
      %v2498 = vpack.c.b16 %v2495, %v2494
      %v2499 = vpack.c.b16 %v2497, %v2496
      %2502 = vmatprep.subr.bf16.mxu0 0
      %2503 = vmatpush1.bf16.msra.mxu0 0
      %2504 = vmatprep.subr.bf16.mxu0 0
      %2505 = vmatpush1.bf16.msra.mxu0 0
      %2506 = vmatprep.subr.bf16.mxu0 0
      %2507 = vmatpush1.bf16.msra.mxu0 0
      %2508 = vmatprep.subr.bf16.mxu0 0
      %2509 = vmatpush1.bf16.msra.mxu0 0
      %2510 = vmatprep.subr.bf16.mxu0 0
      %2511 = vmatpush1.bf16.msra.mxu0 0
      %2512 = vmatprep.subr.bf16.mxu0 0
      %2513 = vmatpush1.bf16.msra.mxu0 0
      %2514 = vmatprep.subr.bf16.mxu0 0
      %2515 = vmatpush1.bf16.msra.mxu0 %v2499
      %2516 = vmatprep.subr.bf16.mxu0 0
      %2517 = vmatpush1.bf16.msra.mxu0 %v2498
      %2518 = vmatprep.subr.bf16.mxu0 0
      %2519 = vmatpush2.bf16.msra.mxu0 0
      %2520 = vmatprep.subr.bf16.mxu0 0
      %2521 = vmatpush2.bf16.msra.mxu0 0
      %2522 = vmatprep.subr.bf16.mxu0 0
      %2523 = vmatpush2.bf16.msra.mxu0 0
      %2524 = vmatprep.subr.bf16.mxu0 0
      %2525 = vmatpush2.bf16.msra.mxu0 0
      %2526 = vmatprep.subr.bf16.mxu0 0
      %2527 = vmatpush2.bf16.msra.mxu0 0
      %2528 = vmatprep.subr.bf16.mxu0 0
      %2529 = vmatpush2.bf16.msra.mxu0 0
      %2530 = vmatprep.subr.bf16.mxu0 0
      %2531 = vmatpush2.bf16.msra.mxu0 0
      %2532 = vmatprep.subr.bf16.mxu0 0
      %2533 = vmatpush2.bf16.msra.mxu0 0
      %2534 = vmatprep.mubr.bf16.mxu0 0
      %2535 = vmatmul.mubr.bf16.gmra.mxu0 %v1413
      %v2536 = vpop.f32.mrf.mxu0
      %v2537 = vadd.f32 %v2488, %v2536
      %v2538 = vpop.f32.mrf.mxu0
      %v2539 = vpop.f32.mrf.mxu0
      %v2540 = vadd.f32 %v2488, %v2539
      %v2541 = vpop.f32.mrf.mxu0
      %2542 = vmatprep.mubr.bf16.mxu0 0
      %2543 = vmatmul.mubr.bf16.gmra.mxu0 %v1416
      %v2544 = vpop.f32.mrf.mxu0
      %v2545 = vadd.f32 %v2488, %v2544
      %v2546 = vpop.f32.mrf.mxu0
      %v2547 = vpop.f32.mrf.mxu0
      %v2548 = vadd.f32 %v2488, %v2547
      %v2549 = vpop.f32.mrf.mxu0
      %2550 = vmatprep.mubr.bf16.mxu0 0
      %2551 = vmatmul.mubr.bf16.gmra.mxu0 %v1419
      %v2552 = vpop.f32.mrf.mxu0
      %v2553 = vadd.f32 %v2488, %v2552
      %v2554 = vpop.f32.mrf.mxu0
      %v2555 = vpop.f32.mrf.mxu0
      %v2556 = vadd.f32 %v2488, %v2555
      %v2557 = vpop.f32.mrf.mxu0
      %2558 = vmatprep.mubr.bf16.mxu0 0
      %2559 = vmatmul.mubr.bf16.gmra.mxu0 %v1422
      %v2560 = vpop.f32.mrf.mxu0
      %v2561 = vadd.f32 %v2488, %v2560
      %v2562 = vpop.f32.mrf.mxu0
      %v2563 = vpop.f32.mrf.mxu0
      %v2564 = vadd.f32 %v2488, %v2563
      %v2565 = vpop.f32.mrf.mxu0
      %2566 = vmatprep.mubr.bf16.mxu0 0
      %2567 = vmatmul.mubr.bf16.gmra.mxu0 %v1425
      %v2568 = vpop.f32.mrf.mxu0
      %v2569 = vadd.f32 %v2488, %v2568
      %v2570 = vpop.f32.mrf.mxu0
      %v2571 = vpop.f32.mrf.mxu0
      %v2572 = vadd.f32 %v2488, %v2571
      %v2573 = vpop.f32.mrf.mxu0
      %2574 = vmatprep.mubr.bf16.mxu0 0
      %2575 = vmatmul.mubr.bf16.gmra.mxu0 %v1428
      %v2576 = vpop.f32.mrf.mxu0
      %v2577 = vadd.f32 %v2488, %v2576
      %v2578 = vpop.f32.mrf.mxu0
      %v2579 = vpop.f32.mrf.mxu0
      %v2580 = vadd.f32 %v2488, %v2579
      %v2581 = vpop.f32.mrf.mxu0
      %2582 = vmatprep.mubr.bf16.mxu0 0
      %2583 = vmatmul.mubr.bf16.gmra.mxu0 %v1431
      %v2584 = vpop.f32.mrf.mxu0
      %v2585 = vadd.f32 %v2488, %v2584
      %v2586 = vpop.f32.mrf.mxu0
      %v2587 = vpop.f32.mrf.mxu0
      %v2588 = vadd.f32 %v2488, %v2587
      %v2589 = vpop.f32.mrf.mxu0
      %2590 = vmatprep.mubr.bf16.mxu0 0
      %2591 = vmatmul.mubr.bf16.gmra.mxu0 %v1434
      %v2592 = vpop.f32.mrf.mxu0
      %v2593 = vadd.f32 %v2488, %v2592
      %v2594 = vpop.f32.mrf.mxu0
      %v2595 = vpop.f32.mrf.mxu0
      %v2596 = vadd.f32 %v2488, %v2595
      %v2597 = vpop.f32.mrf.mxu0
      %2598 = vdwg.mxu0
      %v2599 = vpack.c.bf16 %v2296, %v2293
      %v2600 = vpack.c.bf16 %v2304, %v2301
      %v2601 = vpack.c.bf16 %v2312, %v2309
      %v2602 = vpack.c.bf16 %v2320, %v2317
      %v2603 = vpack.c.bf16 %v2328, %v2325
      %v2604 = vpack.c.bf16 %v2336, %v2333
      %v2605 = vpack.c.bf16 %v2344, %v2341
      %v2606 = vpack.c.bf16 %v2352, %v2349
      %v2607 = vpack.c.bf16 %v2418, %v2415
      %v2608 = vpack.c.bf16 %v2426, %v2423
      %v2609 = vpack.c.bf16 %v2434, %v2431
      %v2610 = vpack.c.bf16 %v2442, %v2439
      %v2611 = vpack.c.bf16 %v2450, %v2447
      %v2612 = vpack.c.bf16 %v2458, %v2455
      %v2613 = vpack.c.bf16 %v2466, %v2463
      %v2614 = vpack.c.bf16 %v2474, %v2471
      %v2616 = vsel %vm1789, %v2599, 0
      %v2619 = vsel %vm1789, %v2600, 0
      %v2622 = vsel %vm1789, %v2601, 0
      %v2625 = vsel %vm1789, %v2602, 0
      %v2628 = vsel %vm1789, %v2603, 0
      %v2631 = vsel %vm1789, %v2604, 0
      %v2634 = vsel %vm1789, %v2605, 0
      %v2637 = vsel %vm1789, %v2606, 0
      %v2640 = vsel %vm1789, %v2607, 0
      %v2643 = vsel %vm1789, %v2608, 0
      %v2646 = vsel %vm1789, %v2609, 0
      %v2649 = vsel %vm1789, %v2610, 0
      %v2652 = vsel %vm1789, %v2611, 0
      %v2655 = vsel %vm1789, %v2612, 0
      %v2658 = vsel %vm1789, %v2613, 0
      %v2661 = vsel %vm1789, %v2614, 0
      %2663 = vmatprep.subr.bf16.mxu0 0
      %2664 = vmatpush1.bf16.xpose.msra.mxu0 %v2661
      %2665 = vmatprep.subr.bf16.mxu0 0
      %2666 = vmatpush1.bf16.xpose.msra.mxu0 %v2658
      %2667 = vmatprep.subr.bf16.mxu0 0
      %2668 = vmatpush1.bf16.xpose.msra.mxu0 %v2655
      %2669 = vmatprep.subr.bf16.mxu0 0
      %2670 = vmatpush1.bf16.xpose.msra.mxu0 %v2652
      %2671 = vmatprep.subr.bf16.mxu0 0
      %2672 = vmatpush1.bf16.xpose.msra.mxu0 %v2649
      %2673 = vmatprep.subr.bf16.mxu0 0
      %2674 = vmatpush1.bf16.xpose.msra.mxu0 %v2646
      %2675 = vmatprep.subr.bf16.mxu0 0
      %2676 = vmatpush1.bf16.xpose.msra.mxu0 %v2643
      %2677 = vmatprep.subr.bf16.mxu0 0
      %2678 = vmatpush1.bf16.xpose.msra.mxu0 %v2640
      %2679 = vmatprep.subr.bf16.mxu0 0
      %2680 = vmatpush2.bf16.xpose.msra.mxu0 0
      %2681 = vmatprep.subr.bf16.mxu0 0
      %2682 = vmatpush2.bf16.xpose.msra.mxu0 0
      %2683 = vmatprep.subr.bf16.mxu0 0
      %2684 = vmatpush2.bf16.xpose.msra.mxu0 0
      %2685 = vmatprep.subr.bf16.mxu0 0
      %2686 = vmatpush2.bf16.xpose.msra.mxu0 0
      %2687 = vmatprep.subr.bf16.mxu0 0
      %2688 = vmatpush2.bf16.xpose.msra.mxu0 0
      %2689 = vmatprep.subr.bf16.mxu0 0
      %2690 = vmatpush2.bf16.xpose.msra.mxu0 0
      %2691 = vmatprep.subr.bf16.mxu0 0
      %2692 = vmatpush2.bf16.xpose.msra.mxu0 0
      %2693 = vmatprep.subr.bf16.mxu0 0
      %2694 = vmatpush2.bf16.xpose.msra.mxu0 0
      %2695 = vmatprep.mubr.bf16.mxu0 0
      %2696 = vmatmul.mubr.bf16.gmra.mxu0 %v2616
      %v2697 = vpop.f32.mrf.mxu0
      %v2698 = vadd.f32 0.0, %v2697
      %v2699 = vpop.f32.mrf.mxu0
      %v2700 = vpop.f32.mrf.mxu0
      %v2701 = vadd.f32 0.0, %v2700
      %v2702 = vpop.f32.mrf.mxu0
      %2703 = vmatprep.mubr.bf16.mxu0 0
      %2704 = vmatmul.mubr.bf16.gmra.mxu0 %v2619
      %v2705 = vpop.f32.mrf.mxu0
      %v2706 = vadd.f32 0.0, %v2705
      %v2707 = vpop.f32.mrf.mxu0
      %v2708 = vpop.f32.mrf.mxu0
      %v2709 = vadd.f32 0.0, %v2708
      %v2710 = vpop.f32.mrf.mxu0
      %2711 = vmatprep.mubr.bf16.mxu0 0
      %2712 = vmatmul.mubr.bf16.gmra.mxu0 %v2622
      %v2713 = vpop.f32.mrf.mxu0
      %v2714 = vadd.f32 0.0, %v2713
      %v2715 = vpop.f32.mrf.mxu0
      %v2716 = vpop.f32.mrf.mxu0
      %v2717 = vadd.f32 0.0, %v2716
      %v2718 = vpop.f32.mrf.mxu0
      %2719 = vmatprep.mubr.bf16.mxu0 0
      %2720 = vmatmul.mubr.bf16.gmra.mxu0 %v2625
      %v2721 = vpop.f32.mrf.mxu0
      %v2722 = vadd.f32 0.0, %v2721
      %v2723 = vpop.f32.mrf.mxu0
      %v2724 = vpop.f32.mrf.mxu0
      %v2725 = vadd.f32 0.0, %v2724
      %v2726 = vpop.f32.mrf.mxu0
      %2727 = vmatprep.mubr.bf16.mxu0 0
      %2728 = vmatmul.mubr.bf16.gmra.mxu0 %v2628
      %v2729 = vpop.f32.mrf.mxu0
      %v2730 = vadd.f32 0.0, %v2729
      %v2731 = vpop.f32.mrf.mxu0
      %v2732 = vpop.f32.mrf.mxu0
      %v2733 = vadd.f32 0.0, %v2732
      %v2734 = vpop.f32.mrf.mxu0
      %2735 = vmatprep.mubr.bf16.mxu0 0
      %2736 = vmatmul.mubr.bf16.gmra.mxu0 %v2631
      %v2737 = vpop.f32.mrf.mxu0
      %v2738 = vadd.f32 0.0, %v2737
      %v2739 = vpop.f32.mrf.mxu0
      %v2740 = vpop.f32.mrf.mxu0
      %v2741 = vadd.f32 0.0, %v2740
      %v2742 = vpop.f32.mrf.mxu0
      %2743 = vmatprep.mubr.bf16.mxu0 0
      %2744 = vmatmul.mubr.bf16.gmra.mxu0 %v2634
      %v2745 = vpop.f32.mrf.mxu0
      %v2746 = vadd.f32 0.0, %v2745
      %v2747 = vpop.f32.mrf.mxu0
      %v2748 = vpop.f32.mrf.mxu0
      %v2749 = vadd.f32 0.0, %v2748
      %v2750 = vpop.f32.mrf.mxu0
      %2751 = vmatprep.mubr.bf16.mxu0 0
      %2752 = vmatmul.mubr.bf16.gmra.mxu0 %v2637
      %v2753 = vpop.f32.mrf.mxu0
      %v2754 = vadd.f32 0.0, %v2753
      %v2755 = vpop.f32.mrf.mxu0
      %v2756 = vpop.f32.mrf.mxu0
      %v2757 = vadd.f32 0.0, %v2756
      %v2758 = vpop.f32.mrf.mxu0
      %2759 = vdwg.mxu0
      %v2760 = vmul.f32 %v2698, 0.35355338
      %v2761 = vmul.f32 %v2701, 0.35355338
      %v2762 = vmul.f32 %v2706, 0.35355338
      %v2763 = vmul.f32 %v2709, 0.35355338
      %v2764 = vmul.f32 %v2714, 0.35355338
      %v2765 = vmul.f32 %v2717, 0.35355338
      %v2766 = vmul.f32 %v2722, 0.35355338
      %v2767 = vmul.f32 %v2725, 0.35355338
      %v2768 = vmul.f32 %v2730, 0.35355338
      %v2769 = vmul.f32 %v2733, 0.35355338
      %v2770 = vmul.f32 %v2738, 0.35355338
      %v2771 = vmul.f32 %v2741, 0.35355338
      %v2772 = vmul.f32 %v2746, 0.35355338
      %v2773 = vmul.f32 %v2749, 0.35355338
      %v2774 = vmul.f32 %v2754, 0.35355338
      %v2775 = vmul.f32 %v2757, 0.35355338
      %v2776 = vadd.f32 %v2760, %v1372
      %v2777 = vadd.f32 %v2761, %v1373
      %v2778 = vadd.f32 %v2762, %v1374
      %v2779 = vadd.f32 %v2763, %v1375
      %v2780 = vadd.f32 %v2764, %v1376
      %v2781 = vadd.f32 %v2765, %v1377
      %v2782 = vadd.f32 %v2766, %v1378
      %v2783 = vadd.f32 %v2767, %v1379
      %v2784 = vadd.f32 %v2768, %v1380
      %v2785 = vadd.f32 %v2769, %v1381
      %v2786 = vadd.f32 %v2770, %v1382
      %v2787 = vadd.f32 %v2771, %v1383
      %v2788 = vadd.f32 %v2772, %v1384
      %v2789 = vadd.f32 %v2773, %v1385
      %v2790 = vadd.f32 %v2774, %v1386
      %v2791 = vadd.f32 %v2775, %v1387
      %2792 = vmax.xlane.f32.xlu0 %v2776
      %v2793 = vpop.xlane.xlu0 %2792
      %2794 = vmax.xlane.f32.xlu0 %v2777
      %v2795 = vpop.xlane.xlu0 %2794
      %2796 = vmax.xlane.f32.xlu0 %v2778
      %v2797 = vpop.xlane.xlu0 %2796
      %2798 = vmax.xlane.f32.xlu0 %v2779
      %v2799 = vpop.xlane.xlu0 %2798
      %2800 = vmax.xlane.f32.xlu0 %v2780
      %v2801 = vpop.xlane.xlu0 %2800
      %2802 = vmax.xlane.f32.xlu0 %v2781
      %v2803 = vpop.xlane.xlu0 %2802
      %2804 = vmax.xlane.f32.xlu0 %v2782
      %v2805 = vpop.xlane.xlu0 %2804
      %2806 = vmax.xlane.f32.xlu0 %v2783
      %v2807 = vpop.xlane.xlu0 %2806
      %2808 = vmax.xlane.f32.xlu0 %v2784
      %v2809 = vpop.xlane.xlu0 %2808
      %2810 = vmax.xlane.f32.xlu0 %v2785
      %v2811 = vpop.xlane.xlu0 %2810
      %2812 = vmax.xlane.f32.xlu0 %v2786
      %v2813 = vpop.xlane.xlu0 %2812
      %2814 = vmax.xlane.f32.xlu0 %v2787
      %v2815 = vpop.xlane.xlu0 %2814
      %2816 = vmax.xlane.f32.xlu0 %v2788
      %v2817 = vpop.xlane.xlu0 %2816
      %2818 = vmax.xlane.f32.xlu0 %v2789
      %v2819 = vpop.xlane.xlu0 %2818
      %2820 = vmax.xlane.f32.xlu0 %v2790
      %v2821 = vpop.xlane.xlu0 %2820
      %2822 = vmax.xlane.f32.xlu0 %v2791
      %v2823 = vpop.xlane.xlu0 %2822
      %v2824 = vsub.f32 %v2776, %v2793
      %v2825 = vsub.f32 %v2777, %v2795
      %v2826 = vsub.f32 %v2778, %v2797
      %v2827 = vsub.f32 %v2779, %v2799
      %v2828 = vsub.f32 %v2780, %v2801
      %v2829 = vsub.f32 %v2781, %v2803
      %v2830 = vsub.f32 %v2782, %v2805
      %v2831 = vsub.f32 %v2783, %v2807
      %v2832 = vsub.f32 %v2784, %v2809
      %v2833 = vsub.f32 %v2785, %v2811
      %v2834 = vsub.f32 %v2786, %v2813
      %v2835 = vsub.f32 %v2787, %v2815
      %v2836 = vsub.f32 %v2788, %v2817
      %v2837 = vsub.f32 %v2789, %v2819
      %v2838 = vsub.f32 %v2790, %v2821
      %v2839 = vsub.f32 %v2791, %v2823
      %v2840 = vmul.f32 %v2824, 1.442695
      %v2841 = vpow.pop %v2840
      %v2842 = vmul.f32 %v2825, 1.442695
      %v2843 = vpow.pop %v2842
      %v2844 = vmul.f32 %v2826, 1.442695
      %v2845 = vpow.pop %v2844
      %v2846 = vmul.f32 %v2827, 1.442695
      %v2847 = vpow.pop %v2846
      %v2848 = vmul.f32 %v2828, 1.442695
      %v2849 = vpow.pop %v2848
      %v2850 = vmul.f32 %v2829, 1.442695
      %v2851 = vpow.pop %v2850
      %v2852 = vmul.f32 %v2830, 1.442695
      %v2853 = vpow.pop %v2852
      %v2854 = vmul.f32 %v2831, 1.442695
      %v2855 = vpow.pop %v2854
      %v2856 = vmul.f32 %v2832, 1.442695
      %v2857 = vpow.pop %v2856
      %v2858 = vmul.f32 %v2833, 1.442695
      %v2859 = vpow.pop %v2858
      %v2860 = vmul.f32 %v2834, 1.442695
      %v2861 = vpow.pop %v2860
      %v2862 = vmul.f32 %v2835, 1.442695
      %v2863 = vpow.pop %v2862
      %v2864 = vmul.f32 %v2836, 1.442695
      %v2865 = vpow.pop %v2864
      %v2866 = vmul.f32 %v2837, 1.442695
      %v2867 = vpow.pop %v2866
      %v2868 = vmul.f32 %v2838, 1.442695
      %v2869 = vpow.pop %v2868
      %v2870 = vmul.f32 %v2839, 1.442695
      %v2871 = vpow.pop %v2870
      %2872 = vadd.xlane.f32.xlu0 %v2841
      %v2873 = vpop.xlane.xlu0 %2872
      %2874 = vadd.xlane.f32.xlu0 %v2843
      %v2875 = vpop.xlane.xlu0 %2874
      %2876 = vadd.xlane.f32.xlu0 %v2845
      %v2877 = vpop.xlane.xlu0 %2876
      %2878 = vadd.xlane.f32.xlu0 %v2847
      %v2879 = vpop.xlane.xlu0 %2878
      %2880 = vadd.xlane.f32.xlu0 %v2849
      %v2881 = vpop.xlane.xlu0 %2880
      %2882 = vadd.xlane.f32.xlu0 %v2851
      %v2883 = vpop.xlane.xlu0 %2882
      %2884 = vadd.xlane.f32.xlu0 %v2853
      %v2885 = vpop.xlane.xlu0 %2884
      %2886 = vadd.xlane.f32.xlu0 %v2855
      %v2887 = vpop.xlane.xlu0 %2886
      %2888 = vadd.xlane.f32.xlu0 %v2857
      %v2889 = vpop.xlane.xlu0 %2888
      %2890 = vadd.xlane.f32.xlu0 %v2859
      %v2891 = vpop.xlane.xlu0 %2890
      %2892 = vadd.xlane.f32.xlu0 %v2861
      %v2893 = vpop.xlane.xlu0 %2892
      %2894 = vadd.xlane.f32.xlu0 %v2863
      %v2895 = vpop.xlane.xlu0 %2894
      %2896 = vadd.xlane.f32.xlu0 %v2865
      %v2897 = vpop.xlane.xlu0 %2896
      %2898 = vadd.xlane.f32.xlu0 %v2867
      %v2899 = vpop.xlane.xlu0 %2898
      %2900 = vadd.xlane.f32.xlu0 %v2869
      %v2901 = vpop.xlane.xlu0 %2900
      %2902 = vadd.xlane.f32.xlu0 %v2871
      %v2903 = vpop.xlane.xlu0 %2902
      %v2904 = vrcp.pop %v2873
      %v2905 = vrcp.pop %v2875
      %v2906 = vrcp.pop %v2877
      %v2907 = vrcp.pop %v2879
      %v2908 = vrcp.pop %v2881
      %v2909 = vrcp.pop %v2883
      %v2910 = vrcp.pop %v2885
      %v2911 = vrcp.pop %v2887
      %v2912 = vrcp.pop %v2889
      %v2913 = vrcp.pop %v2891
      %v2914 = vrcp.pop %v2893
      %v2915 = vrcp.pop %v2895
      %v2916 = vrcp.pop %v2897
      %v2917 = vrcp.pop %v2899
      %v2918 = vrcp.pop %v2901
      %v2919 = vrcp.pop %v2903
      %v2920 = vmul.f32 %v2841, %v2904
      %v2921 = vmul.f32 %v2843, %v2905
      %v2922 = vmul.f32 %v2845, %v2906
      %v2923 = vmul.f32 %v2847, %v2907
      %v2924 = vmul.f32 %v2849, %v2908
      %v2925 = vmul.f32 %v2851, %v2909
      %v2926 = vmul.f32 %v2853, %v2910
      %v2927 = vmul.f32 %v2855, %v2911
      %v2928 = vmul.f32 %v2857, %v2912
      %v2929 = vmul.f32 %v2859, %v2913
      %v2930 = vmul.f32 %v2861, %v2914
      %v2931 = vmul.f32 %v2863, %v2915
      %v2932 = vmul.f32 %v2865, %v2916
      %v2933 = vmul.f32 %v2867, %v2917
      %v2934 = vmul.f32 %v2869, %v2918
      %v2935 = vmul.f32 %v2871, %v2919
      %v2936 = vpack.c.bf16 %v2921, %v2920
      %v2937 = vpack.c.bf16 %v2923, %v2922
      %v2938 = vpack.c.bf16 %v2925, %v2924
      %v2939 = vpack.c.bf16 %v2927, %v2926
      %v2940 = vpack.c.bf16 %v2929, %v2928
      %v2941 = vpack.c.bf16 %v2931, %v2930
      %v2942 = vpack.c.bf16 %v2933, %v2932
      %v2943 = vpack.c.bf16 %v2935, %v2934
      %v2944 = vpack.c.bf16 %v2540, %v2537
      %v2945 = vpack.c.bf16 %v2548, %v2545
      %v2946 = vpack.c.bf16 %v2556, %v2553
      %v2947 = vpack.c.bf16 %v2564, %v2561
      %v2948 = vpack.c.bf16 %v2572, %v2569
      %v2949 = vpack.c.bf16 %v2580, %v2577
      %v2950 = vpack.c.bf16 %v2588, %v2585
      %v2951 = vpack.c.bf16 %v2596, %v2593
      %2952 = vmatprep.subr.bf16.mxu0 0
      %2953 = vmatpush1.bf16.msra.mxu0 %v2951
      %2954 = vmatprep.subr.bf16.mxu0 0
      %2955 = vmatpush1.bf16.msra.mxu0 %v2950
      %2956 = vmatprep.subr.bf16.mxu0 0
      %2957 = vmatpush1.bf16.msra.mxu0 %v2949
      %2958 = vmatprep.subr.bf16.mxu0 0
      %2959 = vmatpush1.bf16.msra.mxu0 %v2948
      %2960 = vmatprep.subr.bf16.mxu0 0
      %2961 = vmatpush1.bf16.msra.mxu0 %v2947
      %2962 = vmatprep.subr.bf16.mxu0 0
      %2963 = vmatpush1.bf16.msra.mxu0 %v2946
      %2964 = vmatprep.subr.bf16.mxu0 0
      %2965 = vmatpush1.bf16.msra.mxu0 %v2945
      %2966 = vmatprep.subr.bf16.mxu0 0
      %2967 = vmatpush1.bf16.msra.mxu0 %v2944
      %2968 = vmatprep.subr.bf16.mxu0 0
      %2969 = vmatpush2.bf16.msra.mxu0 0
      %2970 = vmatprep.subr.bf16.mxu0 0
      %2971 = vmatpush2.bf16.msra.mxu0 0
      %2972 = vmatprep.subr.bf16.mxu0 0
      %2973 = vmatpush2.bf16.msra.mxu0 0
      %2974 = vmatprep.subr.bf16.mxu0 0
      %2975 = vmatpush2.bf16.msra.mxu0 0
      %2976 = vmatprep.subr.bf16.mxu0 0
      %2977 = vmatpush2.bf16.msra.mxu0 0
      %2978 = vmatprep.subr.bf16.mxu0 0
      %2979 = vmatpush2.bf16.msra.mxu0 0
      %2980 = vmatprep.subr.bf16.mxu0 0
      %2981 = vmatpush2.bf16.msra.mxu0 0
      %2982 = vmatprep.subr.bf16.mxu0 0
      %2983 = vmatpush2.bf16.msra.mxu0 0
      %2984 = vmatprep.mubr.bf16.mxu0 0
      %2985 = vmatmul.mubr.bf16.gmra.mxu0 %v2936
      %v2986 = vpop.f32.mrf.mxu0
      %v2987 = vadd.f32 0.0, %v2986
      %v2988 = vpop.f32.mrf.mxu0
      %v2989 = vpop.f32.mrf.mxu0
      %v2990 = vadd.f32 0.0, %v2989
      %v2991 = vpop.f32.mrf.mxu0
      %2992 = vmatprep.mubr.bf16.mxu0 0
      %2993 = vmatmul.mubr.bf16.gmra.mxu0 %v2937
      %v2994 = vpop.f32.mrf.mxu0
      %v2995 = vadd.f32 0.0, %v2994
      %v2996 = vpop.f32.mrf.mxu0
      %v2997 = vpop.f32.mrf.mxu0
      %v2998 = vadd.f32 0.0, %v2997
      %v2999 = vpop.f32.mrf.mxu0
      %3000 = vmatprep.mubr.bf16.mxu0 0
      %3001 = vmatmul.mubr.bf16.gmra.mxu0 %v2938
      %v3002 = vpop.f32.mrf.mxu0
      %v3003 = vadd.f32 0.0, %v3002
      %v3004 = vpop.f32.mrf.mxu0
      %v3005 = vpop.f32.mrf.mxu0
      %v3006 = vadd.f32 0.0, %v3005
      %v3007 = vpop.f32.mrf.mxu0
      %3008 = vmatprep.mubr.bf16.mxu0 0
      %3009 = vmatmul.mubr.bf16.gmra.mxu0 %v2939
      %v3010 = vpop.f32.mrf.mxu0
      %v3011 = vadd.f32 0.0, %v3010
      %v3012 = vpop.f32.mrf.mxu0
      %v3013 = vpop.f32.mrf.mxu0
      %v3014 = vadd.f32 0.0, %v3013
      %v3015 = vpop.f32.mrf.mxu0
      %3016 = vmatprep.mubr.bf16.mxu0 0
      %3017 = vmatmul.mubr.bf16.gmra.mxu0 %v2940
      %v3018 = vpop.f32.mrf.mxu0
      %v3019 = vadd.f32 0.0, %v3018
      %v3020 = vpop.f32.mrf.mxu0
      %v3021 = vpop.f32.mrf.mxu0
      %v3022 = vadd.f32 0.0, %v3021
      %v3023 = vpop.f32.mrf.mxu0
      %3024 = vmatprep.mubr.bf16.mxu0 0
      %3025 = vmatmul.mubr.bf16.gmra.mxu0 %v2941
      %v3026 = vpop.f32.mrf.mxu0
      %v3027 = vadd.f32 0.0, %v3026
      %v3028 = vpop.f32.mrf.mxu0
      %v3029 = vpop.f32.mrf.mxu0
      %v3030 = vadd.f32 0.0, %v3029
      %v3031 = vpop.f32.mrf.mxu0
      %3032 = vmatprep.mubr.bf16.mxu0 0
      %3033 = vmatmul.mubr.bf16.gmra.mxu0 %v2942
      %v3034 = vpop.f32.mrf.mxu0
      %v3035 = vadd.f32 0.0, %v3034
      %v3036 = vpop.f32.mrf.mxu0
      %v3037 = vpop.f32.mrf.mxu0
      %v3038 = vadd.f32 0.0, %v3037
      %v3039 = vpop.f32.mrf.mxu0
      %3040 = vmatprep.mubr.bf16.mxu0 0
      %3041 = vmatmul.mubr.bf16.gmra.mxu0 %v2943
      %v3042 = vpop.f32.mrf.mxu0
      %v3043 = vadd.f32 0.0, %v3042
      %v3044 = vpop.f32.mrf.mxu0
      %v3045 = vpop.f32.mrf.mxu0
      %v3046 = vadd.f32 0.0, %v3045
      %v3047 = vpop.f32.mrf.mxu0
      %3048 = vdwg.mxu0
      %v3049 = vpack.c.bf16 %v2990, %v2987
      %v3050 = vpack.c.bf16 %v2998, %v2995
      %v3051 = vpack.c.bf16 %v3006, %v3003
      %v3052 = vpack.c.bf16 %v3014, %v3011
      %v3053 = vpack.c.bf16 %v3022, %v3019
      %v3054 = vpack.c.bf16 %v3030, %v3027
      %v3055 = vpack.c.bf16 %v3038, %v3035
      %v3056 = vpack.c.bf16 %v3046, %v3043
      %s3057 = scalar_lea.vmem %s861, 4
      %v3058 = vld [vmem:[%s3057] sm:$0xf]
      %v3060 = vsel %vm1789, %v3049, 0
      %v3063 = vsel %vm1789, %v3050, 0
      %v3066 = vsel %vm1789, %v3051, 0
      %v3069 = vsel %vm1789, %v3052, 0
      %v3072 = vsel %vm1789, %v3053, 0
      %v3075 = vsel %vm1789, %v3054, 0
      %v3078 = vsel %vm1789, %v3055, 0
      %v3081 = vsel %vm1789, %v3056, 0
      %vm3083 = vcmask 1043456
      %v3085 = vsel %vm3083, %v3058, 0
      %3087 = vmatprep.subr.bf16.mxu0 0
      %3088 = vmatpush1.bf16.msra.mxu0 0
      %3089 = vmatprep.subr.bf16.mxu0 0
      %3090 = vmatpush1.bf16.msra.mxu0 0
      %3091 = vmatprep.subr.bf16.mxu0 0
      %3092 = vmatpush1.bf16.msra.mxu0 0
      %3093 = vmatprep.subr.bf16.mxu0 0
      %3094 = vmatpush1.bf16.msra.mxu0 0
      %3095 = vmatprep.subr.bf16.mxu0 0
      %3096 = vmatpush1.bf16.msra.mxu0 0
      %3097 = vmatprep.subr.bf16.mxu0 0
      %3098 = vmatpush1.bf16.msra.mxu0 0
      %3099 = vmatprep.subr.bf16.mxu0 0
      %3100 = vmatpush1.bf16.msra.mxu0 0
      %3101 = vmatprep.subr.bf16.mxu0 0
      %3102 = vmatpush1.bf16.msra.mxu0 %v3085
      %3103 = vmatprep.subr.bf16.mxu0 0
      %3104 = vmatpush2.bf16.msra.mxu0 0
      %3105 = vmatprep.subr.bf16.mxu0 0
      %3106 = vmatpush2.bf16.msra.mxu0 0
      %3107 = vmatprep.subr.bf16.mxu0 0
      %3108 = vmatpush2.bf16.msra.mxu0 0
      %3109 = vmatprep.subr.bf16.mxu0 0
      %3110 = vmatpush2.bf16.msra.mxu0 0
      %3111 = vmatprep.subr.bf16.mxu0 0
      %3112 = vmatpush2.bf16.msra.mxu0 0
      %3113 = vmatprep.subr.bf16.mxu0 0
      %3114 = vmatpush2.bf16.msra.mxu0 0
      %3115 = vmatprep.subr.bf16.mxu0 0
      %3116 = vmatpush2.bf16.msra.mxu0 0
      %3117 = vmatprep.subr.bf16.mxu0 0
      %3118 = vmatpush2.bf16.msra.mxu0 0
      %3119 = vmatprep.mubr.bf16.mxu0 0
      %3120 = vmatmul.mubr.bf16.gmra.mxu0 %v3060
      %v3121 = vpop.f32.mrf.mxu0
      %v3122 = vadd.f32 0.0, %v3121
      %v3123 = vpop.f32.mrf.mxu0
      %v3124 = vpop.f32.mrf.mxu0
      %v3125 = vadd.f32 0.0, %v3124
      %v3126 = vpop.f32.mrf.mxu0
      %3127 = vmatprep.mubr.bf16.mxu0 0
      %3128 = vmatmul.mubr.bf16.gmra.mxu0 %v3063
      %v3129 = vpop.f32.mrf.mxu0
      %v3130 = vadd.f32 0.0, %v3129
      %v3131 = vpop.f32.mrf.mxu0
      %v3132 = vpop.f32.mrf.mxu0
      %v3133 = vadd.f32 0.0, %v3132
      %v3134 = vpop.f32.mrf.mxu0
      %3135 = vmatprep.mubr.bf16.mxu0 0
      %3136 = vmatmul.mubr.bf16.gmra.mxu0 %v3066
      %v3137 = vpop.f32.mrf.mxu0
      %v3138 = vadd.f32 0.0, %v3137
      %v3139 = vpop.f32.mrf.mxu0
      %v3140 = vpop.f32.mrf.mxu0
      %v3141 = vadd.f32 0.0, %v3140
      %v3142 = vpop.f32.mrf.mxu0
      %3143 = vmatprep.mubr.bf16.mxu0 0
      %3144 = vmatmul.mubr.bf16.gmra.mxu0 %v3069
      %v3145 = vpop.f32.mrf.mxu0
      %v3146 = vadd.f32 0.0, %v3145
      %v3147 = vpop.f32.mrf.mxu0
      %v3148 = vpop.f32.mrf.mxu0
      %v3149 = vadd.f32 0.0, %v3148
      %v3150 = vpop.f32.mrf.mxu0
      %3151 = vmatprep.mubr.bf16.mxu0 0
      %3152 = vmatmul.mubr.bf16.gmra.mxu0 %v3072
      %v3153 = vpop.f32.mrf.mxu0
      %v3154 = vadd.f32 0.0, %v3153
      %v3155 = vpop.f32.mrf.mxu0
      %v3156 = vpop.f32.mrf.mxu0
      %v3157 = vadd.f32 0.0, %v3156
      %v3158 = vpop.f32.mrf.mxu0
      %3159 = vmatprep.mubr.bf16.mxu0 0
      %3160 = vmatmul.mubr.bf16.gmra.mxu0 %v3075
      %v3161 = vpop.f32.mrf.mxu0
      %v3162 = vadd.f32 0.0, %v3161
      %v3163 = vpop.f32.mrf.mxu0
      %v3164 = vpop.f32.mrf.mxu0
      %v3165 = vadd.f32 0.0, %v3164
      %v3166 = vpop.f32.mrf.mxu0
      %3167 = vmatprep.mubr.bf16.mxu0 0
      %3168 = vmatmul.mubr.bf16.gmra.mxu0 %v3078
      %v3169 = vpop.f32.mrf.mxu0
      %v3170 = vadd.f32 0.0, %v3169
      %v3171 = vpop.f32.mrf.mxu0
      %v3172 = vpop.f32.mrf.mxu0
      %v3173 = vadd.f32 0.0, %v3172
      %v3174 = vpop.f32.mrf.mxu0
      %3175 = vmatprep.mubr.bf16.mxu0 0
      %3176 = vmatmul.mubr.bf16.gmra.mxu0 %v3081
      %v3177 = vpop.f32.mrf.mxu0
      %v3178 = vadd.f32 0.0, %v3177
      %v3179 = vpop.f32.mrf.mxu0
      %v3180 = vpop.f32.mrf.mxu0
      %v3181 = vadd.f32 0.0, %v3180
      %v3182 = vpop.f32.mrf.mxu0
      %3183 = vdwg.mxu0
      %v3185 = vsel %vm1789, %v2224, 0
      %v3188 = vsel %vm1789, %v2225, 0
      %v3191 = vsel %vm1789, %v2226, 0
      %v3194 = vsel %vm1789, %v2227, 0
      %v3197 = vsel %vm1789, %v2228, 0
      %v3200 = vsel %vm1789, %v2229, 0
      %v3203 = vsel %vm1789, %v2230, 0
      %v3206 = vsel %vm1789, %v2231, 0
      %v3209 = vsel %vm3083, %v2232, 0
      %3211 = vmatprep.subr.bf16.mxu0 0
      %3212 = vmatpush1.bf16.msra.mxu0 0
      %3213 = vmatprep.subr.bf16.mxu0 0
      %3214 = vmatpush1.bf16.msra.mxu0 0
      %3215 = vmatprep.subr.bf16.mxu0 0
      %3216 = vmatpush1.bf16.msra.mxu0 0
      %3217 = vmatprep.subr.bf16.mxu0 0
      %3218 = vmatpush1.bf16.msra.mxu0 0
      %3219 = vmatprep.subr.bf16.mxu0 0
      %3220 = vmatpush1.bf16.msra.mxu0 0
      %3221 = vmatprep.subr.bf16.mxu0 0
      %3222 = vmatpush1.bf16.msra.mxu0 0
      %3223 = vmatprep.subr.bf16.mxu0 0
      %3224 = vmatpush1.bf16.msra.mxu0 0
      %3225 = vmatprep.subr.bf16.mxu0 0
      %3226 = vmatpush1.bf16.msra.mxu0 %v3209
      %3227 = vmatprep.subr.bf16.mxu0 0
      %3228 = vmatpush2.bf16.msra.mxu0 0
      %3229 = vmatprep.subr.bf16.mxu0 0
      %3230 = vmatpush2.bf16.msra.mxu0 0
      %3231 = vmatprep.subr.bf16.mxu0 0
      %3232 = vmatpush2.bf16.msra.mxu0 0
      %3233 = vmatprep.subr.bf16.mxu0 0
      %3234 = vmatpush2.bf16.msra.mxu0 0
      %3235 = vmatprep.subr.bf16.mxu0 0
      %3236 = vmatpush2.bf16.msra.mxu0 0
      %3237 = vmatprep.subr.bf16.mxu0 0
      %3238 = vmatpush2.bf16.msra.mxu0 0
      %3239 = vmatprep.subr.bf16.mxu0 0
      %3240 = vmatpush2.bf16.msra.mxu0 0
      %3241 = vmatprep.subr.bf16.mxu0 0
      %3242 = vmatpush2.bf16.msra.mxu0 0
      %3243 = vmatprep.mubr.bf16.mxu0 0
      %3244 = vmatmul.mubr.bf16.gmra.mxu0 %v3185
      %v3245 = vpop.f32.mrf.mxu0
      %v3246 = vadd.f32 %v3122, %v3245
      %v3247 = vpop.f32.mrf.mxu0
      %v3248 = vpop.f32.mrf.mxu0
      %v3249 = vadd.f32 %v3125, %v3248
      %v3250 = vpop.f32.mrf.mxu0
      %3251 = vmatprep.mubr.bf16.mxu0 0
      %3252 = vmatmul.mubr.bf16.gmra.mxu0 %v3188
      %v3253 = vpop.f32.mrf.mxu0
      %v3254 = vadd.f32 %v3130, %v3253
      %v3255 = vpop.f32.mrf.mxu0
      %v3256 = vpop.f32.mrf.mxu0
      %v3257 = vadd.f32 %v3133, %v3256
      %v3258 = vpop.f32.mrf.mxu0
      %3259 = vmatprep.mubr.bf16.mxu0 0
      %3260 = vmatmul.mubr.bf16.gmra.mxu0 %v3191
      %v3261 = vpop.f32.mrf.mxu0
      %v3262 = vadd.f32 %v3138, %v3261
      %v3263 = vpop.f32.mrf.mxu0
      %v3264 = vpop.f32.mrf.mxu0
      %v3265 = vadd.f32 %v3141, %v3264
      %v3266 = vpop.f32.mrf.mxu0
      %3267 = vmatprep.mubr.bf16.mxu0 0
      %3268 = vmatmul.mubr.bf16.gmra.mxu0 %v3194
      %v3269 = vpop.f32.mrf.mxu0
      %v3270 = vadd.f32 %v3146, %v3269
      %v3271 = vpop.f32.mrf.mxu0
      %v3272 = vpop.f32.mrf.mxu0
      %v3273 = vadd.f32 %v3149, %v3272
      %v3274 = vpop.f32.mrf.mxu0
      %3275 = vmatprep.mubr.bf16.mxu0 0
      %3276 = vmatmul.mubr.bf16.gmra.mxu0 %v3197
      %v3277 = vpop.f32.mrf.mxu0
      %v3278 = vadd.f32 %v3154, %v3277
      %v3279 = vpop.f32.mrf.mxu0
      %v3280 = vpop.f32.mrf.mxu0
      %v3281 = vadd.f32 %v3157, %v3280
      %v3282 = vpop.f32.mrf.mxu0
      %3283 = vmatprep.mubr.bf16.mxu0 0
      %3284 = vmatmul.mubr.bf16.gmra.mxu0 %v3200
      %v3285 = vpop.f32.mrf.mxu0
      %v3286 = vadd.f32 %v3162, %v3285
      %v3287 = vpop.f32.mrf.mxu0
      %v3288 = vpop.f32.mrf.mxu0
      %v3289 = vadd.f32 %v3165, %v3288
      %v3290 = vpop.f32.mrf.mxu0
      %3291 = vmatprep.mubr.bf16.mxu0 0
      %3292 = vmatmul.mubr.bf16.gmra.mxu0 %v3203
      %v3293 = vpop.f32.mrf.mxu0
      %v3294 = vadd.f32 %v3170, %v3293
      %v3295 = vpop.f32.mrf.mxu0
      %v3296 = vpop.f32.mrf.mxu0
      %v3297 = vadd.f32 %v3173, %v3296
      %v3298 = vpop.f32.mrf.mxu0
      %3299 = vmatprep.mubr.bf16.mxu0 0
      %3300 = vmatmul.mubr.bf16.gmra.mxu0 %v3206
      %v3301 = vpop.f32.mrf.mxu0
      %v3302 = vadd.f32 %v3178, %v3301
      %v3303 = vpop.f32.mrf.mxu0
      %v3304 = vpop.f32.mrf.mxu0
      %v3305 = vadd.f32 %v3181, %v3304
      %v3306 = vpop.f32.mrf.mxu0
      %3307 = vdwg.mxu0
      %s3308 = scalar_lea.vmem %s834, 32
      %v3309 = vld [vmem:[%s3308] sm:$0xf]
      %v3310 = vld [vmem:[%s3308 + $0x4] sm:$0xf]
      %v3311 = vld [vmem:[%s3308 + $0x8] sm:$0xf]
      %v3312 = vld [vmem:[%s3308 + $0xc] sm:$0xf]
      %s3313 = scalar_lea.vmem %s848, 2
      %v3314 = vld [vmem:[%s3313] sm:$0x1]
      %v3316 = vlaneseq
      %v3317 = vshrl.u32 %v3316, 7
      %v3318 = vsub.s32 0, %v3317
      %v3319 = vrot.slane %v3314, %v3318
      %v3325 = vunpack.c.l.b16 %v3309
      %v3326 = vunpack.c.l.b16 %v3310
      %v3327 = vunpack.c.l.b16 %v3311
      %v3328 = vunpack.c.l.b16 %v3312
      %v3329 = vpack.c.b16 %v3326, %v3325
      %v3330 = vpack.c.b16 %v3328, %v3327
      %3333 = vmatprep.subr.bf16.mxu0 0
      %3334 = vmatpush1.bf16.msra.mxu0 0
      %3335 = vmatprep.subr.bf16.mxu0 0
      %3336 = vmatpush1.bf16.msra.mxu0 0
      %3337 = vmatprep.subr.bf16.mxu0 0
      %3338 = vmatpush1.bf16.msra.mxu0 0
      %3339 = vmatprep.subr.bf16.mxu0 0
      %3340 = vmatpush1.bf16.msra.mxu0 0
      %3341 = vmatprep.subr.bf16.mxu0 0
      %3342 = vmatpush1.bf16.msra.mxu0 0
      %3343 = vmatprep.subr.bf16.mxu0 0
      %3344 = vmatpush1.bf16.msra.mxu0 0
      %3345 = vmatprep.subr.bf16.mxu0 0
      %3346 = vmatpush1.bf16.msra.mxu0 %v3330
      %3347 = vmatprep.subr.bf16.mxu0 0
      %3348 = vmatpush1.bf16.msra.mxu0 %v3329
      %3349 = vmatprep.subr.bf16.mxu0 0
      %3350 = vmatpush2.bf16.msra.mxu0 0
      %3351 = vmatprep.subr.bf16.mxu0 0
      %3352 = vmatpush2.bf16.msra.mxu0 0
      %3353 = vmatprep.subr.bf16.mxu0 0
      %3354 = vmatpush2.bf16.msra.mxu0 0
      %3355 = vmatprep.subr.bf16.mxu0 0
      %3356 = vmatpush2.bf16.msra.mxu0 0
      %3357 = vmatprep.subr.bf16.mxu0 0
      %3358 = vmatpush2.bf16.msra.mxu0 0
      %3359 = vmatprep.subr.bf16.mxu0 0
      %3360 = vmatpush2.bf16.msra.mxu0 0
      %3361 = vmatprep.subr.bf16.mxu0 0
      %3362 = vmatpush2.bf16.msra.mxu0 0
      %3363 = vmatprep.subr.bf16.mxu0 0
      %3364 = vmatpush2.bf16.msra.mxu0 0
      %3365 = vmatprep.mubr.bf16.mxu0 0
      %3366 = vmatmul.mubr.bf16.gmra.mxu0 %v1413
      %v3367 = vpop.f32.mrf.mxu0
      %v3368 = vadd.f32 %v3319, %v3367
      %v3369 = vpop.f32.mrf.mxu0
      %v3370 = vpop.f32.mrf.mxu0
      %v3371 = vadd.f32 %v3319, %v3370
      %v3372 = vpop.f32.mrf.mxu0
      %3373 = vmatprep.mubr.bf16.mxu0 0
      %3374 = vmatmul.mubr.bf16.gmra.mxu0 %v1416
      %v3375 = vpop.f32.mrf.mxu0
      %v3376 = vadd.f32 %v3319, %v3375
      %v3377 = vpop.f32.mrf.mxu0
      %v3378 = vpop.f32.mrf.mxu0
      %v3379 = vadd.f32 %v3319, %v3378
      %v3380 = vpop.f32.mrf.mxu0
      %3381 = vmatprep.mubr.bf16.mxu0 0
      %3382 = vmatmul.mubr.bf16.gmra.mxu0 %v1419
      %v3383 = vpop.f32.mrf.mxu0
      %v3384 = vadd.f32 %v3319, %v3383
      %v3385 = vpop.f32.mrf.mxu0
      %v3386 = vpop.f32.mrf.mxu0
      %v3387 = vadd.f32 %v3319, %v3386
      %v3388 = vpop.f32.mrf.mxu0
      %3389 = vmatprep.mubr.bf16.mxu0 0
      %3390 = vmatmul.mubr.bf16.gmra.mxu0 %v1422
      %v3391 = vpop.f32.mrf.mxu0
      %v3392 = vadd.f32 %v3319, %v3391
      %v3393 = vpop.f32.mrf.mxu0
      %v3394 = vpop.f32.mrf.mxu0
      %v3395 = vadd.f32 %v3319, %v3394
      %v3396 = vpop.f32.mrf.mxu0
      %3397 = vmatprep.mubr.bf16.mxu0 0
      %3398 = vmatmul.mubr.bf16.gmra.mxu0 %v1425
      %v3399 = vpop.f32.mrf.mxu0
      %v3400 = vadd.f32 %v3319, %v3399
      %v3401 = vpop.f32.mrf.mxu0
      %v3402 = vpop.f32.mrf.mxu0
      %v3403 = vadd.f32 %v3319, %v3402
      %v3404 = vpop.f32.mrf.mxu0
      %3405 = vmatprep.mubr.bf16.mxu0 0
      %3406 = vmatmul.mubr.bf16.gmra.mxu0 %v1428
      %v3407 = vpop.f32.mrf.mxu0
      %v3408 = vadd.f32 %v3319, %v3407
      %v3409 = vpop.f32.mrf.mxu0
      %v3410 = vpop.f32.mrf.mxu0
      %v3411 = vadd.f32 %v3319, %v3410
      %v3412 = vpop.f32.mrf.mxu0
      %3413 = vmatprep.mubr.bf16.mxu0 0
      %3414 = vmatmul.mubr.bf16.gmra.mxu0 %v1431
      %v3415 = vpop.f32.mrf.mxu0
      %v3416 = vadd.f32 %v3319, %v3415
      %v3417 = vpop.f32.mrf.mxu0
      %v3418 = vpop.f32.mrf.mxu0
      %v3419 = vadd.f32 %v3319, %v3418
      %v3420 = vpop.f32.mrf.mxu0
      %3421 = vmatprep.mubr.bf16.mxu0 0
      %3422 = vmatmul.mubr.bf16.gmra.mxu0 %v1434
      %v3423 = vpop.f32.mrf.mxu0
      %v3424 = vadd.f32 %v3319, %v3423
      %v3425 = vpop.f32.mrf.mxu0
      %v3426 = vpop.f32.mrf.mxu0
      %v3427 = vadd.f32 %v3319, %v3426
      %v3428 = vpop.f32.mrf.mxu0
      %3429 = vdwg.mxu0
      %s3430 = scalar_lea.vmem %s839, 32
      %v3431 = vld [vmem:[%s3430] sm:$0xf]
      %v3432 = vld [vmem:[%s3430 + $0x4] sm:$0xf]
      %v3433 = vld [vmem:[%s3430 + $0x8] sm:$0xf]
      %v3434 = vld [vmem:[%s3430 + $0xc] sm:$0xf]
      %s3435 = scalar_lea.vmem %s852, 2
      %v3436 = vld [vmem:[%s3435] sm:$0x1]
      %v3438 = vlaneseq
      %v3439 = vshrl.u32 %v3438, 7
      %v3440 = vsub.s32 0, %v3439
      %v3441 = vrot.slane %v3436, %v3440
      %v3447 = vunpack.c.l.b16 %v3431
      %v3448 = vunpack.c.l.b16 %v3432
      %v3449 = vunpack.c.l.b16 %v3433
      %v3450 = vunpack.c.l.b16 %v3434
      %v3451 = vpack.c.b16 %v3448, %v3447
      %v3452 = vpack.c.b16 %v3450, %v3449
      %3455 = vmatprep.subr.bf16.mxu0 0
      %3456 = vmatpush1.bf16.msra.mxu0 0
      %3457 = vmatprep.subr.bf16.mxu0 0
      %3458 = vmatpush1.bf16.msra.mxu0 0
      %3459 = vmatprep.subr.bf16.mxu0 0
      %3460 = vmatpush1.bf16.msra.mxu0 0
      %3461 = vmatprep.subr.bf16.mxu0 0
      %3462 = vmatpush1.bf16.msra.mxu0 0
      %3463 = vmatprep.subr.bf16.mxu0 0
      %3464 = vmatpush1.bf16.msra.mxu0 0
      %3465 = vmatprep.subr.bf16.mxu0 0
      %3466 = vmatpush1.bf16.msra.mxu0 0
      %3467 = vmatprep.subr.bf16.mxu0 0
      %3468 = vmatpush1.bf16.msra.mxu0 %v3452
      %3469 = vmatprep.subr.bf16.mxu0 0
      %3470 = vmatpush1.bf16.msra.mxu0 %v3451
      %3471 = vmatprep.subr.bf16.mxu0 0
      %3472 = vmatpush2.bf16.msra.mxu0 0
      %3473 = vmatprep.subr.bf16.mxu0 0
      %3474 = vmatpush2.bf16.msra.mxu0 0
      %3475 = vmatprep.subr.bf16.mxu0 0
      %3476 = vmatpush2.bf16.msra.mxu0 0
      %3477 = vmatprep.subr.bf16.mxu0 0
      %3478 = vmatpush2.bf16.msra.mxu0 0
      %3479 = vmatprep.subr.bf16.mxu0 0
      %3480 = vmatpush2.bf16.msra.mxu0 0
      %3481 = vmatprep.subr.bf16.mxu0 0
      %3482 = vmatpush2.bf16.msra.mxu0 0
      %3483 = vmatprep.subr.bf16.mxu0 0
      %3484 = vmatpush2.bf16.msra.mxu0 0
      %3485 = vmatprep.subr.bf16.mxu0 0
      %3486 = vmatpush2.bf16.msra.mxu0 0
      %3487 = vmatprep.mubr.bf16.mxu0 0
      %3488 = vmatmul.mubr.bf16.gmra.mxu0 %v1413
      %v3489 = vpop.f32.mrf.mxu0
      %v3490 = vadd.f32 %v3441, %v3489
      %v3491 = vpop.f32.mrf.mxu0
      %v3492 = vpop.f32.mrf.mxu0
      %v3493 = vadd.f32 %v3441, %v3492
      %v3494 = vpop.f32.mrf.mxu0
      %3495 = vmatprep.mubr.bf16.mxu0 0
      %3496 = vmatmul.mubr.bf16.gmra.mxu0 %v1416
      %v3497 = vpop.f32.mrf.mxu0
      %v3498 = vadd.f32 %v3441, %v3497
      %v3499 = vpop.f32.mrf.mxu0
      %v3500 = vpop.f32.mrf.mxu0
      %v3501 = vadd.f32 %v3441, %v3500
      %v3502 = vpop.f32.mrf.mxu0
      %3503 = vmatprep.mubr.bf16.mxu0 0
      %3504 = vmatmul.mubr.bf16.gmra.mxu0 %v1419
      %v3505 = vpop.f32.mrf.mxu0
      %v3506 = vadd.f32 %v3441, %v3505
      %v3507 = vpop.f32.mrf.mxu0
      %v3508 = vpop.f32.mrf.mxu0
      %v3509 = vadd.f32 %v3441, %v3508
      %v3510 = vpop.f32.mrf.mxu0
      %3511 = vmatprep.mubr.bf16.mxu0 0
      %3512 = vmatmul.mubr.bf16.gmra.mxu0 %v1422
      %v3513 = vpop.f32.mrf.mxu0
      %v3514 = vadd.f32 %v3441, %v3513
      %v3515 = vpop.f32.mrf.mxu0
      %v3516 = vpop.f32.mrf.mxu0
      %v3517 = vadd.f32 %v3441, %v3516
      %v3518 = vpop.f32.mrf.mxu0
      %3519 = vmatprep.mubr.bf16.mxu0 0
      %3520 = vmatmul.mubr.bf16.gmra.mxu0 %v1425
      %v3521 = vpop.f32.mrf.mxu0
      %v3522 = vadd.f32 %v3441, %v3521
      %v3523 = vpop.f32.mrf.mxu0
      %v3524 = vpop.f32.mrf.mxu0
      %v3525 = vadd.f32 %v3441, %v3524
      %v3526 = vpop.f32.mrf.mxu0
      %3527 = vmatprep.mubr.bf16.mxu0 0
      %3528 = vmatmul.mubr.bf16.gmra.mxu0 %v1428
      %v3529 = vpop.f32.mrf.mxu0
      %v3530 = vadd.f32 %v3441, %v3529
      %v3531 = vpop.f32.mrf.mxu0
      %v3532 = vpop.f32.mrf.mxu0
      %v3533 = vadd.f32 %v3441, %v3532
      %v3534 = vpop.f32.mrf.mxu0
      %3535 = vmatprep.mubr.bf16.mxu0 0
      %3536 = vmatmul.mubr.bf16.gmra.mxu0 %v1431
      %v3537 = vpop.f32.mrf.mxu0
      %v3538 = vadd.f32 %v3441, %v3537
      %v3539 = vpop.f32.mrf.mxu0
      %v3540 = vpop.f32.mrf.mxu0
      %v3541 = vadd.f32 %v3441, %v3540
      %v3542 = vpop.f32.mrf.mxu0
      %3543 = vmatprep.mubr.bf16.mxu0 0
      %3544 = vmatmul.mubr.bf16.gmra.mxu0 %v1434
      %v3545 = vpop.f32.mrf.mxu0
      %v3546 = vadd.f32 %v3441, %v3545
      %v3547 = vpop.f32.mrf.mxu0
      %v3548 = vpop.f32.mrf.mxu0
      %v3549 = vadd.f32 %v3441, %v3548
      %v3550 = vpop.f32.mrf.mxu0
      %3551 = vdwg.mxu0
      %s3552 = scalar_lea.vmem %s844, 32
      %v3553 = vld [vmem:[%s3552] sm:$0xf]
      %v3554 = vld [vmem:[%s3552 + $0x4] sm:$0xf]
      %v3555 = vld [vmem:[%s3552 + $0x8] sm:$0xf]
      %v3556 = vld [vmem:[%s3552 + $0xc] sm:$0xf]
      %s3557 = scalar_lea.vmem %s856, 2
      %v3558 = vld [vmem:[%s3557] sm:$0x1]
      %v3560 = vlaneseq
      %v3561 = vshrl.u32 %v3560, 7
      %v3562 = vsub.s32 0, %v3561
      %v3563 = vrot.slane %v3558, %v3562
      %v3569 = vunpack.c.l.b16 %v3553
      %v3570 = vunpack.c.l.b16 %v3554
      %v3571 = vunpack.c.l.b16 %v3555
      %v3572 = vunpack.c.l.b16 %v3556
      %v3573 = vpack.c.b16 %v3570, %v3569
      %v3574 = vpack.c.b16 %v3572, %v3571
      %3577 = vmatprep.subr.bf16.mxu0 0
      %3578 = vmatpush1.bf16.msra.mxu0 0
      %3579 = vmatprep.subr.bf16.mxu0 0
      %3580 = vmatpush1.bf16.msra.mxu0 0
      %3581 = vmatprep.subr.bf16.mxu0 0
      %3582 = vmatpush1.bf16.msra.mxu0 0
      %3583 = vmatprep.subr.bf16.mxu0 0
      %3584 = vmatpush1.bf16.msra.mxu0 0
      %3585 = vmatprep.subr.bf16.mxu0 0
      %3586 = vmatpush1.bf16.msra.mxu0 0
      %3587 = vmatprep.subr.bf16.mxu0 0
      %3588 = vmatpush1.bf16.msra.mxu0 0
      %3589 = vmatprep.subr.bf16.mxu0 0
      %3590 = vmatpush1.bf16.msra.mxu0 %v3574
      %3591 = vmatprep.subr.bf16.mxu0 0
      %3592 = vmatpush1.bf16.msra.mxu0 %v3573
      %3593 = vmatprep.subr.bf16.mxu0 0
      %3594 = vmatpush2.bf16.msra.mxu0 0
      %3595 = vmatprep.subr.bf16.mxu0 0
      %3596 = vmatpush2.bf16.msra.mxu0 0
      %3597 = vmatprep.subr.bf16.mxu0 0
      %3598 = vmatpush2.bf16.msra.mxu0 0
      %3599 = vmatprep.subr.bf16.mxu0 0
      %3600 = vmatpush2.bf16.msra.mxu0 0
      %3601 = vmatprep.subr.bf16.mxu0 0
      %3602 = vmatpush2.bf16.msra.mxu0 0
      %3603 = vmatprep.subr.bf16.mxu0 0
      %3604 = vmatpush2.bf16.msra.mxu0 0
      %3605 = vmatprep.subr.bf16.mxu0 0
      %3606 = vmatpush2.bf16.msra.mxu0 0
      %3607 = vmatprep.subr.bf16.mxu0 0
      %3608 = vmatpush2.bf16.msra.mxu0 0
      %3609 = vmatprep.mubr.bf16.mxu0 0
      %3610 = vmatmul.mubr.bf16.gmra.mxu0 %v1413
      %v3611 = vpop.f32.mrf.mxu0
      %v3612 = vadd.f32 %v3563, %v3611
      %v3613 = vpop.f32.mrf.mxu0
      %v3614 = vpop.f32.mrf.mxu0
      %v3615 = vadd.f32 %v3563, %v3614
      %v3616 = vpop.f32.mrf.mxu0
      %3617 = vmatprep.mubr.bf16.mxu0 0
      %3618 = vmatmul.mubr.bf16.gmra.mxu0 %v1416
      %v3619 = vpop.f32.mrf.mxu0
      %v3620 = vadd.f32 %v3563, %v3619
      %v3621 = vpop.f32.mrf.mxu0
      %v3622 = vpop.f32.mrf.mxu0
      %v3623 = vadd.f32 %v3563, %v3622
      %v3624 = vpop.f32.mrf.mxu0
      %3625 = vmatprep.mubr.bf16.mxu0 0
      %3626 = vmatmul.mubr.bf16.gmra.mxu0 %v1419
      %v3627 = vpop.f32.mrf.mxu0
      %v3628 = vadd.f32 %v3563, %v3627
      %v3629 = vpop.f32.mrf.mxu0
      %v3630 = vpop.f32.mrf.mxu0
      %v3631 = vadd.f32 %v3563, %v3630
      %v3632 = vpop.f32.mrf.mxu0
      %3633 = vmatprep.mubr.bf16.mxu0 0
      %3634 = vmatmul.mubr.bf16.gmra.mxu0 %v1422
      %v3635 = vpop.f32.mrf.mxu0
      %v3636 = vadd.f32 %v3563, %v3635
      %v3637 = vpop.f32.mrf.mxu0
      %v3638 = vpop.f32.mrf.mxu0
      %v3639 = vadd.f32 %v3563, %v3638
      %v3640 = vpop.f32.mrf.mxu0
      %3641 = vmatprep.mubr.bf16.mxu0 0
      %3642 = vmatmul.mubr.bf16.gmra.mxu0 %v1425
      %v3643 = vpop.f32.mrf.mxu0
      %v3644 = vadd.f32 %v3563, %v3643
      %v3645 = vpop.f32.mrf.mxu0
      %v3646 = vpop.f32.mrf.mxu0
      %v3647 = vadd.f32 %v3563, %v3646
      %v3648 = vpop.f32.mrf.mxu0
      %3649 = vmatprep.mubr.bf16.mxu0 0
      %3650 = vmatmul.mubr.bf16.gmra.mxu0 %v1428
      %v3651 = vpop.f32.mrf.mxu0
      %v3652 = vadd.f32 %v3563, %v3651
      %v3653 = vpop.f32.mrf.mxu0
      %v3654 = vpop.f32.mrf.mxu0
      %v3655 = vadd.f32 %v3563, %v3654
      %v3656 = vpop.f32.mrf.mxu0
      %3657 = vmatprep.mubr.bf16.mxu0 0
      %3658 = vmatmul.mubr.bf16.gmra.mxu0 %v1431
      %v3659 = vpop.f32.mrf.mxu0
      %v3660 = vadd.f32 %v3563, %v3659
      %v3661 = vpop.f32.mrf.mxu0
      %v3662 = vpop.f32.mrf.mxu0
      %v3663 = vadd.f32 %v3563, %v3662
      %v3664 = vpop.f32.mrf.mxu0
      %3665 = vmatprep.mubr.bf16.mxu0 0
      %3666 = vmatmul.mubr.bf16.gmra.mxu0 %v1434
      %v3667 = vpop.f32.mrf.mxu0
      %v3668 = vadd.f32 %v3563, %v3667
      %v3669 = vpop.f32.mrf.mxu0
      %v3670 = vpop.f32.mrf.mxu0
      %v3671 = vadd.f32 %v3563, %v3670
      %v3672 = vpop.f32.mrf.mxu0
      %3673 = vdwg.mxu0
      %v3674 = vpack.c.bf16 %v3371, %v3368
      %v3675 = vpack.c.bf16 %v3379, %v3376
      %v3676 = vpack.c.bf16 %v3387, %v3384
      %v3677 = vpack.c.bf16 %v3395, %v3392
      %v3678 = vpack.c.bf16 %v3403, %v3400
      %v3679 = vpack.c.bf16 %v3411, %v3408
      %v3680 = vpack.c.bf16 %v3419, %v3416
      %v3681 = vpack.c.bf16 %v3427, %v3424
      %v3682 = vpack.c.bf16 %v3493, %v3490
      %v3683 = vpack.c.bf16 %v3501, %v3498
      %v3684 = vpack.c.bf16 %v3509, %v3506
      %v3685 = vpack.c.bf16 %v3517, %v3514
      %v3686 = vpack.c.bf16 %v3525, %v3522
      %v3687 = vpack.c.bf16 %v3533, %v3530
      %v3688 = vpack.c.bf16 %v3541, %v3538
      %v3689 = vpack.c.bf16 %v3549, %v3546
      %v3691 = vsel %vm1789, %v3674, 0
      %v3694 = vsel %vm1789, %v3675, 0
      %v3697 = vsel %vm1789, %v3676, 0
      %v3700 = vsel %vm1789, %v3677, 0
      %v3703 = vsel %vm1789, %v3678, 0
      %v3706 = vsel %vm1789, %v3679, 0
      %v3709 = vsel %vm1789, %v3680, 0
      %v3712 = vsel %vm1789, %v3681, 0
      %v3715 = vsel %vm1789, %v3682, 0
      %v3718 = vsel %vm1789, %v3683, 0
      %v3721 = vsel %vm1789, %v3684, 0
      %v3724 = vsel %vm1789, %v3685, 0
      %v3727 = vsel %vm1789, %v3686, 0
      %v3730 = vsel %vm1789, %v3687, 0
      %v3733 = vsel %vm1789, %v3688, 0
      %v3736 = vsel %vm1789, %v3689, 0
      %3738 = vmatprep.subr.bf16.mxu0 0
      %3739 = vmatpush1.bf16.xpose.msra.mxu0 %v3736
      %3740 = vmatprep.subr.bf16.mxu0 0
      %3741 = vmatpush1.bf16.xpose.msra.mxu0 %v3733
      %3742 = vmatprep.subr.bf16.mxu0 0
      %3743 = vmatpush1.bf16.xpose.msra.mxu0 %v3730
      %3744 = vmatprep.subr.bf16.mxu0 0
      %3745 = vmatpush1.bf16.xpose.msra.mxu0 %v3727
      %3746 = vmatprep.subr.bf16.mxu0 0
      %3747 = vmatpush1.bf16.xpose.msra.mxu0 %v3724
      %3748 = vmatprep.subr.bf16.mxu0 0
      %3749 = vmatpush1.bf16.xpose.msra.mxu0 %v3721
      %3750 = vmatprep.subr.bf16.mxu0 0
      %3751 = vmatpush1.bf16.xpose.msra.mxu0 %v3718
      %3752 = vmatprep.subr.bf16.mxu0 0
      %3753 = vmatpush1.bf16.xpose.msra.mxu0 %v3715
      %3754 = vmatprep.subr.bf16.mxu0 0
      %3755 = vmatpush2.bf16.xpose.msra.mxu0 0
      %3756 = vmatprep.subr.bf16.mxu0 0
      %3757 = vmatpush2.bf16.xpose.msra.mxu0 0
      %3758 = vmatprep.subr.bf16.mxu0 0
      %3759 = vmatpush2.bf16.xpose.msra.mxu0 0
      %3760 = vmatprep.subr.bf16.mxu0 0
      %3761 = vmatpush2.bf16.xpose.msra.mxu0 0
      %3762 = vmatprep.subr.bf16.mxu0 0
      %3763 = vmatpush2.bf16.xpose.msra.mxu0 0
      %3764 = vmatprep.subr.bf16.mxu0 0
      %3765 = vmatpush2.bf16.xpose.msra.mxu0 0
      %3766 = vmatprep.subr.bf16.mxu0 0
      %3767 = vmatpush2.bf16.xpose.msra.mxu0 0
      %3768 = vmatprep.subr.bf16.mxu0 0
      %3769 = vmatpush2.bf16.xpose.msra.mxu0 0
      %3770 = vmatprep.mubr.bf16.mxu0 0
      %3771 = vmatmul.mubr.bf16.gmra.mxu0 %v3691
      %v3772 = vpop.f32.mrf.mxu0
      %v3773 = vadd.f32 0.0, %v3772
      %v3774 = vpop.f32.mrf.mxu0
      %v3775 = vpop.f32.mrf.mxu0
      %v3776 = vadd.f32 0.0, %v3775
      %v3777 = vpop.f32.mrf.mxu0
      %3778 = vmatprep.mubr.bf16.mxu0 0
      %3779 = vmatmul.mubr.bf16.gmra.mxu0 %v3694
      %v3780 = vpop.f32.mrf.mxu0
      %v3781 = vadd.f32 0.0, %v3780
      %v3782 = vpop.f32.mrf.mxu0
      %v3783 = vpop.f32.mrf.mxu0
      %v3784 = vadd.f32 0.0, %v3783
      %v3785 = vpop.f32.mrf.mxu0
      %3786 = vmatprep.mubr.bf16.mxu0 0
      %3787 = vmatmul.mubr.bf16.gmra.mxu0 %v3697
      %v3788 = vpop.f32.mrf.mxu0
      %v3789 = vadd.f32 0.0, %v3788
      %v3790 = vpop.f32.mrf.mxu0
      %v3791 = vpop.f32.mrf.mxu0
      %v3792 = vadd.f32 0.0, %v3791
      %v3793 = vpop.f32.mrf.mxu0
      %3794 = vmatprep.mubr.bf16.mxu0 0
      %3795 = vmatmul.mubr.bf16.gmra.mxu0 %v3700
      %v3796 = vpop.f32.mrf.mxu0
      %v3797 = vadd.f32 0.0, %v3796
      %v3798 = vpop.f32.mrf.mxu0
      %v3799 = vpop.f32.mrf.mxu0
      %v3800 = vadd.f32 0.0, %v3799
      %v3801 = vpop.f32.mrf.mxu0
      %3802 = vmatprep.mubr.bf16.mxu0 0
      %3803 = vmatmul.mubr.bf16.gmra.mxu0 %v3703
      %v3804 = vpop.f32.mrf.mxu0
      %v3805 = vadd.f32 0.0, %v3804
      %v3806 = vpop.f32.mrf.mxu0
      %v3807 = vpop.f32.mrf.mxu0
      %v3808 = vadd.f32 0.0, %v3807
      %v3809 = vpop.f32.mrf.mxu0
      %3810 = vmatprep.mubr.bf16.mxu0 0
      %3811 = vmatmul.mubr.bf16.gmra.mxu0 %v3706
      %v3812 = vpop.f32.mrf.mxu0
      %v3813 = vadd.f32 0.0, %v3812
      %v3814 = vpop.f32.mrf.mxu0
      %v3815 = vpop.f32.mrf.mxu0
      %v3816 = vadd.f32 0.0, %v3815
      %v3817 = vpop.f32.mrf.mxu0
      %3818 = vmatprep.mubr.bf16.mxu0 0
      %3819 = vmatmul.mubr.bf16.gmra.mxu0 %v3709
      %v3820 = vpop.f32.mrf.mxu0
      %v3821 = vadd.f32 0.0, %v3820
      %v3822 = vpop.f32.mrf.mxu0
      %v3823 = vpop.f32.mrf.mxu0
      %v3824 = vadd.f32 0.0, %v3823
      %v3825 = vpop.f32.mrf.mxu0
      %3826 = vmatprep.mubr.bf16.mxu0 0
      %3827 = vmatmul.mubr.bf16.gmra.mxu0 %v3712
      %v3828 = vpop.f32.mrf.mxu0
      %v3829 = vadd.f32 0.0, %v3828
      %v3830 = vpop.f32.mrf.mxu0
      %v3831 = vpop.f32.mrf.mxu0
      %v3832 = vadd.f32 0.0, %v3831
      %v3833 = vpop.f32.mrf.mxu0
      %3834 = vdwg.mxu0
      %v3835 = vmul.f32 %v3773, 0.35355338
      %v3836 = vmul.f32 %v3776, 0.35355338
      %v3837 = vmul.f32 %v3781, 0.35355338
      %v3838 = vmul.f32 %v3784, 0.35355338
      %v3839 = vmul.f32 %v3789, 0.35355338
      %v3840 = vmul.f32 %v3792, 0.35355338
      %v3841 = vmul.f32 %v3797, 0.35355338
      %v3842 = vmul.f32 %v3800, 0.35355338
      %v3843 = vmul.f32 %v3805, 0.35355338
      %v3844 = vmul.f32 %v3808, 0.35355338
      %v3845 = vmul.f32 %v3813, 0.35355338
      %v3846 = vmul.f32 %v3816, 0.35355338
      %v3847 = vmul.f32 %v3821, 0.35355338
      %v3848 = vmul.f32 %v3824, 0.35355338
      %v3849 = vmul.f32 %v3829, 0.35355338
      %v3850 = vmul.f32 %v3832, 0.35355338
      %v3851 = vadd.f32 %v3835, %v1372
      %v3852 = vadd.f32 %v3836, %v1373
      %v3853 = vadd.f32 %v3837, %v1374
      %v3854 = vadd.f32 %v3838, %v1375
      %v3855 = vadd.f32 %v3839, %v1376
      %v3856 = vadd.f32 %v3840, %v1377
      %v3857 = vadd.f32 %v3841, %v1378
      %v3858 = vadd.f32 %v3842, %v1379
      %v3859 = vadd.f32 %v3843, %v1380
      %v3860 = vadd.f32 %v3844, %v1381
      %v3861 = vadd.f32 %v3845, %v1382
      %v3862 = vadd.f32 %v3846, %v1383
      %v3863 = vadd.f32 %v3847, %v1384
      %v3864 = vadd.f32 %v3848, %v1385
      %v3865 = vadd.f32 %v3849, %v1386
      %v3866 = vadd.f32 %v3850, %v1387
      %3867 = vmax.xlane.f32.xlu0 %v3851
      %v3868 = vpop.xlane.xlu0 %3867
      %3869 = vmax.xlane.f32.xlu0 %v3852
      %v3870 = vpop.xlane.xlu0 %3869
      %3871 = vmax.xlane.f32.xlu0 %v3853
      %v3872 = vpop.xlane.xlu0 %3871
      %3873 = vmax.xlane.f32.xlu0 %v3854
      %v3874 = vpop.xlane.xlu0 %3873
      %3875 = vmax.xlane.f32.xlu0 %v3855
      %v3876 = vpop.xlane.xlu0 %3875
      %3877 = vmax.xlane.f32.xlu0 %v3856
      %v3878 = vpop.xlane.xlu0 %3877
      %3879 = vmax.xlane.f32.xlu0 %v3857
      %v3880 = vpop.xlane.xlu0 %3879
      %3881 = vmax.xlane.f32.xlu0 %v3858
      %v3882 = vpop.xlane.xlu0 %3881
      %3883 = vmax.xlane.f32.xlu0 %v3859
      %v3884 = vpop.xlane.xlu0 %3883
      %3885 = vmax.xlane.f32.xlu0 %v3860
      %v3886 = vpop.xlane.xlu0 %3885
      %3887 = vmax.xlane.f32.xlu0 %v3861
      %v3888 = vpop.xlane.xlu0 %3887
      %3889 = vmax.xlane.f32.xlu0 %v3862
      %v3890 = vpop.xlane.xlu0 %3889
      %3891 = vmax.xlane.f32.xlu0 %v3863
      %v3892 = vpop.xlane.xlu0 %3891
      %3893 = vmax.xlane.f32.xlu0 %v3864
      %v3894 = vpop.xlane.xlu0 %3893
      %3895 = vmax.xlane.f32.xlu0 %v3865
      %v3896 = vpop.xlane.xlu0 %3895
      %3897 = vmax.xlane.f32.xlu0 %v3866
      %v3898 = vpop.xlane.xlu0 %3897
      %v3899 = vsub.f32 %v3851, %v3868
      %v3900 = vsub.f32 %v3852, %v3870
      %v3901 = vsub.f32 %v3853, %v3872
      %v3902 = vsub.f32 %v3854, %v3874
      %v3903 = vsub.f32 %v3855, %v3876
      %v3904 = vsub.f32 %v3856, %v3878
      %v3905 = vsub.f32 %v3857, %v3880
      %v3906 = vsub.f32 %v3858, %v3882
      %v3907 = vsub.f32 %v3859, %v3884
      %v3908 = vsub.f32 %v3860, %v3886
      %v3909 = vsub.f32 %v3861, %v3888
      %v3910 = vsub.f32 %v3862, %v3890
      %v3911 = vsub.f32 %v3863, %v3892
      %v3912 = vsub.f32 %v3864, %v3894
      %v3913 = vsub.f32 %v3865, %v3896
      %v3914 = vsub.f32 %v3866, %v3898
      %v3915 = vmul.f32 %v3899, 1.442695
      %v3916 = vpow.pop %v3915
      %v3917 = vmul.f32 %v3900, 1.442695
      %v3918 = vpow.pop %v3917
      %v3919 = vmul.f32 %v3901, 1.442695
      %v3920 = vpow.pop %v3919
      %v3921 = vmul.f32 %v3902, 1.442695
      %v3922 = vpow.pop %v3921
      %v3923 = vmul.f32 %v3903, 1.442695
      %v3924 = vpow.pop %v3923
      %v3925 = vmul.f32 %v3904, 1.442695
      %v3926 = vpow.pop %v3925
      %v3927 = vmul.f32 %v3905, 1.442695
      %v3928 = vpow.pop %v3927
      %v3929 = vmul.f32 %v3906, 1.442695
      %v3930 = vpow.pop %v3929
      %v3931 = vmul.f32 %v3907, 1.442695
      %v3932 = vpow.pop %v3931
      %v3933 = vmul.f32 %v3908, 1.442695
      %v3934 = vpow.pop %v3933
      %v3935 = vmul.f32 %v3909, 1.442695
      %v3936 = vpow.pop %v3935
      %v3937 = vmul.f32 %v3910, 1.442695
      %v3938 = vpow.pop %v3937
      %v3939 = vmul.f32 %v3911, 1.442695
      %v3940 = vpow.pop %v3939
      %v3941 = vmul.f32 %v3912, 1.442695
      %v3942 = vpow.pop %v3941
      %v3943 = vmul.f32 %v3913, 1.442695
      %v3944 = vpow.pop %v3943
      %v3945 = vmul.f32 %v3914, 1.442695
      %v3946 = vpow.pop %v3945
      %3947 = vadd.xlane.f32.xlu0 %v3916
      %v3948 = vpop.xlane.xlu0 %3947
      %3949 = vadd.xlane.f32.xlu0 %v3918
      %v3950 = vpop.xlane.xlu0 %3949
      %3951 = vadd.xlane.f32.xlu0 %v3920
      %v3952 = vpop.xlane.xlu0 %3951
      %3953 = vadd.xlane.f32.xlu0 %v3922
      %v3954 = vpop.xlane.xlu0 %3953
      %3955 = vadd.xlane.f32.xlu0 %v3924
      %v3956 = vpop.xlane.xlu0 %3955
      %3957 = vadd.xlane.f32.xlu0 %v3926
      %v3958 = vpop.xlane.xlu0 %3957
      %3959 = vadd.xlane.f32.xlu0 %v3928
      %v3960 = vpop.xlane.xlu0 %3959
      %3961 = vadd.xlane.f32.xlu0 %v3930
      %v3962 = vpop.xlane.xlu0 %3961
      %3963 = vadd.xlane.f32.xlu0 %v3932
      %v3964 = vpop.xlane.xlu0 %3963
      %3965 = vadd.xlane.f32.xlu0 %v3934
      %v3966 = vpop.xlane.xlu0 %3965
      %3967 = vadd.xlane.f32.xlu0 %v3936
      %v3968 = vpop.xlane.xlu0 %3967
      %3969 = vadd.xlane.f32.xlu0 %v3938
      %v3970 = vpop.xlane.xlu0 %3969
      %3971 = vadd.xlane.f32.xlu0 %v3940
      %v3972 = vpop.xlane.xlu0 %3971
      %3973 = vadd.xlane.f32.xlu0 %v3942
      %v3974 = vpop.xlane.xlu0 %3973
      %3975 = vadd.xlane.f32.xlu0 %v3944
      %v3976 = vpop.xlane.xlu0 %3975
      %3977 = vadd.xlane.f32.xlu0 %v3946
      %v3978 = vpop.xlane.xlu0 %3977
      %v3979 = vrcp.pop %v3948
      %v3980 = vrcp.pop %v3950
      %v3981 = vrcp.pop %v3952
      %v3982 = vrcp.pop %v3954
      %v3983 = vrcp.pop %v3956
      %v3984 = vrcp.pop %v3958
      %v3985 = vrcp.pop %v3960
      %v3986 = vrcp.pop %v3962
      %v3987 = vrcp.pop %v3964
      %v3988 = vrcp.pop %v3966
      %v3989 = vrcp.pop %v3968
      %v3990 = vrcp.pop %v3970
      %v3991 = vrcp.pop %v3972
      %v3992 = vrcp.pop %v3974
      %v3993 = vrcp.pop %v3976
      %v3994 = vrcp.pop %v3978
      %v3995 = vmul.f32 %v3916, %v3979
      %v3996 = vmul.f32 %v3918, %v3980
      %v3997 = vmul.f32 %v3920, %v3981
      %v3998 = vmul.f32 %v3922, %v3982
      %v3999 = vmul.f32 %v3924, %v3983
      %v4000 = vmul.f32 %v3926, %v3984
      %v4001 = vmul.f32 %v3928, %v3985
      %v4002 = vmul.f32 %v3930, %v3986
      %v4003 = vmul.f32 %v3932, %v3987
      %v4004 = vmul.f32 %v3934, %v3988
      %v4005 = vmul.f32 %v3936, %v3989
      %v4006 = vmul.f32 %v3938, %v3990
      %v4007 = vmul.f32 %v3940, %v3991
      %v4008 = vmul.f32 %v3942, %v3992
      %v4009 = vmul.f32 %v3944, %v3993
      %v4010 = vmul.f32 %v3946, %v3994
      %v4011 = vpack.c.bf16 %v3996, %v3995
      %v4012 = vpack.c.bf16 %v3998, %v3997
      %v4013 = vpack.c.bf16 %v4000, %v3999
      %v4014 = vpack.c.bf16 %v4002, %v4001
      %v4015 = vpack.c.bf16 %v4004, %v4003
      %v4016 = vpack.c.bf16 %v4006, %v4005
      %v4017 = vpack.c.bf16 %v4008, %v4007
      %v4018 = vpack.c.bf16 %v4010, %v4009
      %v4019 = vpack.c.bf16 %v3615, %v3612
      %v4020 = vpack.c.bf16 %v3623, %v3620
      %v4021 = vpack.c.bf16 %v3631, %v3628
      %v4022 = vpack.c.bf16 %v3639, %v3636
      %v4023 = vpack.c.bf16 %v3647, %v3644
      %v4024 = vpack.c.bf16 %v3655, %v3652
      %v4025 = vpack.c.bf16 %v3663, %v3660
      %v4026 = vpack.c.bf16 %v3671, %v3668
      %4027 = vmatprep.subr.bf16.mxu0 0
      %4028 = vmatpush1.bf16.msra.mxu0 %v4026
      %4029 = vmatprep.subr.bf16.mxu0 0
      %4030 = vmatpush1.bf16.msra.mxu0 %v4025
      %4031 = vmatprep.subr.bf16.mxu0 0
      %4032 = vmatpush1.bf16.msra.mxu0 %v4024
      %4033 = vmatprep.subr.bf16.mxu0 0
      %4034 = vmatpush1.bf16.msra.mxu0 %v4023
      %4035 = vmatprep.subr.bf16.mxu0 0
      %4036 = vmatpush1.bf16.msra.mxu0 %v4022
      %4037 = vmatprep.subr.bf16.mxu0 0
      %4038 = vmatpush1.bf16.msra.mxu0 %v4021
      %4039 = vmatprep.subr.bf16.mxu0 0
      %4040 = vmatpush1.bf16.msra.mxu0 %v4020
      %4041 = vmatprep.subr.bf16.mxu0 0
      %4042 = vmatpush1.bf16.msra.mxu0 %v4019
      %4043 = vmatprep.subr.bf16.mxu0 0
      %4044 = vmatpush2.bf16.msra.mxu0 0
      %4045 = vmatprep.subr.bf16.mxu0 0
      %4046 = vmatpush2.bf16.msra.mxu0 0
      %4047 = vmatprep.subr.bf16.mxu0 0
      %4048 = vmatpush2.bf16.msra.mxu0 0
      %4049 = vmatprep.subr.bf16.mxu0 0
      %4050 = vmatpush2.bf16.msra.mxu0 0
      %4051 = vmatprep.subr.bf16.mxu0 0
      %4052 = vmatpush2.bf16.msra.mxu0 0
      %4053 = vmatprep.subr.bf16.mxu0 0
      %4054 = vmatpush2.bf16.msra.mxu0 0
      %4055 = vmatprep.subr.bf16.mxu0 0
      %4056 = vmatpush2.bf16.msra.mxu0 0
      %4057 = vmatprep.subr.bf16.mxu0 0
      %4058 = vmatpush2.bf16.msra.mxu0 0
      %4059 = vmatprep.mubr.bf16.mxu0 0
      %4060 = vmatmul.mubr.bf16.gmra.mxu0 %v4011
      %v4061 = vpop.f32.mrf.mxu0
      %v4062 = vadd.f32 0.0, %v4061
      %v4063 = vpop.f32.mrf.mxu0
      %v4064 = vpop.f32.mrf.mxu0
      %v4065 = vadd.f32 0.0, %v4064
      %v4066 = vpop.f32.mrf.mxu0
      %4067 = vmatprep.mubr.bf16.mxu0 0
      %4068 = vmatmul.mubr.bf16.gmra.mxu0 %v4012
      %v4069 = vpop.f32.mrf.mxu0
      %v4070 = vadd.f32 0.0, %v4069
      %v4071 = vpop.f32.mrf.mxu0
      %v4072 = vpop.f32.mrf.mxu0
      %v4073 = vadd.f32 0.0, %v4072
      %v4074 = vpop.f32.mrf.mxu0
      %4075 = vmatprep.mubr.bf16.mxu0 0
      %4076 = vmatmul.mubr.bf16.gmra.mxu0 %v4013
      %v4077 = vpop.f32.mrf.mxu0
      %v4078 = vadd.f32 0.0, %v4077
      %v4079 = vpop.f32.mrf.mxu0
      %v4080 = vpop.f32.mrf.mxu0
      %v4081 = vadd.f32 0.0, %v4080
      %v4082 = vpop.f32.mrf.mxu0
      %4083 = vmatprep.mubr.bf16.mxu0 0
      %4084 = vmatmul.mubr.bf16.gmra.mxu0 %v4014
      %v4085 = vpop.f32.mrf.mxu0
      %v4086 = vadd.f32 0.0, %v4085
      %v4087 = vpop.f32.mrf.mxu0
      %v4088 = vpop.f32.mrf.mxu0
      %v4089 = vadd.f32 0.0, %v4088
      %v4090 = vpop.f32.mrf.mxu0
      %4091 = vmatprep.mubr.bf16.mxu0 0
      %4092 = vmatmul.mubr.bf16.gmra.mxu0 %v4015
      %v4093 = vpop.f32.mrf.mxu0
      %v4094 = vadd.f32 0.0, %v4093
      %v4095 = vpop.f32.mrf.mxu0
      %v4096 = vpop.f32.mrf.mxu0
      %v4097 = vadd.f32 0.0, %v4096
      %v4098 = vpop.f32.mrf.mxu0
      %4099 = vmatprep.mubr.bf16.mxu0 0
      %4100 = vmatmul.mubr.bf16.gmra.mxu0 %v4016
      %v4101 = vpop.f32.mrf.mxu0
      %v4102 = vadd.f32 0.0, %v4101
      %v4103 = vpop.f32.mrf.mxu0
      %v4104 = vpop.f32.mrf.mxu0
      %v4105 = vadd.f32 0.0, %v4104
      %v4106 = vpop.f32.mrf.mxu0
      %4107 = vmatprep.mubr.bf16.mxu0 0
      %4108 = vmatmul.mubr.bf16.gmra.mxu0 %v4017
      %v4109 = vpop.f32.mrf.mxu0
      %v4110 = vadd.f32 0.0, %v4109
      %v4111 = vpop.f32.mrf.mxu0
      %v4112 = vpop.f32.mrf.mxu0
      %v4113 = vadd.f32 0.0, %v4112
      %v4114 = vpop.f32.mrf.mxu0
      %4115 = vmatprep.mubr.bf16.mxu0 0
      %4116 = vmatmul.mubr.bf16.gmra.mxu0 %v4018
      %v4117 = vpop.f32.mrf.mxu0
      %v4118 = vadd.f32 0.0, %v4117
      %v4119 = vpop.f32.mrf.mxu0
      %v4120 = vpop.f32.mrf.mxu0
      %v4121 = vadd.f32 0.0, %v4120
      %v4122 = vpop.f32.mrf.mxu0
      %4123 = vdwg.mxu0
      %v4124 = vpack.c.bf16 %v4065, %v4062
      %v4125 = vpack.c.bf16 %v4073, %v4070
      %v4126 = vpack.c.bf16 %v4081, %v4078
      %v4127 = vpack.c.bf16 %v4089, %v4086
      %v4128 = vpack.c.bf16 %v4097, %v4094
      %v4129 = vpack.c.bf16 %v4105, %v4102
      %v4130 = vpack.c.bf16 %v4113, %v4110
      %v4131 = vpack.c.bf16 %v4121, %v4118
      %s4132 = scalar_lea.vmem %s861, 8
      %v4133 = vld [vmem:[%s4132] sm:$0xf]
      %v4135 = vsel %vm1789, %v4124, 0
      %v4138 = vsel %vm1789, %v4125, 0
      %v4141 = vsel %vm1789, %v4126, 0
      %v4144 = vsel %vm1789, %v4127, 0
      %v4147 = vsel %vm1789, %v4128, 0
      %v4150 = vsel %vm1789, %v4129, 0
      %v4153 = vsel %vm1789, %v4130, 0
      %v4156 = vsel %vm1789, %v4131, 0
      %v4159 = vsel %vm3083, %v4133, 0
      %4161 = vmatprep.subr.bf16.mxu0 0
      %4162 = vmatpush1.bf16.msra.mxu0 0
      %4163 = vmatprep.subr.bf16.mxu0 0
      %4164 = vmatpush1.bf16.msra.mxu0 0
      %4165 = vmatprep.subr.bf16.mxu0 0
      %4166 = vmatpush1.bf16.msra.mxu0 0
      %4167 = vmatprep.subr.bf16.mxu0 0
      %4168 = vmatpush1.bf16.msra.mxu0 0
      %4169 = vmatprep.subr.bf16.mxu0 0
      %4170 = vmatpush1.bf16.msra.mxu0 0
      %4171 = vmatprep.subr.bf16.mxu0 0
      %4172 = vmatpush1.bf16.msra.mxu0 0
      %4173 = vmatprep.subr.bf16.mxu0 0
      %4174 = vmatpush1.bf16.msra.mxu0 0
      %4175 = vmatprep.subr.bf16.mxu0 0
      %4176 = vmatpush1.bf16.msra.mxu0 %v4159
      %4177 = vmatprep.subr.bf16.mxu0 0
      %4178 = vmatpush2.bf16.msra.mxu0 0
      %4179 = vmatprep.subr.bf16.mxu0 0
      %4180 = vmatpush2.bf16.msra.mxu0 0
      %4181 = vmatprep.subr.bf16.mxu0 0
      %4182 = vmatpush2.bf16.msra.mxu0 0
      %4183 = vmatprep.subr.bf16.mxu0 0
      %4184 = vmatpush2.bf16.msra.mxu0 0
      %4185 = vmatprep.subr.bf16.mxu0 0
      %4186 = vmatpush2.bf16.msra.mxu0 0
      %4187 = vmatprep.subr.bf16.mxu0 0
      %4188 = vmatpush2.bf16.msra.mxu0 0
      %4189 = vmatprep.subr.bf16.mxu0 0
      %4190 = vmatpush2.bf16.msra.mxu0 0
      %4191 = vmatprep.subr.bf16.mxu0 0
      %4192 = vmatpush2.bf16.msra.mxu0 0
      %4193 = vmatprep.mubr.bf16.mxu0 0
      %4194 = vmatmul.mubr.bf16.gmra.mxu0 %v4135
      %v4195 = vpop.f32.mrf.mxu0
      %v4196 = vadd.f32 0.0, %v4195
      %v4197 = vpop.f32.mrf.mxu0
      %v4198 = vpop.f32.mrf.mxu0
      %v4199 = vadd.f32 0.0, %v4198
      %v4200 = vpop.f32.mrf.mxu0
      %4201 = vmatprep.mubr.bf16.mxu0 0
      %4202 = vmatmul.mubr.bf16.gmra.mxu0 %v4138
      %v4203 = vpop.f32.mrf.mxu0
      %v4204 = vadd.f32 0.0, %v4203
      %v4205 = vpop.f32.mrf.mxu0
      %v4206 = vpop.f32.mrf.mxu0
      %v4207 = vadd.f32 0.0, %v4206
      %v4208 = vpop.f32.mrf.mxu0
      %4209 = vmatprep.mubr.bf16.mxu0 0
      %4210 = vmatmul.mubr.bf16.gmra.mxu0 %v4141
      %v4211 = vpop.f32.mrf.mxu0
      %v4212 = vadd.f32 0.0, %v4211
      %v4213 = vpop.f32.mrf.mxu0
      %v4214 = vpop.f32.mrf.mxu0
      %v4215 = vadd.f32 0.0, %v4214
      %v4216 = vpop.f32.mrf.mxu0
      %4217 = vmatprep.mubr.bf16.mxu0 0
      %4218 = vmatmul.mubr.bf16.gmra.mxu0 %v4144
      %v4219 = vpop.f32.mrf.mxu0
      %v4220 = vadd.f32 0.0, %v4219
      %v4221 = vpop.f32.mrf.mxu0
      %v4222 = vpop.f32.mrf.mxu0
      %v4223 = vadd.f32 0.0, %v4222
      %v4224 = vpop.f32.mrf.mxu0
      %4225 = vmatprep.mubr.bf16.mxu0 0
      %4226 = vmatmul.mubr.bf16.gmra.mxu0 %v4147
      %v4227 = vpop.f32.mrf.mxu0
      %v4228 = vadd.f32 0.0, %v4227
      %v4229 = vpop.f32.mrf.mxu0
      %v4230 = vpop.f32.mrf.mxu0
      %v4231 = vadd.f32 0.0, %v4230
      %v4232 = vpop.f32.mrf.mxu0
      %4233 = vmatprep.mubr.bf16.mxu0 0
      %4234 = vmatmul.mubr.bf16.gmra.mxu0 %v4150
      %v4235 = vpop.f32.mrf.mxu0
      %v4236 = vadd.f32 0.0, %v4235
      %v4237 = vpop.f32.mrf.mxu0
      %v4238 = vpop.f32.mrf.mxu0
      %v4239 = vadd.f32 0.0, %v4238
      %v4240 = vpop.f32.mrf.mxu0
      %4241 = vmatprep.mubr.bf16.mxu0 0
      %4242 = vmatmul.mubr.bf16.gmra.mxu0 %v4153
      %v4243 = vpop.f32.mrf.mxu0
      %v4244 = vadd.f32 0.0, %v4243
      %v4245 = vpop.f32.mrf.mxu0
      %v4246 = vpop.f32.mrf.mxu0
      %v4247 = vadd.f32 0.0, %v4246
      %v4248 = vpop.f32.mrf.mxu0
      %4249 = vmatprep.mubr.bf16.mxu0 0
      %4250 = vmatmul.mubr.bf16.gmra.mxu0 %v4156
      %v4251 = vpop.f32.mrf.mxu0
      %v4252 = vadd.f32 0.0, %v4251
      %v4253 = vpop.f32.mrf.mxu0
      %v4254 = vpop.f32.mrf.mxu0
      %v4255 = vadd.f32 0.0, %v4254
      %v4256 = vpop.f32.mrf.mxu0
      %4257 = vdwg.mxu0
      %v4258 = vadd.f32 %v3246, %v4196
      %v4259 = vadd.f32 %v3249, %v4199
      %v4260 = vadd.f32 %v3254, %v4204
      %v4261 = vadd.f32 %v3257, %v4207
      %v4262 = vadd.f32 %v3262, %v4212
      %v4263 = vadd.f32 %v3265, %v4215
      %v4264 = vadd.f32 %v3270, %v4220
      %v4265 = vadd.f32 %v3273, %v4223
      %v4266 = vadd.f32 %v3278, %v4228
      %v4267 = vadd.f32 %v3281, %v4231
      %v4268 = vadd.f32 %v3286, %v4236
      %v4269 = vadd.f32 %v3289, %v4239
      %v4270 = vadd.f32 %v3294, %v4244
      %v4271 = vadd.f32 %v3297, %v4247
      %v4272 = vadd.f32 %v3302, %v4252
      %v4273 = vadd.f32 %v3305, %v4255
      %s4274 = scalar_lea.vmem %s834, 48
      %v4275 = vld [vmem:[%s4274] sm:$0xf]
      %v4276 = vld [vmem:[%s4274 + $0x4] sm:$0xf]
      %v4277 = vld [vmem:[%s4274 + $0x8] sm:$0xf]
      %v4278 = vld [vmem:[%s4274 + $0xc] sm:$0xf]
      %s4279 = scalar_lea.vmem %s848, 3
      %v4280 = vld [vmem:[%s4279] sm:$0x1]
      %v4282 = vlaneseq
      %v4283 = vshrl.u32 %v4282, 7
      %v4284 = vsub.s32 0, %v4283
      %v4285 = vrot.slane %v4280, %v4284
      %v4291 = vunpack.c.l.b16 %v4275
      %v4292 = vunpack.c.l.b16 %v4276
      %v4293 = vunpack.c.l.b16 %v4277
      %v4294 = vunpack.c.l.b16 %v4278
      %v4295 = vpack.c.b16 %v4292, %v4291
      %v4296 = vpack.c.b16 %v4294, %v4293
      %4299 = vmatprep.subr.bf16.mxu0 0
      %4300 = vmatpush1.bf16.msra.mxu0 0
      %4301 = vmatprep.subr.bf16.mxu0 0
      %4302 = vmatpush1.bf16.msra.mxu0 0
      %4303 = vmatprep.subr.bf16.mxu0 0
      %4304 = vmatpush1.bf16.msra.mxu0 0
      %4305 = vmatprep.subr.bf16.mxu0 0
      %4306 = vmatpush1.bf16.msra.mxu0 0
      %4307 = vmatprep.subr.bf16.mxu0 0
      %4308 = vmatpush1.bf16.msra.mxu0 0
      %4309 = vmatprep.subr.bf16.mxu0 0
      %4310 = vmatpush1.bf16.msra.mxu0 0
      %4311 = vmatprep.subr.bf16.mxu0 0
      %4312 = vmatpush1.bf16.msra.mxu0 %v4296
      %4313 = vmatprep.subr.bf16.mxu0 0
      %4314 = vmatpush1.bf16.msra.mxu0 %v4295
      %4315 = vmatprep.subr.bf16.mxu0 0
      %4316 = vmatpush2.bf16.msra.mxu0 0
      %4317 = vmatprep.subr.bf16.mxu0 0
      %4318 = vmatpush2.bf16.msra.mxu0 0
      %4319 = vmatprep.subr.bf16.mxu0 0
      %4320 = vmatpush2.bf16.msra.mxu0 0
      %4321 = vmatprep.subr.bf16.mxu0 0
      %4322 = vmatpush2.bf16.msra.mxu0 0
      %4323 = vmatprep.subr.bf16.mxu0 0
      %4324 = vmatpush2.bf16.msra.mxu0 0
      %4325 = vmatprep.subr.bf16.mxu0 0
      %4326 = vmatpush2.bf16.msra.mxu0 0
      %4327 = vmatprep.subr.bf16.mxu0 0
      %4328 = vmatpush2.bf16.msra.mxu0 0
      %4329 = vmatprep.subr.bf16.mxu0 0
      %4330 = vmatpush2.bf16.msra.mxu0 0
      %4331 = vmatprep.mubr.bf16.mxu0 0
      %4332 = vmatmul.mubr.bf16.gmra.mxu0 %v1413
      %v4333 = vpop.f32.mrf.mxu0
      %v4334 = vadd.f32 %v4285, %v4333
      %v4335 = vpop.f32.mrf.mxu0
      %v4336 = vpop.f32.mrf.mxu0
      %v4337 = vadd.f32 %v4285, %v4336
      %v4338 = vpop.f32.mrf.mxu0
      %4339 = vmatprep.mubr.bf16.mxu0 0
      %4340 = vmatmul.mubr.bf16.gmra.mxu0 %v1416
      %v4341 = vpop.f32.mrf.mxu0
      %v4342 = vadd.f32 %v4285, %v4341
      %v4343 = vpop.f32.mrf.mxu0
      %v4344 = vpop.f32.mrf.mxu0
      %v4345 = vadd.f32 %v4285, %v4344
      %v4346 = vpop.f32.mrf.mxu0
      %4347 = vmatprep.mubr.bf16.mxu0 0
      %4348 = vmatmul.mubr.bf16.gmra.mxu0 %v1419
      %v4349 = vpop.f32.mrf.mxu0
      %v4350 = vadd.f32 %v4285, %v4349
      %v4351 = vpop.f32.mrf.mxu0
      %v4352 = vpop.f32.mrf.mxu0
      %v4353 = vadd.f32 %v4285, %v4352
      %v4354 = vpop.f32.mrf.mxu0
      %4355 = vmatprep.mubr.bf16.mxu0 0
      %4356 = vmatmul.mubr.bf16.gmra.mxu0 %v1422
      %v4357 = vpop.f32.mrf.mxu0
      %v4358 = vadd.f32 %v4285, %v4357
      %v4359 = vpop.f32.mrf.mxu0
      %v4360 = vpop.f32.mrf.mxu0
      %v4361 = vadd.f32 %v4285, %v4360
      %v4362 = vpop.f32.mrf.mxu0
      %4363 = vmatprep.mubr.bf16.mxu0 0
      %4364 = vmatmul.mubr.bf16.gmra.mxu0 %v1425
      %v4365 = vpop.f32.mrf.mxu0
      %v4366 = vadd.f32 %v4285, %v4365
      %v4367 = vpop.f32.mrf.mxu0
      %v4368 = vpop.f32.mrf.mxu0
      %v4369 = vadd.f32 %v4285, %v4368
      %v4370 = vpop.f32.mrf.mxu0
      %4371 = vmatprep.mubr.bf16.mxu0 0
      %4372 = vmatmul.mubr.bf16.gmra.mxu0 %v1428
      %v4373 = vpop.f32.mrf.mxu0
      %v4374 = vadd.f32 %v4285, %v4373
      %v4375 = vpop.f32.mrf.mxu0
      %v4376 = vpop.f32.mrf.mxu0
      %v4377 = vadd.f32 %v4285, %v4376
      %v4378 = vpop.f32.mrf.mxu0
      %4379 = vmatprep.mubr.bf16.mxu0 0
      %4380 = vmatmul.mubr.bf16.gmra.mxu0 %v1431
      %v4381 = vpop.f32.mrf.mxu0
      %v4382 = vadd.f32 %v4285, %v4381
      %v4383 = vpop.f32.mrf.mxu0
      %v4384 = vpop.f32.mrf.mxu0
      %v4385 = vadd.f32 %v4285, %v4384
      %v4386 = vpop.f32.mrf.mxu0
      %4387 = vmatprep.mubr.bf16.mxu0 0
      %4388 = vmatmul.mubr.bf16.gmra.mxu0 %v1434
      %v4389 = vpop.f32.mrf.mxu0
      %v4390 = vadd.f32 %v4285, %v4389
      %v4391 = vpop.f32.mrf.mxu0
      %v4392 = vpop.f32.mrf.mxu0
      %v4393 = vadd.f32 %v4285, %v4392
      %v4394 = vpop.f32.mrf.mxu0
      %4395 = vdwg.mxu0
      %s4396 = scalar_lea.vmem %s839, 48
      %v4397 = vld [vmem:[%s4396] sm:$0xf]
      %v4398 = vld [vmem:[%s4396 + $0x4] sm:$0xf]
      %v4399 = vld [vmem:[%s4396 + $0x8] sm:$0xf]
      %v4400 = vld [vmem:[%s4396 + $0xc] sm:$0xf]
      %s4401 = scalar_lea.vmem %s852, 3
      %v4402 = vld [vmem:[%s4401] sm:$0x1]
      %v4404 = vlaneseq
      %v4405 = vshrl.u32 %v4404, 7
      %v4406 = vsub.s32 0, %v4405
      %v4407 = vrot.slane %v4402, %v4406
      %v4413 = vunpack.c.l.b16 %v4397
      %v4414 = vunpack.c.l.b16 %v4398
      %v4415 = vunpack.c.l.b16 %v4399
      %v4416 = vunpack.c.l.b16 %v4400
      %v4417 = vpack.c.b16 %v4414, %v4413
      %v4418 = vpack.c.b16 %v4416, %v4415
      %4421 = vmatprep.subr.bf16.mxu0 0
      %4422 = vmatpush1.bf16.msra.mxu0 0
      %4423 = vmatprep.subr.bf16.mxu0 0
      %4424 = vmatpush1.bf16.msra.mxu0 0
      %4425 = vmatprep.subr.bf16.mxu0 0
      %4426 = vmatpush1.bf16.msra.mxu0 0
      %4427 = vmatprep.subr.bf16.mxu0 0
      %4428 = vmatpush1.bf16.msra.mxu0 0
      %4429 = vmatprep.subr.bf16.mxu0 0
      %4430 = vmatpush1.bf16.msra.mxu0 0
      %4431 = vmatprep.subr.bf16.mxu0 0
      %4432 = vmatpush1.bf16.msra.mxu0 0
      %4433 = vmatprep.subr.bf16.mxu0 0
      %4434 = vmatpush1.bf16.msra.mxu0 %v4418
      %4435 = vmatprep.subr.bf16.mxu0 0
      %4436 = vmatpush1.bf16.msra.mxu0 %v4417
      %4437 = vmatprep.subr.bf16.mxu0 0
      %4438 = vmatpush2.bf16.msra.mxu0 0
      %4439 = vmatprep.subr.bf16.mxu0 0
      %4440 = vmatpush2.bf16.msra.mxu0 0
      %4441 = vmatprep.subr.bf16.mxu0 0
      %4442 = vmatpush2.bf16.msra.mxu0 0
      %4443 = vmatprep.subr.bf16.mxu0 0
      %4444 = vmatpush2.bf16.msra.mxu0 0
      %4445 = vmatprep.subr.bf16.mxu0 0
      %4446 = vmatpush2.bf16.msra.mxu0 0
      %4447 = vmatprep.subr.bf16.mxu0 0
      %4448 = vmatpush2.bf16.msra.mxu0 0
      %4449 = vmatprep.subr.bf16.mxu0 0
      %4450 = vmatpush2.bf16.msra.mxu0 0
      %4451 = vmatprep.subr.bf16.mxu0 0
      %4452 = vmatpush2.bf16.msra.mxu0 0
      %4453 = vmatprep.mubr.bf16.mxu0 0
      %4454 = vmatmul.mubr.bf16.gmra.mxu0 %v1413
      %v4455 = vpop.f32.mrf.mxu0
      %v4456 = vadd.f32 %v4407, %v4455
      %v4457 = vpop.f32.mrf.mxu0
      %v4458 = vpop.f32.mrf.mxu0
      %v4459 = vadd.f32 %v4407, %v4458
      %v4460 = vpop.f32.mrf.mxu0
      %4461 = vmatprep.mubr.bf16.mxu0 0
      %4462 = vmatmul.mubr.bf16.gmra.mxu0 %v1416
      %v4463 = vpop.f32.mrf.mxu0
      %v4464 = vadd.f32 %v4407, %v4463
      %v4465 = vpop.f32.mrf.mxu0
      %v4466 = vpop.f32.mrf.mxu0
      %v4467 = vadd.f32 %v4407, %v4466
      %v4468 = vpop.f32.mrf.mxu0
      %4469 = vmatprep.mubr.bf16.mxu0 0
      %4470 = vmatmul.mubr.bf16.gmra.mxu0 %v1419
      %v4471 = vpop.f32.mrf.mxu0
      %v4472 = vadd.f32 %v4407, %v4471
      %v4473 = vpop.f32.mrf.mxu0
      %v4474 = vpop.f32.mrf.mxu0
      %v4475 = vadd.f32 %v4407, %v4474
      %v4476 = vpop.f32.mrf.mxu0
      %4477 = vmatprep.mubr.bf16.mxu0 0
      %4478 = vmatmul.mubr.bf16.gmra.mxu0 %v1422
      %v4479 = vpop.f32.mrf.mxu0
      %v4480 = vadd.f32 %v4407, %v4479
      %v4481 = vpop.f32.mrf.mxu0
      %v4482 = vpop.f32.mrf.mxu0
      %v4483 = vadd.f32 %v4407, %v4482
      %v4484 = vpop.f32.mrf.mxu0
      %4485 = vmatprep.mubr.bf16.mxu0 0
      %4486 = vmatmul.mubr.bf16.gmra.mxu0 %v1425
      %v4487 = vpop.f32.mrf.mxu0
      %v4488 = vadd.f32 %v4407, %v4487
      %v4489 = vpop.f32.mrf.mxu0
      %v4490 = vpop.f32.mrf.mxu0
      %v4491 = vadd.f32 %v4407, %v4490
      %v4492 = vpop.f32.mrf.mxu0
      %4493 = vmatprep.mubr.bf16.mxu0 0
      %4494 = vmatmul.mubr.bf16.gmra.mxu0 %v1428
      %v4495 = vpop.f32.mrf.mxu0
      %v4496 = vadd.f32 %v4407, %v4495
      %v4497 = vpop.f32.mrf.mxu0
      %v4498 = vpop.f32.mrf.mxu0
      %v4499 = vadd.f32 %v4407, %v4498
      %v4500 = vpop.f32.mrf.mxu0
      %4501 = vmatprep.mubr.bf16.mxu0 0
      %4502 = vmatmul.mubr.bf16.gmra.mxu0 %v1431
      %v4503 = vpop.f32.mrf.mxu0
      %v4504 = vadd.f32 %v4407, %v4503
      %v4505 = vpop.f32.mrf.mxu0
      %v4506 = vpop.f32.mrf.mxu0
      %v4507 = vadd.f32 %v4407, %v4506
      %v4508 = vpop.f32.mrf.mxu0
      %4509 = vmatprep.mubr.bf16.mxu0 0
      %4510 = vmatmul.mubr.bf16.gmra.mxu0 %v1434
      %v4511 = vpop.f32.mrf.mxu0
      %v4512 = vadd.f32 %v4407, %v4511
      %v4513 = vpop.f32.mrf.mxu0
      %v4514 = vpop.f32.mrf.mxu0
      %v4515 = vadd.f32 %v4407, %v4514
      %v4516 = vpop.f32.mrf.mxu0
      %4517 = vdwg.mxu0
      %s4518 = scalar_lea.vmem %s844, 48
      %v4519 = vld [vmem:[%s4518] sm:$0xf]
      %v4520 = vld [vmem:[%s4518 + $0x4] sm:$0xf]
      %v4521 = vld [vmem:[%s4518 + $0x8] sm:$0xf]
      %v4522 = vld [vmem:[%s4518 + $0xc] sm:$0xf]
      %s4523 = scalar_lea.vmem %s856, 3
      %v4524 = vld [vmem:[%s4523] sm:$0x1]
      %v4526 = vlaneseq
      %v4527 = vshrl.u32 %v4526, 7
      %v4528 = vsub.s32 0, %v4527
      %v4529 = vrot.slane %v4524, %v4528
      %v4535 = vunpack.c.l.b16 %v4519
      %v4536 = vunpack.c.l.b16 %v4520
      %v4537 = vunpack.c.l.b16 %v4521
      %v4538 = vunpack.c.l.b16 %v4522
      %v4539 = vpack.c.b16 %v4536, %v4535
      %v4540 = vpack.c.b16 %v4538, %v4537
      %4543 = vmatprep.subr.bf16.mxu0 0
      %4544 = vmatpush1.bf16.msra.mxu0 0
      %4545 = vmatprep.subr.bf16.mxu0 0
      %4546 = vmatpush1.bf16.msra.mxu0 0
      %4547 = vmatprep.subr.bf16.mxu0 0
      %4548 = vmatpush1.bf16.msra.mxu0 0
      %4549 = vmatprep.subr.bf16.mxu0 0
      %4550 = vmatpush1.bf16.msra.mxu0 0
      %4551 = vmatprep.subr.bf16.mxu0 0
      %4552 = vmatpush1.bf16.msra.mxu0 0
      %4553 = vmatprep.subr.bf16.mxu0 0
      %4554 = vmatpush1.bf16.msra.mxu0 0
      %4555 = vmatprep.subr.bf16.mxu0 0
      %4556 = vmatpush1.bf16.msra.mxu0 %v4540
      %4557 = vmatprep.subr.bf16.mxu0 0
      %4558 = vmatpush1.bf16.msra.mxu0 %v4539
      %4559 = vmatprep.subr.bf16.mxu0 0
      %4560 = vmatpush2.bf16.msra.mxu0 0
      %4561 = vmatprep.subr.bf16.mxu0 0
      %4562 = vmatpush2.bf16.msra.mxu0 0
      %4563 = vmatprep.subr.bf16.mxu0 0
      %4564 = vmatpush2.bf16.msra.mxu0 0
      %4565 = vmatprep.subr.bf16.mxu0 0
      %4566 = vmatpush2.bf16.msra.mxu0 0
      %4567 = vmatprep.subr.bf16.mxu0 0
      %4568 = vmatpush2.bf16.msra.mxu0 0
      %4569 = vmatprep.subr.bf16.mxu0 0
      %4570 = vmatpush2.bf16.msra.mxu0 0
      %4571 = vmatprep.subr.bf16.mxu0 0
      %4572 = vmatpush2.bf16.msra.mxu0 0
      %4573 = vmatprep.subr.bf16.mxu0 0
      %4574 = vmatpush2.bf16.msra.mxu0 0
      %4575 = vmatprep.mubr.bf16.mxu0 0
      %4576 = vmatmul.mubr.bf16.gmra.mxu0 %v1413
      %v4577 = vpop.f32.mrf.mxu0
      %v4578 = vadd.f32 %v4529, %v4577
      %v4579 = vpop.f32.mrf.mxu0
      %v4580 = vpop.f32.mrf.mxu0
      %v4581 = vadd.f32 %v4529, %v4580
      %v4582 = vpop.f32.mrf.mxu0
      %4583 = vmatprep.mubr.bf16.mxu0 0
      %4584 = vmatmul.mubr.bf16.gmra.mxu0 %v1416
      %v4585 = vpop.f32.mrf.mxu0
      %v4586 = vadd.f32 %v4529, %v4585
      %v4587 = vpop.f32.mrf.mxu0
      %v4588 = vpop.f32.mrf.mxu0
      %v4589 = vadd.f32 %v4529, %v4588
      %v4590 = vpop.f32.mrf.mxu0
      %4591 = vmatprep.mubr.bf16.mxu0 0
      %4592 = vmatmul.mubr.bf16.gmra.mxu0 %v1419
      %v4593 = vpop.f32.mrf.mxu0
      %v4594 = vadd.f32 %v4529, %v4593
      %v4595 = vpop.f32.mrf.mxu0
      %v4596 = vpop.f32.mrf.mxu0
      %v4597 = vadd.f32 %v4529, %v4596
      %v4598 = vpop.f32.mrf.mxu0
      %4599 = vmatprep.mubr.bf16.mxu0 0
      %4600 = vmatmul.mubr.bf16.gmra.mxu0 %v1422
      %v4601 = vpop.f32.mrf.mxu0
      %v4602 = vadd.f32 %v4529, %v4601
      %v4603 = vpop.f32.mrf.mxu0
      %v4604 = vpop.f32.mrf.mxu0
      %v4605 = vadd.f32 %v4529, %v4604
      %v4606 = vpop.f32.mrf.mxu0
      %4607 = vmatprep.mubr.bf16.mxu0 0
      %4608 = vmatmul.mubr.bf16.gmra.mxu0 %v1425
      %v4609 = vpop.f32.mrf.mxu0
      %v4610 = vadd.f32 %v4529, %v4609
      %v4611 = vpop.f32.mrf.mxu0
      %v4612 = vpop.f32.mrf.mxu0
      %v4613 = vadd.f32 %v4529, %v4612
      %v4614 = vpop.f32.mrf.mxu0
      %4615 = vmatprep.mubr.bf16.mxu0 0
      %4616 = vmatmul.mubr.bf16.gmra.mxu0 %v1428
      %v4617 = vpop.f32.mrf.mxu0
      %v4618 = vadd.f32 %v4529, %v4617
      %v4619 = vpop.f32.mrf.mxu0
      %v4620 = vpop.f32.mrf.mxu0
      %v4621 = vadd.f32 %v4529, %v4620
      %v4622 = vpop.f32.mrf.mxu0
      %4623 = vmatprep.mubr.bf16.mxu0 0
      %4624 = vmatmul.mubr.bf16.gmra.mxu0 %v1431
      %v4625 = vpop.f32.mrf.mxu0
      %v4626 = vadd.f32 %v4529, %v4625
      %v4627 = vpop.f32.mrf.mxu0
      %v4628 = vpop.f32.mrf.mxu0
      %v4629 = vadd.f32 %v4529, %v4628
      %v4630 = vpop.f32.mrf.mxu0
      %4631 = vmatprep.mubr.bf16.mxu0 0
      %4632 = vmatmul.mubr.bf16.gmra.mxu0 %v1434
      %v4633 = vpop.f32.mrf.mxu0
      %v4634 = vadd.f32 %v4529, %v4633
      %v4635 = vpop.f32.mrf.mxu0
      %v4636 = vpop.f32.mrf.mxu0
      %v4637 = vadd.f32 %v4529, %v4636
      %v4638 = vpop.f32.mrf.mxu0
      %4639 = vdwg.mxu0
      %v4640 = vpack.c.bf16 %v4337, %v4334
      %v4641 = vpack.c.bf16 %v4345, %v4342
      %v4642 = vpack.c.bf16 %v4353, %v4350
      %v4643 = vpack.c.bf16 %v4361, %v4358
      %v4644 = vpack.c.bf16 %v4369, %v4366
      %v4645 = vpack.c.bf16 %v4377, %v4374
      %v4646 = vpack.c.bf16 %v4385, %v4382
      %v4647 = vpack.c.bf16 %v4393, %v4390
      %v4648 = vpack.c.bf16 %v4459, %v4456
      %v4649 = vpack.c.bf16 %v4467, %v4464
      %v4650 = vpack.c.bf16 %v4475, %v4472
      %v4651 = vpack.c.bf16 %v4483, %v4480
      %v4652 = vpack.c.bf16 %v4491, %v4488
      %v4653 = vpack.c.bf16 %v4499, %v4496
      %v4654 = vpack.c.bf16 %v4507, %v4504
      %v4655 = vpack.c.bf16 %v4515, %v4512
      %v4657 = vsel %vm1789, %v4640, 0
      %v4660 = vsel %vm1789, %v4641, 0
      %v4663 = vsel %vm1789, %v4642, 0
      %v4666 = vsel %vm1789, %v4643, 0
      %v4669 = vsel %vm1789, %v4644, 0
      %v4672 = vsel %vm1789, %v4645, 0
      %v4675 = vsel %vm1789, %v4646, 0
      %v4678 = vsel %vm1789, %v4647, 0
      %v4681 = vsel %vm1789, %v4648, 0
      %v4684 = vsel %vm1789, %v4649, 0
      %v4687 = vsel %vm1789, %v4650, 0
      %v4690 = vsel %vm1789, %v4651, 0
      %v4693 = vsel %vm1789, %v4652, 0
      %v4696 = vsel %vm1789, %v4653, 0
      %v4699 = vsel %vm1789, %v4654, 0
      %v4702 = vsel %vm1789, %v4655, 0
      %4704 = vmatprep.subr.bf16.mxu0 0
      %4705 = vmatpush1.bf16.xpose.msra.mxu0 %v4702
      %4706 = vmatprep.subr.bf16.mxu0 0
      %4707 = vmatpush1.bf16.xpose.msra.mxu0 %v4699
      %4708 = vmatprep.subr.bf16.mxu0 0
      %4709 = vmatpush1.bf16.xpose.msra.mxu0 %v4696
      %4710 = vmatprep.subr.bf16.mxu0 0
      %4711 = vmatpush1.bf16.xpose.msra.mxu0 %v4693
      %4712 = vmatprep.subr.bf16.mxu0 0
      %4713 = vmatpush1.bf16.xpose.msra.mxu0 %v4690
      %4714 = vmatprep.subr.bf16.mxu0 0
      %4715 = vmatpush1.bf16.xpose.msra.mxu0 %v4687
      %4716 = vmatprep.subr.bf16.mxu0 0
      %4717 = vmatpush1.bf16.xpose.msra.mxu0 %v4684
      %4718 = vmatprep.subr.bf16.mxu0 0
      %4719 = vmatpush1.bf16.xpose.msra.mxu0 %v4681
      %4720 = vmatprep.subr.bf16.mxu0 0
      %4721 = vmatpush2.bf16.xpose.msra.mxu0 0
      %4722 = vmatprep.subr.bf16.mxu0 0
      %4723 = vmatpush2.bf16.xpose.msra.mxu0 0
      %4724 = vmatprep.subr.bf16.mxu0 0
      %4725 = vmatpush2.bf16.xpose.msra.mxu0 0
      %4726 = vmatprep.subr.bf16.mxu0 0
      %4727 = vmatpush2.bf16.xpose.msra.mxu0 0
      %4728 = vmatprep.subr.bf16.mxu0 0
      %4729 = vmatpush2.bf16.xpose.msra.mxu0 0
      %4730 = vmatprep.subr.bf16.mxu0 0
      %4731 = vmatpush2.bf16.xpose.msra.mxu0 0
      %4732 = vmatprep.subr.bf16.mxu0 0
      %4733 = vmatpush2.bf16.xpose.msra.mxu0 0
      %4734 = vmatprep.subr.bf16.mxu0 0
      %4735 = vmatpush2.bf16.xpose.msra.mxu0 0
      %4736 = vmatprep.mubr.bf16.mxu0 0
      %4737 = vmatmul.mubr.bf16.gmra.mxu0 %v4657
      %v4738 = vpop.f32.mrf.mxu0
      %v4739 = vadd.f32 0.0, %v4738
      %v4740 = vpop.f32.mrf.mxu0
      %v4741 = vpop.f32.mrf.mxu0
      %v4742 = vadd.f32 0.0, %v4741
      %v4743 = vpop.f32.mrf.mxu0
      %4744 = vmatprep.mubr.bf16.mxu0 0
      %4745 = vmatmul.mubr.bf16.gmra.mxu0 %v4660
      %v4746 = vpop.f32.mrf.mxu0
      %v4747 = vadd.f32 0.0, %v4746
      %v4748 = vpop.f32.mrf.mxu0
      %v4749 = vpop.f32.mrf.mxu0
      %v4750 = vadd.f32 0.0, %v4749
      %v4751 = vpop.f32.mrf.mxu0
      %4752 = vmatprep.mubr.bf16.mxu0 0
      %4753 = vmatmul.mubr.bf16.gmra.mxu0 %v4663
      %v4754 = vpop.f32.mrf.mxu0
      %v4755 = vadd.f32 0.0, %v4754
      %v4756 = vpop.f32.mrf.mxu0
      %v4757 = vpop.f32.mrf.mxu0
      %v4758 = vadd.f32 0.0, %v4757
      %v4759 = vpop.f32.mrf.mxu0
      %4760 = vmatprep.mubr.bf16.mxu0 0
      %4761 = vmatmul.mubr.bf16.gmra.mxu0 %v4666
      %v4762 = vpop.f32.mrf.mxu0
      %v4763 = vadd.f32 0.0, %v4762
      %v4764 = vpop.f32.mrf.mxu0
      %v4765 = vpop.f32.mrf.mxu0
      %v4766 = vadd.f32 0.0, %v4765
      %v4767 = vpop.f32.mrf.mxu0
      %4768 = vmatprep.mubr.bf16.mxu0 0
      %4769 = vmatmul.mubr.bf16.gmra.mxu0 %v4669
      %v4770 = vpop.f32.mrf.mxu0
      %v4771 = vadd.f32 0.0, %v4770
      %v4772 = vpop.f32.mrf.mxu0
      %v4773 = vpop.f32.mrf.mxu0
      %v4774 = vadd.f32 0.0, %v4773
      %v4775 = vpop.f32.mrf.mxu0
      %4776 = vmatprep.mubr.bf16.mxu0 0
      %4777 = vmatmul.mubr.bf16.gmra.mxu0 %v4672
      %v4778 = vpop.f32.mrf.mxu0
      %v4779 = vadd.f32 0.0, %v4778
      %v4780 = vpop.f32.mrf.mxu0
      %v4781 = vpop.f32.mrf.mxu0
      %v4782 = vadd.f32 0.0, %v4781
      %v4783 = vpop.f32.mrf.mxu0
      %4784 = vmatprep.mubr.bf16.mxu0 0
      %4785 = vmatmul.mubr.bf16.gmra.mxu0 %v4675
      %v4786 = vpop.f32.mrf.mxu0
      %v4787 = vadd.f32 0.0, %v4786
      %v4788 = vpop.f32.mrf.mxu0
      %v4789 = vpop.f32.mrf.mxu0
      %v4790 = vadd.f32 0.0, %v4789
      %v4791 = vpop.f32.mrf.mxu0
      %4792 = vmatprep.mubr.bf16.mxu0 0
      %4793 = vmatmul.mubr.bf16.gmra.mxu0 %v4678
      %v4794 = vpop.f32.mrf.mxu0
      %v4795 = vadd.f32 0.0, %v4794
      %v4796 = vpop.f32.mrf.mxu0
      %v4797 = vpop.f32.mrf.mxu0
      %v4798 = vadd.f32 0.0, %v4797
      %v4799 = vpop.f32.mrf.mxu0
      %4800 = vdwg.mxu0
      %v4801 = vmul.f32 %v4739, 0.35355338
      %v4802 = vmul.f32 %v4742, 0.35355338
      %v4803 = vmul.f32 %v4747, 0.35355338
      %v4804 = vmul.f32 %v4750, 0.35355338
      %v4805 = vmul.f32 %v4755, 0.35355338
      %v4806 = vmul.f32 %v4758, 0.35355338
      %v4807 = vmul.f32 %v4763, 0.35355338
      %v4808 = vmul.f32 %v4766, 0.35355338
      %v4809 = vmul.f32 %v4771, 0.35355338
      %v4810 = vmul.f32 %v4774, 0.35355338
      %v4811 = vmul.f32 %v4779, 0.35355338
      %v4812 = vmul.f32 %v4782, 0.35355338
      %v4813 = vmul.f32 %v4787, 0.35355338
      %v4814 = vmul.f32 %v4790, 0.35355338
      %v4815 = vmul.f32 %v4795, 0.35355338
      %v4816 = vmul.f32 %v4798, 0.35355338
      %v4817 = vadd.f32 %v4801, %v1372
      %v4818 = vadd.f32 %v4802, %v1373
      %v4819 = vadd.f32 %v4803, %v1374
      %v4820 = vadd.f32 %v4804, %v1375
      %v4821 = vadd.f32 %v4805, %v1376
      %v4822 = vadd.f32 %v4806, %v1377
      %v4823 = vadd.f32 %v4807, %v1378
      %v4824 = vadd.f32 %v4808, %v1379
      %v4825 = vadd.f32 %v4809, %v1380
      %v4826 = vadd.f32 %v4810, %v1381
      %v4827 = vadd.f32 %v4811, %v1382
      %v4828 = vadd.f32 %v4812, %v1383
      %v4829 = vadd.f32 %v4813, %v1384
      %v4830 = vadd.f32 %v4814, %v1385
      %v4831 = vadd.f32 %v4815, %v1386
      %v4832 = vadd.f32 %v4816, %v1387
      %4833 = vmax.xlane.f32.xlu0 %v4817
      %v4834 = vpop.xlane.xlu0 %4833
      %4835 = vmax.xlane.f32.xlu0 %v4818
      %v4836 = vpop.xlane.xlu0 %4835
      %4837 = vmax.xlane.f32.xlu0 %v4819
      %v4838 = vpop.xlane.xlu0 %4837
      %4839 = vmax.xlane.f32.xlu0 %v4820
      %v4840 = vpop.xlane.xlu0 %4839
      %4841 = vmax.xlane.f32.xlu0 %v4821
      %v4842 = vpop.xlane.xlu0 %4841
      %4843 = vmax.xlane.f32.xlu0 %v4822
      %v4844 = vpop.xlane.xlu0 %4843
      %4845 = vmax.xlane.f32.xlu0 %v4823
      %v4846 = vpop.xlane.xlu0 %4845
      %4847 = vmax.xlane.f32.xlu0 %v4824
      %v4848 = vpop.xlane.xlu0 %4847
      %4849 = vmax.xlane.f32.xlu0 %v4825
      %v4850 = vpop.xlane.xlu0 %4849
      %4851 = vmax.xlane.f32.xlu0 %v4826
      %v4852 = vpop.xlane.xlu0 %4851
      %4853 = vmax.xlane.f32.xlu0 %v4827
      %v4854 = vpop.xlane.xlu0 %4853
      %4855 = vmax.xlane.f32.xlu0 %v4828
      %v4856 = vpop.xlane.xlu0 %4855
      %4857 = vmax.xlane.f32.xlu0 %v4829
      %v4858 = vpop.xlane.xlu0 %4857
      %4859 = vmax.xlane.f32.xlu0 %v4830
      %v4860 = vpop.xlane.xlu0 %4859
      %4861 = vmax.xlane.f32.xlu0 %v4831
      %v4862 = vpop.xlane.xlu0 %4861
      %4863 = vmax.xlane.f32.xlu0 %v4832
      %v4864 = vpop.xlane.xlu0 %4863
      %v4865 = vsub.f32 %v4817, %v4834
      %v4866 = vsub.f32 %v4818, %v4836
      %v4867 = vsub.f32 %v4819, %v4838
      %v4868 = vsub.f32 %v4820, %v4840
      %v4869 = vsub.f32 %v4821, %v4842
      %v4870 = vsub.f32 %v4822, %v4844
      %v4871 = vsub.f32 %v4823, %v4846
      %v4872 = vsub.f32 %v4824, %v4848
      %v4873 = vsub.f32 %v4825, %v4850
      %v4874 = vsub.f32 %v4826, %v4852
      %v4875 = vsub.f32 %v4827, %v4854
      %v4876 = vsub.f32 %v4828, %v4856
      %v4877 = vsub.f32 %v4829, %v4858
      %v4878 = vsub.f32 %v4830, %v4860
      %v4879 = vsub.f32 %v4831, %v4862
      %v4880 = vsub.f32 %v4832, %v4864
      %v4881 = vmul.f32 %v4865, 1.442695
      %v4882 = vpow.pop %v4881
      %v4883 = vmul.f32 %v4866, 1.442695
      %v4884 = vpow.pop %v4883
      %v4885 = vmul.f32 %v4867, 1.442695
      %v4886 = vpow.pop %v4885
      %v4887 = vmul.f32 %v4868, 1.442695
      %v4888 = vpow.pop %v4887
      %v4889 = vmul.f32 %v4869, 1.442695
      %v4890 = vpow.pop %v4889
      %v4891 = vmul.f32 %v4870, 1.442695
      %v4892 = vpow.pop %v4891
      %v4893 = vmul.f32 %v4871, 1.442695
      %v4894 = vpow.pop %v4893
      %v4895 = vmul.f32 %v4872, 1.442695
      %v4896 = vpow.pop %v4895
      %v4897 = vmul.f32 %v4873, 1.442695
      %v4898 = vpow.pop %v4897
      %v4899 = vmul.f32 %v4874, 1.442695
      %v4900 = vpow.pop %v4899
      %v4901 = vmul.f32 %v4875, 1.442695
      %v4902 = vpow.pop %v4901
      %v4903 = vmul.f32 %v4876, 1.442695
      %v4904 = vpow.pop %v4903
      %v4905 = vmul.f32 %v4877, 1.442695
      %v4906 = vpow.pop %v4905
      %v4907 = vmul.f32 %v4878, 1.442695
      %v4908 = vpow.pop %v4907
      %v4909 = vmul.f32 %v4879, 1.442695
      %v4910 = vpow.pop %v4909
      %v4911 = vmul.f32 %v4880, 1.442695
      %v4912 = vpow.pop %v4911
      %4913 = vadd.xlane.f32.xlu0 %v4882
      %v4914 = vpop.xlane.xlu0 %4913
      %4915 = vadd.xlane.f32.xlu0 %v4884
      %v4916 = vpop.xlane.xlu0 %4915
      %4917 = vadd.xlane.f32.xlu0 %v4886
      %v4918 = vpop.xlane.xlu0 %4917
      %4919 = vadd.xlane.f32.xlu0 %v4888
      %v4920 = vpop.xlane.xlu0 %4919
      %4921 = vadd.xlane.f32.xlu0 %v4890
      %v4922 = vpop.xlane.xlu0 %4921
      %4923 = vadd.xlane.f32.xlu0 %v4892
      %v4924 = vpop.xlane.xlu0 %4923
      %4925 = vadd.xlane.f32.xlu0 %v4894
      %v4926 = vpop.xlane.xlu0 %4925
      %4927 = vadd.xlane.f32.xlu0 %v4896
      %v4928 = vpop.xlane.xlu0 %4927
      %4929 = vadd.xlane.f32.xlu0 %v4898
      %v4930 = vpop.xlane.xlu0 %4929
      %4931 = vadd.xlane.f32.xlu0 %v4900
      %v4932 = vpop.xlane.xlu0 %4931
      %4933 = vadd.xlane.f32.xlu0 %v4902
      %v4934 = vpop.xlane.xlu0 %4933
      %4935 = vadd.xlane.f32.xlu0 %v4904
      %v4936 = vpop.xlane.xlu0 %4935
      %4937 = vadd.xlane.f32.xlu0 %v4906
      %v4938 = vpop.xlane.xlu0 %4937
      %4939 = vadd.xlane.f32.xlu0 %v4908
      %v4940 = vpop.xlane.xlu0 %4939
      %4941 = vadd.xlane.f32.xlu0 %v4910
      %v4942 = vpop.xlane.xlu0 %4941
      %4943 = vadd.xlane.f32.xlu0 %v4912
      %v4944 = vpop.xlane.xlu0 %4943
      %v4945 = vrcp.pop %v4914
      %v4946 = vrcp.pop %v4916
      %v4947 = vrcp.pop %v4918
      %v4948 = vrcp.pop %v4920
      %v4949 = vrcp.pop %v4922
      %v4950 = vrcp.pop %v4924
      %v4951 = vrcp.pop %v4926
      %v4952 = vrcp.pop %v4928
      %v4953 = vrcp.pop %v4930
      %v4954 = vrcp.pop %v4932
      %v4955 = vrcp.pop %v4934
      %v4956 = vrcp.pop %v4936
      %v4957 = vrcp.pop %v4938
      %v4958 = vrcp.pop %v4940
      %v4959 = vrcp.pop %v4942
      %v4960 = vrcp.pop %v4944
      %v4961 = vmul.f32 %v4882, %v4945
      %v4962 = vmul.f32 %v4884, %v4946
      %v4963 = vmul.f32 %v4886, %v4947
      %v4964 = vmul.f32 %v4888, %v4948
      %v4965 = vmul.f32 %v4890, %v4949
      %v4966 = vmul.f32 %v4892, %v4950
      %v4967 = vmul.f32 %v4894, %v4951
      %v4968 = vmul.f32 %v4896, %v4952
      %v4969 = vmul.f32 %v4898, %v4953
      %v4970 = vmul.f32 %v4900, %v4954
      %v4971 = vmul.f32 %v4902, %v4955
      %v4972 = vmul.f32 %v4904, %v4956
      %v4973 = vmul.f32 %v4906, %v4957
      %v4974 = vmul.f32 %v4908, %v4958
      %v4975 = vmul.f32 %v4910, %v4959
      %v4976 = vmul.f32 %v4912, %v4960
      %v4977 = vpack.c.bf16 %v4962, %v4961
      %v4978 = vpack.c.bf16 %v4964, %v4963
      %v4979 = vpack.c.bf16 %v4966, %v4965
      %v4980 = vpack.c.bf16 %v4968, %v4967
      %v4981 = vpack.c.bf16 %v4970, %v4969
      %v4982 = vpack.c.bf16 %v4972, %v4971
      %v4983 = vpack.c.bf16 %v4974, %v4973
      %v4984 = vpack.c.bf16 %v4976, %v4975
      %v4985 = vpack.c.bf16 %v4581, %v4578
      %v4986 = vpack.c.bf16 %v4589, %v4586
      %v4987 = vpack.c.bf16 %v4597, %v4594
      %v4988 = vpack.c.bf16 %v4605, %v4602
      %v4989 = vpack.c.bf16 %v4613, %v4610
      %v4990 = vpack.c.bf16 %v4621, %v4618
      %v4991 = vpack.c.bf16 %v4629, %v4626
      %v4992 = vpack.c.bf16 %v4637, %v4634
      %4993 = vmatprep.subr.bf16.mxu0 0
      %4994 = vmatpush1.bf16.msra.mxu0 %v4992
      %4995 = vmatprep.subr.bf16.mxu0 0
      %4996 = vmatpush1.bf16.msra.mxu0 %v4991
      %4997 = vmatprep.subr.bf16.mxu0 0
      %4998 = vmatpush1.bf16.msra.mxu0 %v4990
      %4999 = vmatprep.subr.bf16.mxu0 0
      %5000 = vmatpush1.bf16.msra.mxu0 %v4989
      %5001 = vmatprep.subr.bf16.mxu0 0
      %5002 = vmatpush1.bf16.msra.mxu0 %v4988
      %5003 = vmatprep.subr.bf16.mxu0 0
      %5004 = vmatpush1.bf16.msra.mxu0 %v4987
      %5005 = vmatprep.subr.bf16.mxu0 0
      %5006 = vmatpush1.bf16.msra.mxu0 %v4986
      %5007 = vmatprep.subr.bf16.mxu0 0
      %5008 = vmatpush1.bf16.msra.mxu0 %v4985
      %5009 = vmatprep.subr.bf16.mxu0 0
      %5010 = vmatpush2.bf16.msra.mxu0 0
      %5011 = vmatprep.subr.bf16.mxu0 0
      %5012 = vmatpush2.bf16.msra.mxu0 0
      %5013 = vmatprep.subr.bf16.mxu0 0
      %5014 = vmatpush2.bf16.msra.mxu0 0
      %5015 = vmatprep.subr.bf16.mxu0 0
      %5016 = vmatpush2.bf16.msra.mxu0 0
      %5017 = vmatprep.subr.bf16.mxu0 0
      %5018 = vmatpush2.bf16.msra.mxu0 0
      %5019 = vmatprep.subr.bf16.mxu0 0
      %5020 = vmatpush2.bf16.msra.mxu0 0
      %5021 = vmatprep.subr.bf16.mxu0 0
      %5022 = vmatpush2.bf16.msra.mxu0 0
      %5023 = vmatprep.subr.bf16.mxu0 0
      %5024 = vmatpush2.bf16.msra.mxu0 0
      %5025 = vmatprep.mubr.bf16.mxu0 0
      %5026 = vmatmul.mubr.bf16.gmra.mxu0 %v4977
      %v5027 = vpop.f32.mrf.mxu0
      %v5028 = vadd.f32 0.0, %v5027
      %v5029 = vpop.f32.mrf.mxu0
      %v5030 = vpop.f32.mrf.mxu0
      %v5031 = vadd.f32 0.0, %v5030
      %v5032 = vpop.f32.mrf.mxu0
      %5033 = vmatprep.mubr.bf16.mxu0 0
      %5034 = vmatmul.mubr.bf16.gmra.mxu0 %v4978
      %v5035 = vpop.f32.mrf.mxu0
      %v5036 = vadd.f32 0.0, %v5035
      %v5037 = vpop.f32.mrf.mxu0
      %v5038 = vpop.f32.mrf.mxu0
      %v5039 = vadd.f32 0.0, %v5038
      %v5040 = vpop.f32.mrf.mxu0
      %5041 = vmatprep.mubr.bf16.mxu0 0
      %5042 = vmatmul.mubr.bf16.gmra.mxu0 %v4979
      %v5043 = vpop.f32.mrf.mxu0
      %v5044 = vadd.f32 0.0, %v5043
      %v5045 = vpop.f32.mrf.mxu0
      %v5046 = vpop.f32.mrf.mxu0
      %v5047 = vadd.f32 0.0, %v5046
      %v5048 = vpop.f32.mrf.mxu0
      %5049 = vmatprep.mubr.bf16.mxu0 0
      %5050 = vmatmul.mubr.bf16.gmra.mxu0 %v4980
      %v5051 = vpop.f32.mrf.mxu0
      %v5052 = vadd.f32 0.0, %v5051
      %v5053 = vpop.f32.mrf.mxu0
      %v5054 = vpop.f32.mrf.mxu0
      %v5055 = vadd.f32 0.0, %v5054
      %v5056 = vpop.f32.mrf.mxu0
      %5057 = vmatprep.mubr.bf16.mxu0 0
      %5058 = vmatmul.mubr.bf16.gmra.mxu0 %v4981
      %v5059 = vpop.f32.mrf.mxu0
      %v5060 = vadd.f32 0.0, %v5059
      %v5061 = vpop.f32.mrf.mxu0
      %v5062 = vpop.f32.mrf.mxu0
      %v5063 = vadd.f32 0.0, %v5062
      %v5064 = vpop.f32.mrf.mxu0
      %5065 = vmatprep.mubr.bf16.mxu0 0
      %5066 = vmatmul.mubr.bf16.gmra.mxu0 %v4982
      %v5067 = vpop.f32.mrf.mxu0
      %v5068 = vadd.f32 0.0, %v5067
      %v5069 = vpop.f32.mrf.mxu0
      %v5070 = vpop.f32.mrf.mxu0
      %v5071 = vadd.f32 0.0, %v5070
      %v5072 = vpop.f32.mrf.mxu0
      %5073 = vmatprep.mubr.bf16.mxu0 0
      %5074 = vmatmul.mubr.bf16.gmra.mxu0 %v4983
      %v5075 = vpop.f32.mrf.mxu0
      %v5076 = vadd.f32 0.0, %v5075
      %v5077 = vpop.f32.mrf.mxu0
      %v5078 = vpop.f32.mrf.mxu0
      %v5079 = vadd.f32 0.0, %v5078
      %v5080 = vpop.f32.mrf.mxu0
      %5081 = vmatprep.mubr.bf16.mxu0 0
      %5082 = vmatmul.mubr.bf16.gmra.mxu0 %v4984
      %v5083 = vpop.f32.mrf.mxu0
      %v5084 = vadd.f32 0.0, %v5083
      %v5085 = vpop.f32.mrf.mxu0
      %v5086 = vpop.f32.mrf.mxu0
      %v5087 = vadd.f32 0.0, %v5086
      %v5088 = vpop.f32.mrf.mxu0
      %5089 = vdwg.mxu0
      %v5090 = vpack.c.bf16 %v5031, %v5028
      %v5091 = vpack.c.bf16 %v5039, %v5036
      %v5092 = vpack.c.bf16 %v5047, %v5044
      %v5093 = vpack.c.bf16 %v5055, %v5052
      %v5094 = vpack.c.bf16 %v5063, %v5060
      %v5095 = vpack.c.bf16 %v5071, %v5068
      %v5096 = vpack.c.bf16 %v5079, %v5076
      %v5097 = vpack.c.bf16 %v5087, %v5084
      %s5098 = scalar_lea.vmem %s861, 12
      %v5099 = vld [vmem:[%s5098] sm:$0xf]
      %v5101 = vsel %vm1789, %v5090, 0
      %v5104 = vsel %vm1789, %v5091, 0
      %v5107 = vsel %vm1789, %v5092, 0
      %v5110 = vsel %vm1789, %v5093, 0
      %v5113 = vsel %vm1789, %v5094, 0
      %v5116 = vsel %vm1789, %v5095, 0
      %v5119 = vsel %vm1789, %v5096, 0
      %v5122 = vsel %vm1789, %v5097, 0
      %v5125 = vsel %vm3083, %v5099, 0
      %5127 = vmatprep.subr.bf16.mxu0 0
      %5128 = vmatpush1.bf16.msra.mxu0 0
      %5129 = vmatprep.subr.bf16.mxu0 0
      %5130 = vmatpush1.bf16.msra.mxu0 0
      %5131 = vmatprep.subr.bf16.mxu0 0
      %5132 = vmatpush1.bf16.msra.mxu0 0
      %5133 = vmatprep.subr.bf16.mxu0 0
      %5134 = vmatpush1.bf16.msra.mxu0 0
      %5135 = vmatprep.subr.bf16.mxu0 0
      %5136 = vmatpush1.bf16.msra.mxu0 0
      %5137 = vmatprep.subr.bf16.mxu0 0
      %5138 = vmatpush1.bf16.msra.mxu0 0
      %5139 = vmatprep.subr.bf16.mxu0 0
      %5140 = vmatpush1.bf16.msra.mxu0 0
      %5141 = vmatprep.subr.bf16.mxu0 0
      %5142 = vmatpush1.bf16.msra.mxu0 %v5125
      %5143 = vmatprep.subr.bf16.mxu0 0
      %5144 = vmatpush2.bf16.msra.mxu0 0
      %5145 = vmatprep.subr.bf16.mxu0 0
      %5146 = vmatpush2.bf16.msra.mxu0 0
      %5147 = vmatprep.subr.bf16.mxu0 0
      %5148 = vmatpush2.bf16.msra.mxu0 0
      %5149 = vmatprep.subr.bf16.mxu0 0
      %5150 = vmatpush2.bf16.msra.mxu0 0
      %5151 = vmatprep.subr.bf16.mxu0 0
      %5152 = vmatpush2.bf16.msra.mxu0 0
      %5153 = vmatprep.subr.bf16.mxu0 0
      %5154 = vmatpush2.bf16.msra.mxu0 0
      %5155 = vmatprep.subr.bf16.mxu0 0
      %5156 = vmatpush2.bf16.msra.mxu0 0
      %5157 = vmatprep.subr.bf16.mxu0 0
      %5158 = vmatpush2.bf16.msra.mxu0 0
      %5159 = vmatprep.mubr.bf16.mxu0 0
      %5160 = vmatmul.mubr.bf16.gmra.mxu0 %v5101
      %v5161 = vpop.f32.mrf.mxu0
      %v5162 = vadd.f32 0.0, %v5161
      %v5163 = vpop.f32.mrf.mxu0
      %v5164 = vpop.f32.mrf.mxu0
      %v5165 = vadd.f32 0.0, %v5164
      %v5166 = vpop.f32.mrf.mxu0
      %5167 = vmatprep.mubr.bf16.mxu0 0
      %5168 = vmatmul.mubr.bf16.gmra.mxu0 %v5104
      %v5169 = vpop.f32.mrf.mxu0
      %v5170 = vadd.f32 0.0, %v5169
      %v5171 = vpop.f32.mrf.mxu0
      %v5172 = vpop.f32.mrf.mxu0
      %v5173 = vadd.f32 0.0, %v5172
      %v5174 = vpop.f32.mrf.mxu0
      %5175 = vmatprep.mubr.bf16.mxu0 0
      %5176 = vmatmul.mubr.bf16.gmra.mxu0 %v5107
      %v5177 = vpop.f32.mrf.mxu0
      %v5178 = vadd.f32 0.0, %v5177
      %v5179 = vpop.f32.mrf.mxu0
      %v5180 = vpop.f32.mrf.mxu0
      %v5181 = vadd.f32 0.0, %v5180
      %v5182 = vpop.f32.mrf.mxu0
      %5183 = vmatprep.mubr.bf16.mxu0 0
      %5184 = vmatmul.mubr.bf16.gmra.mxu0 %v5110
      %v5185 = vpop.f32.mrf.mxu0
      %v5186 = vadd.f32 0.0, %v5185
      %v5187 = vpop.f32.mrf.mxu0
      %v5188 = vpop.f32.mrf.mxu0
      %v5189 = vadd.f32 0.0, %v5188
      %v5190 = vpop.f32.mrf.mxu0
      %5191 = vmatprep.mubr.bf16.mxu0 0
      %5192 = vmatmul.mubr.bf16.gmra.mxu0 %v5113
      %v5193 = vpop.f32.mrf.mxu0
      %v5194 = vadd.f32 0.0, %v5193
      %v5195 = vpop.f32.mrf.mxu0
      %v5196 = vpop.f32.mrf.mxu0
      %v5197 = vadd.f32 0.0, %v5196
      %v5198 = vpop.f32.mrf.mxu0
      %5199 = vmatprep.mubr.bf16.mxu0 0
      %5200 = vmatmul.mubr.bf16.gmra.mxu0 %v5116
      %v5201 = vpop.f32.mrf.mxu0
      %v5202 = vadd.f32 0.0, %v5201
      %v5203 = vpop.f32.mrf.mxu0
      %v5204 = vpop.f32.mrf.mxu0
      %v5205 = vadd.f32 0.0, %v5204
      %v5206 = vpop.f32.mrf.mxu0
      %5207 = vmatprep.mubr.bf16.mxu0 0
      %5208 = vmatmul.mubr.bf16.gmra.mxu0 %v5119
      %v5209 = vpop.f32.mrf.mxu0
      %v5210 = vadd.f32 0.0, %v5209
      %v5211 = vpop.f32.mrf.mxu0
      %v5212 = vpop.f32.mrf.mxu0
      %v5213 = vadd.f32 0.0, %v5212
      %v5214 = vpop.f32.mrf.mxu0
      %5215 = vmatprep.mubr.bf16.mxu0 0
      %5216 = vmatmul.mubr.bf16.gmra.mxu0 %v5122
      %v5217 = vpop.f32.mrf.mxu0
      %v5218 = vadd.f32 0.0, %v5217
      %v5219 = vpop.f32.mrf.mxu0
      %v5220 = vpop.f32.mrf.mxu0
      %v5221 = vadd.f32 0.0, %v5220
      %v5222 = vpop.f32.mrf.mxu0
      %5223 = vdwg.mxu0
      %v5224 = vadd.f32 %v4258, %v5162
      %v5225 = vadd.f32 %v4259, %v5165
      %v5226 = vadd.f32 %v4260, %v5170
      %v5227 = vadd.f32 %v4261, %v5173
      %v5228 = vadd.f32 %v4262, %v5178
      %v5229 = vadd.f32 %v4263, %v5181
      %v5230 = vadd.f32 %v4264, %v5186
      %v5231 = vadd.f32 %v4265, %v5189
      %v5232 = vadd.f32 %v4266, %v5194
      %v5233 = vadd.f32 %v4267, %v5197
      %v5234 = vadd.f32 %v4268, %v5202
      %v5235 = vadd.f32 %v4269, %v5205
      %v5236 = vadd.f32 %v4270, %v5210
      %v5237 = vadd.f32 %v4271, %v5213
      %v5238 = vadd.f32 %v4272, %v5218
      %v5239 = vadd.f32 %v4273, %v5221
      %v5240 = vld [vmem:[%s864] sm:$0x1]
      %v5242 = vlaneseq
      %v5243 = vshrl.u32 %v5242, 7
      %v5244 = vsub.s32 0, %v5243
      %v5245 = vrot.slane %v5240, %v5244
      %v5247 = vadd.f32 %v5224, %v5245
      %v5248 = vadd.f32 %v5225, %v5245
      %v5249 = vadd.f32 %v5226, %v5245
      %v5250 = vadd.f32 %v5227, %v5245
      %v5251 = vadd.f32 %v5228, %v5245
      %v5252 = vadd.f32 %v5229, %v5245
      %v5253 = vadd.f32 %v5230, %v5245
      %v5254 = vadd.f32 %v5231, %v5245
      %v5255 = vadd.f32 %v5232, %v5245
      %v5256 = vadd.f32 %v5233, %v5245
      %v5257 = vadd.f32 %v5234, %v5245
      %v5258 = vadd.f32 %v5235, %v5245
      %v5259 = vadd.f32 %v5236, %v5245
      %v5260 = vadd.f32 %v5237, %v5245
      %v5261 = vadd.f32 %v5238, %v5245
      %v5262 = vadd.f32 %v5239, %v5245
      %v5263 = vadd.f32 %v1109, %v5247
      %v5264 = vadd.f32 %v1110, %v5248
      %v5265 = vadd.f32 %v1111, %v5249
      %v5266 = vadd.f32 %v1112, %v5250
      %v5267 = vadd.f32 %v1113, %v5251
      %v5268 = vadd.f32 %v1114, %v5252
      %v5269 = vadd.f32 %v1115, %v5253
      %v5270 = vadd.f32 %v1116, %v5254
      %v5271 = vadd.f32 %v1117, %v5255
      %v5272 = vadd.f32 %v1118, %v5256
      %v5273 = vadd.f32 %v1119, %v5257
      %v5274 = vadd.f32 %v1120, %v5258
      %v5275 = vadd.f32 %v1121, %v5259
      %v5276 = vadd.f32 %v1122, %v5260
      %v5277 = vadd.f32 %v1123, %v5261
      %v5278 = vadd.f32 %v1124, %v5262
      %v5279 = vld [vmem:[%s867] sm:$0x1]
      %v5280 = vld [vmem:[%s870] sm:$0x1]
      %v5281 = vsel %vm1411, %v5263, 0.0
      %5282 = vadd.xlane.f32.xlu0 %v5281
      %v5283 = vpop.xlane.xlu0 %5282
      %v5284 = vsel %vm1411, %v5264, 0.0
      %5285 = vadd.xlane.f32.xlu0 %v5284
      %v5286 = vpop.xlane.xlu0 %5285
      %v5287 = vsel %vm1411, %v5265, 0.0
      %5288 = vadd.xlane.f32.xlu0 %v5287
      %v5289 = vpop.xlane.xlu0 %5288
      %v5290 = vsel %vm1411, %v5266, 0.0
      %5291 = vadd.xlane.f32.xlu0 %v5290
      %v5292 = vpop.xlane.xlu0 %5291
      %v5293 = vsel %vm1411, %v5267, 0.0
      %5294 = vadd.xlane.f32.xlu0 %v5293
      %v5295 = vpop.xlane.xlu0 %5294
      %v5296 = vsel %vm1411, %v5268, 0.0
      %5297 = vadd.xlane.f32.xlu0 %v5296
      %v5298 = vpop.xlane.xlu0 %5297
      %v5299 = vsel %vm1411, %v5269, 0.0
      %5300 = vadd.xlane.f32.xlu0 %v5299
      %v5301 = vpop.xlane.xlu0 %5300
      %v5302 = vsel %vm1411, %v5270, 0.0
      %5303 = vadd.xlane.f32.xlu0 %v5302
      %v5304 = vpop.xlane.xlu0 %5303
      %v5305 = vsel %vm1411, %v5271, 0.0
      %5306 = vadd.xlane.f32.xlu0 %v5305
      %v5307 = vpop.xlane.xlu0 %5306
      %v5308 = vsel %vm1411, %v5272, 0.0
      %5309 = vadd.xlane.f32.xlu0 %v5308
      %v5310 = vpop.xlane.xlu0 %5309
      %v5311 = vsel %vm1411, %v5273, 0.0
      %5312 = vadd.xlane.f32.xlu0 %v5311
      %v5313 = vpop.xlane.xlu0 %5312
      %v5314 = vsel %vm1411, %v5274, 0.0
      %5315 = vadd.xlane.f32.xlu0 %v5314
      %v5316 = vpop.xlane.xlu0 %5315
      %v5317 = vsel %vm1411, %v5275, 0.0
      %5318 = vadd.xlane.f32.xlu0 %v5317
      %v5319 = vpop.xlane.xlu0 %5318
      %v5320 = vsel %vm1411, %v5276, 0.0
      %5321 = vadd.xlane.f32.xlu0 %v5320
      %v5322 = vpop.xlane.xlu0 %5321
      %v5323 = vsel %vm1411, %v5277, 0.0
      %5324 = vadd.xlane.f32.xlu0 %v5323
      %v5325 = vpop.xlane.xlu0 %5324
      %v5326 = vsel %vm1411, %v5278, 0.0
      %5327 = vadd.xlane.f32.xlu0 %v5326
      %v5328 = vpop.xlane.xlu0 %5327
      %v5329 = vrcp.pop 32.0
      %v5330 = vmul.f32 %v5283, %v5329
      %v5331 = vmul.f32 %v5286, %v5329
      %v5332 = vmul.f32 %v5289, %v5329
      %v5333 = vmul.f32 %v5292, %v5329
      %v5334 = vmul.f32 %v5295, %v5329
      %v5335 = vmul.f32 %v5298, %v5329
      %v5336 = vmul.f32 %v5301, %v5329
      %v5337 = vmul.f32 %v5304, %v5329
      %v5338 = vmul.f32 %v5307, %v5329
      %v5339 = vmul.f32 %v5310, %v5329
      %v5340 = vmul.f32 %v5313, %v5329
      %v5341 = vmul.f32 %v5316, %v5329
      %v5342 = vmul.f32 %v5319, %v5329
      %v5343 = vmul.f32 %v5322, %v5329
      %v5344 = vmul.f32 %v5325, %v5329
      %v5345 = vmul.f32 %v5328, %v5329
      %v5346 = vsub.f32 %v5263, %v5330
      %v5347 = vsub.f32 %v5264, %v5331
      %v5348 = vsub.f32 %v5265, %v5332
      %v5349 = vsub.f32 %v5266, %v5333
      %v5350 = vsub.f32 %v5267, %v5334
      %v5351 = vsub.f32 %v5268, %v5335
      %v5352 = vsub.f32 %v5269, %v5336
      %v5353 = vsub.f32 %v5270, %v5337
      %v5354 = vsub.f32 %v5271, %v5338
      %v5355 = vsub.f32 %v5272, %v5339
      %v5356 = vsub.f32 %v5273, %v5340
      %v5357 = vsub.f32 %v5274, %v5341
      %v5358 = vsub.f32 %v5275, %v5342
      %v5359 = vsub.f32 %v5276, %v5343
      %v5360 = vsub.f32 %v5277, %v5344
      %v5361 = vsub.f32 %v5278, %v5345
      %v5362 = vmul.f32 %v5346, %v5346
      %v5363 = vmul.f32 %v5347, %v5347
      %v5364 = vmul.f32 %v5348, %v5348
      %v5365 = vmul.f32 %v5349, %v5349
      %v5366 = vmul.f32 %v5350, %v5350
      %v5367 = vmul.f32 %v5351, %v5351
      %v5368 = vmul.f32 %v5352, %v5352
      %v5369 = vmul.f32 %v5353, %v5353
      %v5370 = vmul.f32 %v5354, %v5354
      %v5371 = vmul.f32 %v5355, %v5355
      %v5372 = vmul.f32 %v5356, %v5356
      %v5373 = vmul.f32 %v5357, %v5357
      %v5374 = vmul.f32 %v5358, %v5358
      %v5375 = vmul.f32 %v5359, %v5359
      %v5376 = vmul.f32 %v5360, %v5360
      %v5377 = vmul.f32 %v5361, %v5361
      %v5378 = vsel %vm1411, %v5362, 0.0
      %5379 = vadd.xlane.f32.xlu0 %v5378
      %v5380 = vpop.xlane.xlu0 %5379
      %v5381 = vsel %vm1411, %v5363, 0.0
      %5382 = vadd.xlane.f32.xlu0 %v5381
      %v5383 = vpop.xlane.xlu0 %5382
      %v5384 = vsel %vm1411, %v5364, 0.0
      %5385 = vadd.xlane.f32.xlu0 %v5384
      %v5386 = vpop.xlane.xlu0 %5385
      %v5387 = vsel %vm1411, %v5365, 0.0
      %5388 = vadd.xlane.f32.xlu0 %v5387
      %v5389 = vpop.xlane.xlu0 %5388
      %v5390 = vsel %vm1411, %v5366, 0.0
      %5391 = vadd.xlane.f32.xlu0 %v5390
      %v5392 = vpop.xlane.xlu0 %5391
      %v5393 = vsel %vm1411, %v5367, 0.0
      %5394 = vadd.xlane.f32.xlu0 %v5393
      %v5395 = vpop.xlane.xlu0 %5394
      %v5396 = vsel %vm1411, %v5368, 0.0
      %5397 = vadd.xlane.f32.xlu0 %v5396
      %v5398 = vpop.xlane.xlu0 %5397
      %v5399 = vsel %vm1411, %v5369, 0.0
      %5400 = vadd.xlane.f32.xlu0 %v5399
      %v5401 = vpop.xlane.xlu0 %5400
      %v5402 = vsel %vm1411, %v5370, 0.0
      %5403 = vadd.xlane.f32.xlu0 %v5402
      %v5404 = vpop.xlane.xlu0 %5403
      %v5405 = vsel %vm1411, %v5371, 0.0
      %5406 = vadd.xlane.f32.xlu0 %v5405
      %v5407 = vpop.xlane.xlu0 %5406
      %v5408 = vsel %vm1411, %v5372, 0.0
      %5409 = vadd.xlane.f32.xlu0 %v5408
      %v5410 = vpop.xlane.xlu0 %5409
      %v5411 = vsel %vm1411, %v5373, 0.0
      %5412 = vadd.xlane.f32.xlu0 %v5411
      %v5413 = vpop.xlane.xlu0 %5412
      %v5414 = vsel %vm1411, %v5374, 0.0
      %5415 = vadd.xlane.f32.xlu0 %v5414
      %v5416 = vpop.xlane.xlu0 %5415
      %v5417 = vsel %vm1411, %v5375, 0.0
      %5418 = vadd.xlane.f32.xlu0 %v5417
      %v5419 = vpop.xlane.xlu0 %5418
      %v5420 = vsel %vm1411, %v5376, 0.0
      %5421 = vadd.xlane.f32.xlu0 %v5420
      %v5422 = vpop.xlane.xlu0 %5421
      %v5423 = vsel %vm1411, %v5377, 0.0
      %5424 = vadd.xlane.f32.xlu0 %v5423
      %v5425 = vpop.xlane.xlu0 %5424
      %v5426 = vmul.f32 %v5380, %v5329
      %v5427 = vmul.f32 %v5383, %v5329
      %v5428 = vmul.f32 %v5386, %v5329
      %v5429 = vmul.f32 %v5389, %v5329
      %v5430 = vmul.f32 %v5392, %v5329
      %v5431 = vmul.f32 %v5395, %v5329
      %v5432 = vmul.f32 %v5398, %v5329
      %v5433 = vmul.f32 %v5401, %v5329
      %v5434 = vmul.f32 %v5404, %v5329
      %v5435 = vmul.f32 %v5407, %v5329
      %v5436 = vmul.f32 %v5410, %v5329
      %v5437 = vmul.f32 %v5413, %v5329
      %v5438 = vmul.f32 %v5416, %v5329
      %v5439 = vmul.f32 %v5419, %v5329
      %v5440 = vmul.f32 %v5422, %v5329
      %v5441 = vmul.f32 %v5425, %v5329
      %v5442 = vadd.f32 %v5426, 1e-05
      %v5443 = vadd.f32 %v5427, 1e-05
      %v5444 = vadd.f32 %v5428, 1e-05
      %v5445 = vadd.f32 %v5429, 1e-05
      %v5446 = vadd.f32 %v5430, 1e-05
      %v5447 = vadd.f32 %v5431, 1e-05
      %v5448 = vadd.f32 %v5432, 1e-05
      %v5449 = vadd.f32 %v5433, 1e-05
      %v5450 = vadd.f32 %v5434, 1e-05
      %v5451 = vadd.f32 %v5435, 1e-05
      %v5452 = vadd.f32 %v5436, 1e-05
      %v5453 = vadd.f32 %v5437, 1e-05
      %v5454 = vadd.f32 %v5438, 1e-05
      %v5455 = vadd.f32 %v5439, 1e-05
      %v5456 = vadd.f32 %v5440, 1e-05
      %v5457 = vadd.f32 %v5441, 1e-05
      %v5458 = vrsqrt.pop %v5442
      %v5459 = vrsqrt.pop %v5443
      %v5460 = vrsqrt.pop %v5444
      %v5461 = vrsqrt.pop %v5445
      %v5462 = vrsqrt.pop %v5446
      %v5463 = vrsqrt.pop %v5447
      %v5464 = vrsqrt.pop %v5448
      %v5465 = vrsqrt.pop %v5449
      %v5466 = vrsqrt.pop %v5450
      %v5467 = vrsqrt.pop %v5451
      %v5468 = vrsqrt.pop %v5452
      %v5469 = vrsqrt.pop %v5453
      %v5470 = vrsqrt.pop %v5454
      %v5471 = vrsqrt.pop %v5455
      %v5472 = vrsqrt.pop %v5456
      %v5473 = vrsqrt.pop %v5457
      %v5474 = vmul.f32 %v5346, %v5458
      %v5475 = vmul.f32 %v5347, %v5459
      %v5476 = vmul.f32 %v5348, %v5460
      %v5477 = vmul.f32 %v5349, %v5461
      %v5478 = vmul.f32 %v5350, %v5462
      %v5479 = vmul.f32 %v5351, %v5463
      %v5480 = vmul.f32 %v5352, %v5464
      %v5481 = vmul.f32 %v5353, %v5465
      %v5482 = vmul.f32 %v5354, %v5466
      %v5483 = vmul.f32 %v5355, %v5467
      %v5484 = vmul.f32 %v5356, %v5468
      %v5485 = vmul.f32 %v5357, %v5469
      %v5486 = vmul.f32 %v5358, %v5470
      %v5487 = vmul.f32 %v5359, %v5471
      %v5488 = vmul.f32 %v5360, %v5472
      %v5489 = vmul.f32 %v5361, %v5473
      %v5491 = vlaneseq
      %v5492 = vshrl.u32 %v5491, 7
      %v5493 = vsub.s32 0, %v5492
      %v5494 = vrot.slane %v5279, %v5493
      %v5496 = vmul.f32 %v5474, %v5494
      %v5497 = vmul.f32 %v5475, %v5494
      %v5498 = vmul.f32 %v5476, %v5494
      %v5499 = vmul.f32 %v5477, %v5494
      %v5500 = vmul.f32 %v5478, %v5494
      %v5501 = vmul.f32 %v5479, %v5494
      %v5502 = vmul.f32 %v5480, %v5494
      %v5503 = vmul.f32 %v5481, %v5494
      %v5504 = vmul.f32 %v5482, %v5494
      %v5505 = vmul.f32 %v5483, %v5494
      %v5506 = vmul.f32 %v5484, %v5494
      %v5507 = vmul.f32 %v5485, %v5494
      %v5508 = vmul.f32 %v5486, %v5494
      %v5509 = vmul.f32 %v5487, %v5494
      %v5510 = vmul.f32 %v5488, %v5494
      %v5511 = vmul.f32 %v5489, %v5494
      %v5513 = vlaneseq
      %v5514 = vshrl.u32 %v5513, 7
      %v5515 = vsub.s32 0, %v5514
      %v5516 = vrot.slane %v5280, %v5515
      %v5518 = vadd.f32 %v5496, %v5516
      %v5519 = vadd.f32 %v5497, %v5516
      %v5520 = vadd.f32 %v5498, %v5516
      %v5521 = vadd.f32 %v5499, %v5516
      %v5522 = vadd.f32 %v5500, %v5516
      %v5523 = vadd.f32 %v5501, %v5516
      %v5524 = vadd.f32 %v5502, %v5516
      %v5525 = vadd.f32 %v5503, %v5516
      %v5526 = vadd.f32 %v5504, %v5516
      %v5527 = vadd.f32 %v5505, %v5516
      %v5528 = vadd.f32 %v5506, %v5516
      %v5529 = vadd.f32 %v5507, %v5516
      %v5530 = vadd.f32 %v5508, %v5516
      %v5531 = vadd.f32 %v5509, %v5516
      %v5532 = vadd.f32 %v5510, %v5516
      %v5533 = vadd.f32 %v5511, %v5516
      %5534 = vst.msk [vmem:[#allocation2] sm:$0xff] %vm1411, %v5518
      %5535 = vst.msk [vmem:[#allocation2 + $0x8] sm:$0xff] %vm1411, %v5519
      %5536 = vst.msk [vmem:[#allocation2 + $0x10] sm:$0xff] %vm1411, %v5520
      %5537 = vst.msk [vmem:[#allocation2 + $0x18] sm:$0xff] %vm1411, %v5521
      %5538 = vst.msk [vmem:[#allocation2 + $0x20] sm:$0xff] %vm1411, %v5522
      %5539 = vst.msk [vmem:[#allocation2 + $0x28] sm:$0xff] %vm1411, %v5523
      %5540 = vst.msk [vmem:[#allocation2 + $0x30] sm:$0xff] %vm1411, %v5524
      %5541 = vst.msk [vmem:[#allocation2 + $0x38] sm:$0xff] %vm1411, %v5525
      %5542 = vst.msk [vmem:[#allocation2 + $0x40] sm:$0xff] %vm1411, %v5526
      %5543 = vst.msk [vmem:[#allocation2 + $0x48] sm:$0xff] %vm1411, %v5527
      %5544 = vst.msk [vmem:[#allocation2 + $0x50] sm:$0xff] %vm1411, %v5528
      %5545 = vst.msk [vmem:[#allocation2 + $0x58] sm:$0xff] %vm1411, %v5529
      %5546 = vst.msk [vmem:[#allocation2 + $0x60] sm:$0xff] %vm1411, %v5530
      %5547 = vst.msk [vmem:[#allocation2 + $0x68] sm:$0xff] %vm1411, %v5531
      %5548 = vst.msk [vmem:[#allocation2 + $0x70] sm:$0xff] %vm1411, %v5532
      %5549 = vst.msk [vmem:[#allocation2 + $0x78] sm:$0xff] %vm1411, %v5533
      %v5550 = vld [vmem:[#allocation2] sm:$0xff]
      %v5551 = vld [vmem:[#allocation2 + $0x8] sm:$0xff]
      %v5552 = vld [vmem:[#allocation2 + $0x10] sm:$0xff]
      %v5553 = vld [vmem:[#allocation2 + $0x18] sm:$0xff]
      %v5554 = vld [vmem:[#allocation2 + $0x20] sm:$0xff]
      %v5555 = vld [vmem:[#allocation2 + $0x28] sm:$0xff]
      %v5556 = vld [vmem:[#allocation2 + $0x30] sm:$0xff]
      %v5557 = vld [vmem:[#allocation2 + $0x38] sm:$0xff]
      %v5558 = vld [vmem:[#allocation2 + $0x40] sm:$0xff]
      %v5559 = vld [vmem:[#allocation2 + $0x48] sm:$0xff]
      %v5560 = vld [vmem:[#allocation2 + $0x50] sm:$0xff]
      %v5561 = vld [vmem:[#allocation2 + $0x58] sm:$0xff]
      %v5562 = vld [vmem:[#allocation2 + $0x60] sm:$0xff]
      %v5563 = vld [vmem:[#allocation2 + $0x68] sm:$0xff]
      %v5564 = vld [vmem:[#allocation2 + $0x70] sm:$0xff]
      %v5565 = vld [vmem:[#allocation2 + $0x78] sm:$0xff]
      %v5566 = vpack.c.bf16 %v5551, %v5550
      %v5567 = vpack.c.bf16 %v5553, %v5552
      %v5568 = vpack.c.bf16 %v5555, %v5554
      %v5569 = vpack.c.bf16 %v5557, %v5556
      %v5570 = vpack.c.bf16 %v5559, %v5558
      %v5571 = vpack.c.bf16 %v5561, %v5560
      %v5572 = vpack.c.bf16 %v5563, %v5562
      %v5573 = vpack.c.bf16 %v5565, %v5564
      %v5574 = vld [vmem:[%s875] sm:$0xff]
      %v5575 = vld [vmem:[%s875 + $0x8] sm:$0xff]
      %v5576 = vld [vmem:[%s875 + $0x10] sm:$0xff]
      %v5577 = vld [vmem:[%s875 + $0x18] sm:$0xff]
      %v5578 = vld [vmem:[%s875 + $0x20] sm:$0xff]
      %v5579 = vld [vmem:[%s875 + $0x28] sm:$0xff]
      %v5580 = vld [vmem:[%s875 + $0x30] sm:$0xff]
      %v5581 = vld [vmem:[%s875 + $0x38] sm:$0xff]
      %v5582 = vld [vmem:[%s875 + $0x40] sm:$0xff]
      %v5583 = vld [vmem:[%s875 + $0x48] sm:$0xff]
      %v5584 = vld [vmem:[%s875 + $0x50] sm:$0xff]
      %v5585 = vld [vmem:[%s875 + $0x58] sm:$0xff]
      %v5586 = vld [vmem:[%s875 + $0x60] sm:$0xff]
      %v5587 = vld [vmem:[%s875 + $0x68] sm:$0xff]
      %v5588 = vld [vmem:[%s875 + $0x70] sm:$0xff]
      %v5589 = vld [vmem:[%s875 + $0x78] sm:$0xff]
      %v5590 = vld [vmem:[%s875 + $0x80] sm:$0xff]
      %v5591 = vld [vmem:[%s875 + $0x88] sm:$0xff]
      %v5592 = vld [vmem:[%s875 + $0x90] sm:$0xff]
      %v5593 = vld [vmem:[%s875 + $0x98] sm:$0xff]
      %v5594 = vld [vmem:[%s875 + $0xa0] sm:$0xff]
      %v5595 = vld [vmem:[%s875 + $0xa8] sm:$0xff]
      %v5596 = vld [vmem:[%s875 + $0xb0] sm:$0xff]
      %v5597 = vld [vmem:[%s875 + $0xb8] sm:$0xff]
      %v5598 = vld [vmem:[%s875 + $0xc0] sm:$0xff]
      %v5599 = vld [vmem:[%s875 + $0xc8] sm:$0xff]
      %v5600 = vld [vmem:[%s875 + $0xd0] sm:$0xff]
      %v5601 = vld [vmem:[%s875 + $0xd8] sm:$0xff]
      %v5602 = vld [vmem:[%s875 + $0xe0] sm:$0xff]
      %v5603 = vld [vmem:[%s875 + $0xe8] sm:$0xff]
      %v5604 = vld [vmem:[%s875 + $0xf0] sm:$0xff]
      %v5605 = vld [vmem:[%s875 + $0xf8] sm:$0xff]
      %v5606 = vld [vmem:[%s879] sm:$0xff]
      %v5607 = vld [vmem:[%s879 + $0x8] sm:$0xff]
      %v5610 = vlaneseq
      %v5611 = vshrl.u32 %v5610, 7
      %v5612 = vsub.s32 0, %v5611
      %v5613 = vrot.slane %v5606, %v5612
      %v5614 = vlaneseq
      %v5615 = vshrl.u32 %v5614, 7
      %v5616 = vsub.s32 1, %v5615
      %v5617 = vrot.slane %v5606, %v5616
      %v5618 = vlaneseq
      %v5619 = vshrl.u32 %v5618, 7
      %v5620 = vsub.s32 2, %v5619
      %v5621 = vrot.slane %v5606, %v5620
      %v5622 = vlaneseq
      %v5623 = vshrl.u32 %v5622, 7
      %v5624 = vsub.s32 3, %v5623
      %v5625 = vrot.slane %v5606, %v5624
      %v5626 = vlaneseq
      %v5627 = vshrl.u32 %v5626, 7
      %v5628 = vsub.s32 4, %v5627
      %v5629 = vrot.slane %v5606, %v5628
      %v5630 = vlaneseq
      %v5631 = vshrl.u32 %v5630, 7
      %v5632 = vsub.s32 5, %v5631
      %v5633 = vrot.slane %v5606, %v5632
      %v5634 = vlaneseq
      %v5635 = vshrl.u32 %v5634, 7
      %v5636 = vsub.s32 6, %v5635
      %v5637 = vrot.slane %v5606, %v5636
      %v5638 = vlaneseq
      %v5639 = vshrl.u32 %v5638, 7
      %v5640 = vsub.s32 7, %v5639
      %v5641 = vrot.slane %v5606, %v5640
      %v5642 = vlaneseq
      %v5643 = vshrl.u32 %v5642, 7
      %v5644 = vsub.s32 0, %v5643
      %v5645 = vrot.slane %v5607, %v5644
      %v5646 = vlaneseq
      %v5647 = vshrl.u32 %v5646, 7
      %v5648 = vsub.s32 1, %v5647
      %v5649 = vrot.slane %v5607, %v5648
      %v5650 = vlaneseq
      %v5651 = vshrl.u32 %v5650, 7
      %v5652 = vsub.s32 2, %v5651
      %v5653 = vrot.slane %v5607, %v5652
      %v5654 = vlaneseq
      %v5655 = vshrl.u32 %v5654, 7
      %v5656 = vsub.s32 3, %v5655
      %v5657 = vrot.slane %v5607, %v5656
      %v5658 = vlaneseq
      %v5659 = vshrl.u32 %v5658, 7
      %v5660 = vsub.s32 4, %v5659
      %v5661 = vrot.slane %v5607, %v5660
      %v5662 = vlaneseq
      %v5663 = vshrl.u32 %v5662, 7
      %v5664 = vsub.s32 5, %v5663
      %v5665 = vrot.slane %v5607, %v5664
      %v5666 = vlaneseq
      %v5667 = vshrl.u32 %v5666, 7
      %v5668 = vsub.s32 6, %v5667
      %v5669 = vrot.slane %v5607, %v5668
      %v5670 = vlaneseq
      %v5671 = vshrl.u32 %v5670, 7
      %v5672 = vsub.s32 7, %v5671
      %v5673 = vrot.slane %v5607, %v5672
      %v5722 = vunpack.c.l.b16 %v5574
      %v5723 = vunpack.c.h.b16 %v5574
      %v5724 = vunpack.c.l.b16 %v5575
      %v5725 = vunpack.c.h.b16 %v5575
      %v5726 = vunpack.c.l.b16 %v5576
      %v5727 = vunpack.c.h.b16 %v5576
      %v5728 = vunpack.c.l.b16 %v5577
      %v5729 = vunpack.c.h.b16 %v5577
      %v5730 = vunpack.c.l.b16 %v5578
      %v5731 = vunpack.c.h.b16 %v5578
      %v5732 = vunpack.c.l.b16 %v5579
      %v5733 = vunpack.c.h.b16 %v5579
      %v5734 = vunpack.c.l.b16 %v5580
      %v5735 = vunpack.c.h.b16 %v5580
      %v5736 = vunpack.c.l.b16 %v5581
      %v5737 = vunpack.c.h.b16 %v5581
      %v5738 = vunpack.c.l.b16 %v5582
      %v5739 = vunpack.c.h.b16 %v5582
      %v5740 = vunpack.c.l.b16 %v5583
      %v5741 = vunpack.c.h.b16 %v5583
      %v5742 = vunpack.c.l.b16 %v5584
      %v5743 = vunpack.c.h.b16 %v5584
      %v5744 = vunpack.c.l.b16 %v5585
      %v5745 = vunpack.c.h.b16 %v5585
      %v5746 = vunpack.c.l.b16 %v5586
      %v5747 = vunpack.c.h.b16 %v5586
      %v5748 = vunpack.c.l.b16 %v5587
      %v5749 = vunpack.c.h.b16 %v5587
      %v5750 = vunpack.c.l.b16 %v5588
      %v5751 = vunpack.c.h.b16 %v5588
      %v5752 = vunpack.c.l.b16 %v5589
      %v5753 = vunpack.c.h.b16 %v5589
      %v5754 = vunpack.c.l.b16 %v5590
      %v5755 = vunpack.c.h.b16 %v5590
      %v5756 = vunpack.c.l.b16 %v5591
      %v5757 = vunpack.c.h.b16 %v5591
      %v5758 = vunpack.c.l.b16 %v5592
      %v5759 = vunpack.c.h.b16 %v5592
      %v5760 = vunpack.c.l.b16 %v5593
      %v5761 = vunpack.c.h.b16 %v5593
      %v5762 = vunpack.c.l.b16 %v5594
      %v5763 = vunpack.c.h.b16 %v5594
      %v5764 = vunpack.c.l.b16 %v5595
      %v5765 = vunpack.c.h.b16 %v5595
      %v5766 = vunpack.c.l.b16 %v5596
      %v5767 = vunpack.c.h.b16 %v5596
      %v5768 = vunpack.c.l.b16 %v5597
      %v5769 = vunpack.c.h.b16 %v5597
      %v5770 = vunpack.c.l.b16 %v5598
      %v5771 = vunpack.c.h.b16 %v5598
      %v5772 = vunpack.c.l.b16 %v5599
      %v5773 = vunpack.c.h.b16 %v5599
      %v5774 = vunpack.c.l.b16 %v5600
      %v5775 = vunpack.c.h.b16 %v5600
      %v5776 = vunpack.c.l.b16 %v5601
      %v5777 = vunpack.c.h.b16 %v5601
      %v5778 = vunpack.c.l.b16 %v5602
      %v5779 = vunpack.c.h.b16 %v5602
      %v5780 = vunpack.c.l.b16 %v5603
      %v5781 = vunpack.c.h.b16 %v5603
      %v5782 = vunpack.c.l.b16 %v5604
      %v5783 = vunpack.c.h.b16 %v5604
      %v5784 = vunpack.c.l.b16 %v5605
      %v5785 = vunpack.c.h.b16 %v5605
      %v5786 = vpack.c.b16 %v5738, %v5722
      %v5787 = vpack.c.b16 %v5739, %v5723
      %v5788 = vpack.c.b16 %v5740, %v5724
      %v5789 = vpack.c.b16 %v5741, %v5725
      %v5790 = vpack.c.b16 %v5742, %v5726
      %v5791 = vpack.c.b16 %v5743, %v5727
      %v5792 = vpack.c.b16 %v5744, %v5728
      %v5793 = vpack.c.b16 %v5745, %v5729
      %v5794 = vpack.c.b16 %v5746, %v5730
      %v5795 = vpack.c.b16 %v5747, %v5731
      %v5796 = vpack.c.b16 %v5748, %v5732
      %v5797 = vpack.c.b16 %v5749, %v5733
      %v5798 = vpack.c.b16 %v5750, %v5734
      %v5799 = vpack.c.b16 %v5751, %v5735
      %v5800 = vpack.c.b16 %v5752, %v5736
      %v5801 = vpack.c.b16 %v5753, %v5737
      %v5802 = vpack.c.b16 %v5770, %v5754
      %v5803 = vpack.c.b16 %v5771, %v5755
      %v5804 = vpack.c.b16 %v5772, %v5756
      %v5805 = vpack.c.b16 %v5773, %v5757
      %v5806 = vpack.c.b16 %v5774, %v5758
      %v5807 = vpack.c.b16 %v5775, %v5759
      %v5808 = vpack.c.b16 %v5776, %v5760
      %v5809 = vpack.c.b16 %v5777, %v5761
      %v5810 = vpack.c.b16 %v5778, %v5762
      %v5811 = vpack.c.b16 %v5779, %v5763
      %v5812 = vpack.c.b16 %v5780, %v5764
      %v5813 = vpack.c.b16 %v5781, %v5765
      %v5814 = vpack.c.b16 %v5782, %v5766
      %v5815 = vpack.c.b16 %v5783, %v5767
      %v5816 = vpack.c.b16 %v5784, %v5768
      %v5817 = vpack.c.b16 %v5785, %v5769
      %v5851 = vsel %vm1411, %v5566, 0
      %v5854 = vsel %vm1411, %v5567, 0
      %v5857 = vsel %vm1411, %v5568, 0
      %v5860 = vsel %vm1411, %v5569, 0
      %v5863 = vsel %vm1411, %v5570, 0
      %v5866 = vsel %vm1411, %v5571, 0
      %v5869 = vsel %vm1411, %v5572, 0
      %v5872 = vsel %vm1411, %v5573, 0
      %5874 = vmatprep.subr.bf16.mxu0 0
      %5875 = vmatpush1.bf16.msra.mxu0 0
      %5876 = vmatprep.subr.bf16.mxu0 0
      %5877 = vmatpush1.bf16.msra.mxu0 0
      %5878 = vmatprep.subr.bf16.mxu0 0
      %5879 = vmatpush1.bf16.msra.mxu0 0
      %5880 = vmatprep.subr.bf16.mxu0 0
      %5881 = vmatpush1.bf16.msra.mxu0 0
      %5882 = vmatprep.subr.bf16.mxu0 0
      %5883 = vmatpush1.bf16.msra.mxu0 0
      %5884 = vmatprep.subr.bf16.mxu0 0
      %5885 = vmatpush1.bf16.msra.mxu0 0
      %5886 = vmatprep.subr.bf16.mxu0 %v5803
      %5887 = vmatpush1.bf16.msra.mxu0 %v5802
      %5888 = vmatprep.subr.bf16.mxu0 %v5787
      %5889 = vmatpush1.bf16.msra.mxu0 %v5786
      %5890 = vmatprep.subr.bf16.mxu0 0
      %5891 = vmatpush2.bf16.msra.mxu0 0
      %5892 = vmatprep.subr.bf16.mxu0 0
      %5893 = vmatpush2.bf16.msra.mxu0 0
      %5894 = vmatprep.subr.bf16.mxu0 0
      %5895 = vmatpush2.bf16.msra.mxu0 0
      %5896 = vmatprep.subr.bf16.mxu0 0
      %5897 = vmatpush2.bf16.msra.mxu0 0
      %5898 = vmatprep.subr.bf16.mxu0 0
      %5899 = vmatpush2.bf16.msra.mxu0 0
      %5900 = vmatprep.subr.bf16.mxu0 0
      %5901 = vmatpush2.bf16.msra.mxu0 0
      %5902 = vmatprep.subr.bf16.mxu0 0
      %5903 = vmatpush2.bf16.msra.mxu0 0
      %5904 = vmatprep.subr.bf16.mxu0 0
      %5905 = vmatpush2.bf16.msra.mxu0 0
      %5906 = vmatprep.mubr.bf16.mxu0 0
      %5907 = vmatmul.mubr.bf16.gmra.mxu0 %v5851
      %v5908 = vpop.f32.mrf.mxu0
      %v5909 = vadd.f32 %v5613, %v5908
      %v5910 = vpop.f32.mrf.mxu0
      %v5911 = vadd.f32 %v5617, %v5910
      %v5912 = vpop.f32.mrf.mxu0
      %v5913 = vadd.f32 %v5613, %v5912
      %v5914 = vpop.f32.mrf.mxu0
      %v5915 = vadd.f32 %v5617, %v5914
      %5916 = vmatprep.mubr.bf16.mxu0 0
      %5917 = vmatmul.mubr.bf16.gmra.mxu0 %v5854
      %v5918 = vpop.f32.mrf.mxu0
      %v5919 = vadd.f32 %v5613, %v5918
      %v5920 = vpop.f32.mrf.mxu0
      %v5921 = vadd.f32 %v5617, %v5920
      %v5922 = vpop.f32.mrf.mxu0
      %v5923 = vadd.f32 %v5613, %v5922
      %v5924 = vpop.f32.mrf.mxu0
      %v5925 = vadd.f32 %v5617, %v5924
      %5926 = vmatprep.mubr.bf16.mxu0 0
      %5927 = vmatmul.mubr.bf16.gmra.mxu0 %v5857
      %v5928 = vpop.f32.mrf.mxu0
      %v5929 = vadd.f32 %v5613, %v5928
      %v5930 = vpop.f32.mrf.mxu0
      %v5931 = vadd.f32 %v5617, %v5930
      %v5932 = vpop.f32.mrf.mxu0
      %v5933 = vadd.f32 %v5613, %v5932
      %v5934 = vpop.f32.mrf.mxu0
      %v5935 = vadd.f32 %v5617, %v5934
      %5936 = vmatprep.mubr.bf16.mxu0 0
      %5937 = vmatmul.mubr.bf16.gmra.mxu0 %v5860
      %v5938 = vpop.f32.mrf.mxu0
      %v5939 = vadd.f32 %v5613, %v5938
      %v5940 = vpop.f32.mrf.mxu0
      %v5941 = vadd.f32 %v5617, %v5940
      %v5942 = vpop.f32.mrf.mxu0
      %v5943 = vadd.f32 %v5613, %v5942
      %v5944 = vpop.f32.mrf.mxu0
      %v5945 = vadd.f32 %v5617, %v5944
      %5946 = vmatprep.mubr.bf16.mxu0 0
      %5947 = vmatmul.mubr.bf16.gmra.mxu0 %v5863
      %v5948 = vpop.f32.mrf.mxu0
      %v5949 = vadd.f32 %v5613, %v5948
      %v5950 = vpop.f32.mrf.mxu0
      %v5951 = vadd.f32 %v5617, %v5950
      %v5952 = vpop.f32.mrf.mxu0
      %v5953 = vadd.f32 %v5613, %v5952
      %v5954 = vpop.f32.mrf.mxu0
      %v5955 = vadd.f32 %v5617, %v5954
      %5956 = vmatprep.mubr.bf16.mxu0 0
      %5957 = vmatmul.mubr.bf16.gmra.mxu0 %v5866
      %v5958 = vpop.f32.mrf.mxu0
      %v5959 = vadd.f32 %v5613, %v5958
      %v5960 = vpop.f32.mrf.mxu0
      %v5961 = vadd.f32 %v5617, %v5960
      %v5962 = vpop.f32.mrf.mxu0
      %v5963 = vadd.f32 %v5613, %v5962
      %v5964 = vpop.f32.mrf.mxu0
      %v5965 = vadd.f32 %v5617, %v5964
      %5966 = vmatprep.mubr.bf16.mxu0 0
      %5967 = vmatmul.mubr.bf16.gmra.mxu0 %v5869
      %v5968 = vpop.f32.mrf.mxu0
      %v5969 = vadd.f32 %v5613, %v5968
      %v5970 = vpop.f32.mrf.mxu0
      %v5971 = vadd.f32 %v5617, %v5970
      %v5972 = vpop.f32.mrf.mxu0
      %v5973 = vadd.f32 %v5613, %v5972
      %v5974 = vpop.f32.mrf.mxu0
      %v5975 = vadd.f32 %v5617, %v5974
      %5976 = vmatprep.mubr.bf16.mxu0 0
      %5977 = vmatmul.mubr.bf16.gmra.mxu0 %v5872
      %v5978 = vpop.f32.mrf.mxu0
      %v5979 = vadd.f32 %v5613, %v5978
      %v5980 = vpop.f32.mrf.mxu0
      %v5981 = vadd.f32 %v5617, %v5980
      %v5982 = vpop.f32.mrf.mxu0
      %v5983 = vadd.f32 %v5613, %v5982
      %v5984 = vpop.f32.mrf.mxu0
      %v5985 = vadd.f32 %v5617, %v5984
      %5986 = vdwg.mxu0
      %5987 = vmatprep.subr.bf16.mxu0 0
      %5988 = vmatpush1.bf16.msra.mxu0 0
      %5989 = vmatprep.subr.bf16.mxu0 0
      %5990 = vmatpush1.bf16.msra.mxu0 0
      %5991 = vmatprep.subr.bf16.mxu0 0
      %5992 = vmatpush1.bf16.msra.mxu0 0
      %5993 = vmatprep.subr.bf16.mxu0 0
      %5994 = vmatpush1.bf16.msra.mxu0 0
      %5995 = vmatprep.subr.bf16.mxu0 0
      %5996 = vmatpush1.bf16.msra.mxu0 0
      %5997 = vmatprep.subr.bf16.mxu0 0
      %5998 = vmatpush1.bf16.msra.mxu0 0
      %5999 = vmatprep.subr.bf16.mxu0 %v5805
      %6000 = vmatpush1.bf16.msra.mxu0 %v5804
      %6001 = vmatprep.subr.bf16.mxu0 %v5789
      %6002 = vmatpush1.bf16.msra.mxu0 %v5788
      %6003 = vmatprep.subr.bf16.mxu0 0
      %6004 = vmatpush2.bf16.msra.mxu0 0
      %6005 = vmatprep.subr.bf16.mxu0 0
      %6006 = vmatpush2.bf16.msra.mxu0 0
      %6007 = vmatprep.subr.bf16.mxu0 0
      %6008 = vmatpush2.bf16.msra.mxu0 0
      %6009 = vmatprep.subr.bf16.mxu0 0
      %6010 = vmatpush2.bf16.msra.mxu0 0
      %6011 = vmatprep.subr.bf16.mxu0 0
      %6012 = vmatpush2.bf16.msra.mxu0 0
      %6013 = vmatprep.subr.bf16.mxu0 0
      %6014 = vmatpush2.bf16.msra.mxu0 0
      %6015 = vmatprep.subr.bf16.mxu0 0
      %6016 = vmatpush2.bf16.msra.mxu0 0
      %6017 = vmatprep.subr.bf16.mxu0 0
      %6018 = vmatpush2.bf16.msra.mxu0 0
      %6019 = vmatprep.mubr.bf16.mxu0 0
      %6020 = vmatmul.mubr.bf16.gmra.mxu0 %v5851
      %v6021 = vpop.f32.mrf.mxu0
      %v6022 = vadd.f32 %v5621, %v6021
      %v6023 = vpop.f32.mrf.mxu0
      %v6024 = vadd.f32 %v5625, %v6023
      %v6025 = vpop.f32.mrf.mxu0
      %v6026 = vadd.f32 %v5621, %v6025
      %v6027 = vpop.f32.mrf.mxu0
      %v6028 = vadd.f32 %v5625, %v6027
      %6029 = vmatprep.mubr.bf16.mxu0 0
      %6030 = vmatmul.mubr.bf16.gmra.mxu0 %v5854
      %v6031 = vpop.f32.mrf.mxu0
      %v6032 = vadd.f32 %v5621, %v6031
      %v6033 = vpop.f32.mrf.mxu0
      %v6034 = vadd.f32 %v5625, %v6033
      %v6035 = vpop.f32.mrf.mxu0
      %v6036 = vadd.f32 %v5621, %v6035
      %v6037 = vpop.f32.mrf.mxu0
      %v6038 = vadd.f32 %v5625, %v6037
      %6039 = vmatprep.mubr.bf16.mxu0 0
      %6040 = vmatmul.mubr.bf16.gmra.mxu0 %v5857
      %v6041 = vpop.f32.mrf.mxu0
      %v6042 = vadd.f32 %v5621, %v6041
      %v6043 = vpop.f32.mrf.mxu0
      %v6044 = vadd.f32 %v5625, %v6043
      %v6045 = vpop.f32.mrf.mxu0
      %v6046 = vadd.f32 %v5621, %v6045
      %v6047 = vpop.f32.mrf.mxu0
      %v6048 = vadd.f32 %v5625, %v6047
      %6049 = vmatprep.mubr.bf16.mxu0 0
      %6050 = vmatmul.mubr.bf16.gmra.mxu0 %v5860
      %v6051 = vpop.f32.mrf.mxu0
      %v6052 = vadd.f32 %v5621, %v6051
      %v6053 = vpop.f32.mrf.mxu0
      %v6054 = vadd.f32 %v5625, %v6053
      %v6055 = vpop.f32.mrf.mxu0
      %v6056 = vadd.f32 %v5621, %v6055
      %v6057 = vpop.f32.mrf.mxu0
      %v6058 = vadd.f32 %v5625, %v6057
      %6059 = vmatprep.mubr.bf16.mxu0 0
      %6060 = vmatmul.mubr.bf16.gmra.mxu0 %v5863
      %v6061 = vpop.f32.mrf.mxu0
      %v6062 = vadd.f32 %v5621, %v6061
      %v6063 = vpop.f32.mrf.mxu0
      %v6064 = vadd.f32 %v5625, %v6063
      %v6065 = vpop.f32.mrf.mxu0
      %v6066 = vadd.f32 %v5621, %v6065
      %v6067 = vpop.f32.mrf.mxu0
      %v6068 = vadd.f32 %v5625, %v6067
      %6069 = vmatprep.mubr.bf16.mxu0 0
      %6070 = vmatmul.mubr.bf16.gmra.mxu0 %v5866
      %v6071 = vpop.f32.mrf.mxu0
      %v6072 = vadd.f32 %v5621, %v6071
      %v6073 = vpop.f32.mrf.mxu0
      %v6074 = vadd.f32 %v5625, %v6073
      %v6075 = vpop.f32.mrf.mxu0
      %v6076 = vadd.f32 %v5621, %v6075
      %v6077 = vpop.f32.mrf.mxu0
      %v6078 = vadd.f32 %v5625, %v6077
      %6079 = vmatprep.mubr.bf16.mxu0 0
      %6080 = vmatmul.mubr.bf16.gmra.mxu0 %v5869
      %v6081 = vpop.f32.mrf.mxu0
      %v6082 = vadd.f32 %v5621, %v6081
      %v6083 = vpop.f32.mrf.mxu0
      %v6084 = vadd.f32 %v5625, %v6083
      %v6085 = vpop.f32.mrf.mxu0
      %v6086 = vadd.f32 %v5621, %v6085
      %v6087 = vpop.f32.mrf.mxu0
      %v6088 = vadd.f32 %v5625, %v6087
      %6089 = vmatprep.mubr.bf16.mxu0 0
      %6090 = vmatmul.mubr.bf16.gmra.mxu0 %v5872
      %v6091 = vpop.f32.mrf.mxu0
      %v6092 = vadd.f32 %v5621, %v6091
      %v6093 = vpop.f32.mrf.mxu0
      %v6094 = vadd.f32 %v5625, %v6093
      %v6095 = vpop.f32.mrf.mxu0
      %v6096 = vadd.f32 %v5621, %v6095
      %v6097 = vpop.f32.mrf.mxu0
      %v6098 = vadd.f32 %v5625, %v6097
      %6099 = vdwg.mxu0
      %6100 = vmatprep.subr.bf16.mxu0 0
      %6101 = vmatpush1.bf16.msra.mxu0 0
      %6102 = vmatprep.subr.bf16.mxu0 0
      %6103 = vmatpush1.bf16.msra.mxu0 0
      %6104 = vmatprep.subr.bf16.mxu0 0
      %6105 = vmatpush1.bf16.msra.mxu0 0
      %6106 = vmatprep.subr.bf16.mxu0 0
      %6107 = vmatpush1.bf16.msra.mxu0 0
      %6108 = vmatprep.subr.bf16.mxu0 0
      %6109 = vmatpush1.bf16.msra.mxu0 0
      %6110 = vmatprep.subr.bf16.mxu0 0
      %6111 = vmatpush1.bf16.msra.mxu0 0
      %6112 = vmatprep.subr.bf16.mxu0 %v5807
      %6113 = vmatpush1.bf16.msra.mxu0 %v5806
      %6114 = vmatprep.subr.bf16.mxu0 %v5791
      %6115 = vmatpush1.bf16.msra.mxu0 %v5790
      %6116 = vmatprep.subr.bf16.mxu0 0
      %6117 = vmatpush2.bf16.msra.mxu0 0
      %6118 = vmatprep.subr.bf16.mxu0 0
      %6119 = vmatpush2.bf16.msra.mxu0 0
      %6120 = vmatprep.subr.bf16.mxu0 0
      %6121 = vmatpush2.bf16.msra.mxu0 0
      %6122 = vmatprep.subr.bf16.mxu0 0
      %6123 = vmatpush2.bf16.msra.mxu0 0
      %6124 = vmatprep.subr.bf16.mxu0 0
      %6125 = vmatpush2.bf16.msra.mxu0 0
      %6126 = vmatprep.subr.bf16.mxu0 0
      %6127 = vmatpush2.bf16.msra.mxu0 0
      %6128 = vmatprep.subr.bf16.mxu0 0
      %6129 = vmatpush2.bf16.msra.mxu0 0
      %6130 = vmatprep.subr.bf16.mxu0 0
      %6131 = vmatpush2.bf16.msra.mxu0 0
      %6132 = vmatprep.mubr.bf16.mxu0 0
      %6133 = vmatmul.mubr.bf16.gmra.mxu0 %v5851
      %v6134 = vpop.f32.mrf.mxu0
      %v6135 = vadd.f32 %v5629, %v6134
      %v6136 = vpop.f32.mrf.mxu0
      %v6137 = vadd.f32 %v5633, %v6136
      %v6138 = vpop.f32.mrf.mxu0
      %v6139 = vadd.f32 %v5629, %v6138
      %v6140 = vpop.f32.mrf.mxu0
      %v6141 = vadd.f32 %v5633, %v6140
      %6142 = vmatprep.mubr.bf16.mxu0 0
      %6143 = vmatmul.mubr.bf16.gmra.mxu0 %v5854
      %v6144 = vpop.f32.mrf.mxu0
      %v6145 = vadd.f32 %v5629, %v6144
      %v6146 = vpop.f32.mrf.mxu0
      %v6147 = vadd.f32 %v5633, %v6146
      %v6148 = vpop.f32.mrf.mxu0
      %v6149 = vadd.f32 %v5629, %v6148
      %v6150 = vpop.f32.mrf.mxu0
      %v6151 = vadd.f32 %v5633, %v6150
      %6152 = vmatprep.mubr.bf16.mxu0 0
      %6153 = vmatmul.mubr.bf16.gmra.mxu0 %v5857
      %v6154 = vpop.f32.mrf.mxu0
      %v6155 = vadd.f32 %v5629, %v6154
      %v6156 = vpop.f32.mrf.mxu0
      %v6157 = vadd.f32 %v5633, %v6156
      %v6158 = vpop.f32.mrf.mxu0
      %v6159 = vadd.f32 %v5629, %v6158
      %v6160 = vpop.f32.mrf.mxu0
      %v6161 = vadd.f32 %v5633, %v6160
      %6162 = vmatprep.mubr.bf16.mxu0 0
      %6163 = vmatmul.mubr.bf16.gmra.mxu0 %v5860
      %v6164 = vpop.f32.mrf.mxu0
      %v6165 = vadd.f32 %v5629, %v6164
      %v6166 = vpop.f32.mrf.mxu0
      %v6167 = vadd.f32 %v5633, %v6166
      %v6168 = vpop.f32.mrf.mxu0
      %v6169 = vadd.f32 %v5629, %v6168
      %v6170 = vpop.f32.mrf.mxu0
      %v6171 = vadd.f32 %v5633, %v6170
      %6172 = vmatprep.mubr.bf16.mxu0 0
      %6173 = vmatmul.mubr.bf16.gmra.mxu0 %v5863
      %v6174 = vpop.f32.mrf.mxu0
      %v6175 = vadd.f32 %v5629, %v6174
      %v6176 = vpop.f32.mrf.mxu0
      %v6177 = vadd.f32 %v5633, %v6176
      %v6178 = vpop.f32.mrf.mxu0
      %v6179 = vadd.f32 %v5629, %v6178
      %v6180 = vpop.f32.mrf.mxu0
      %v6181 = vadd.f32 %v5633, %v6180
      %6182 = vmatprep.mubr.bf16.mxu0 0
      %6183 = vmatmul.mubr.bf16.gmra.mxu0 %v5866
      %v6184 = vpop.f32.mrf.mxu0
      %v6185 = vadd.f32 %v5629, %v6184
      %v6186 = vpop.f32.mrf.mxu0
      %v6187 = vadd.f32 %v5633, %v6186
      %v6188 = vpop.f32.mrf.mxu0
      %v6189 = vadd.f32 %v5629, %v6188
      %v6190 = vpop.f32.mrf.mxu0
      %v6191 = vadd.f32 %v5633, %v6190
      %6192 = vmatprep.mubr.bf16.mxu0 0
      %6193 = vmatmul.mubr.bf16.gmra.mxu0 %v5869
      %v6194 = vpop.f32.mrf.mxu0
      %v6195 = vadd.f32 %v5629, %v6194
      %v6196 = vpop.f32.mrf.mxu0
      %v6197 = vadd.f32 %v5633, %v6196
      %v6198 = vpop.f32.mrf.mxu0
      %v6199 = vadd.f32 %v5629, %v6198
      %v6200 = vpop.f32.mrf.mxu0
      %v6201 = vadd.f32 %v5633, %v6200
      %6202 = vmatprep.mubr.bf16.mxu0 0
      %6203 = vmatmul.mubr.bf16.gmra.mxu0 %v5872
      %v6204 = vpop.f32.mrf.mxu0
      %v6205 = vadd.f32 %v5629, %v6204
      %v6206 = vpop.f32.mrf.mxu0
      %v6207 = vadd.f32 %v5633, %v6206
      %v6208 = vpop.f32.mrf.mxu0
      %v6209 = vadd.f32 %v5629, %v6208
      %v6210 = vpop.f32.mrf.mxu0
      %v6211 = vadd.f32 %v5633, %v6210
      %6212 = vdwg.mxu0
      %6213 = vmatprep.subr.bf16.mxu0 0
      %6214 = vmatpush1.bf16.msra.mxu0 0
      %6215 = vmatprep.subr.bf16.mxu0 0
      %6216 = vmatpush1.bf16.msra.mxu0 0
      %6217 = vmatprep.subr.bf16.mxu0 0
      %6218 = vmatpush1.bf16.msra.mxu0 0
      %6219 = vmatprep.subr.bf16.mxu0 0
      %6220 = vmatpush1.bf16.msra.mxu0 0
      %6221 = vmatprep.subr.bf16.mxu0 0
      %6222 = vmatpush1.bf16.msra.mxu0 0
      %6223 = vmatprep.subr.bf16.mxu0 0
      %6224 = vmatpush1.bf16.msra.mxu0 0
      %6225 = vmatprep.subr.bf16.mxu0 %v5809
      %6226 = vmatpush1.bf16.msra.mxu0 %v5808
      %6227 = vmatprep.subr.bf16.mxu0 %v5793
      %6228 = vmatpush1.bf16.msra.mxu0 %v5792
      %6229 = vmatprep.subr.bf16.mxu0 0
      %6230 = vmatpush2.bf16.msra.mxu0 0
      %6231 = vmatprep.subr.bf16.mxu0 0
      %6232 = vmatpush2.bf16.msra.mxu0 0
      %6233 = vmatprep.subr.bf16.mxu0 0
      %6234 = vmatpush2.bf16.msra.mxu0 0
      %6235 = vmatprep.subr.bf16.mxu0 0
      %6236 = vmatpush2.bf16.msra.mxu0 0
      %6237 = vmatprep.subr.bf16.mxu0 0
      %6238 = vmatpush2.bf16.msra.mxu0 0
      %6239 = vmatprep.subr.bf16.mxu0 0
      %6240 = vmatpush2.bf16.msra.mxu0 0
      %6241 = vmatprep.subr.bf16.mxu0 0
      %6242 = vmatpush2.bf16.msra.mxu0 0
      %6243 = vmatprep.subr.bf16.mxu0 0
      %6244 = vmatpush2.bf16.msra.mxu0 0
      %6245 = vmatprep.mubr.bf16.mxu0 0
      %6246 = vmatmul.mubr.bf16.gmra.mxu0 %v5851
      %v6247 = vpop.f32.mrf.mxu0
      %v6248 = vadd.f32 %v5637, %v6247
      %v6249 = vpop.f32.mrf.mxu0
      %v6250 = vadd.f32 %v5641, %v6249
      %v6251 = vpop.f32.mrf.mxu0
      %v6252 = vadd.f32 %v5637, %v6251
      %v6253 = vpop.f32.mrf.mxu0
      %v6254 = vadd.f32 %v5641, %v6253
      %6255 = vmatprep.mubr.bf16.mxu0 0
      %6256 = vmatmul.mubr.bf16.gmra.mxu0 %v5854
      %v6257 = vpop.f32.mrf.mxu0
      %v6258 = vadd.f32 %v5637, %v6257
      %v6259 = vpop.f32.mrf.mxu0
      %v6260 = vadd.f32 %v5641, %v6259
      %v6261 = vpop.f32.mrf.mxu0
      %v6262 = vadd.f32 %v5637, %v6261
      %v6263 = vpop.f32.mrf.mxu0
      %v6264 = vadd.f32 %v5641, %v6263
      %6265 = vmatprep.mubr.bf16.mxu0 0
      %6266 = vmatmul.mubr.bf16.gmra.mxu0 %v5857
      %v6267 = vpop.f32.mrf.mxu0
      %v6268 = vadd.f32 %v5637, %v6267
      %v6269 = vpop.f32.mrf.mxu0
      %v6270 = vadd.f32 %v5641, %v6269
      %v6271 = vpop.f32.mrf.mxu0
      %v6272 = vadd.f32 %v5637, %v6271
      %v6273 = vpop.f32.mrf.mxu0
      %v6274 = vadd.f32 %v5641, %v6273
      %6275 = vmatprep.mubr.bf16.mxu0 0
      %6276 = vmatmul.mubr.bf16.gmra.mxu0 %v5860
      %v6277 = vpop.f32.mrf.mxu0
      %v6278 = vadd.f32 %v5637, %v6277
      %v6279 = vpop.f32.mrf.mxu0
      %v6280 = vadd.f32 %v5641, %v6279
      %v6281 = vpop.f32.mrf.mxu0
      %v6282 = vadd.f32 %v5637, %v6281
      %v6283 = vpop.f32.mrf.mxu0
      %v6284 = vadd.f32 %v5641, %v6283
      %6285 = vmatprep.mubr.bf16.mxu0 0
      %6286 = vmatmul.mubr.bf16.gmra.mxu0 %v5863
      %v6287 = vpop.f32.mrf.mxu0
      %v6288 = vadd.f32 %v5637, %v6287
      %v6289 = vpop.f32.mrf.mxu0
      %v6290 = vadd.f32 %v5641, %v6289
      %v6291 = vpop.f32.mrf.mxu0
      %v6292 = vadd.f32 %v5637, %v6291
      %v6293 = vpop.f32.mrf.mxu0
      %v6294 = vadd.f32 %v5641, %v6293
      %6295 = vmatprep.mubr.bf16.mxu0 0
      %6296 = vmatmul.mubr.bf16.gmra.mxu0 %v5866
      %v6297 = vpop.f32.mrf.mxu0
      %v6298 = vadd.f32 %v5637, %v6297
      %v6299 = vpop.f32.mrf.mxu0
      %v6300 = vadd.f32 %v5641, %v6299
      %v6301 = vpop.f32.mrf.mxu0
      %v6302 = vadd.f32 %v5637, %v6301
      %v6303 = vpop.f32.mrf.mxu0
      %v6304 = vadd.f32 %v5641, %v6303
      %6305 = vmatprep.mubr.bf16.mxu0 0
      %6306 = vmatmul.mubr.bf16.gmra.mxu0 %v5869
      %v6307 = vpop.f32.mrf.mxu0
      %v6308 = vadd.f32 %v5637, %v6307
      %v6309 = vpop.f32.mrf.mxu0
      %v6310 = vadd.f32 %v5641, %v6309
      %v6311 = vpop.f32.mrf.mxu0
      %v6312 = vadd.f32 %v5637, %v6311
      %v6313 = vpop.f32.mrf.mxu0
      %v6314 = vadd.f32 %v5641, %v6313
      %6315 = vmatprep.mubr.bf16.mxu0 0
      %6316 = vmatmul.mubr.bf16.gmra.mxu0 %v5872
      %v6317 = vpop.f32.mrf.mxu0
      %v6318 = vadd.f32 %v5637, %v6317
      %v6319 = vpop.f32.mrf.mxu0
      %v6320 = vadd.f32 %v5641, %v6319
      %v6321 = vpop.f32.mrf.mxu0
      %v6322 = vadd.f32 %v5637, %v6321
      %v6323 = vpop.f32.mrf.mxu0
      %v6324 = vadd.f32 %v5641, %v6323
      %6325 = vdwg.mxu0
      %6326 = vmatprep.subr.bf16.mxu0 0
      %6327 = vmatpush1.bf16.msra.mxu0 0
      %6328 = vmatprep.subr.bf16.mxu0 0
      %6329 = vmatpush1.bf16.msra.mxu0 0
      %6330 = vmatprep.subr.bf16.mxu0 0
      %6331 = vmatpush1.bf16.msra.mxu0 0
      %6332 = vmatprep.subr.bf16.mxu0 0
      %6333 = vmatpush1.bf16.msra.mxu0 0
      %6334 = vmatprep.subr.bf16.mxu0 0
      %6335 = vmatpush1.bf16.msra.mxu0 0
      %6336 = vmatprep.subr.bf16.mxu0 0
      %6337 = vmatpush1.bf16.msra.mxu0 0
      %6338 = vmatprep.subr.bf16.mxu0 %v5811
      %6339 = vmatpush1.bf16.msra.mxu0 %v5810
      %6340 = vmatprep.subr.bf16.mxu0 %v5795
      %6341 = vmatpush1.bf16.msra.mxu0 %v5794
      %6342 = vmatprep.subr.bf16.mxu0 0
      %6343 = vmatpush2.bf16.msra.mxu0 0
      %6344 = vmatprep.subr.bf16.mxu0 0
      %6345 = vmatpush2.bf16.msra.mxu0 0
      %6346 = vmatprep.subr.bf16.mxu0 0
      %6347 = vmatpush2.bf16.msra.mxu0 0
      %6348 = vmatprep.subr.bf16.mxu0 0
      %6349 = vmatpush2.bf16.msra.mxu0 0
      %6350 = vmatprep.subr.bf16.mxu0 0
      %6351 = vmatpush2.bf16.msra.mxu0 0
      %6352 = vmatprep.subr.bf16.mxu0 0
      %6353 = vmatpush2.bf16.msra.mxu0 0
      %6354 = vmatprep.subr.bf16.mxu0 0
      %6355 = vmatpush2.bf16.msra.mxu0 0
      %6356 = vmatprep.subr.bf16.mxu0 0
      %6357 = vmatpush2.bf16.msra.mxu0 0
      %6358 = vmatprep.mubr.bf16.mxu0 0
      %6359 = vmatmul.mubr.bf16.gmra.mxu0 %v5851
      %v6360 = vpop.f32.mrf.mxu0
      %v6361 = vadd.f32 %v5645, %v6360
      %v6362 = vpop.f32.mrf.mxu0
      %v6363 = vadd.f32 %v5649, %v6362
      %v6364 = vpop.f32.mrf.mxu0
      %v6365 = vadd.f32 %v5645, %v6364
      %v6366 = vpop.f32.mrf.mxu0
      %v6367 = vadd.f32 %v5649, %v6366
      %6368 = vmatprep.mubr.bf16.mxu0 0
      %6369 = vmatmul.mubr.bf16.gmra.mxu0 %v5854
      %v6370 = vpop.f32.mrf.mxu0
      %v6371 = vadd.f32 %v5645, %v6370
      %v6372 = vpop.f32.mrf.mxu0
      %v6373 = vadd.f32 %v5649, %v6372
      %v6374 = vpop.f32.mrf.mxu0
      %v6375 = vadd.f32 %v5645, %v6374
      %v6376 = vpop.f32.mrf.mxu0
      %v6377 = vadd.f32 %v5649, %v6376
      %6378 = vmatprep.mubr.bf16.mxu0 0
      %6379 = vmatmul.mubr.bf16.gmra.mxu0 %v5857
      %v6380 = vpop.f32.mrf.mxu0
      %v6381 = vadd.f32 %v5645, %v6380
      %v6382 = vpop.f32.mrf.mxu0
      %v6383 = vadd.f32 %v5649, %v6382
      %v6384 = vpop.f32.mrf.mxu0
      %v6385 = vadd.f32 %v5645, %v6384
      %v6386 = vpop.f32.mrf.mxu0
      %v6387 = vadd.f32 %v5649, %v6386
      %6388 = vmatprep.mubr.bf16.mxu0 0
      %6389 = vmatmul.mubr.bf16.gmra.mxu0 %v5860
      %v6390 = vpop.f32.mrf.mxu0
      %v6391 = vadd.f32 %v5645, %v6390
      %v6392 = vpop.f32.mrf.mxu0
      %v6393 = vadd.f32 %v5649, %v6392
      %v6394 = vpop.f32.mrf.mxu0
      %v6395 = vadd.f32 %v5645, %v6394
      %v6396 = vpop.f32.mrf.mxu0
      %v6397 = vadd.f32 %v5649, %v6396
      %6398 = vmatprep.mubr.bf16.mxu0 0
      %6399 = vmatmul.mubr.bf16.gmra.mxu0 %v5863
      %v6400 = vpop.f32.mrf.mxu0
      %v6401 = vadd.f32 %v5645, %v6400
      %v6402 = vpop.f32.mrf.mxu0
      %v6403 = vadd.f32 %v5649, %v6402
      %v6404 = vpop.f32.mrf.mxu0
      %v6405 = vadd.f32 %v5645, %v6404
      %v6406 = vpop.f32.mrf.mxu0
      %v6407 = vadd.f32 %v5649, %v6406
      %6408 = vmatprep.mubr.bf16.mxu0 0
      %6409 = vmatmul.mubr.bf16.gmra.mxu0 %v5866
      %v6410 = vpop.f32.mrf.mxu0
      %v6411 = vadd.f32 %v5645, %v6410
      %v6412 = vpop.f32.mrf.mxu0
      %v6413 = vadd.f32 %v5649, %v6412
      %v6414 = vpop.f32.mrf.mxu0
      %v6415 = vadd.f32 %v5645, %v6414
      %v6416 = vpop.f32.mrf.mxu0
      %v6417 = vadd.f32 %v5649, %v6416
      %6418 = vmatprep.mubr.bf16.mxu0 0
      %6419 = vmatmul.mubr.bf16.gmra.mxu0 %v5869
      %v6420 = vpop.f32.mrf.mxu0
      %v6421 = vadd.f32 %v5645, %v6420
      %v6422 = vpop.f32.mrf.mxu0
      %v6423 = vadd.f32 %v5649, %v6422
      %v6424 = vpop.f32.mrf.mxu0
      %v6425 = vadd.f32 %v5645, %v6424
      %v6426 = vpop.f32.mrf.mxu0
      %v6427 = vadd.f32 %v5649, %v6426
      %6428 = vmatprep.mubr.bf16.mxu0 0
      %6429 = vmatmul.mubr.bf16.gmra.mxu0 %v5872
      %v6430 = vpop.f32.mrf.mxu0
      %v6431 = vadd.f32 %v5645, %v6430
      %v6432 = vpop.f32.mrf.mxu0
      %v6433 = vadd.f32 %v5649, %v6432
      %v6434 = vpop.f32.mrf.mxu0
      %v6435 = vadd.f32 %v5645, %v6434
      %v6436 = vpop.f32.mrf.mxu0
      %v6437 = vadd.f32 %v5649, %v6436
      %6438 = vdwg.mxu0
      %6439 = vmatprep.subr.bf16.mxu0 0
      %6440 = vmatpush1.bf16.msra.mxu0 0
      %6441 = vmatprep.subr.bf16.mxu0 0
      %6442 = vmatpush1.bf16.msra.mxu0 0
      %6443 = vmatprep.subr.bf16.mxu0 0
      %6444 = vmatpush1.bf16.msra.mxu0 0
      %6445 = vmatprep.subr.bf16.mxu0 0
      %6446 = vmatpush1.bf16.msra.mxu0 0
      %6447 = vmatprep.subr.bf16.mxu0 0
      %6448 = vmatpush1.bf16.msra.mxu0 0
      %6449 = vmatprep.subr.bf16.mxu0 0
      %6450 = vmatpush1.bf16.msra.mxu0 0
      %6451 = vmatprep.subr.bf16.mxu0 %v5813
      %6452 = vmatpush1.bf16.msra.mxu0 %v5812
      %6453 = vmatprep.subr.bf16.mxu0 %v5797
      %6454 = vmatpush1.bf16.msra.mxu0 %v5796
      %6455 = vmatprep.subr.bf16.mxu0 0
      %6456 = vmatpush2.bf16.msra.mxu0 0
      %6457 = vmatprep.subr.bf16.mxu0 0
      %6458 = vmatpush2.bf16.msra.mxu0 0
      %6459 = vmatprep.subr.bf16.mxu0 0
      %6460 = vmatpush2.bf16.msra.mxu0 0
      %6461 = vmatprep.subr.bf16.mxu0 0
      %6462 = vmatpush2.bf16.msra.mxu0 0
      %6463 = vmatprep.subr.bf16.mxu0 0
      %6464 = vmatpush2.bf16.msra.mxu0 0
      %6465 = vmatprep.subr.bf16.mxu0 0
      %6466 = vmatpush2.bf16.msra.mxu0 0
      %6467 = vmatprep.subr.bf16.mxu0 0
      %6468 = vmatpush2.bf16.msra.mxu0 0
      %6469 = vmatprep.subr.bf16.mxu0 0
      %6470 = vmatpush2.bf16.msra.mxu0 0
      %6471 = vmatprep.mubr.bf16.mxu0 0
      %6472 = vmatmul.mubr.bf16.gmra.mxu0 %v5851
      %v6473 = vpop.f32.mrf.mxu0
      %v6474 = vadd.f32 %v5653, %v6473
      %v6475 = vpop.f32.mrf.mxu0
      %v6476 = vadd.f32 %v5657, %v6475
      %v6477 = vpop.f32.mrf.mxu0
      %v6478 = vadd.f32 %v5653, %v6477
      %v6479 = vpop.f32.mrf.mxu0
      %v6480 = vadd.f32 %v5657, %v6479
      %6481 = vmatprep.mubr.bf16.mxu0 0
      %6482 = vmatmul.mubr.bf16.gmra.mxu0 %v5854
      %v6483 = vpop.f32.mrf.mxu0
      %v6484 = vadd.f32 %v5653, %v6483
      %v6485 = vpop.f32.mrf.mxu0
      %v6486 = vadd.f32 %v5657, %v6485
      %v6487 = vpop.f32.mrf.mxu0
      %v6488 = vadd.f32 %v5653, %v6487
      %v6489 = vpop.f32.mrf.mxu0
      %v6490 = vadd.f32 %v5657, %v6489
      %6491 = vmatprep.mubr.bf16.mxu0 0
      %6492 = vmatmul.mubr.bf16.gmra.mxu0 %v5857
      %v6493 = vpop.f32.mrf.mxu0
      %v6494 = vadd.f32 %v5653, %v6493
      %v6495 = vpop.f32.mrf.mxu0
      %v6496 = vadd.f32 %v5657, %v6495
      %v6497 = vpop.f32.mrf.mxu0
      %v6498 = vadd.f32 %v5653, %v6497
      %v6499 = vpop.f32.mrf.mxu0
      %v6500 = vadd.f32 %v5657, %v6499
      %6501 = vmatprep.mubr.bf16.mxu0 0
      %6502 = vmatmul.mubr.bf16.gmra.mxu0 %v5860
      %v6503 = vpop.f32.mrf.mxu0
      %v6504 = vadd.f32 %v5653, %v6503
      %v6505 = vpop.f32.mrf.mxu0
      %v6506 = vadd.f32 %v5657, %v6505
      %v6507 = vpop.f32.mrf.mxu0
      %v6508 = vadd.f32 %v5653, %v6507
      %v6509 = vpop.f32.mrf.mxu0
      %v6510 = vadd.f32 %v5657, %v6509
      %6511 = vmatprep.mubr.bf16.mxu0 0
      %6512 = vmatmul.mubr.bf16.gmra.mxu0 %v5863
      %v6513 = vpop.f32.mrf.mxu0
      %v6514 = vadd.f32 %v5653, %v6513
      %v6515 = vpop.f32.mrf.mxu0
      %v6516 = vadd.f32 %v5657, %v6515
      %v6517 = vpop.f32.mrf.mxu0
      %v6518 = vadd.f32 %v5653, %v6517
      %v6519 = vpop.f32.mrf.mxu0
      %v6520 = vadd.f32 %v5657, %v6519
      %6521 = vmatprep.mubr.bf16.mxu0 0
      %6522 = vmatmul.mubr.bf16.gmra.mxu0 %v5866
      %v6523 = vpop.f32.mrf.mxu0
      %v6524 = vadd.f32 %v5653, %v6523
      %v6525 = vpop.f32.mrf.mxu0
      %v6526 = vadd.f32 %v5657, %v6525
      %v6527 = vpop.f32.mrf.mxu0
      %v6528 = vadd.f32 %v5653, %v6527
      %v6529 = vpop.f32.mrf.mxu0
      %v6530 = vadd.f32 %v5657, %v6529
      %6531 = vmatprep.mubr.bf16.mxu0 0
      %6532 = vmatmul.mubr.bf16.gmra.mxu0 %v5869
      %v6533 = vpop.f32.mrf.mxu0
      %v6534 = vadd.f32 %v5653, %v6533
      %v6535 = vpop.f32.mrf.mxu0
      %v6536 = vadd.f32 %v5657, %v6535
      %v6537 = vpop.f32.mrf.mxu0
      %v6538 = vadd.f32 %v5653, %v6537
      %v6539 = vpop.f32.mrf.mxu0
      %v6540 = vadd.f32 %v5657, %v6539
      %6541 = vmatprep.mubr.bf16.mxu0 0
      %6542 = vmatmul.mubr.bf16.gmra.mxu0 %v5872
      %v6543 = vpop.f32.mrf.mxu0
      %v6544 = vadd.f32 %v5653, %v6543
      %v6545 = vpop.f32.mrf.mxu0
      %v6546 = vadd.f32 %v5657, %v6545
      %v6547 = vpop.f32.mrf.mxu0
      %v6548 = vadd.f32 %v5653, %v6547
      %v6549 = vpop.f32.mrf.mxu0
      %v6550 = vadd.f32 %v5657, %v6549
      %6551 = vdwg.mxu0
      %6552 = vmatprep.subr.bf16.mxu0 0
      %6553 = vmatpush1.bf16.msra.mxu0 0
      %6554 = vmatprep.subr.bf16.mxu0 0
      %6555 = vmatpush1.bf16.msra.mxu0 0
      %6556 = vmatprep.subr.bf16.mxu0 0
      %6557 = vmatpush1.bf16.msra.mxu0 0
      %6558 = vmatprep.subr.bf16.mxu0 0
      %6559 = vmatpush1.bf16.msra.mxu0 0
      %6560 = vmatprep.subr.bf16.mxu0 0
      %6561 = vmatpush1.bf16.msra.mxu0 0
      %6562 = vmatprep.subr.bf16.mxu0 0
      %6563 = vmatpush1.bf16.msra.mxu0 0
      %6564 = vmatprep.subr.bf16.mxu0 %v5815
      %6565 = vmatpush1.bf16.msra.mxu0 %v5814
      %6566 = vmatprep.subr.bf16.mxu0 %v5799
      %6567 = vmatpush1.bf16.msra.mxu0 %v5798
      %6568 = vmatprep.subr.bf16.mxu0 0
      %6569 = vmatpush2.bf16.msra.mxu0 0
      %6570 = vmatprep.subr.bf16.mxu0 0
      %6571 = vmatpush2.bf16.msra.mxu0 0
      %6572 = vmatprep.subr.bf16.mxu0 0
      %6573 = vmatpush2.bf16.msra.mxu0 0
      %6574 = vmatprep.subr.bf16.mxu0 0
      %6575 = vmatpush2.bf16.msra.mxu0 0
      %6576 = vmatprep.subr.bf16.mxu0 0
      %6577 = vmatpush2.bf16.msra.mxu0 0
      %6578 = vmatprep.subr.bf16.mxu0 0
      %6579 = vmatpush2.bf16.msra.mxu0 0
      %6580 = vmatprep.subr.bf16.mxu0 0
      %6581 = vmatpush2.bf16.msra.mxu0 0
      %6582 = vmatprep.subr.bf16.mxu0 0
      %6583 = vmatpush2.bf16.msra.mxu0 0
      %6584 = vmatprep.mubr.bf16.mxu0 0
      %6585 = vmatmul.mubr.bf16.gmra.mxu0 %v5851
      %v6586 = vpop.f32.mrf.mxu0
      %v6587 = vadd.f32 %v5661, %v6586
      %v6588 = vpop.f32.mrf.mxu0
      %v6589 = vadd.f32 %v5665, %v6588
      %v6590 = vpop.f32.mrf.mxu0
      %v6591 = vadd.f32 %v5661, %v6590
      %v6592 = vpop.f32.mrf.mxu0
      %v6593 = vadd.f32 %v5665, %v6592
      %6594 = vmatprep.mubr.bf16.mxu0 0
      %6595 = vmatmul.mubr.bf16.gmra.mxu0 %v5854
      %v6596 = vpop.f32.mrf.mxu0
      %v6597 = vadd.f32 %v5661, %v6596
      %v6598 = vpop.f32.mrf.mxu0
      %v6599 = vadd.f32 %v5665, %v6598
      %v6600 = vpop.f32.mrf.mxu0
      %v6601 = vadd.f32 %v5661, %v6600
      %v6602 = vpop.f32.mrf.mxu0
      %v6603 = vadd.f32 %v5665, %v6602
      %6604 = vmatprep.mubr.bf16.mxu0 0
      %6605 = vmatmul.mubr.bf16.gmra.mxu0 %v5857
      %v6606 = vpop.f32.mrf.mxu0
      %v6607 = vadd.f32 %v5661, %v6606
      %v6608 = vpop.f32.mrf.mxu0
      %v6609 = vadd.f32 %v5665, %v6608
      %v6610 = vpop.f32.mrf.mxu0
      %v6611 = vadd.f32 %v5661, %v6610
      %v6612 = vpop.f32.mrf.mxu0
      %v6613 = vadd.f32 %v5665, %v6612
      %6614 = vmatprep.mubr.bf16.mxu0 0
      %6615 = vmatmul.mubr.bf16.gmra.mxu0 %v5860
      %v6616 = vpop.f32.mrf.mxu0
      %v6617 = vadd.f32 %v5661, %v6616
      %v6618 = vpop.f32.mrf.mxu0
      %v6619 = vadd.f32 %v5665, %v6618
      %v6620 = vpop.f32.mrf.mxu0
      %v6621 = vadd.f32 %v5661, %v6620
      %v6622 = vpop.f32.mrf.mxu0
      %v6623 = vadd.f32 %v5665, %v6622
      %6624 = vmatprep.mubr.bf16.mxu0 0
      %6625 = vmatmul.mubr.bf16.gmra.mxu0 %v5863
      %v6626 = vpop.f32.mrf.mxu0
      %v6627 = vadd.f32 %v5661, %v6626
      %v6628 = vpop.f32.mrf.mxu0
      %v6629 = vadd.f32 %v5665, %v6628
      %v6630 = vpop.f32.mrf.mxu0
      %v6631 = vadd.f32 %v5661, %v6630
      %v6632 = vpop.f32.mrf.mxu0
      %v6633 = vadd.f32 %v5665, %v6632
      %6634 = vmatprep.mubr.bf16.mxu0 0
      %6635 = vmatmul.mubr.bf16.gmra.mxu0 %v5866
      %v6636 = vpop.f32.mrf.mxu0
      %v6637 = vadd.f32 %v5661, %v6636
      %v6638 = vpop.f32.mrf.mxu0
      %v6639 = vadd.f32 %v5665, %v6638
      %v6640 = vpop.f32.mrf.mxu0
      %v6641 = vadd.f32 %v5661, %v6640
      %v6642 = vpop.f32.mrf.mxu0
      %v6643 = vadd.f32 %v5665, %v6642
      %6644 = vmatprep.mubr.bf16.mxu0 0
      %6645 = vmatmul.mubr.bf16.gmra.mxu0 %v5869
      %v6646 = vpop.f32.mrf.mxu0
      %v6647 = vadd.f32 %v5661, %v6646
      %v6648 = vpop.f32.mrf.mxu0
      %v6649 = vadd.f32 %v5665, %v6648
      %v6650 = vpop.f32.mrf.mxu0
      %v6651 = vadd.f32 %v5661, %v6650
      %v6652 = vpop.f32.mrf.mxu0
      %v6653 = vadd.f32 %v5665, %v6652
      %6654 = vmatprep.mubr.bf16.mxu0 0
      %6655 = vmatmul.mubr.bf16.gmra.mxu0 %v5872
      %v6656 = vpop.f32.mrf.mxu0
      %v6657 = vadd.f32 %v5661, %v6656
      %v6658 = vpop.f32.mrf.mxu0
      %v6659 = vadd.f32 %v5665, %v6658
      %v6660 = vpop.f32.mrf.mxu0
      %v6661 = vadd.f32 %v5661, %v6660
      %v6662 = vpop.f32.mrf.mxu0
      %v6663 = vadd.f32 %v5665, %v6662
      %6664 = vdwg.mxu0
      %6665 = vmatprep.subr.bf16.mxu0 0
      %6666 = vmatpush1.bf16.msra.mxu0 0
      %6667 = vmatprep.subr.bf16.mxu0 0
      %6668 = vmatpush1.bf16.msra.mxu0 0
      %6669 = vmatprep.subr.bf16.mxu0 0
      %6670 = vmatpush1.bf16.msra.mxu0 0
      %6671 = vmatprep.subr.bf16.mxu0 0
      %6672 = vmatpush1.bf16.msra.mxu0 0
      %6673 = vmatprep.subr.bf16.mxu0 0
      %6674 = vmatpush1.bf16.msra.mxu0 0
      %6675 = vmatprep.subr.bf16.mxu0 0
      %6676 = vmatpush1.bf16.msra.mxu0 0
      %6677 = vmatprep.subr.bf16.mxu0 %v5817
      %6678 = vmatpush1.bf16.msra.mxu0 %v5816
      %6679 = vmatprep.subr.bf16.mxu0 %v5801
      %6680 = vmatpush1.bf16.msra.mxu0 %v5800
      %6681 = vmatprep.subr.bf16.mxu0 0
      %6682 = vmatpush2.bf16.msra.mxu0 0
      %6683 = vmatprep.subr.bf16.mxu0 0
      %6684 = vmatpush2.bf16.msra.mxu0 0
      %6685 = vmatprep.subr.bf16.mxu0 0
      %6686 = vmatpush2.bf16.msra.mxu0 0
      %6687 = vmatprep.subr.bf16.mxu0 0
      %6688 = vmatpush2.bf16.msra.mxu0 0
      %6689 = vmatprep.subr.bf16.mxu0 0
      %6690 = vmatpush2.bf16.msra.mxu0 0
      %6691 = vmatprep.subr.bf16.mxu0 0
      %6692 = vmatpush2.bf16.msra.mxu0 0
      %6693 = vmatprep.subr.bf16.mxu0 0
      %6694 = vmatpush2.bf16.msra.mxu0 0
      %6695 = vmatprep.subr.bf16.mxu0 0
      %6696 = vmatpush2.bf16.msra.mxu0 0
      %6697 = vmatprep.mubr.bf16.mxu0 0
      %6698 = vmatmul.mubr.bf16.gmra.mxu0 %v5851
      %v6699 = vpop.f32.mrf.mxu0
      %v6700 = vadd.f32 %v5669, %v6699
      %v6701 = vpop.f32.mrf.mxu0
      %v6702 = vadd.f32 %v5673, %v6701
      %v6703 = vpop.f32.mrf.mxu0
      %v6704 = vadd.f32 %v5669, %v6703
      %v6705 = vpop.f32.mrf.mxu0
      %v6706 = vadd.f32 %v5673, %v6705
      %6707 = vmatprep.mubr.bf16.mxu0 0
      %6708 = vmatmul.mubr.bf16.gmra.mxu0 %v5854
      %v6709 = vpop.f32.mrf.mxu0
      %v6710 = vadd.f32 %v5669, %v6709
      %v6711 = vpop.f32.mrf.mxu0
      %v6712 = vadd.f32 %v5673, %v6711
      %v6713 = vpop.f32.mrf.mxu0
      %v6714 = vadd.f32 %v5669, %v6713
      %v6715 = vpop.f32.mrf.mxu0
      %v6716 = vadd.f32 %v5673, %v6715
      %6717 = vmatprep.mubr.bf16.mxu0 0
      %6718 = vmatmul.mubr.bf16.gmra.mxu0 %v5857
      %v6719 = vpop.f32.mrf.mxu0
      %v6720 = vadd.f32 %v5669, %v6719
      %v6721 = vpop.f32.mrf.mxu0
      %v6722 = vadd.f32 %v5673, %v6721
      %v6723 = vpop.f32.mrf.mxu0
      %v6724 = vadd.f32 %v5669, %v6723
      %v6725 = vpop.f32.mrf.mxu0
      %v6726 = vadd.f32 %v5673, %v6725
      %6727 = vmatprep.mubr.bf16.mxu0 0
      %6728 = vmatmul.mubr.bf16.gmra.mxu0 %v5860
      %v6729 = vpop.f32.mrf.mxu0
      %v6730 = vadd.f32 %v5669, %v6729
      %v6731 = vpop.f32.mrf.mxu0
      %v6732 = vadd.f32 %v5673, %v6731
      %v6733 = vpop.f32.mrf.mxu0
      %v6734 = vadd.f32 %v5669, %v6733
      %v6735 = vpop.f32.mrf.mxu0
      %v6736 = vadd.f32 %v5673, %v6735
      %6737 = vmatprep.mubr.bf16.mxu0 0
      %6738 = vmatmul.mubr.bf16.gmra.mxu0 %v5863
      %v6739 = vpop.f32.mrf.mxu0
      %v6740 = vadd.f32 %v5669, %v6739
      %v6741 = vpop.f32.mrf.mxu0
      %v6742 = vadd.f32 %v5673, %v6741
      %v6743 = vpop.f32.mrf.mxu0
      %v6744 = vadd.f32 %v5669, %v6743
      %v6745 = vpop.f32.mrf.mxu0
      %v6746 = vadd.f32 %v5673, %v6745
      %6747 = vmatprep.mubr.bf16.mxu0 0
      %6748 = vmatmul.mubr.bf16.gmra.mxu0 %v5866
      %v6749 = vpop.f32.mrf.mxu0
      %v6750 = vadd.f32 %v5669, %v6749
      %v6751 = vpop.f32.mrf.mxu0
      %v6752 = vadd.f32 %v5673, %v6751
      %v6753 = vpop.f32.mrf.mxu0
      %v6754 = vadd.f32 %v5669, %v6753
      %v6755 = vpop.f32.mrf.mxu0
      %v6756 = vadd.f32 %v5673, %v6755
      %6757 = vmatprep.mubr.bf16.mxu0 0
      %6758 = vmatmul.mubr.bf16.gmra.mxu0 %v5869
      %v6759 = vpop.f32.mrf.mxu0
      %v6760 = vadd.f32 %v5669, %v6759
      %v6761 = vpop.f32.mrf.mxu0
      %v6762 = vadd.f32 %v5673, %v6761
      %v6763 = vpop.f32.mrf.mxu0
      %v6764 = vadd.f32 %v5669, %v6763
      %v6765 = vpop.f32.mrf.mxu0
      %v6766 = vadd.f32 %v5673, %v6765
      %6767 = vmatprep.mubr.bf16.mxu0 0
      %6768 = vmatmul.mubr.bf16.gmra.mxu0 %v5872
      %v6769 = vpop.f32.mrf.mxu0
      %v6770 = vadd.f32 %v5669, %v6769
      %v6771 = vpop.f32.mrf.mxu0
      %v6772 = vadd.f32 %v5673, %v6771
      %v6773 = vpop.f32.mrf.mxu0
      %v6774 = vadd.f32 %v5669, %v6773
      %v6775 = vpop.f32.mrf.mxu0
      %v6776 = vadd.f32 %v5673, %v6775
      %6777 = vdwg.mxu0
      %v6778 = vmax.f32 %v5909, 0.0
      %v6779 = vmax.f32 %v5911, 0.0
      %v6780 = vmax.f32 %v6022, 0.0
      %v6781 = vmax.f32 %v6024, 0.0
      %v6782 = vmax.f32 %v6135, 0.0
      %v6783 = vmax.f32 %v6137, 0.0
      %v6784 = vmax.f32 %v6248, 0.0
      %v6785 = vmax.f32 %v6250, 0.0
      %v6786 = vmax.f32 %v6361, 0.0
      %v6787 = vmax.f32 %v6363, 0.0
      %v6788 = vmax.f32 %v6474, 0.0
      %v6789 = vmax.f32 %v6476, 0.0
      %v6790 = vmax.f32 %v6587, 0.0
      %v6791 = vmax.f32 %v6589, 0.0
      %v6792 = vmax.f32 %v6700, 0.0
      %v6793 = vmax.f32 %v6702, 0.0
      %v6794 = vmax.f32 %v5913, 0.0
      %v6795 = vmax.f32 %v5915, 0.0
      %v6796 = vmax.f32 %v6026, 0.0
      %v6797 = vmax.f32 %v6028, 0.0
      %v6798 = vmax.f32 %v6139, 0.0
      %v6799 = vmax.f32 %v6141, 0.0
      %v6800 = vmax.f32 %v6252, 0.0
      %v6801 = vmax.f32 %v6254, 0.0
      %v6802 = vmax.f32 %v6365, 0.0
      %v6803 = vmax.f32 %v6367, 0.0
      %v6804 = vmax.f32 %v6478, 0.0
      %v6805 = vmax.f32 %v6480, 0.0
      %v6806 = vmax.f32 %v6591, 0.0
      %v6807 = vmax.f32 %v6593, 0.0
      %v6808 = vmax.f32 %v6704, 0.0
      %v6809 = vmax.f32 %v6706, 0.0
      %v6810 = vmax.f32 %v5919, 0.0
      %v6811 = vmax.f32 %v5921, 0.0
      %v6812 = vmax.f32 %v6032, 0.0
      %v6813 = vmax.f32 %v6034, 0.0
      %v6814 = vmax.f32 %v6145, 0.0
      %v6815 = vmax.f32 %v6147, 0.0
      %v6816 = vmax.f32 %v6258, 0.0
      %v6817 = vmax.f32 %v6260, 0.0
      %v6818 = vmax.f32 %v6371, 0.0
      %v6819 = vmax.f32 %v6373, 0.0
      %v6820 = vmax.f32 %v6484, 0.0
      %v6821 = vmax.f32 %v6486, 0.0
      %v6822 = vmax.f32 %v6597, 0.0
      %v6823 = vmax.f32 %v6599, 0.0
      %v6824 = vmax.f32 %v6710, 0.0
      %v6825 = vmax.f32 %v6712, 0.0
      %v6826 = vmax.f32 %v5923, 0.0
      %v6827 = vmax.f32 %v5925, 0.0
      %v6828 = vmax.f32 %v6036, 0.0
      %v6829 = vmax.f32 %v6038, 0.0
      %v6830 = vmax.f32 %v6149, 0.0
      %v6831 = vmax.f32 %v6151, 0.0
      %v6832 = vmax.f32 %v6262, 0.0
      %v6833 = vmax.f32 %v6264, 0.0
      %v6834 = vmax.f32 %v6375, 0.0
      %v6835 = vmax.f32 %v6377, 0.0
      %v6836 = vmax.f32 %v6488, 0.0
      %v6837 = vmax.f32 %v6490, 0.0
      %v6838 = vmax.f32 %v6601, 0.0
      %v6839 = vmax.f32 %v6603, 0.0
      %v6840 = vmax.f32 %v6714, 0.0
      %v6841 = vmax.f32 %v6716, 0.0
      %v6842 = vmax.f32 %v5929, 0.0
      %v6843 = vmax.f32 %v5931, 0.0
      %v6844 = vmax.f32 %v6042, 0.0
      %v6845 = vmax.f32 %v6044, 0.0
      %v6846 = vmax.f32 %v6155, 0.0
      %v6847 = vmax.f32 %v6157, 0.0
      %v6848 = vmax.f32 %v6268, 0.0
      %v6849 = vmax.f32 %v6270, 0.0
      %v6850 = vmax.f32 %v6381, 0.0
      %v6851 = vmax.f32 %v6383, 0.0
      %v6852 = vmax.f32 %v6494, 0.0
      %v6853 = vmax.f32 %v6496, 0.0
      %v6854 = vmax.f32 %v6607, 0.0
      %v6855 = vmax.f32 %v6609, 0.0
      %v6856 = vmax.f32 %v6720, 0.0
      %v6857 = vmax.f32 %v6722, 0.0
      %v6858 = vmax.f32 %v5933, 0.0
      %v6859 = vmax.f32 %v5935, 0.0
      %v6860 = vmax.f32 %v6046, 0.0
      %v6861 = vmax.f32 %v6048, 0.0
      %v6862 = vmax.f32 %v6159, 0.0
      %v6863 = vmax.f32 %v6161, 0.0
      %v6864 = vmax.f32 %v6272, 0.0
      %v6865 = vmax.f32 %v6274, 0.0
      %v6866 = vmax.f32 %v6385, 0.0
      %v6867 = vmax.f32 %v6387, 0.0
      %v6868 = vmax.f32 %v6498, 0.0
      %v6869 = vmax.f32 %v6500, 0.0
      %v6870 = vmax.f32 %v6611, 0.0
      %v6871 = vmax.f32 %v6613, 0.0
      %v6872 = vmax.f32 %v6724, 0.0
      %v6873 = vmax.f32 %v6726, 0.0
      %v6874 = vmax.f32 %v5939, 0.0
      %v6875 = vmax.f32 %v5941, 0.0
      %v6876 = vmax.f32 %v6052, 0.0
      %v6877 = vmax.f32 %v6054, 0.0
      %v6878 = vmax.f32 %v6165, 0.0
      %v6879 = vmax.f32 %v6167, 0.0
      %v6880 = vmax.f32 %v6278, 0.0
      %v6881 = vmax.f32 %v6280, 0.0
      %v6882 = vmax.f32 %v6391, 0.0
      %v6883 = vmax.f32 %v6393, 0.0
      %v6884 = vmax.f32 %v6504, 0.0
      %v6885 = vmax.f32 %v6506, 0.0
      %v6886 = vmax.f32 %v6617, 0.0
      %v6887 = vmax.f32 %v6619, 0.0
      %v6888 = vmax.f32 %v6730, 0.0
      %v6889 = vmax.f32 %v6732, 0.0
      %v6890 = vmax.f32 %v5943, 0.0
      %v6891 = vmax.f32 %v5945, 0.0
      %v6892 = vmax.f32 %v6056, 0.0
      %v6893 = vmax.f32 %v6058, 0.0
      %v6894 = vmax.f32 %v6169, 0.0
      %v6895 = vmax.f32 %v6171, 0.0
      %v6896 = vmax.f32 %v6282, 0.0
      %v6897 = vmax.f32 %v6284, 0.0
      %v6898 = vmax.f32 %v6395, 0.0
      %v6899 = vmax.f32 %v6397, 0.0
      %v6900 = vmax.f32 %v6508, 0.0
      %v6901 = vmax.f32 %v6510, 0.0
      %v6902 = vmax.f32 %v6621, 0.0
      %v6903 = vmax.f32 %v6623, 0.0
      %v6904 = vmax.f32 %v6734, 0.0
      %v6905 = vmax.f32 %v6736, 0.0
      %v6906 = vmax.f32 %v5949, 0.0
      %v6907 = vmax.f32 %v5951, 0.0
      %v6908 = vmax.f32 %v6062, 0.0
      %v6909 = vmax.f32 %v6064, 0.0
      %v6910 = vmax.f32 %v6175, 0.0
      %v6911 = vmax.f32 %v6177, 0.0
      %v6912 = vmax.f32 %v6288, 0.0
      %v6913 = vmax.f32 %v6290, 0.0
      %v6914 = vmax.f32 %v6401, 0.0
      %v6915 = vmax.f32 %v6403, 0.0
      %v6916 = vmax.f32 %v6514, 0.0
      %v6917 = vmax.f32 %v6516, 0.0
      %v6918 = vmax.f32 %v6627, 0.0
      %v6919 = vmax.f32 %v6629, 0.0
      %v6920 = vmax.f32 %v6740, 0.0
      %v6921 = vmax.f32 %v6742, 0.0
      %v6922 = vmax.f32 %v5953, 0.0
      %v6923 = vmax.f32 %v5955, 0.0
      %v6924 = vmax.f32 %v6066, 0.0
      %v6925 = vmax.f32 %v6068, 0.0
      %v6926 = vmax.f32 %v6179, 0.0
      %v6927 = vmax.f32 %v6181, 0.0
      %v6928 = vmax.f32 %v6292, 0.0
      %v6929 = vmax.f32 %v6294, 0.0
      %v6930 = vmax.f32 %v6405, 0.0
      %v6931 = vmax.f32 %v6407, 0.0
      %v6932 = vmax.f32 %v6518, 0.0
      %v6933 = vmax.f32 %v6520, 0.0
      %v6934 = vmax.f32 %v6631, 0.0
      %v6935 = vmax.f32 %v6633, 0.0
      %v6936 = vmax.f32 %v6744, 0.0
      %v6937 = vmax.f32 %v6746, 0.0
      %v6938 = vmax.f32 %v5959, 0.0
      %v6939 = vmax.f32 %v5961, 0.0
      %v6940 = vmax.f32 %v6072, 0.0
      %v6941 = vmax.f32 %v6074, 0.0
      %v6942 = vmax.f32 %v6185, 0.0
      %v6943 = vmax.f32 %v6187, 0.0
      %v6944 = vmax.f32 %v6298, 0.0
      %v6945 = vmax.f32 %v6300, 0.0
      %v6946 = vmax.f32 %v6411, 0.0
      %v6947 = vmax.f32 %v6413, 0.0
      %v6948 = vmax.f32 %v6524, 0.0
      %v6949 = vmax.f32 %v6526, 0.0
      %v6950 = vmax.f32 %v6637, 0.0
      %v6951 = vmax.f32 %v6639, 0.0
      %v6952 = vmax.f32 %v6750, 0.0
      %v6953 = vmax.f32 %v6752, 0.0
      %v6954 = vmax.f32 %v5963, 0.0
      %v6955 = vmax.f32 %v5965, 0.0
      %v6956 = vmax.f32 %v6076, 0.0
      %v6957 = vmax.f32 %v6078, 0.0
      %v6958 = vmax.f32 %v6189, 0.0
      %v6959 = vmax.f32 %v6191, 0.0
      %v6960 = vmax.f32 %v6302, 0.0
      %v6961 = vmax.f32 %v6304, 0.0
      %v6962 = vmax.f32 %v6415, 0.0
      %v6963 = vmax.f32 %v6417, 0.0
      %v6964 = vmax.f32 %v6528, 0.0
      %v6965 = vmax.f32 %v6530, 0.0
      %v6966 = vmax.f32 %v6641, 0.0
      %v6967 = vmax.f32 %v6643, 0.0
      %v6968 = vmax.f32 %v6754, 0.0
      %v6969 = vmax.f32 %v6756, 0.0
      %v6970 = vmax.f32 %v5969, 0.0
      %v6971 = vmax.f32 %v5971, 0.0
      %v6972 = vmax.f32 %v6082, 0.0
      %v6973 = vmax.f32 %v6084, 0.0
      %v6974 = vmax.f32 %v6195, 0.0
      %v6975 = vmax.f32 %v6197, 0.0
      %v6976 = vmax.f32 %v6308, 0.0
      %v6977 = vmax.f32 %v6310, 0.0
      %v6978 = vmax.f32 %v6421, 0.0
      %v6979 = vmax.f32 %v6423, 0.0
      %v6980 = vmax.f32 %v6534, 0.0
      %v6981 = vmax.f32 %v6536, 0.0
      %v6982 = vmax.f32 %v6647, 0.0
      %v6983 = vmax.f32 %v6649, 0.0
      %v6984 = vmax.f32 %v6760, 0.0
      %v6985 = vmax.f32 %v6762, 0.0
      %v6986 = vmax.f32 %v5973, 0.0
      %v6987 = vmax.f32 %v5975, 0.0
      %v6988 = vmax.f32 %v6086, 0.0
      %v6989 = vmax.f32 %v6088, 0.0
      %v6990 = vmax.f32 %v6199, 0.0
      %v6991 = vmax.f32 %v6201, 0.0
      %v6992 = vmax.f32 %v6312, 0.0
      %v6993 = vmax.f32 %v6314, 0.0
      %v6994 = vmax.f32 %v6425, 0.0
      %v6995 = vmax.f32 %v6427, 0.0
      %v6996 = vmax.f32 %v6538, 0.0
      %v6997 = vmax.f32 %v6540, 0.0
      %v6998 = vmax.f32 %v6651, 0.0
      %v6999 = vmax.f32 %v6653, 0.0
      %v7000 = vmax.f32 %v6764, 0.0
      %v7001 = vmax.f32 %v6766, 0.0
      %v7002 = vmax.f32 %v5979, 0.0
      %v7003 = vmax.f32 %v5981, 0.0
      %v7004 = vmax.f32 %v6092, 0.0
      %v7005 = vmax.f32 %v6094, 0.0
      %v7006 = vmax.f32 %v6205, 0.0
      %v7007 = vmax.f32 %v6207, 0.0
      %v7008 = vmax.f32 %v6318, 0.0
      %v7009 = vmax.f32 %v6320, 0.0
      %v7010 = vmax.f32 %v6431, 0.0
      %v7011 = vmax.f32 %v6433, 0.0
      %v7012 = vmax.f32 %v6544, 0.0
      %v7013 = vmax.f32 %v6546, 0.0
      %v7014 = vmax.f32 %v6657, 0.0
      %v7015 = vmax.f32 %v6659, 0.0
      %v7016 = vmax.f32 %v6770, 0.0
      %v7017 = vmax.f32 %v6772, 0.0
      %v7018 = vmax.f32 %v5983, 0.0
      %v7019 = vmax.f32 %v5985, 0.0
      %v7020 = vmax.f32 %v6096, 0.0
      %v7021 = vmax.f32 %v6098, 0.0
      %v7022 = vmax.f32 %v6209, 0.0
      %v7023 = vmax.f32 %v6211, 0.0
      %v7024 = vmax.f32 %v6322, 0.0
      %v7025 = vmax.f32 %v6324, 0.0
      %v7026 = vmax.f32 %v6435, 0.0
      %v7027 = vmax.f32 %v6437, 0.0
      %v7028 = vmax.f32 %v6548, 0.0
      %v7029 = vmax.f32 %v6550, 0.0
      %v7030 = vmax.f32 %v6661, 0.0
      %v7031 = vmax.f32 %v6663, 0.0
      %v7032 = vmax.f32 %v6774, 0.0
      %v7033 = vmax.f32 %v6776, 0.0
      %v7034 = vpack.c.bf16 %v6794, %v6778
      %v7035 = vpack.c.bf16 %v6795, %v6779
      %v7036 = vpack.c.bf16 %v6796, %v6780
      %v7037 = vpack.c.bf16 %v6797, %v6781
      %v7038 = vpack.c.bf16 %v6798, %v6782
      %v7039 = vpack.c.bf16 %v6799, %v6783
      %v7040 = vpack.c.bf16 %v6800, %v6784
      %v7041 = vpack.c.bf16 %v6801, %v6785
      %v7042 = vpack.c.bf16 %v6802, %v6786
      %v7043 = vpack.c.bf16 %v6803, %v6787
      %v7044 = vpack.c.bf16 %v6804, %v6788
      %v7045 = vpack.c.bf16 %v6805, %v6789
      %v7046 = vpack.c.bf16 %v6806, %v6790
      %v7047 = vpack.c.bf16 %v6807, %v6791
      %v7048 = vpack.c.bf16 %v6808, %v6792
      %v7049 = vpack.c.bf16 %v6809, %v6793
      %v7050 = vpack.c.bf16 %v6826, %v6810
      %v7051 = vpack.c.bf16 %v6827, %v6811
      %v7052 = vpack.c.bf16 %v6828, %v6812
      %v7053 = vpack.c.bf16 %v6829, %v6813
      %v7054 = vpack.c.bf16 %v6830, %v6814
      %v7055 = vpack.c.bf16 %v6831, %v6815
      %v7056 = vpack.c.bf16 %v6832, %v6816
      %v7057 = vpack.c.bf16 %v6833, %v6817
      %v7058 = vpack.c.bf16 %v6834, %v6818
      %v7059 = vpack.c.bf16 %v6835, %v6819
      %v7060 = vpack.c.bf16 %v6836, %v6820
      %v7061 = vpack.c.bf16 %v6837, %v6821
      %v7062 = vpack.c.bf16 %v6838, %v6822
      %v7063 = vpack.c.bf16 %v6839, %v6823
      %v7064 = vpack.c.bf16 %v6840, %v6824
      %v7065 = vpack.c.bf16 %v6841, %v6825
      %v7066 = vpack.c.bf16 %v6858, %v6842
      %v7067 = vpack.c.bf16 %v6859, %v6843
      %v7068 = vpack.c.bf16 %v6860, %v6844
      %v7069 = vpack.c.bf16 %v6861, %v6845
      %v7070 = vpack.c.bf16 %v6862, %v6846
      %v7071 = vpack.c.bf16 %v6863, %v6847
      %v7072 = vpack.c.bf16 %v6864, %v6848
      %v7073 = vpack.c.bf16 %v6865, %v6849
      %v7074 = vpack.c.bf16 %v6866, %v6850
      %v7075 = vpack.c.bf16 %v6867, %v6851
      %v7076 = vpack.c.bf16 %v6868, %v6852
      %v7077 = vpack.c.bf16 %v6869, %v6853
      %v7078 = vpack.c.bf16 %v6870, %v6854
      %v7079 = vpack.c.bf16 %v6871, %v6855
      %v7080 = vpack.c.bf16 %v6872, %v6856
      %v7081 = vpack.c.bf16 %v6873, %v6857
      %v7082 = vpack.c.bf16 %v6890, %v6874
      %v7083 = vpack.c.bf16 %v6891, %v6875
      %v7084 = vpack.c.bf16 %v6892, %v6876
      %v7085 = vpack.c.bf16 %v6893, %v6877
      %v7086 = vpack.c.bf16 %v6894, %v6878
      %v7087 = vpack.c.bf16 %v6895, %v6879
      %v7088 = vpack.c.bf16 %v6896, %v6880
      %v7089 = vpack.c.bf16 %v6897, %v6881
      %v7090 = vpack.c.bf16 %v6898, %v6882
      %v7091 = vpack.c.bf16 %v6899, %v6883
      %v7092 = vpack.c.bf16 %v6900, %v6884
      %v7093 = vpack.c.bf16 %v6901, %v6885
      %v7094 = vpack.c.bf16 %v6902, %v6886
      %v7095 = vpack.c.bf16 %v6903, %v6887
      %v7096 = vpack.c.bf16 %v6904, %v6888
      %v7097 = vpack.c.bf16 %v6905, %v6889
      %v7098 = vpack.c.bf16 %v6922, %v6906
      %v7099 = vpack.c.bf16 %v6923, %v6907
      %v7100 = vpack.c.bf16 %v6924, %v6908
      %v7101 = vpack.c.bf16 %v6925, %v6909
      %v7102 = vpack.c.bf16 %v6926, %v6910
      %v7103 = vpack.c.bf16 %v6927, %v6911
      %v7104 = vpack.c.bf16 %v6928, %v6912
      %v7105 = vpack.c.bf16 %v6929, %v6913
      %v7106 = vpack.c.bf16 %v6930, %v6914
      %v7107 = vpack.c.bf16 %v6931, %v6915
      %v7108 = vpack.c.bf16 %v6932, %v6916
      %v7109 = vpack.c.bf16 %v6933, %v6917
      %v7110 = vpack.c.bf16 %v6934, %v6918
      %v7111 = vpack.c.bf16 %v6935, %v6919
      %v7112 = vpack.c.bf16 %v6936, %v6920
      %v7113 = vpack.c.bf16 %v6937, %v6921
      %v7114 = vpack.c.bf16 %v6954, %v6938
      %v7115 = vpack.c.bf16 %v6955, %v6939
      %v7116 = vpack.c.bf16 %v6956, %v6940
      %v7117 = vpack.c.bf16 %v6957, %v6941
      %v7118 = vpack.c.bf16 %v6958, %v6942
      %v7119 = vpack.c.bf16 %v6959, %v6943
      %v7120 = vpack.c.bf16 %v6960, %v6944
      %v7121 = vpack.c.bf16 %v6961, %v6945
      %v7122 = vpack.c.bf16 %v6962, %v6946
      %v7123 = vpack.c.bf16 %v6963, %v6947
      %v7124 = vpack.c.bf16 %v6964, %v6948
      %v7125 = vpack.c.bf16 %v6965, %v6949
      %v7126 = vpack.c.bf16 %v6966, %v6950
      %v7127 = vpack.c.bf16 %v6967, %v6951
      %v7128 = vpack.c.bf16 %v6968, %v6952
      %v7129 = vpack.c.bf16 %v6969, %v6953
      %v7130 = vpack.c.bf16 %v6986, %v6970
      %v7131 = vpack.c.bf16 %v6987, %v6971
      %v7132 = vpack.c.bf16 %v6988, %v6972
      %v7133 = vpack.c.bf16 %v6989, %v6973
      %v7134 = vpack.c.bf16 %v6990, %v6974
      %v7135 = vpack.c.bf16 %v6991, %v6975
      %v7136 = vpack.c.bf16 %v6992, %v6976
      %v7137 = vpack.c.bf16 %v6993, %v6977
      %v7138 = vpack.c.bf16 %v6994, %v6978
      %v7139 = vpack.c.bf16 %v6995, %v6979
      %v7140 = vpack.c.bf16 %v6996, %v6980
      %v7141 = vpack.c.bf16 %v6997, %v6981
      %v7142 = vpack.c.bf16 %v6998, %v6982
      %v7143 = vpack.c.bf16 %v6999, %v6983
      %v7144 = vpack.c.bf16 %v7000, %v6984
      %v7145 = vpack.c.bf16 %v7001, %v6985
      %v7146 = vpack.c.bf16 %v7018, %v7002
      %v7147 = vpack.c.bf16 %v7019, %v7003
      %v7148 = vpack.c.bf16 %v7020, %v7004
      %v7149 = vpack.c.bf16 %v7021, %v7005
      %v7150 = vpack.c.bf16 %v7022, %v7006
      %v7151 = vpack.c.bf16 %v7023, %v7007
      %v7152 = vpack.c.bf16 %v7024, %v7008
      %v7153 = vpack.c.bf16 %v7025, %v7009
      %v7154 = vpack.c.bf16 %v7026, %v7010
      %v7155 = vpack.c.bf16 %v7027, %v7011
      %v7156 = vpack.c.bf16 %v7028, %v7012
      %v7157 = vpack.c.bf16 %v7029, %v7013
      %v7158 = vpack.c.bf16 %v7030, %v7014
      %v7159 = vpack.c.bf16 %v7031, %v7015
      %v7160 = vpack.c.bf16 %v7032, %v7016
      %v7161 = vpack.c.bf16 %v7033, %v7017
      %v7162 = vld [vmem:[%s884] sm:$0xf]
      %v7163 = vld [vmem:[%s884 + $0x4] sm:$0xf]
      %v7164 = vld [vmem:[%s884 + $0x8] sm:$0xf]
      %v7165 = vld [vmem:[%s884 + $0xc] sm:$0xf]
      %v7166 = vld [vmem:[%s884 + $0x10] sm:$0xf]
      %v7167 = vld [vmem:[%s884 + $0x14] sm:$0xf]
      %v7168 = vld [vmem:[%s884 + $0x18] sm:$0xf]
      %v7169 = vld [vmem:[%s884 + $0x1c] sm:$0xf]
      %v7170 = vld [vmem:[%s884 + $0x20] sm:$0xf]
      %v7171 = vld [vmem:[%s884 + $0x24] sm:$0xf]
      %v7172 = vld [vmem:[%s884 + $0x28] sm:$0xf]
      %v7173 = vld [vmem:[%s884 + $0x2c] sm:$0xf]
      %v7174 = vld [vmem:[%s884 + $0x30] sm:$0xf]
      %v7175 = vld [vmem:[%s884 + $0x34] sm:$0xf]
      %v7176 = vld [vmem:[%s884 + $0x38] sm:$0xf]
      %v7177 = vld [vmem:[%s884 + $0x3c] sm:$0xf]
      %v7178 = vld [vmem:[%s884 + $0x40] sm:$0xf]
      %v7179 = vld [vmem:[%s884 + $0x44] sm:$0xf]
      %v7180 = vld [vmem:[%s884 + $0x48] sm:$0xf]
      %v7181 = vld [vmem:[%s884 + $0x4c] sm:$0xf]
      %v7182 = vld [vmem:[%s884 + $0x50] sm:$0xf]
      %v7183 = vld [vmem:[%s884 + $0x54] sm:$0xf]
      %v7184 = vld [vmem:[%s884 + $0x58] sm:$0xf]
      %v7185 = vld [vmem:[%s884 + $0x5c] sm:$0xf]
      %v7186 = vld [vmem:[%s884 + $0x60] sm:$0xf]
      %v7187 = vld [vmem:[%s884 + $0x64] sm:$0xf]
      %v7188 = vld [vmem:[%s884 + $0x68] sm:$0xf]
      %v7189 = vld [vmem:[%s884 + $0x6c] sm:$0xf]
      %v7190 = vld [vmem:[%s884 + $0x70] sm:$0xf]
      %v7191 = vld [vmem:[%s884 + $0x74] sm:$0xf]
      %v7192 = vld [vmem:[%s884 + $0x78] sm:$0xf]
      %v7193 = vld [vmem:[%s884 + $0x7c] sm:$0xf]
      %v7194 = vld [vmem:[%s884 + $0x80] sm:$0xf]
      %v7195 = vld [vmem:[%s884 + $0x84] sm:$0xf]
      %v7196 = vld [vmem:[%s884 + $0x88] sm:$0xf]
      %v7197 = vld [vmem:[%s884 + $0x8c] sm:$0xf]
      %v7198 = vld [vmem:[%s884 + $0x90] sm:$0xf]
      %v7199 = vld [vmem:[%s884 + $0x94] sm:$0xf]
      %v7200 = vld [vmem:[%s884 + $0x98] sm:$0xf]
      %v7201 = vld [vmem:[%s884 + $0x9c] sm:$0xf]
      %v7202 = vld [vmem:[%s884 + $0xa0] sm:$0xf]
      %v7203 = vld [vmem:[%s884 + $0xa4] sm:$0xf]
      %v7204 = vld [vmem:[%s884 + $0xa8] sm:$0xf]
      %v7205 = vld [vmem:[%s884 + $0xac] sm:$0xf]
      %v7206 = vld [vmem:[%s884 + $0xb0] sm:$0xf]
      %v7207 = vld [vmem:[%s884 + $0xb4] sm:$0xf]
      %v7208 = vld [vmem:[%s884 + $0xb8] sm:$0xf]
      %v7209 = vld [vmem:[%s884 + $0xbc] sm:$0xf]
      %v7210 = vld [vmem:[%s884 + $0xc0] sm:$0xf]
      %v7211 = vld [vmem:[%s884 + $0xc4] sm:$0xf]
      %v7212 = vld [vmem:[%s884 + $0xc8] sm:$0xf]
      %v7213 = vld [vmem:[%s884 + $0xcc] sm:$0xf]
      %v7214 = vld [vmem:[%s884 + $0xd0] sm:$0xf]
      %v7215 = vld [vmem:[%s884 + $0xd4] sm:$0xf]
      %v7216 = vld [vmem:[%s884 + $0xd8] sm:$0xf]
      %v7217 = vld [vmem:[%s884 + $0xdc] sm:$0xf]
      %v7218 = vld [vmem:[%s884 + $0xe0] sm:$0xf]
      %v7219 = vld [vmem:[%s884 + $0xe4] sm:$0xf]
      %v7220 = vld [vmem:[%s884 + $0xe8] sm:$0xf]
      %v7221 = vld [vmem:[%s884 + $0xec] sm:$0xf]
      %v7222 = vld [vmem:[%s884 + $0xf0] sm:$0xf]
      %v7223 = vld [vmem:[%s884 + $0xf4] sm:$0xf]
      %v7224 = vld [vmem:[%s884 + $0xf8] sm:$0xf]
      %v7225 = vld [vmem:[%s884 + $0xfc] sm:$0xf]
      %v7226 = vld [vmem:[%s884 + $0x100] sm:$0xf]
      %v7227 = vld [vmem:[%s884 + $0x104] sm:$0xf]
      %v7228 = vld [vmem:[%s884 + $0x108] sm:$0xf]
      %v7229 = vld [vmem:[%s884 + $0x10c] sm:$0xf]
      %v7230 = vld [vmem:[%s884 + $0x110] sm:$0xf]
      %v7231 = vld [vmem:[%s884 + $0x114] sm:$0xf]
      %v7232 = vld [vmem:[%s884 + $0x118] sm:$0xf]
      %v7233 = vld [vmem:[%s884 + $0x11c] sm:$0xf]
      %v7234 = vld [vmem:[%s884 + $0x120] sm:$0xf]
      %v7235 = vld [vmem:[%s884 + $0x124] sm:$0xf]
      %v7236 = vld [vmem:[%s884 + $0x128] sm:$0xf]
      %v7237 = vld [vmem:[%s884 + $0x12c] sm:$0xf]
      %v7238 = vld [vmem:[%s884 + $0x130] sm:$0xf]
      %v7239 = vld [vmem:[%s884 + $0x134] sm:$0xf]
      %v7240 = vld [vmem:[%s884 + $0x138] sm:$0xf]
      %v7241 = vld [vmem:[%s884 + $0x13c] sm:$0xf]
      %v7242 = vld [vmem:[%s884 + $0x140] sm:$0xf]
      %v7243 = vld [vmem:[%s884 + $0x144] sm:$0xf]
      %v7244 = vld [vmem:[%s884 + $0x148] sm:$0xf]
      %v7245 = vld [vmem:[%s884 + $0x14c] sm:$0xf]
      %v7246 = vld [vmem:[%s884 + $0x150] sm:$0xf]
      %v7247 = vld [vmem:[%s884 + $0x154] sm:$0xf]
      %v7248 = vld [vmem:[%s884 + $0x158] sm:$0xf]
      %v7249 = vld [vmem:[%s884 + $0x15c] sm:$0xf]
      %v7250 = vld [vmem:[%s884 + $0x160] sm:$0xf]
      %v7251 = vld [vmem:[%s884 + $0x164] sm:$0xf]
      %v7252 = vld [vmem:[%s884 + $0x168] sm:$0xf]
      %v7253 = vld [vmem:[%s884 + $0x16c] sm:$0xf]
      %v7254 = vld [vmem:[%s884 + $0x170] sm:$0xf]
      %v7255 = vld [vmem:[%s884 + $0x174] sm:$0xf]
      %v7256 = vld [vmem:[%s884 + $0x178] sm:$0xf]
      %v7257 = vld [vmem:[%s884 + $0x17c] sm:$0xf]
      %v7258 = vld [vmem:[%s884 + $0x180] sm:$0xf]
      %v7259 = vld [vmem:[%s884 + $0x184] sm:$0xf]
      %v7260 = vld [vmem:[%s884 + $0x188] sm:$0xf]
      %v7261 = vld [vmem:[%s884 + $0x18c] sm:$0xf]
      %v7262 = vld [vmem:[%s884 + $0x190] sm:$0xf]
      %v7263 = vld [vmem:[%s884 + $0x194] sm:$0xf]
      %v7264 = vld [vmem:[%s884 + $0x198] sm:$0xf]
      %v7265 = vld [vmem:[%s884 + $0x19c] sm:$0xf]
      %v7266 = vld [vmem:[%s884 + $0x1a0] sm:$0xf]
      %v7267 = vld [vmem:[%s884 + $0x1a4] sm:$0xf]
      %v7268 = vld [vmem:[%s884 + $0x1a8] sm:$0xf]
      %v7269 = vld [vmem:[%s884 + $0x1ac] sm:$0xf]
      %v7270 = vld [vmem:[%s884 + $0x1b0] sm:$0xf]
      %v7271 = vld [vmem:[%s884 + $0x1b4] sm:$0xf]
      %v7272 = vld [vmem:[%s884 + $0x1b8] sm:$0xf]
      %v7273 = vld [vmem:[%s884 + $0x1bc] sm:$0xf]
      %v7274 = vld [vmem:[%s884 + $0x1c0] sm:$0xf]
      %v7275 = vld [vmem:[%s884 + $0x1c4] sm:$0xf]
      %v7276 = vld [vmem:[%s884 + $0x1c8] sm:$0xf]
      %v7277 = vld [vmem:[%s884 + $0x1cc] sm:$0xf]
      %v7278 = vld [vmem:[%s884 + $0x1d0] sm:$0xf]
      %v7279 = vld [vmem:[%s884 + $0x1d4] sm:$0xf]
      %v7280 = vld [vmem:[%s884 + $0x1d8] sm:$0xf]
      %v7281 = vld [vmem:[%s884 + $0x1dc] sm:$0xf]
      %v7282 = vld [vmem:[%s884 + $0x1e0] sm:$0xf]
      %v7283 = vld [vmem:[%s884 + $0x1e4] sm:$0xf]
      %v7284 = vld [vmem:[%s884 + $0x1e8] sm:$0xf]
      %v7285 = vld [vmem:[%s884 + $0x1ec] sm:$0xf]
      %v7286 = vld [vmem:[%s884 + $0x1f0] sm:$0xf]
      %v7287 = vld [vmem:[%s884 + $0x1f4] sm:$0xf]
      %v7288 = vld [vmem:[%s884 + $0x1f8] sm:$0xf]
      %v7289 = vld [vmem:[%s884 + $0x1fc] sm:$0xf]
      %v7290 = vld [vmem:[%s884 + $0x200] sm:$0xf]
      %v7291 = vld [vmem:[%s884 + $0x204] sm:$0xf]
      %v7292 = vld [vmem:[%s884 + $0x208] sm:$0xf]
      %v7293 = vld [vmem:[%s884 + $0x20c] sm:$0xf]
      %v7294 = vld [vmem:[%s884 + $0x210] sm:$0xf]
      %v7295 = vld [vmem:[%s884 + $0x214] sm:$0xf]
      %v7296 = vld [vmem:[%s884 + $0x218] sm:$0xf]
      %v7297 = vld [vmem:[%s884 + $0x21c] sm:$0xf]
      %v7298 = vld [vmem:[%s884 + $0x220] sm:$0xf]
      %v7299 = vld [vmem:[%s884 + $0x224] sm:$0xf]
      %v7300 = vld [vmem:[%s884 + $0x228] sm:$0xf]
      %v7301 = vld [vmem:[%s884 + $0x22c] sm:$0xf]
      %v7302 = vld [vmem:[%s884 + $0x230] sm:$0xf]
      %v7303 = vld [vmem:[%s884 + $0x234] sm:$0xf]
      %v7304 = vld [vmem:[%s884 + $0x238] sm:$0xf]
      %v7305 = vld [vmem:[%s884 + $0x23c] sm:$0xf]
      %v7306 = vld [vmem:[%s884 + $0x240] sm:$0xf]
      %v7307 = vld [vmem:[%s884 + $0x244] sm:$0xf]
      %v7308 = vld [vmem:[%s884 + $0x248] sm:$0xf]
      %v7309 = vld [vmem:[%s884 + $0x24c] sm:$0xf]
      %v7310 = vld [vmem:[%s884 + $0x250] sm:$0xf]
      %v7311 = vld [vmem:[%s884 + $0x254] sm:$0xf]
      %v7312 = vld [vmem:[%s884 + $0x258] sm:$0xf]
      %v7313 = vld [vmem:[%s884 + $0x25c] sm:$0xf]
      %v7314 = vld [vmem:[%s884 + $0x260] sm:$0xf]
      %v7315 = vld [vmem:[%s884 + $0x264] sm:$0xf]
      %v7316 = vld [vmem:[%s884 + $0x268] sm:$0xf]
      %v7317 = vld [vmem:[%s884 + $0x26c] sm:$0xf]
      %v7318 = vld [vmem:[%s884 + $0x270] sm:$0xf]
      %v7319 = vld [vmem:[%s884 + $0x274] sm:$0xf]
      %v7320 = vld [vmem:[%s884 + $0x278] sm:$0xf]
      %v7321 = vld [vmem:[%s884 + $0x27c] sm:$0xf]
      %v7322 = vld [vmem:[%s884 + $0x280] sm:$0xf]
      %v7323 = vld [vmem:[%s884 + $0x284] sm:$0xf]
      %v7324 = vld [vmem:[%s884 + $0x288] sm:$0xf]
      %v7325 = vld [vmem:[%s884 + $0x28c] sm:$0xf]
      %v7326 = vld [vmem:[%s884 + $0x290] sm:$0xf]
      %v7327 = vld [vmem:[%s884 + $0x294] sm:$0xf]
      %v7328 = vld [vmem:[%s884 + $0x298] sm:$0xf]
      %v7329 = vld [vmem:[%s884 + $0x29c] sm:$0xf]
      %v7330 = vld [vmem:[%s884 + $0x2a0] sm:$0xf]
      %v7331 = vld [vmem:[%s884 + $0x2a4] sm:$0xf]
      %v7332 = vld [vmem:[%s884 + $0x2a8] sm:$0xf]
      %v7333 = vld [vmem:[%s884 + $0x2ac] sm:$0xf]
      %v7334 = vld [vmem:[%s884 + $0x2b0] sm:$0xf]
      %v7335 = vld [vmem:[%s884 + $0x2b4] sm:$0xf]
      %v7336 = vld [vmem:[%s884 + $0x2b8] sm:$0xf]
      %v7337 = vld [vmem:[%s884 + $0x2bc] sm:$0xf]
      %v7338 = vld [vmem:[%s884 + $0x2c0] sm:$0xf]
      %v7339 = vld [vmem:[%s884 + $0x2c4] sm:$0xf]
      %v7340 = vld [vmem:[%s884 + $0x2c8] sm:$0xf]
      %v7341 = vld [vmem:[%s884 + $0x2cc] sm:$0xf]
      %v7342 = vld [vmem:[%s884 + $0x2d0] sm:$0xf]
      %v7343 = vld [vmem:[%s884 + $0x2d4] sm:$0xf]
      %v7344 = vld [vmem:[%s884 + $0x2d8] sm:$0xf]
      %v7345 = vld [vmem:[%s884 + $0x2dc] sm:$0xf]
      %v7346 = vld [vmem:[%s884 + $0x2e0] sm:$0xf]
      %v7347 = vld [vmem:[%s884 + $0x2e4] sm:$0xf]
      %v7348 = vld [vmem:[%s884 + $0x2e8] sm:$0xf]
      %v7349 = vld [vmem:[%s884 + $0x2ec] sm:$0xf]
      %v7350 = vld [vmem:[%s884 + $0x2f0] sm:$0xf]
      %v7351 = vld [vmem:[%s884 + $0x2f4] sm:$0xf]
      %v7352 = vld [vmem:[%s884 + $0x2f8] sm:$0xf]
      %v7353 = vld [vmem:[%s884 + $0x2fc] sm:$0xf]
      %v7354 = vld [vmem:[%s884 + $0x300] sm:$0xf]
      %v7355 = vld [vmem:[%s884 + $0x304] sm:$0xf]
      %v7356 = vld [vmem:[%s884 + $0x308] sm:$0xf]
      %v7357 = vld [vmem:[%s884 + $0x30c] sm:$0xf]
      %v7358 = vld [vmem:[%s884 + $0x310] sm:$0xf]
      %v7359 = vld [vmem:[%s884 + $0x314] sm:$0xf]
      %v7360 = vld [vmem:[%s884 + $0x318] sm:$0xf]
      %v7361 = vld [vmem:[%s884 + $0x31c] sm:$0xf]
      %v7362 = vld [vmem:[%s884 + $0x320] sm:$0xf]
      %v7363 = vld [vmem:[%s884 + $0x324] sm:$0xf]
      %v7364 = vld [vmem:[%s884 + $0x328] sm:$0xf]
      %v7365 = vld [vmem:[%s884 + $0x32c] sm:$0xf]
      %v7366 = vld [vmem:[%s884 + $0x330] sm:$0xf]
      %v7367 = vld [vmem:[%s884 + $0x334] sm:$0xf]
      %v7368 = vld [vmem:[%s884 + $0x338] sm:$0xf]
      %v7369 = vld [vmem:[%s884 + $0x33c] sm:$0xf]
      %v7370 = vld [vmem:[%s884 + $0x340] sm:$0xf]
      %v7371 = vld [vmem:[%s884 + $0x344] sm:$0xf]
      %v7372 = vld [vmem:[%s884 + $0x348] sm:$0xf]
      %v7373 = vld [vmem:[%s884 + $0x34c] sm:$0xf]
      %v7374 = vld [vmem:[%s884 + $0x350] sm:$0xf]
      %v7375 = vld [vmem:[%s884 + $0x354] sm:$0xf]
      %v7376 = vld [vmem:[%s884 + $0x358] sm:$0xf]
      %v7377 = vld [vmem:[%s884 + $0x35c] sm:$0xf]
      %v7378 = vld [vmem:[%s884 + $0x360] sm:$0xf]
      %v7379 = vld [vmem:[%s884 + $0x364] sm:$0xf]
      %v7380 = vld [vmem:[%s884 + $0x368] sm:$0xf]
      %v7381 = vld [vmem:[%s884 + $0x36c] sm:$0xf]
      %v7382 = vld [vmem:[%s884 + $0x370] sm:$0xf]
      %v7383 = vld [vmem:[%s884 + $0x374] sm:$0xf]
      %v7384 = vld [vmem:[%s884 + $0x378] sm:$0xf]
      %v7385 = vld [vmem:[%s884 + $0x37c] sm:$0xf]
      %v7386 = vld [vmem:[%s884 + $0x380] sm:$0xf]
      %v7387 = vld [vmem:[%s884 + $0x384] sm:$0xf]
      %v7388 = vld [vmem:[%s884 + $0x388] sm:$0xf]
      %v7389 = vld [vmem:[%s884 + $0x38c] sm:$0xf]
      %v7390 = vld [vmem:[%s884 + $0x390] sm:$0xf]
      %v7391 = vld [vmem:[%s884 + $0x394] sm:$0xf]
      %v7392 = vld [vmem:[%s884 + $0x398] sm:$0xf]
      %v7393 = vld [vmem:[%s884 + $0x39c] sm:$0xf]
      %v7394 = vld [vmem:[%s884 + $0x3a0] sm:$0xf]
      %v7395 = vld [vmem:[%s884 + $0x3a4] sm:$0xf]
      %v7396 = vld [vmem:[%s884 + $0x3a8] sm:$0xf]
      %v7397 = vld [vmem:[%s884 + $0x3ac] sm:$0xf]
      %v7398 = vld [vmem:[%s884 + $0x3b0] sm:$0xf]
      %v7399 = vld [vmem:[%s884 + $0x3b4] sm:$0xf]
      %v7400 = vld [vmem:[%s884 + $0x3b8] sm:$0xf]
      %v7401 = vld [vmem:[%s884 + $0x3bc] sm:$0xf]
      %v7402 = vld [vmem:[%s884 + $0x3c0] sm:$0xf]
      %v7403 = vld [vmem:[%s884 + $0x3c4] sm:$0xf]
      %v7404 = vld [vmem:[%s884 + $0x3c8] sm:$0xf]
      %v7405 = vld [vmem:[%s884 + $0x3cc] sm:$0xf]
      %v7406 = vld [vmem:[%s884 + $0x3d0] sm:$0xf]
      %v7407 = vld [vmem:[%s884 + $0x3d4] sm:$0xf]
      %v7408 = vld [vmem:[%s884 + $0x3d8] sm:$0xf]
      %v7409 = vld [vmem:[%s884 + $0x3dc] sm:$0xf]
      %v7410 = vld [vmem:[%s884 + $0x3e0] sm:$0xf]
      %v7411 = vld [vmem:[%s884 + $0x3e4] sm:$0xf]
      %v7412 = vld [vmem:[%s884 + $0x3e8] sm:$0xf]
      %v7413 = vld [vmem:[%s884 + $0x3ec] sm:$0xf]
      %v7414 = vld [vmem:[%s884 + $0x3f0] sm:$0xf]
      %v7415 = vld [vmem:[%s884 + $0x3f4] sm:$0xf]
      %v7416 = vld [vmem:[%s884 + $0x3f8] sm:$0xf]
      %v7417 = vld [vmem:[%s884 + $0x3fc] sm:$0xf]
      %v7418 = vld [vmem:[%s887] sm:$0x1]
      %v7420 = vlaneseq
      %v7421 = vshrl.u32 %v7420, 7
      %v7422 = vsub.s32 0, %v7421
      %v7423 = vrot.slane %v7418, %v7422
      %v7681 = vunpack.c.l.b16 %v7162
      %v7682 = vunpack.c.l.b16 %v7163
      %v7683 = vunpack.c.l.b16 %v7164
      %v7684 = vunpack.c.l.b16 %v7165
      %v7685 = vunpack.c.l.b16 %v7166
      %v7686 = vunpack.c.l.b16 %v7167
      %v7687 = vunpack.c.l.b16 %v7168
      %v7688 = vunpack.c.l.b16 %v7169
      %v7689 = vunpack.c.l.b16 %v7170
      %v7690 = vunpack.c.l.b16 %v7171
      %v7691 = vunpack.c.l.b16 %v7172
      %v7692 = vunpack.c.l.b16 %v7173
      %v7693 = vunpack.c.l.b16 %v7174
      %v7694 = vunpack.c.l.b16 %v7175
      %v7695 = vunpack.c.l.b16 %v7176
      %v7696 = vunpack.c.l.b16 %v7177
      %v7697 = vunpack.c.l.b16 %v7178
      %v7698 = vunpack.c.l.b16 %v7179
      %v7699 = vunpack.c.l.b16 %v7180
      %v7700 = vunpack.c.l.b16 %v7181
      %v7701 = vunpack.c.l.b16 %v7182
      %v7702 = vunpack.c.l.b16 %v7183
      %v7703 = vunpack.c.l.b16 %v7184
      %v7704 = vunpack.c.l.b16 %v7185
      %v7705 = vunpack.c.l.b16 %v7186
      %v7706 = vunpack.c.l.b16 %v7187
      %v7707 = vunpack.c.l.b16 %v7188
      %v7708 = vunpack.c.l.b16 %v7189
      %v7709 = vunpack.c.l.b16 %v7190
      %v7710 = vunpack.c.l.b16 %v7191
      %v7711 = vunpack.c.l.b16 %v7192
      %v7712 = vunpack.c.l.b16 %v7193
      %v7713 = vunpack.c.l.b16 %v7194
      %v7714 = vunpack.c.l.b16 %v7195
      %v7715 = vunpack.c.l.b16 %v7196
      %v7716 = vunpack.c.l.b16 %v7197
      %v7717 = vunpack.c.l.b16 %v7198
      %v7718 = vunpack.c.l.b16 %v7199
      %v7719 = vunpack.c.l.b16 %v7200
      %v7720 = vunpack.c.l.b16 %v7201
      %v7721 = vunpack.c.l.b16 %v7202
      %v7722 = vunpack.c.l.b16 %v7203
      %v7723 = vunpack.c.l.b16 %v7204
      %v7724 = vunpack.c.l.b16 %v7205
      %v7725 = vunpack.c.l.b16 %v7206
      %v7726 = vunpack.c.l.b16 %v7207
      %v7727 = vunpack.c.l.b16 %v7208
      %v7728 = vunpack.c.l.b16 %v7209
      %v7729 = vunpack.c.l.b16 %v7210
      %v7730 = vunpack.c.l.b16 %v7211
      %v7731 = vunpack.c.l.b16 %v7212
      %v7732 = vunpack.c.l.b16 %v7213
      %v7733 = vunpack.c.l.b16 %v7214
      %v7734 = vunpack.c.l.b16 %v7215
      %v7735 = vunpack.c.l.b16 %v7216
      %v7736 = vunpack.c.l.b16 %v7217
      %v7737 = vunpack.c.l.b16 %v7218
      %v7738 = vunpack.c.l.b16 %v7219
      %v7739 = vunpack.c.l.b16 %v7220
      %v7740 = vunpack.c.l.b16 %v7221
      %v7741 = vunpack.c.l.b16 %v7222
      %v7742 = vunpack.c.l.b16 %v7223
      %v7743 = vunpack.c.l.b16 %v7224
      %v7744 = vunpack.c.l.b16 %v7225
      %v7745 = vunpack.c.l.b16 %v7226
      %v7746 = vunpack.c.l.b16 %v7227
      %v7747 = vunpack.c.l.b16 %v7228
      %v7748 = vunpack.c.l.b16 %v7229
      %v7749 = vunpack.c.l.b16 %v7230
      %v7750 = vunpack.c.l.b16 %v7231
      %v7751 = vunpack.c.l.b16 %v7232
      %v7752 = vunpack.c.l.b16 %v7233
      %v7753 = vunpack.c.l.b16 %v7234
      %v7754 = vunpack.c.l.b16 %v7235
      %v7755 = vunpack.c.l.b16 %v7236
      %v7756 = vunpack.c.l.b16 %v7237
      %v7757 = vunpack.c.l.b16 %v7238
      %v7758 = vunpack.c.l.b16 %v7239
      %v7759 = vunpack.c.l.b16 %v7240
      %v7760 = vunpack.c.l.b16 %v7241
      %v7761 = vunpack.c.l.b16 %v7242
      %v7762 = vunpack.c.l.b16 %v7243
      %v7763 = vunpack.c.l.b16 %v7244
      %v7764 = vunpack.c.l.b16 %v7245
      %v7765 = vunpack.c.l.b16 %v7246
      %v7766 = vunpack.c.l.b16 %v7247
      %v7767 = vunpack.c.l.b16 %v7248
      %v7768 = vunpack.c.l.b16 %v7249
      %v7769 = vunpack.c.l.b16 %v7250
      %v7770 = vunpack.c.l.b16 %v7251
      %v7771 = vunpack.c.l.b16 %v7252
      %v7772 = vunpack.c.l.b16 %v7253
      %v7773 = vunpack.c.l.b16 %v7254
      %v7774 = vunpack.c.l.b16 %v7255
      %v7775 = vunpack.c.l.b16 %v7256
      %v7776 = vunpack.c.l.b16 %v7257
      %v7777 = vunpack.c.l.b16 %v7258
      %v7778 = vunpack.c.l.b16 %v7259
      %v7779 = vunpack.c.l.b16 %v7260
      %v7780 = vunpack.c.l.b16 %v7261
      %v7781 = vunpack.c.l.b16 %v7262
      %v7782 = vunpack.c.l.b16 %v7263
      %v7783 = vunpack.c.l.b16 %v7264
      %v7784 = vunpack.c.l.b16 %v7265
      %v7785 = vunpack.c.l.b16 %v7266
      %v7786 = vunpack.c.l.b16 %v7267
      %v7787 = vunpack.c.l.b16 %v7268
      %v7788 = vunpack.c.l.b16 %v7269
      %v7789 = vunpack.c.l.b16 %v7270
      %v7790 = vunpack.c.l.b16 %v7271
      %v7791 = vunpack.c.l.b16 %v7272
      %v7792 = vunpack.c.l.b16 %v7273
      %v7793 = vunpack.c.l.b16 %v7274
      %v7794 = vunpack.c.l.b16 %v7275
      %v7795 = vunpack.c.l.b16 %v7276
      %v7796 = vunpack.c.l.b16 %v7277
      %v7797 = vunpack.c.l.b16 %v7278
      %v7798 = vunpack.c.l.b16 %v7279
      %v7799 = vunpack.c.l.b16 %v7280
      %v7800 = vunpack.c.l.b16 %v7281
      %v7801 = vunpack.c.l.b16 %v7282
      %v7802 = vunpack.c.l.b16 %v7283
      %v7803 = vunpack.c.l.b16 %v7284
      %v7804 = vunpack.c.l.b16 %v7285
      %v7805 = vunpack.c.l.b16 %v7286
      %v7806 = vunpack.c.l.b16 %v7287
      %v7807 = vunpack.c.l.b16 %v7288
      %v7808 = vunpack.c.l.b16 %v7289
      %v7809 = vunpack.c.l.b16 %v7290
      %v7810 = vunpack.c.l.b16 %v7291
      %v7811 = vunpack.c.l.b16 %v7292
      %v7812 = vunpack.c.l.b16 %v7293
      %v7813 = vunpack.c.l.b16 %v7294
      %v7814 = vunpack.c.l.b16 %v7295
      %v7815 = vunpack.c.l.b16 %v7296
      %v7816 = vunpack.c.l.b16 %v7297
      %v7817 = vunpack.c.l.b16 %v7298
      %v7818 = vunpack.c.l.b16 %v7299
      %v7819 = vunpack.c.l.b16 %v7300
      %v7820 = vunpack.c.l.b16 %v7301
      %v7821 = vunpack.c.l.b16 %v7302
      %v7822 = vunpack.c.l.b16 %v7303
      %v7823 = vunpack.c.l.b16 %v7304
      %v7824 = vunpack.c.l.b16 %v7305
      %v7825 = vunpack.c.l.b16 %v7306
      %v7826 = vunpack.c.l.b16 %v7307
      %v7827 = vunpack.c.l.b16 %v7308
      %v7828 = vunpack.c.l.b16 %v7309
      %v7829 = vunpack.c.l.b16 %v7310
      %v7830 = vunpack.c.l.b16 %v7311
      %v7831 = vunpack.c.l.b16 %v7312
      %v7832 = vunpack.c.l.b16 %v7313
      %v7833 = vunpack.c.l.b16 %v7314
      %v7834 = vunpack.c.l.b16 %v7315
      %v7835 = vunpack.c.l.b16 %v7316
      %v7836 = vunpack.c.l.b16 %v7317
      %v7837 = vunpack.c.l.b16 %v7318
      %v7838 = vunpack.c.l.b16 %v7319
      %v7839 = vunpack.c.l.b16 %v7320
      %v7840 = vunpack.c.l.b16 %v7321
      %v7841 = vunpack.c.l.b16 %v7322
      %v7842 = vunpack.c.l.b16 %v7323
      %v7843 = vunpack.c.l.b16 %v7324
      %v7844 = vunpack.c.l.b16 %v7325
      %v7845 = vunpack.c.l.b16 %v7326
      %v7846 = vunpack.c.l.b16 %v7327
      %v7847 = vunpack.c.l.b16 %v7328
      %v7848 = vunpack.c.l.b16 %v7329
      %v7849 = vunpack.c.l.b16 %v7330
      %v7850 = vunpack.c.l.b16 %v7331
      %v7851 = vunpack.c.l.b16 %v7332
      %v7852 = vunpack.c.l.b16 %v7333
      %v7853 = vunpack.c.l.b16 %v7334
      %v7854 = vunpack.c.l.b16 %v7335
      %v7855 = vunpack.c.l.b16 %v7336
      %v7856 = vunpack.c.l.b16 %v7337
      %v7857 = vunpack.c.l.b16 %v7338
      %v7858 = vunpack.c.l.b16 %v7339
      %v7859 = vunpack.c.l.b16 %v7340
      %v7860 = vunpack.c.l.b16 %v7341
      %v7861 = vunpack.c.l.b16 %v7342
      %v7862 = vunpack.c.l.b16 %v7343
      %v7863 = vunpack.c.l.b16 %v7344
      %v7864 = vunpack.c.l.b16 %v7345
      %v7865 = vunpack.c.l.b16 %v7346
      %v7866 = vunpack.c.l.b16 %v7347
      %v7867 = vunpack.c.l.b16 %v7348
      %v7868 = vunpack.c.l.b16 %v7349
      %v7869 = vunpack.c.l.b16 %v7350
      %v7870 = vunpack.c.l.b16 %v7351
      %v7871 = vunpack.c.l.b16 %v7352
      %v7872 = vunpack.c.l.b16 %v7353
      %v7873 = vunpack.c.l.b16 %v7354
      %v7874 = vunpack.c.l.b16 %v7355
      %v7875 = vunpack.c.l.b16 %v7356
      %v7876 = vunpack.c.l.b16 %v7357
      %v7877 = vunpack.c.l.b16 %v7358
      %v7878 = vunpack.c.l.b16 %v7359
      %v7879 = vunpack.c.l.b16 %v7360
      %v7880 = vunpack.c.l.b16 %v7361
      %v7881 = vunpack.c.l.b16 %v7362
      %v7882 = vunpack.c.l.b16 %v7363
      %v7883 = vunpack.c.l.b16 %v7364
      %v7884 = vunpack.c.l.b16 %v7365
      %v7885 = vunpack.c.l.b16 %v7366
      %v7886 = vunpack.c.l.b16 %v7367
      %v7887 = vunpack.c.l.b16 %v7368
      %v7888 = vunpack.c.l.b16 %v7369
      %v7889 = vunpack.c.l.b16 %v7370
      %v7890 = vunpack.c.l.b16 %v7371
      %v7891 = vunpack.c.l.b16 %v7372
      %v7892 = vunpack.c.l.b16 %v7373
      %v7893 = vunpack.c.l.b16 %v7374
      %v7894 = vunpack.c.l.b16 %v7375
      %v7895 = vunpack.c.l.b16 %v7376
      %v7896 = vunpack.c.l.b16 %v7377
      %v7897 = vunpack.c.l.b16 %v7378
      %v7898 = vunpack.c.l.b16 %v7379
      %v7899 = vunpack.c.l.b16 %v7380
      %v7900 = vunpack.c.l.b16 %v7381
      %v7901 = vunpack.c.l.b16 %v7382
      %v7902 = vunpack.c.l.b16 %v7383
      %v7903 = vunpack.c.l.b16 %v7384
      %v7904 = vunpack.c.l.b16 %v7385
      %v7905 = vunpack.c.l.b16 %v7386
      %v7906 = vunpack.c.l.b16 %v7387
      %v7907 = vunpack.c.l.b16 %v7388
      %v7908 = vunpack.c.l.b16 %v7389
      %v7909 = vunpack.c.l.b16 %v7390
      %v7910 = vunpack.c.l.b16 %v7391
      %v7911 = vunpack.c.l.b16 %v7392
      %v7912 = vunpack.c.l.b16 %v7393
      %v7913 = vunpack.c.l.b16 %v7394
      %v7914 = vunpack.c.l.b16 %v7395
      %v7915 = vunpack.c.l.b16 %v7396
      %v7916 = vunpack.c.l.b16 %v7397
      %v7917 = vunpack.c.l.b16 %v7398
      %v7918 = vunpack.c.l.b16 %v7399
      %v7919 = vunpack.c.l.b16 %v7400
      %v7920 = vunpack.c.l.b16 %v7401
      %v7921 = vunpack.c.l.b16 %v7402
      %v7922 = vunpack.c.l.b16 %v7403
      %v7923 = vunpack.c.l.b16 %v7404
      %v7924 = vunpack.c.l.b16 %v7405
      %v7925 = vunpack.c.l.b16 %v7406
      %v7926 = vunpack.c.l.b16 %v7407
      %v7927 = vunpack.c.l.b16 %v7408
      %v7928 = vunpack.c.l.b16 %v7409
      %v7929 = vunpack.c.l.b16 %v7410
      %v7930 = vunpack.c.l.b16 %v7411
      %v7931 = vunpack.c.l.b16 %v7412
      %v7932 = vunpack.c.l.b16 %v7413
      %v7933 = vunpack.c.l.b16 %v7414
      %v7934 = vunpack.c.l.b16 %v7415
      %v7935 = vunpack.c.l.b16 %v7416
      %v7936 = vunpack.c.l.b16 %v7417
      %v7937 = vpack.c.b16 %v7682, %v7681
      %v7938 = vpack.c.b16 %v7684, %v7683
      %v7939 = vpack.c.b16 %v7686, %v7685
      %v7940 = vpack.c.b16 %v7688, %v7687
      %v7941 = vpack.c.b16 %v7690, %v7689
      %v7942 = vpack.c.b16 %v7692, %v7691
      %v7943 = vpack.c.b16 %v7694, %v7693
      %v7944 = vpack.c.b16 %v7696, %v7695
      %v7945 = vpack.c.b16 %v7698, %v7697
      %v7946 = vpack.c.b16 %v7700, %v7699
      %v7947 = vpack.c.b16 %v7702, %v7701
      %v7948 = vpack.c.b16 %v7704, %v7703
      %v7949 = vpack.c.b16 %v7706, %v7705
      %v7950 = vpack.c.b16 %v7708, %v7707
      %v7951 = vpack.c.b16 %v7710, %v7709
      %v7952 = vpack.c.b16 %v7712, %v7711
      %v7953 = vpack.c.b16 %v7714, %v7713
      %v7954 = vpack.c.b16 %v7716, %v7715
      %v7955 = vpack.c.b16 %v7718, %v7717
      %v7956 = vpack.c.b16 %v7720, %v7719
      %v7957 = vpack.c.b16 %v7722, %v7721
      %v7958 = vpack.c.b16 %v7724, %v7723
      %v7959 = vpack.c.b16 %v7726, %v7725
      %v7960 = vpack.c.b16 %v7728, %v7727
      %v7961 = vpack.c.b16 %v7730, %v7729
      %v7962 = vpack.c.b16 %v7732, %v7731
      %v7963 = vpack.c.b16 %v7734, %v7733
      %v7964 = vpack.c.b16 %v7736, %v7735
      %v7965 = vpack.c.b16 %v7738, %v7737
      %v7966 = vpack.c.b16 %v7740, %v7739
      %v7967 = vpack.c.b16 %v7742, %v7741
      %v7968 = vpack.c.b16 %v7744, %v7743
      %v7969 = vpack.c.b16 %v7746, %v7745
      %v7970 = vpack.c.b16 %v7748, %v7747
      %v7971 = vpack.c.b16 %v7750, %v7749
      %v7972 = vpack.c.b16 %v7752, %v7751
      %v7973 = vpack.c.b16 %v7754, %v7753
      %v7974 = vpack.c.b16 %v7756, %v7755
      %v7975 = vpack.c.b16 %v7758, %v7757
      %v7976 = vpack.c.b16 %v7760, %v7759
      %v7977 = vpack.c.b16 %v7762, %v7761
      %v7978 = vpack.c.b16 %v7764, %v7763
      %v7979 = vpack.c.b16 %v7766, %v7765
      %v7980 = vpack.c.b16 %v7768, %v7767
      %v7981 = vpack.c.b16 %v7770, %v7769
      %v7982 = vpack.c.b16 %v7772, %v7771
      %v7983 = vpack.c.b16 %v7774, %v7773
      %v7984 = vpack.c.b16 %v7776, %v7775
      %v7985 = vpack.c.b16 %v7778, %v7777
      %v7986 = vpack.c.b16 %v7780, %v7779
      %v7987 = vpack.c.b16 %v7782, %v7781
      %v7988 = vpack.c.b16 %v7784, %v7783
      %v7989 = vpack.c.b16 %v7786, %v7785
      %v7990 = vpack.c.b16 %v7788, %v7787
      %v7991 = vpack.c.b16 %v7790, %v7789
      %v7992 = vpack.c.b16 %v7792, %v7791
      %v7993 = vpack.c.b16 %v7794, %v7793
      %v7994 = vpack.c.b16 %v7796, %v7795
      %v7995 = vpack.c.b16 %v7798, %v7797
      %v7996 = vpack.c.b16 %v7800, %v7799
      %v7997 = vpack.c.b16 %v7802, %v7801
      %v7998 = vpack.c.b16 %v7804, %v7803
      %v7999 = vpack.c.b16 %v7806, %v7805
      %v8000 = vpack.c.b16 %v7808, %v7807
      %v8001 = vpack.c.b16 %v7810, %v7809
      %v8002 = vpack.c.b16 %v7812, %v7811
      %v8003 = vpack.c.b16 %v7814, %v7813
      %v8004 = vpack.c.b16 %v7816, %v7815
      %v8005 = vpack.c.b16 %v7818, %v7817
      %v8006 = vpack.c.b16 %v7820, %v7819
      %v8007 = vpack.c.b16 %v7822, %v7821
      %v8008 = vpack.c.b16 %v7824, %v7823
      %v8009 = vpack.c.b16 %v7826, %v7825
      %v8010 = vpack.c.b16 %v7828, %v7827
      %v8011 = vpack.c.b16 %v7830, %v7829
      %v8012 = vpack.c.b16 %v7832, %v7831
      %v8013 = vpack.c.b16 %v7834, %v7833
      %v8014 = vpack.c.b16 %v7836, %v7835
      %v8015 = vpack.c.b16 %v7838, %v7837
      %v8016 = vpack.c.b16 %v7840, %v7839
      %v8017 = vpack.c.b16 %v7842, %v7841
      %v8018 = vpack.c.b16 %v7844, %v7843
      %v8019 = vpack.c.b16 %v7846, %v7845
      %v8020 = vpack.c.b16 %v7848, %v7847
      %v8021 = vpack.c.b16 %v7850, %v7849
      %v8022 = vpack.c.b16 %v7852, %v7851
      %v8023 = vpack.c.b16 %v7854, %v7853
      %v8024 = vpack.c.b16 %v7856, %v7855
      %v8025 = vpack.c.b16 %v7858, %v7857
      %v8026 = vpack.c.b16 %v7860, %v7859
      %v8027 = vpack.c.b16 %v7862, %v7861
      %v8028 = vpack.c.b16 %v7864, %v7863
      %v8029 = vpack.c.b16 %v7866, %v7865
      %v8030 = vpack.c.b16 %v7868, %v7867
      %v8031 = vpack.c.b16 %v7870, %v7869
      %v8032 = vpack.c.b16 %v7872, %v7871
      %v8033 = vpack.c.b16 %v7874, %v7873
      %v8034 = vpack.c.b16 %v7876, %v7875
      %v8035 = vpack.c.b16 %v7878, %v7877
      %v8036 = vpack.c.b16 %v7880, %v7879
      %v8037 = vpack.c.b16 %v7882, %v7881
      %v8038 = vpack.c.b16 %v7884, %v7883
      %v8039 = vpack.c.b16 %v7886, %v7885
      %v8040 = vpack.c.b16 %v7888, %v7887
      %v8041 = vpack.c.b16 %v7890, %v7889
      %v8042 = vpack.c.b16 %v7892, %v7891
      %v8043 = vpack.c.b16 %v7894, %v7893
      %v8044 = vpack.c.b16 %v7896, %v7895
      %v8045 = vpack.c.b16 %v7898, %v7897
      %v8046 = vpack.c.b16 %v7900, %v7899
      %v8047 = vpack.c.b16 %v7902, %v7901
      %v8048 = vpack.c.b16 %v7904, %v7903
      %v8049 = vpack.c.b16 %v7906, %v7905
      %v8050 = vpack.c.b16 %v7908, %v7907
      %v8051 = vpack.c.b16 %v7910, %v7909
      %v8052 = vpack.c.b16 %v7912, %v7911
      %v8053 = vpack.c.b16 %v7914, %v7913
      %v8054 = vpack.c.b16 %v7916, %v7915
      %v8055 = vpack.c.b16 %v7918, %v7917
      %v8056 = vpack.c.b16 %v7920, %v7919
      %v8057 = vpack.c.b16 %v7922, %v7921
      %v8058 = vpack.c.b16 %v7924, %v7923
      %v8059 = vpack.c.b16 %v7926, %v7925
      %v8060 = vpack.c.b16 %v7928, %v7927
      %v8061 = vpack.c.b16 %v7930, %v7929
      %v8062 = vpack.c.b16 %v7932, %v7931
      %v8063 = vpack.c.b16 %v7934, %v7933
      %v8064 = vpack.c.b16 %v7936, %v7935
      %8193 = vmatprep.subr.bf16.mxu0 0
      %8194 = vmatpush1.bf16.msra.mxu0 %v7944
      %8195 = vmatprep.subr.bf16.mxu0 0
      %8196 = vmatpush1.bf16.msra.mxu0 %v7943
      %8197 = vmatprep.subr.bf16.mxu0 0
      %8198 = vmatpush1.bf16.msra.mxu0 %v7942
      %8199 = vmatprep.subr.bf16.mxu0 0
      %8200 = vmatpush1.bf16.msra.mxu0 %v7941
      %8201 = vmatprep.subr.bf16.mxu0 0
      %8202 = vmatpush1.bf16.msra.mxu0 %v7940
      %8203 = vmatprep.subr.bf16.mxu0 0
      %8204 = vmatpush1.bf16.msra.mxu0 %v7939
      %8205 = vmatprep.subr.bf16.mxu0 0
      %8206 = vmatpush1.bf16.msra.mxu0 %v7938
      %8207 = vmatprep.subr.bf16.mxu0 0
      %8208 = vmatpush1.bf16.msra.mxu0 %v7937
      %8209 = vmatprep.subr.bf16.mxu0 0
      %8210 = vmatpush2.bf16.msra.mxu0 %v7952
      %8211 = vmatprep.subr.bf16.mxu0 0
      %8212 = vmatpush2.bf16.msra.mxu0 %v7951
      %8213 = vmatprep.subr.bf16.mxu0 0
      %8214 = vmatpush2.bf16.msra.mxu0 %v7950
      %8215 = vmatprep.subr.bf16.mxu0 0
      %8216 = vmatpush2.bf16.msra.mxu0 %v7949
      %8217 = vmatprep.subr.bf16.mxu0 0
      %8218 = vmatpush2.bf16.msra.mxu0 %v7948
      %8219 = vmatprep.subr.bf16.mxu0 0
      %8220 = vmatpush2.bf16.msra.mxu0 %v7947
      %8221 = vmatprep.subr.bf16.mxu0 0
      %8222 = vmatpush2.bf16.msra.mxu0 %v7946
      %8223 = vmatprep.subr.bf16.mxu0 0
      %8224 = vmatpush2.bf16.msra.mxu0 %v7945
      %8225 = vmatprep.mubr.bf16.mxu0 %v7035
      %8226 = vmatmul.mubr.bf16.gmra.mxu0 %v7034
      %v8227 = vpop.f32.mrf.mxu0
      %v8228 = vadd.f32 %v7423, %v8227
      %v8229 = vpop.f32.mrf.mxu0
      %v8230 = vpop.f32.mrf.mxu0
      %v8231 = vadd.f32 %v7423, %v8230
      %v8232 = vpop.f32.mrf.mxu0
      %8233 = vmatprep.mubr.bf16.mxu0 %v7051
      %8234 = vmatmul.mubr.bf16.gmra.mxu0 %v7050
      %v8235 = vpop.f32.mrf.mxu0
      %v8236 = vadd.f32 %v7423, %v8235
      %v8237 = vpop.f32.mrf.mxu0
      %v8238 = vpop.f32.mrf.mxu0
      %v8239 = vadd.f32 %v7423, %v8238
      %v8240 = vpop.f32.mrf.mxu0
      %8241 = vmatprep.mubr.bf16.mxu0 %v7067
      %8242 = vmatmul.mubr.bf16.gmra.mxu0 %v7066
      %v8243 = vpop.f32.mrf.mxu0
      %v8244 = vadd.f32 %v7423, %v8243
      %v8245 = vpop.f32.mrf.mxu0
      %v8246 = vpop.f32.mrf.mxu0
      %v8247 = vadd.f32 %v7423, %v8246
      %v8248 = vpop.f32.mrf.mxu0
      %8249 = vmatprep.mubr.bf16.mxu0 %v7083
      %8250 = vmatmul.mubr.bf16.gmra.mxu0 %v7082
      %v8251 = vpop.f32.mrf.mxu0
      %v8252 = vadd.f32 %v7423, %v8251
      %v8253 = vpop.f32.mrf.mxu0
      %v8254 = vpop.f32.mrf.mxu0
      %v8255 = vadd.f32 %v7423, %v8254
      %v8256 = vpop.f32.mrf.mxu0
      %8257 = vmatprep.mubr.bf16.mxu0 %v7099
      %8258 = vmatmul.mubr.bf16.gmra.mxu0 %v7098
      %v8259 = vpop.f32.mrf.mxu0
      %v8260 = vadd.f32 %v7423, %v8259
      %v8261 = vpop.f32.mrf.mxu0
      %v8262 = vpop.f32.mrf.mxu0
      %v8263 = vadd.f32 %v7423, %v8262
      %v8264 = vpop.f32.mrf.mxu0
      %8265 = vmatprep.mubr.bf16.mxu0 %v7115
      %8266 = vmatmul.mubr.bf16.gmra.mxu0 %v7114
      %v8267 = vpop.f32.mrf.mxu0
      %v8268 = vadd.f32 %v7423, %v8267
      %v8269 = vpop.f32.mrf.mxu0
      %v8270 = vpop.f32.mrf.mxu0
      %v8271 = vadd.f32 %v7423, %v8270
      %v8272 = vpop.f32.mrf.mxu0
      %8273 = vmatprep.mubr.bf16.mxu0 %v7131
      %8274 = vmatmul.mubr.bf16.gmra.mxu0 %v7130
      %v8275 = vpop.f32.mrf.mxu0
      %v8276 = vadd.f32 %v7423, %v8275
      %v8277 = vpop.f32.mrf.mxu0
      %v8278 = vpop.f32.mrf.mxu0
      %v8279 = vadd.f32 %v7423, %v8278
      %v8280 = vpop.f32.mrf.mxu0
      %8281 = vmatprep.mubr.bf16.mxu0 %v7147
      %8282 = vmatmul.mubr.bf16.gmra.mxu0 %v7146
      %v8283 = vpop.f32.mrf.mxu0
      %v8284 = vadd.f32 %v7423, %v8283
      %v8285 = vpop.f32.mrf.mxu0
      %v8286 = vpop.f32.mrf.mxu0
      %v8287 = vadd.f32 %v7423, %v8286
      %v8288 = vpop.f32.mrf.mxu0
      %8289 = vdwg.mxu0
      %8290 = vmatprep.subr.bf16.mxu0 0
      %8291 = vmatpush1.bf16.msra.mxu0 %v7960
      %8292 = vmatprep.subr.bf16.mxu0 0
      %8293 = vmatpush1.bf16.msra.mxu0 %v7959
      %8294 = vmatprep.subr.bf16.mxu0 0
      %8295 = vmatpush1.bf16.msra.mxu0 %v7958
      %8296 = vmatprep.subr.bf16.mxu0 0
      %8297 = vmatpush1.bf16.msra.mxu0 %v7957
      %8298 = vmatprep.subr.bf16.mxu0 0
      %8299 = vmatpush1.bf16.msra.mxu0 %v7956
      %8300 = vmatprep.subr.bf16.mxu0 0
      %8301 = vmatpush1.bf16.msra.mxu0 %v7955
      %8302 = vmatprep.subr.bf16.mxu0 0
      %8303 = vmatpush1.bf16.msra.mxu0 %v7954
      %8304 = vmatprep.subr.bf16.mxu0 0
      %8305 = vmatpush1.bf16.msra.mxu0 %v7953
      %8306 = vmatprep.subr.bf16.mxu0 0
      %8307 = vmatpush2.bf16.msra.mxu0 %v7968
      %8308 = vmatprep.subr.bf16.mxu0 0
      %8309 = vmatpush2.bf16.msra.mxu0 %v7967
      %8310 = vmatprep.subr.bf16.mxu0 0
      %8311 = vmatpush2.bf16.msra.mxu0 %v7966
      %8312 = vmatprep.subr.bf16.mxu0 0
      %8313 = vmatpush2.bf16.msra.mxu0 %v7965
      %8314 = vmatprep.subr.bf16.mxu0 0
      %8315 = vmatpush2.bf16.msra.mxu0 %v7964
      %8316 = vmatprep.subr.bf16.mxu0 0
      %8317 = vmatpush2.bf16.msra.mxu0 %v7963
      %8318 = vmatprep.subr.bf16.mxu0 0
      %8319 = vmatpush2.bf16.msra.mxu0 %v7962
      %8320 = vmatprep.subr.bf16.mxu0 0
      %8321 = vmatpush2.bf16.msra.mxu0 %v7961
      %8322 = vmatprep.mubr.bf16.mxu0 %v7037
      %8323 = vmatmul.mubr.bf16.gmra.mxu0 %v7036
      %v8324 = vpop.f32.mrf.mxu0
      %v8325 = vadd.f32 %v8228, %v8324
      %v8326 = vpop.f32.mrf.mxu0
      %v8327 = vpop.f32.mrf.mxu0
      %v8328 = vadd.f32 %v8231, %v8327
      %v8329 = vpop.f32.mrf.mxu0
      %8330 = vmatprep.mubr.bf16.mxu0 %v7053
      %8331 = vmatmul.mubr.bf16.gmra.mxu0 %v7052
      %v8332 = vpop.f32.mrf.mxu0
      %v8333 = vadd.f32 %v8236, %v8332
      %v8334 = vpop.f32.mrf.mxu0
      %v8335 = vpop.f32.mrf.mxu0
      %v8336 = vadd.f32 %v8239, %v8335
      %v8337 = vpop.f32.mrf.mxu0
      %8338 = vmatprep.mubr.bf16.mxu0 %v7069
      %8339 = vmatmul.mubr.bf16.gmra.mxu0 %v7068
      %v8340 = vpop.f32.mrf.mxu0
      %v8341 = vadd.f32 %v8244, %v8340
      %v8342 = vpop.f32.mrf.mxu0
      %v8343 = vpop.f32.mrf.mxu0
      %v8344 = vadd.f32 %v8247, %v8343
      %v8345 = vpop.f32.mrf.mxu0
      %8346 = vmatprep.mubr.bf16.mxu0 %v7085
      %8347 = vmatmul.mubr.bf16.gmra.mxu0 %v7084
      %v8348 = vpop.f32.mrf.mxu0
      %v8349 = vadd.f32 %v8252, %v8348
      %v8350 = vpop.f32.mrf.mxu0
      %v8351 = vpop.f32.mrf.mxu0
      %v8352 = vadd.f32 %v8255, %v8351
      %v8353 = vpop.f32.mrf.mxu0
      %8354 = vmatprep.mubr.bf16.mxu0 %v7101
      %8355 = vmatmul.mubr.bf16.gmra.mxu0 %v7100
      %v8356 = vpop.f32.mrf.mxu0
      %v8357 = vadd.f32 %v8260, %v8356
      %v8358 = vpop.f32.mrf.mxu0
      %v8359 = vpop.f32.mrf.mxu0
      %v8360 = vadd.f32 %v8263, %v8359
      %v8361 = vpop.f32.mrf.mxu0
      %8362 = vmatprep.mubr.bf16.mxu0 %v7117
      %8363 = vmatmul.mubr.bf16.gmra.mxu0 %v7116
      %v8364 = vpop.f32.mrf.mxu0
      %v8365 = vadd.f32 %v8268, %v8364
      %v8366 = vpop.f32.mrf.mxu0
      %v8367 = vpop.f32.mrf.mxu0
      %v8368 = vadd.f32 %v8271, %v8367
      %v8369 = vpop.f32.mrf.mxu0
      %8370 = vmatprep.mubr.bf16.mxu0 %v7133
      %8371 = vmatmul.mubr.bf16.gmra.mxu0 %v7132
      %v8372 = vpop.f32.mrf.mxu0
      %v8373 = vadd.f32 %v8276, %v8372
      %v8374 = vpop.f32.mrf.mxu0
      %v8375 = vpop.f32.mrf.mxu0
      %v8376 = vadd.f32 %v8279, %v8375
      %v8377 = vpop.f32.mrf.mxu0
      %8378 = vmatprep.mubr.bf16.mxu0 %v7149
      %8379 = vmatmul.mubr.bf16.gmra.mxu0 %v7148
      %v8380 = vpop.f32.mrf.mxu0
      %v8381 = vadd.f32 %v8284, %v8380
      %v8382 = vpop.f32.mrf.mxu0
      %v8383 = vpop.f32.mrf.mxu0
      %v8384 = vadd.f32 %v8287, %v8383
      %v8385 = vpop.f32.mrf.mxu0
      %8386 = vdwg.mxu0
      %8387 = vmatprep.subr.bf16.mxu0 0
      %8388 = vmatpush1.bf16.msra.mxu0 %v7976
      %8389 = vmatprep.subr.bf16.mxu0 0
      %8390 = vmatpush1.bf16.msra.mxu0 %v7975
      %8391 = vmatprep.subr.bf16.mxu0 0
      %8392 = vmatpush1.bf16.msra.mxu0 %v7974
      %8393 = vmatprep.subr.bf16.mxu0 0
      %8394 = vmatpush1.bf16.msra.mxu0 %v7973
      %8395 = vmatprep.subr.bf16.mxu0 0
      %8396 = vmatpush1.bf16.msra.mxu0 %v7972
      %8397 = vmatprep.subr.bf16.mxu0 0
      %8398 = vmatpush1.bf16.msra.mxu0 %v7971
      %8399 = vmatprep.subr.bf16.mxu0 0
      %8400 = vmatpush1.bf16.msra.mxu0 %v7970
      %8401 = vmatprep.subr.bf16.mxu0 0
      %8402 = vmatpush1.bf16.msra.mxu0 %v7969
      %8403 = vmatprep.subr.bf16.mxu0 0
      %8404 = vmatpush2.bf16.msra.mxu0 %v7984
      %8405 = vmatprep.subr.bf16.mxu0 0
      %8406 = vmatpush2.bf16.msra.mxu0 %v7983
      %8407 = vmatprep.subr.bf16.mxu0 0
      %8408 = vmatpush2.bf16.msra.mxu0 %v7982
      %8409 = vmatprep.subr.bf16.mxu0 0
      %8410 = vmatpush2.bf16.msra.mxu0 %v7981
      %8411 = vmatprep.subr.bf16.mxu0 0
      %8412 = vmatpush2.bf16.msra.mxu0 %v7980
      %8413 = vmatprep.subr.bf16.mxu0 0
      %8414 = vmatpush2.bf16.msra.mxu0 %v7979
      %8415 = vmatprep.subr.bf16.mxu0 0
      %8416 = vmatpush2.bf16.msra.mxu0 %v7978
      %8417 = vmatprep.subr.bf16.mxu0 0
      %8418 = vmatpush2.bf16.msra.mxu0 %v7977
      %8419 = vmatprep.mubr.bf16.mxu0 %v7039
      %8420 = vmatmul.mubr.bf16.gmra.mxu0 %v7038
      %v8421 = vpop.f32.mrf.mxu0
      %v8422 = vadd.f32 %v8325, %v8421
      %v8423 = vpop.f32.mrf.mxu0
      %v8424 = vpop.f32.mrf.mxu0
      %v8425 = vadd.f32 %v8328, %v8424
      %v8426 = vpop.f32.mrf.mxu0
      %8427 = vmatprep.mubr.bf16.mxu0 %v7055
      %8428 = vmatmul.mubr.bf16.gmra.mxu0 %v7054
      %v8429 = vpop.f32.mrf.mxu0
      %v8430 = vadd.f32 %v8333, %v8429
      %v8431 = vpop.f32.mrf.mxu0
      %v8432 = vpop.f32.mrf.mxu0
      %v8433 = vadd.f32 %v8336, %v8432
      %v8434 = vpop.f32.mrf.mxu0
      %8435 = vmatprep.mubr.bf16.mxu0 %v7071
      %8436 = vmatmul.mubr.bf16.gmra.mxu0 %v7070
      %v8437 = vpop.f32.mrf.mxu0
      %v8438 = vadd.f32 %v8341, %v8437
      %v8439 = vpop.f32.mrf.mxu0
      %v8440 = vpop.f32.mrf.mxu0
      %v8441 = vadd.f32 %v8344, %v8440
      %v8442 = vpop.f32.mrf.mxu0
      %8443 = vmatprep.mubr.bf16.mxu0 %v7087
      %8444 = vmatmul.mubr.bf16.gmra.mxu0 %v7086
      %v8445 = vpop.f32.mrf.mxu0
      %v8446 = vadd.f32 %v8349, %v8445
      %v8447 = vpop.f32.mrf.mxu0
      %v8448 = vpop.f32.mrf.mxu0
      %v8449 = vadd.f32 %v8352, %v8448
      %v8450 = vpop.f32.mrf.mxu0
      %8451 = vmatprep.mubr.bf16.mxu0 %v7103
      %8452 = vmatmul.mubr.bf16.gmra.mxu0 %v7102
      %v8453 = vpop.f32.mrf.mxu0
      %v8454 = vadd.f32 %v8357, %v8453
      %v8455 = vpop.f32.mrf.mxu0
      %v8456 = vpop.f32.mrf.mxu0
      %v8457 = vadd.f32 %v8360, %v8456
      %v8458 = vpop.f32.mrf.mxu0
      %8459 = vmatprep.mubr.bf16.mxu0 %v7119
      %8460 = vmatmul.mubr.bf16.gmra.mxu0 %v7118
      %v8461 = vpop.f32.mrf.mxu0
      %v8462 = vadd.f32 %v8365, %v8461
      %v8463 = vpop.f32.mrf.mxu0
      %v8464 = vpop.f32.mrf.mxu0
      %v8465 = vadd.f32 %v8368, %v8464
      %v8466 = vpop.f32.mrf.mxu0
      %8467 = vmatprep.mubr.bf16.mxu0 %v7135
      %8468 = vmatmul.mubr.bf16.gmra.mxu0 %v7134
      %v8469 = vpop.f32.mrf.mxu0
      %v8470 = vadd.f32 %v8373, %v8469
      %v8471 = vpop.f32.mrf.mxu0
      %v8472 = vpop.f32.mrf.mxu0
      %v8473 = vadd.f32 %v8376, %v8472
      %v8474 = vpop.f32.mrf.mxu0
      %8475 = vmatprep.mubr.bf16.mxu0 %v7151
      %8476 = vmatmul.mubr.bf16.gmra.mxu0 %v7150
      %v8477 = vpop.f32.mrf.mxu0
      %v8478 = vadd.f32 %v8381, %v8477
      %v8479 = vpop.f32.mrf.mxu0
      %v8480 = vpop.f32.mrf.mxu0
      %v8481 = vadd.f32 %v8384, %v8480
      %v8482 = vpop.f32.mrf.mxu0
      %8483 = vdwg.mxu0
      %8484 = vmatprep.subr.bf16.mxu0 0
      %8485 = vmatpush1.bf16.msra.mxu0 %v7992
      %8486 = vmatprep.subr.bf16.mxu0 0
      %8487 = vmatpush1.bf16.msra.mxu0 %v7991
      %8488 = vmatprep.subr.bf16.mxu0 0
      %8489 = vmatpush1.bf16.msra.mxu0 %v7990
      %8490 = vmatprep.subr.bf16.mxu0 0
      %8491 = vmatpush1.bf16.msra.mxu0 %v7989
      %8492 = vmatprep.subr.bf16.mxu0 0
      %8493 = vmatpush1.bf16.msra.mxu0 %v7988
      %8494 = vmatprep.subr.bf16.mxu0 0
      %8495 = vmatpush1.bf16.msra.mxu0 %v7987
      %8496 = vmatprep.subr.bf16.mxu0 0
      %8497 = vmatpush1.bf16.msra.mxu0 %v7986
      %8498 = vmatprep.subr.bf16.mxu0 0
      %8499 = vmatpush1.bf16.msra.mxu0 %v7985
      %8500 = vmatprep.subr.bf16.mxu0 0
      %8501 = vmatpush2.bf16.msra.mxu0 %v8000
      %8502 = vmatprep.subr.bf16.mxu0 0
      %8503 = vmatpush2.bf16.msra.mxu0 %v7999
      %8504 = vmatprep.subr.bf16.mxu0 0
      %8505 = vmatpush2.bf16.msra.mxu0 %v7998
      %8506 = vmatprep.subr.bf16.mxu0 0
      %8507 = vmatpush2.bf16.msra.mxu0 %v7997
      %8508 = vmatprep.subr.bf16.mxu0 0
      %8509 = vmatpush2.bf16.msra.mxu0 %v7996
      %8510 = vmatprep.subr.bf16.mxu0 0
      %8511 = vmatpush2.bf16.msra.mxu0 %v7995
      %8512 = vmatprep.subr.bf16.mxu0 0
      %8513 = vmatpush2.bf16.msra.mxu0 %v7994
      %8514 = vmatprep.subr.bf16.mxu0 0
      %8515 = vmatpush2.bf16.msra.mxu0 %v7993
      %8516 = vmatprep.mubr.bf16.mxu0 %v7041
      %8517 = vmatmul.mubr.bf16.gmra.mxu0 %v7040
      %v8518 = vpop.f32.mrf.mxu0
      %v8519 = vadd.f32 %v8422, %v8518
      %v8520 = vpop.f32.mrf.mxu0
      %v8521 = vpop.f32.mrf.mxu0
      %v8522 = vadd.f32 %v8425, %v8521
      %v8523 = vpop.f32.mrf.mxu0
      %8524 = vmatprep.mubr.bf16.mxu0 %v7057
      %8525 = vmatmul.mubr.bf16.gmra.mxu0 %v7056
      %v8526 = vpop.f32.mrf.mxu0
      %v8527 = vadd.f32 %v8430, %v8526
      %v8528 = vpop.f32.mrf.mxu0
      %v8529 = vpop.f32.mrf.mxu0
      %v8530 = vadd.f32 %v8433, %v8529
      %v8531 = vpop.f32.mrf.mxu0
      %8532 = vmatprep.mubr.bf16.mxu0 %v7073
      %8533 = vmatmul.mubr.bf16.gmra.mxu0 %v7072
      %v8534 = vpop.f32.mrf.mxu0
      %v8535 = vadd.f32 %v8438, %v8534
      %v8536 = vpop.f32.mrf.mxu0
      %v8537 = vpop.f32.mrf.mxu0
      %v8538 = vadd.f32 %v8441, %v8537
      %v8539 = vpop.f32.mrf.mxu0
      %8540 = vmatprep.mubr.bf16.mxu0 %v7089
      %8541 = vmatmul.mubr.bf16.gmra.mxu0 %v7088
      %v8542 = vpop.f32.mrf.mxu0
      %v8543 = vadd.f32 %v8446, %v8542
      %v8544 = vpop.f32.mrf.mxu0
      %v8545 = vpop.f32.mrf.mxu0
      %v8546 = vadd.f32 %v8449, %v8545
      %v8547 = vpop.f32.mrf.mxu0
      %8548 = vmatprep.mubr.bf16.mxu0 %v7105
      %8549 = vmatmul.mubr.bf16.gmra.mxu0 %v7104
      %v8550 = vpop.f32.mrf.mxu0
      %v8551 = vadd.f32 %v8454, %v8550
      %v8552 = vpop.f32.mrf.mxu0
      %v8553 = vpop.f32.mrf.mxu0
      %v8554 = vadd.f32 %v8457, %v8553
      %v8555 = vpop.f32.mrf.mxu0
      %8556 = vmatprep.mubr.bf16.mxu0 %v7121
      %8557 = vmatmul.mubr.bf16.gmra.mxu0 %v7120
      %v8558 = vpop.f32.mrf.mxu0
      %v8559 = vadd.f32 %v8462, %v8558
      %v8560 = vpop.f32.mrf.mxu0
      %v8561 = vpop.f32.mrf.mxu0
      %v8562 = vadd.f32 %v8465, %v8561
      %v8563 = vpop.f32.mrf.mxu0
      %8564 = vmatprep.mubr.bf16.mxu0 %v7137
      %8565 = vmatmul.mubr.bf16.gmra.mxu0 %v7136
      %v8566 = vpop.f32.mrf.mxu0
      %v8567 = vadd.f32 %v8470, %v8566
      %v8568 = vpop.f32.mrf.mxu0
      %v8569 = vpop.f32.mrf.mxu0
      %v8570 = vadd.f32 %v8473, %v8569
      %v8571 = vpop.f32.mrf.mxu0
      %8572 = vmatprep.mubr.bf16.mxu0 %v7153
      %8573 = vmatmul.mubr.bf16.gmra.mxu0 %v7152
      %v8574 = vpop.f32.mrf.mxu0
      %v8575 = vadd.f32 %v8478, %v8574
      %v8576 = vpop.f32.mrf.mxu0
      %v8577 = vpop.f32.mrf.mxu0
      %v8578 = vadd.f32 %v8481, %v8577
      %v8579 = vpop.f32.mrf.mxu0
      %8580 = vdwg.mxu0
      %8581 = vmatprep.subr.bf16.mxu0 0
      %8582 = vmatpush1.bf16.msra.mxu0 %v8008
      %8583 = vmatprep.subr.bf16.mxu0 0
      %8584 = vmatpush1.bf16.msra.mxu0 %v8007
      %8585 = vmatprep.subr.bf16.mxu0 0
      %8586 = vmatpush1.bf16.msra.mxu0 %v8006
      %8587 = vmatprep.subr.bf16.mxu0 0
      %8588 = vmatpush1.bf16.msra.mxu0 %v8005
      %8589 = vmatprep.subr.bf16.mxu0 0
      %8590 = vmatpush1.bf16.msra.mxu0 %v8004
      %8591 = vmatprep.subr.bf16.mxu0 0
      %8592 = vmatpush1.bf16.msra.mxu0 %v8003
      %8593 = vmatprep.subr.bf16.mxu0 0
      %8594 = vmatpush1.bf16.msra.mxu0 %v8002
      %8595 = vmatprep.subr.bf16.mxu0 0
      %8596 = vmatpush1.bf16.msra.mxu0 %v8001
      %8597 = vmatprep.subr.bf16.mxu0 0
      %8598 = vmatpush2.bf16.msra.mxu0 %v8016
      %8599 = vmatprep.subr.bf16.mxu0 0
      %8600 = vmatpush2.bf16.msra.mxu0 %v8015
      %8601 = vmatprep.subr.bf16.mxu0 0
      %8602 = vmatpush2.bf16.msra.mxu0 %v8014
      %8603 = vmatprep.subr.bf16.mxu0 0
      %8604 = vmatpush2.bf16.msra.mxu0 %v8013
      %8605 = vmatprep.subr.bf16.mxu0 0
      %8606 = vmatpush2.bf16.msra.mxu0 %v8012
      %8607 = vmatprep.subr.bf16.mxu0 0
      %8608 = vmatpush2.bf16.msra.mxu0 %v8011
      %8609 = vmatprep.subr.bf16.mxu0 0
      %8610 = vmatpush2.bf16.msra.mxu0 %v8010
      %8611 = vmatprep.subr.bf16.mxu0 0
      %8612 = vmatpush2.bf16.msra.mxu0 %v8009
      %8613 = vmatprep.mubr.bf16.mxu0 %v7043
      %8614 = vmatmul.mubr.bf16.gmra.mxu0 %v7042
      %v8615 = vpop.f32.mrf.mxu0
      %v8616 = vadd.f32 %v8519, %v8615
      %v8617 = vpop.f32.mrf.mxu0
      %v8618 = vpop.f32.mrf.mxu0
      %v8619 = vadd.f32 %v8522, %v8618
      %v8620 = vpop.f32.mrf.mxu0
      %8621 = vmatprep.mubr.bf16.mxu0 %v7059
      %8622 = vmatmul.mubr.bf16.gmra.mxu0 %v7058
      %v8623 = vpop.f32.mrf.mxu0
      %v8624 = vadd.f32 %v8527, %v8623
      %v8625 = vpop.f32.mrf.mxu0
      %v8626 = vpop.f32.mrf.mxu0
      %v8627 = vadd.f32 %v8530, %v8626
      %v8628 = vpop.f32.mrf.mxu0
      %8629 = vmatprep.mubr.bf16.mxu0 %v7075
      %8630 = vmatmul.mubr.bf16.gmra.mxu0 %v7074
      %v8631 = vpop.f32.mrf.mxu0
      %v8632 = vadd.f32 %v8535, %v8631
      %v8633 = vpop.f32.mrf.mxu0
      %v8634 = vpop.f32.mrf.mxu0
      %v8635 = vadd.f32 %v8538, %v8634
      %v8636 = vpop.f32.mrf.mxu0
      %8637 = vmatprep.mubr.bf16.mxu0 %v7091
      %8638 = vmatmul.mubr.bf16.gmra.mxu0 %v7090
      %v8639 = vpop.f32.mrf.mxu0
      %v8640 = vadd.f32 %v8543, %v8639
      %v8641 = vpop.f32.mrf.mxu0
      %v8642 = vpop.f32.mrf.mxu0
      %v8643 = vadd.f32 %v8546, %v8642
      %v8644 = vpop.f32.mrf.mxu0
      %8645 = vmatprep.mubr.bf16.mxu0 %v7107
      %8646 = vmatmul.mubr.bf16.gmra.mxu0 %v7106
      %v8647 = vpop.f32.mrf.mxu0
      %v8648 = vadd.f32 %v8551, %v8647
      %v8649 = vpop.f32.mrf.mxu0
      %v8650 = vpop.f32.mrf.mxu0
      %v8651 = vadd.f32 %v8554, %v8650
      %v8652 = vpop.f32.mrf.mxu0
      %8653 = vmatprep.mubr.bf16.mxu0 %v7123
      %8654 = vmatmul.mubr.bf16.gmra.mxu0 %v7122
      %v8655 = vpop.f32.mrf.mxu0
      %v8656 = vadd.f32 %v8559, %v8655
      %v8657 = vpop.f32.mrf.mxu0
      %v8658 = vpop.f32.mrf.mxu0
      %v8659 = vadd.f32 %v8562, %v8658
      %v8660 = vpop.f32.mrf.mxu0
      %8661 = vmatprep.mubr.bf16.mxu0 %v7139
      %8662 = vmatmul.mubr.bf16.gmra.mxu0 %v7138
      %v8663 = vpop.f32.mrf.mxu0
      %v8664 = vadd.f32 %v8567, %v8663
      %v8665 = vpop.f32.mrf.mxu0
      %v8666 = vpop.f32.mrf.mxu0
      %v8667 = vadd.f32 %v8570, %v8666
      %v8668 = vpop.f32.mrf.mxu0
      %8669 = vmatprep.mubr.bf16.mxu0 %v7155
      %8670 = vmatmul.mubr.bf16.gmra.mxu0 %v7154
      %v8671 = vpop.f32.mrf.mxu0
      %v8672 = vadd.f32 %v8575, %v8671
      %v8673 = vpop.f32.mrf.mxu0
      %v8674 = vpop.f32.mrf.mxu0
      %v8675 = vadd.f32 %v8578, %v8674
      %v8676 = vpop.f32.mrf.mxu0
      %8677 = vdwg.mxu0
      %8678 = vmatprep.subr.bf16.mxu0 0
      %8679 = vmatpush1.bf16.msra.mxu0 %v8024
      %8680 = vmatprep.subr.bf16.mxu0 0
      %8681 = vmatpush1.bf16.msra.mxu0 %v8023
      %8682 = vmatprep.subr.bf16.mxu0 0
      %8683 = vmatpush1.bf16.msra.mxu0 %v8022
      %8684 = vmatprep.subr.bf16.mxu0 0
      %8685 = vmatpush1.bf16.msra.mxu0 %v8021
      %8686 = vmatprep.subr.bf16.mxu0 0
      %8687 = vmatpush1.bf16.msra.mxu0 %v8020
      %8688 = vmatprep.subr.bf16.mxu0 0
      %8689 = vmatpush1.bf16.msra.mxu0 %v8019
      %8690 = vmatprep.subr.bf16.mxu0 0
      %8691 = vmatpush1.bf16.msra.mxu0 %v8018
      %8692 = vmatprep.subr.bf16.mxu0 0
      %8693 = vmatpush1.bf16.msra.mxu0 %v8017
      %8694 = vmatprep.subr.bf16.mxu0 0
      %8695 = vmatpush2.bf16.msra.mxu0 %v8032
      %8696 = vmatprep.subr.bf16.mxu0 0
      %8697 = vmatpush2.bf16.msra.mxu0 %v8031
      %8698 = vmatprep.subr.bf16.mxu0 0
      %8699 = vmatpush2.bf16.msra.mxu0 %v8030
      %8700 = vmatprep.subr.bf16.mxu0 0
      %8701 = vmatpush2.bf16.msra.mxu0 %v8029
      %8702 = vmatprep.subr.bf16.mxu0 0
      %8703 = vmatpush2.bf16.msra.mxu0 %v8028
      %8704 = vmatprep.subr.bf16.mxu0 0
      %8705 = vmatpush2.bf16.msra.mxu0 %v8027
      %8706 = vmatprep.subr.bf16.mxu0 0
      %8707 = vmatpush2.bf16.msra.mxu0 %v8026
      %8708 = vmatprep.subr.bf16.mxu0 0
      %8709 = vmatpush2.bf16.msra.mxu0 %v8025
      %8710 = vmatprep.mubr.bf16.mxu0 %v7045
      %8711 = vmatmul.mubr.bf16.gmra.mxu0 %v7044
      %v8712 = vpop.f32.mrf.mxu0
      %v8713 = vadd.f32 %v8616, %v8712
      %v8714 = vpop.f32.mrf.mxu0
      %v8715 = vpop.f32.mrf.mxu0
      %v8716 = vadd.f32 %v8619, %v8715
      %v8717 = vpop.f32.mrf.mxu0
      %8718 = vmatprep.mubr.bf16.mxu0 %v7061
      %8719 = vmatmul.mubr.bf16.gmra.mxu0 %v7060
      %v8720 = vpop.f32.mrf.mxu0
      %v8721 = vadd.f32 %v8624, %v8720
      %v8722 = vpop.f32.mrf.mxu0
      %v8723 = vpop.f32.mrf.mxu0
      %v8724 = vadd.f32 %v8627, %v8723
      %v8725 = vpop.f32.mrf.mxu0
      %8726 = vmatprep.mubr.bf16.mxu0 %v7077
      %8727 = vmatmul.mubr.bf16.gmra.mxu0 %v7076
      %v8728 = vpop.f32.mrf.mxu0
      %v8729 = vadd.f32 %v8632, %v8728
      %v8730 = vpop.f32.mrf.mxu0
      %v8731 = vpop.f32.mrf.mxu0
      %v8732 = vadd.f32 %v8635, %v8731
      %v8733 = vpop.f32.mrf.mxu0
      %8734 = vmatprep.mubr.bf16.mxu0 %v7093
      %8735 = vmatmul.mubr.bf16.gmra.mxu0 %v7092
      %v8736 = vpop.f32.mrf.mxu0
      %v8737 = vadd.f32 %v8640, %v8736
      %v8738 = vpop.f32.mrf.mxu0
      %v8739 = vpop.f32.mrf.mxu0
      %v8740 = vadd.f32 %v8643, %v8739
      %v8741 = vpop.f32.mrf.mxu0
      %8742 = vmatprep.mubr.bf16.mxu0 %v7109
      %8743 = vmatmul.mubr.bf16.gmra.mxu0 %v7108
      %v8744 = vpop.f32.mrf.mxu0
      %v8745 = vadd.f32 %v8648, %v8744
      %v8746 = vpop.f32.mrf.mxu0
      %v8747 = vpop.f32.mrf.mxu0
      %v8748 = vadd.f32 %v8651, %v8747
      %v8749 = vpop.f32.mrf.mxu0
      %8750 = vmatprep.mubr.bf16.mxu0 %v7125
      %8751 = vmatmul.mubr.bf16.gmra.mxu0 %v7124
      %v8752 = vpop.f32.mrf.mxu0
      %v8753 = vadd.f32 %v8656, %v8752
      %v8754 = vpop.f32.mrf.mxu0
      %v8755 = vpop.f32.mrf.mxu0
      %v8756 = vadd.f32 %v8659, %v8755
      %v8757 = vpop.f32.mrf.mxu0
      %8758 = vmatprep.mubr.bf16.mxu0 %v7141
      %8759 = vmatmul.mubr.bf16.gmra.mxu0 %v7140
      %v8760 = vpop.f32.mrf.mxu0
      %v8761 = vadd.f32 %v8664, %v8760
      %v8762 = vpop.f32.mrf.mxu0
      %v8763 = vpop.f32.mrf.mxu0
      %v8764 = vadd.f32 %v8667, %v8763
      %v8765 = vpop.f32.mrf.mxu0
      %8766 = vmatprep.mubr.bf16.mxu0 %v7157
      %8767 = vmatmul.mubr.bf16.gmra.mxu0 %v7156
      %v8768 = vpop.f32.mrf.mxu0
      %v8769 = vadd.f32 %v8672, %v8768
      %v8770 = vpop.f32.mrf.mxu0
      %v8771 = vpop.f32.mrf.mxu0
      %v8772 = vadd.f32 %v8675, %v8771
      %v8773 = vpop.f32.mrf.mxu0
      %8774 = vdwg.mxu0
      %8775 = vmatprep.subr.bf16.mxu0 0
      %8776 = vmatpush1.bf16.msra.mxu0 %v8040
      %8777 = vmatprep.subr.bf16.mxu0 0
      %8778 = vmatpush1.bf16.msra.mxu0 %v8039
      %8779 = vmatprep.subr.bf16.mxu0 0
      %8780 = vmatpush1.bf16.msra.mxu0 %v8038
      %8781 = vmatprep.subr.bf16.mxu0 0
      %8782 = vmatpush1.bf16.msra.mxu0 %v8037
      %8783 = vmatprep.subr.bf16.mxu0 0
      %8784 = vmatpush1.bf16.msra.mxu0 %v8036
      %8785 = vmatprep.subr.bf16.mxu0 0
      %8786 = vmatpush1.bf16.msra.mxu0 %v8035
      %8787 = vmatprep.subr.bf16.mxu0 0
      %8788 = vmatpush1.bf16.msra.mxu0 %v8034
      %8789 = vmatprep.subr.bf16.mxu0 0
      %8790 = vmatpush1.bf16.msra.mxu0 %v8033
      %8791 = vmatprep.subr.bf16.mxu0 0
      %8792 = vmatpush2.bf16.msra.mxu0 %v8048
      %8793 = vmatprep.subr.bf16.mxu0 0
      %8794 = vmatpush2.bf16.msra.mxu0 %v8047
      %8795 = vmatprep.subr.bf16.mxu0 0
      %8796 = vmatpush2.bf16.msra.mxu0 %v8046
      %8797 = vmatprep.subr.bf16.mxu0 0
      %8798 = vmatpush2.bf16.msra.mxu0 %v8045
      %8799 = vmatprep.subr.bf16.mxu0 0
      %8800 = vmatpush2.bf16.msra.mxu0 %v8044
      %8801 = vmatprep.subr.bf16.mxu0 0
      %8802 = vmatpush2.bf16.msra.mxu0 %v8043
      %8803 = vmatprep.subr.bf16.mxu0 0
      %8804 = vmatpush2.bf16.msra.mxu0 %v8042
      %8805 = vmatprep.subr.bf16.mxu0 0
      %8806 = vmatpush2.bf16.msra.mxu0 %v8041
      %8807 = vmatprep.mubr.bf16.mxu0 %v7047
      %8808 = vmatmul.mubr.bf16.gmra.mxu0 %v7046
      %v8809 = vpop.f32.mrf.mxu0
      %v8810 = vadd.f32 %v8713, %v8809
      %v8811 = vpop.f32.mrf.mxu0
      %v8812 = vpop.f32.mrf.mxu0
      %v8813 = vadd.f32 %v8716, %v8812
      %v8814 = vpop.f32.mrf.mxu0
      %8815 = vmatprep.mubr.bf16.mxu0 %v7063
      %8816 = vmatmul.mubr.bf16.gmra.mxu0 %v7062
      %v8817 = vpop.f32.mrf.mxu0
      %v8818 = vadd.f32 %v8721, %v8817
      %v8819 = vpop.f32.mrf.mxu0
      %v8820 = vpop.f32.mrf.mxu0
      %v8821 = vadd.f32 %v8724, %v8820
      %v8822 = vpop.f32.mrf.mxu0
      %8823 = vmatprep.mubr.bf16.mxu0 %v7079
      %8824 = vmatmul.mubr.bf16.gmra.mxu0 %v7078
      %v8825 = vpop.f32.mrf.mxu0
      %v8826 = vadd.f32 %v8729, %v8825
      %v8827 = vpop.f32.mrf.mxu0
      %v8828 = vpop.f32.mrf.mxu0
      %v8829 = vadd.f32 %v8732, %v8828
      %v8830 = vpop.f32.mrf.mxu0
      %8831 = vmatprep.mubr.bf16.mxu0 %v7095
      %8832 = vmatmul.mubr.bf16.gmra.mxu0 %v7094
      %v8833 = vpop.f32.mrf.mxu0
      %v8834 = vadd.f32 %v8737, %v8833
      %v8835 = vpop.f32.mrf.mxu0
      %v8836 = vpop.f32.mrf.mxu0
      %v8837 = vadd.f32 %v8740, %v8836
      %v8838 = vpop.f32.mrf.mxu0
      %8839 = vmatprep.mubr.bf16.mxu0 %v7111
      %8840 = vmatmul.mubr.bf16.gmra.mxu0 %v7110
      %v8841 = vpop.f32.mrf.mxu0
      %v8842 = vadd.f32 %v8745, %v8841
      %v8843 = vpop.f32.mrf.mxu0
      %v8844 = vpop.f32.mrf.mxu0
      %v8845 = vadd.f32 %v8748, %v8844
      %v8846 = vpop.f32.mrf.mxu0
      %8847 = vmatprep.mubr.bf16.mxu0 %v7127
      %8848 = vmatmul.mubr.bf16.gmra.mxu0 %v7126
      %v8849 = vpop.f32.mrf.mxu0
      %v8850 = vadd.f32 %v8753, %v8849
      %v8851 = vpop.f32.mrf.mxu0
      %v8852 = vpop.f32.mrf.mxu0
      %v8853 = vadd.f32 %v8756, %v8852
      %v8854 = vpop.f32.mrf.mxu0
      %8855 = vmatprep.mubr.bf16.mxu0 %v7143
      %8856 = vmatmul.mubr.bf16.gmra.mxu0 %v7142
      %v8857 = vpop.f32.mrf.mxu0
      %v8858 = vadd.f32 %v8761, %v8857
      %v8859 = vpop.f32.mrf.mxu0
      %v8860 = vpop.f32.mrf.mxu0
      %v8861 = vadd.f32 %v8764, %v8860
      %v8862 = vpop.f32.mrf.mxu0
      %8863 = vmatprep.mubr.bf16.mxu0 %v7159
      %8864 = vmatmul.mubr.bf16.gmra.mxu0 %v7158
      %v8865 = vpop.f32.mrf.mxu0
      %v8866 = vadd.f32 %v8769, %v8865
      %v8867 = vpop.f32.mrf.mxu0
      %v8868 = vpop.f32.mrf.mxu0
      %v8869 = vadd.f32 %v8772, %v8868
      %v8870 = vpop.f32.mrf.mxu0
      %8871 = vdwg.mxu0
      %8872 = vmatprep.subr.bf16.mxu0 0
      %8873 = vmatpush1.bf16.msra.mxu0 %v8056
      %8874 = vmatprep.subr.bf16.mxu0 0
      %8875 = vmatpush1.bf16.msra.mxu0 %v8055
      %8876 = vmatprep.subr.bf16.mxu0 0
      %8877 = vmatpush1.bf16.msra.mxu0 %v8054
      %8878 = vmatprep.subr.bf16.mxu0 0
      %8879 = vmatpush1.bf16.msra.mxu0 %v8053
      %8880 = vmatprep.subr.bf16.mxu0 0
      %8881 = vmatpush1.bf16.msra.mxu0 %v8052
      %8882 = vmatprep.subr.bf16.mxu0 0
      %8883 = vmatpush1.bf16.msra.mxu0 %v8051
      %8884 = vmatprep.subr.bf16.mxu0 0
      %8885 = vmatpush1.bf16.msra.mxu0 %v8050
      %8886 = vmatprep.subr.bf16.mxu0 0
      %8887 = vmatpush1.bf16.msra.mxu0 %v8049
      %8888 = vmatprep.subr.bf16.mxu0 0
      %8889 = vmatpush2.bf16.msra.mxu0 %v8064
      %8890 = vmatprep.subr.bf16.mxu0 0
      %8891 = vmatpush2.bf16.msra.mxu0 %v8063
      %8892 = vmatprep.subr.bf16.mxu0 0
      %8893 = vmatpush2.bf16.msra.mxu0 %v8062
      %8894 = vmatprep.subr.bf16.mxu0 0
      %8895 = vmatpush2.bf16.msra.mxu0 %v8061
      %8896 = vmatprep.subr.bf16.mxu0 0
      %8897 = vmatpush2.bf16.msra.mxu0 %v8060
      %8898 = vmatprep.subr.bf16.mxu0 0
      %8899 = vmatpush2.bf16.msra.mxu0 %v8059
      %8900 = vmatprep.subr.bf16.mxu0 0
      %8901 = vmatpush2.bf16.msra.mxu0 %v8058
      %8902 = vmatprep.subr.bf16.mxu0 0
      %8903 = vmatpush2.bf16.msra.mxu0 %v8057
      %8904 = vmatprep.mubr.bf16.mxu0 %v7049
      %8905 = vmatmul.mubr.bf16.gmra.mxu0 %v7048
      %v8906 = vpop.f32.mrf.mxu0
      %v8907 = vadd.f32 %v8810, %v8906
      %v8908 = vpop.f32.mrf.mxu0
      %v8909 = vpop.f32.mrf.mxu0
      %v8910 = vadd.f32 %v8813, %v8909
      %v8911 = vpop.f32.mrf.mxu0
      %8912 = vmatprep.mubr.bf16.mxu0 %v7065
      %8913 = vmatmul.mubr.bf16.gmra.mxu0 %v7064
      %v8914 = vpop.f32.mrf.mxu0
      %v8915 = vadd.f32 %v8818, %v8914
      %v8916 = vpop.f32.mrf.mxu0
      %v8917 = vpop.f32.mrf.mxu0
      %v8918 = vadd.f32 %v8821, %v8917
      %v8919 = vpop.f32.mrf.mxu0
      %8920 = vmatprep.mubr.bf16.mxu0 %v7081
      %8921 = vmatmul.mubr.bf16.gmra.mxu0 %v7080
      %v8922 = vpop.f32.mrf.mxu0
      %v8923 = vadd.f32 %v8826, %v8922
      %v8924 = vpop.f32.mrf.mxu0
      %v8925 = vpop.f32.mrf.mxu0
      %v8926 = vadd.f32 %v8829, %v8925
      %v8927 = vpop.f32.mrf.mxu0
      %8928 = vmatprep.mubr.bf16.mxu0 %v7097
      %8929 = vmatmul.mubr.bf16.gmra.mxu0 %v7096
      %v8930 = vpop.f32.mrf.mxu0
      %v8931 = vadd.f32 %v8834, %v8930
      %v8932 = vpop.f32.mrf.mxu0
      %v8933 = vpop.f32.mrf.mxu0
      %v8934 = vadd.f32 %v8837, %v8933
      %v8935 = vpop.f32.mrf.mxu0
      %8936 = vmatprep.mubr.bf16.mxu0 %v7113
      %8937 = vmatmul.mubr.bf16.gmra.mxu0 %v7112
      %v8938 = vpop.f32.mrf.mxu0
      %v8939 = vadd.f32 %v8842, %v8938
      %v8940 = vpop.f32.mrf.mxu0
      %v8941 = vpop.f32.mrf.mxu0
      %v8942 = vadd.f32 %v8845, %v8941
      %v8943 = vpop.f32.mrf.mxu0
      %8944 = vmatprep.mubr.bf16.mxu0 %v7129
      %8945 = vmatmul.mubr.bf16.gmra.mxu0 %v7128
      %v8946 = vpop.f32.mrf.mxu0
      %v8947 = vadd.f32 %v8850, %v8946
      %v8948 = vpop.f32.mrf.mxu0
      %v8949 = vpop.f32.mrf.mxu0
      %v8950 = vadd.f32 %v8853, %v8949
      %v8951 = vpop.f32.mrf.mxu0
      %8952 = vmatprep.mubr.bf16.mxu0 %v7145
      %8953 = vmatmul.mubr.bf16.gmra.mxu0 %v7144
      %v8954 = vpop.f32.mrf.mxu0
      %v8955 = vadd.f32 %v8858, %v8954
      %v8956 = vpop.f32.mrf.mxu0
      %v8957 = vpop.f32.mrf.mxu0
      %v8958 = vadd.f32 %v8861, %v8957
      %v8959 = vpop.f32.mrf.mxu0
      %8960 = vmatprep.mubr.bf16.mxu0 %v7161
      %8961 = vmatmul.mubr.bf16.gmra.mxu0 %v7160
      %v8962 = vpop.f32.mrf.mxu0
      %v8963 = vadd.f32 %v8866, %v8962
      %v8964 = vpop.f32.mrf.mxu0
      %v8965 = vpop.f32.mrf.mxu0
      %v8966 = vadd.f32 %v8869, %v8965
      %v8967 = vpop.f32.mrf.mxu0
      %8968 = vdwg.mxu0
      %v8969 = vadd.f32 %v5550, %v8907
      %v8970 = vadd.f32 %v5551, %v8910
      %v8971 = vadd.f32 %v5552, %v8915
      %v8972 = vadd.f32 %v5553, %v8918
      %v8973 = vadd.f32 %v5554, %v8923
      %v8974 = vadd.f32 %v5555, %v8926
      %v8975 = vadd.f32 %v5556, %v8931
      %v8976 = vadd.f32 %v5557, %v8934
      %v8977 = vadd.f32 %v5558, %v8939
      %v8978 = vadd.f32 %v5559, %v8942
      %v8979 = vadd.f32 %v5560, %v8947
      %v8980 = vadd.f32 %v5561, %v8950
      %v8981 = vadd.f32 %v5562, %v8955
      %v8982 = vadd.f32 %v5563, %v8958
      %v8983 = vadd.f32 %v5564, %v8963
      %v8984 = vadd.f32 %v5565, %v8966
      %v8985 = vld [vmem:[%s890] sm:$0x1]
      %v8986 = vld [vmem:[%s893] sm:$0x1]
      %v8987 = vsel %vm1411, %v8969, 0.0
      %8988 = vadd.xlane.f32.xlu0 %v8987
      %v8989 = vpop.xlane.xlu0 %8988
      %v8990 = vsel %vm1411, %v8970, 0.0
      %8991 = vadd.xlane.f32.xlu0 %v8990
      %v8992 = vpop.xlane.xlu0 %8991
      %v8993 = vsel %vm1411, %v8971, 0.0
      %8994 = vadd.xlane.f32.xlu0 %v8993
      %v8995 = vpop.xlane.xlu0 %8994
      %v8996 = vsel %vm1411, %v8972, 0.0
      %8997 = vadd.xlane.f32.xlu0 %v8996
      %v8998 = vpop.xlane.xlu0 %8997
      %v8999 = vsel %vm1411, %v8973, 0.0
      %9000 = vadd.xlane.f32.xlu0 %v8999
      %v9001 = vpop.xlane.xlu0 %9000
      %v9002 = vsel %vm1411, %v8974, 0.0
      %9003 = vadd.xlane.f32.xlu0 %v9002
      %v9004 = vpop.xlane.xlu0 %9003
      %v9005 = vsel %vm1411, %v8975, 0.0
      %9006 = vadd.xlane.f32.xlu0 %v9005
      %v9007 = vpop.xlane.xlu0 %9006
      %v9008 = vsel %vm1411, %v8976, 0.0
      %9009 = vadd.xlane.f32.xlu0 %v9008
      %v9010 = vpop.xlane.xlu0 %9009
      %v9011 = vsel %vm1411, %v8977, 0.0
      %9012 = vadd.xlane.f32.xlu0 %v9011
      %v9013 = vpop.xlane.xlu0 %9012
      %v9014 = vsel %vm1411, %v8978, 0.0
      %9015 = vadd.xlane.f32.xlu0 %v9014
      %v9016 = vpop.xlane.xlu0 %9015
      %v9017 = vsel %vm1411, %v8979, 0.0
      %9018 = vadd.xlane.f32.xlu0 %v9017
      %v9019 = vpop.xlane.xlu0 %9018
      %v9020 = vsel %vm1411, %v8980, 0.0
      %9021 = vadd.xlane.f32.xlu0 %v9020
      %v9022 = vpop.xlane.xlu0 %9021
      %v9023 = vsel %vm1411, %v8981, 0.0
      %9024 = vadd.xlane.f32.xlu0 %v9023
      %v9025 = vpop.xlane.xlu0 %9024
      %v9026 = vsel %vm1411, %v8982, 0.0
      %9027 = vadd.xlane.f32.xlu0 %v9026
      %v9028 = vpop.xlane.xlu0 %9027
      %v9029 = vsel %vm1411, %v8983, 0.0
      %9030 = vadd.xlane.f32.xlu0 %v9029
      %v9031 = vpop.xlane.xlu0 %9030
      %v9032 = vsel %vm1411, %v8984, 0.0
      %9033 = vadd.xlane.f32.xlu0 %v9032
      %v9034 = vpop.xlane.xlu0 %9033
      %v9035 = vmul.f32 %v8989, %v5329
      %v9036 = vmul.f32 %v8992, %v5329
      %v9037 = vmul.f32 %v8995, %v5329
      %v9038 = vmul.f32 %v8998, %v5329
      %v9039 = vmul.f32 %v9001, %v5329
      %v9040 = vmul.f32 %v9004, %v5329
      %v9041 = vmul.f32 %v9007, %v5329
      %v9042 = vmul.f32 %v9010, %v5329
      %v9043 = vmul.f32 %v9013, %v5329
      %v9044 = vmul.f32 %v9016, %v5329
      %v9045 = vmul.f32 %v9019, %v5329
      %v9046 = vmul.f32 %v9022, %v5329
      %v9047 = vmul.f32 %v9025, %v5329
      %v9048 = vmul.f32 %v9028, %v5329
      %v9049 = vmul.f32 %v9031, %v5329
      %v9050 = vmul.f32 %v9034, %v5329
      %v9051 = vsub.f32 %v8969, %v9035
      %v9052 = vsub.f32 %v8970, %v9036
      %v9053 = vsub.f32 %v8971, %v9037
      %v9054 = vsub.f32 %v8972, %v9038
      %v9055 = vsub.f32 %v8973, %v9039
      %v9056 = vsub.f32 %v8974, %v9040
      %v9057 = vsub.f32 %v8975, %v9041
      %v9058 = vsub.f32 %v8976, %v9042
      %v9059 = vsub.f32 %v8977, %v9043
      %v9060 = vsub.f32 %v8978, %v9044
      %v9061 = vsub.f32 %v8979, %v9045
      %v9062 = vsub.f32 %v8980, %v9046
      %v9063 = vsub.f32 %v8981, %v9047
      %v9064 = vsub.f32 %v8982, %v9048
      %v9065 = vsub.f32 %v8983, %v9049
      %v9066 = vsub.f32 %v8984, %v9050
      %v9067 = vmul.f32 %v9051, %v9051
      %v9068 = vmul.f32 %v9052, %v9052
      %v9069 = vmul.f32 %v9053, %v9053
      %v9070 = vmul.f32 %v9054, %v9054
      %v9071 = vmul.f32 %v9055, %v9055
      %v9072 = vmul.f32 %v9056, %v9056
      %v9073 = vmul.f32 %v9057, %v9057
      %v9074 = vmul.f32 %v9058, %v9058
      %v9075 = vmul.f32 %v9059, %v9059
      %v9076 = vmul.f32 %v9060, %v9060
      %v9077 = vmul.f32 %v9061, %v9061
      %v9078 = vmul.f32 %v9062, %v9062
      %v9079 = vmul.f32 %v9063, %v9063
      %v9080 = vmul.f32 %v9064, %v9064
      %v9081 = vmul.f32 %v9065, %v9065
      %v9082 = vmul.f32 %v9066, %v9066
      %v9083 = vsel %vm1411, %v9067, 0.0
      %9084 = vadd.xlane.f32.xlu0 %v9083
      %v9085 = vpop.xlane.xlu0 %9084
      %v9086 = vsel %vm1411, %v9068, 0.0
      %9087 = vadd.xlane.f32.xlu0 %v9086
      %v9088 = vpop.xlane.xlu0 %9087
      %v9089 = vsel %vm1411, %v9069, 0.0
      %9090 = vadd.xlane.f32.xlu0 %v9089
      %v9091 = vpop.xlane.xlu0 %9090
      %v9092 = vsel %vm1411, %v9070, 0.0
      %9093 = vadd.xlane.f32.xlu0 %v9092
      %v9094 = vpop.xlane.xlu0 %9093
      %v9095 = vsel %vm1411, %v9071, 0.0
      %9096 = vadd.xlane.f32.xlu0 %v9095
      %v9097 = vpop.xlane.xlu0 %9096
      %v9098 = vsel %vm1411, %v9072, 0.0
      %9099 = vadd.xlane.f32.xlu0 %v9098
      %v9100 = vpop.xlane.xlu0 %9099
      %v9101 = vsel %vm1411, %v9073, 0.0
      %9102 = vadd.xlane.f32.xlu0 %v9101
      %v9103 = vpop.xlane.xlu0 %9102
      %v9104 = vsel %vm1411, %v9074, 0.0
      %9105 = vadd.xlane.f32.xlu0 %v9104
      %v9106 = vpop.xlane.xlu0 %9105
      %v9107 = vsel %vm1411, %v9075, 0.0
      %9108 = vadd.xlane.f32.xlu0 %v9107
      %v9109 = vpop.xlane.xlu0 %9108
      %v9110 = vsel %vm1411, %v9076, 0.0
      %9111 = vadd.xlane.f32.xlu0 %v9110
      %v9112 = vpop.xlane.xlu0 %9111
      %v9113 = vsel %vm1411, %v9077, 0.0
      %9114 = vadd.xlane.f32.xlu0 %v9113
      %v9115 = vpop.xlane.xlu0 %9114
      %v9116 = vsel %vm1411, %v9078, 0.0
      %9117 = vadd.xlane.f32.xlu0 %v9116
      %v9118 = vpop.xlane.xlu0 %9117
      %v9119 = vsel %vm1411, %v9079, 0.0
      %9120 = vadd.xlane.f32.xlu0 %v9119
      %v9121 = vpop.xlane.xlu0 %9120
      %v9122 = vsel %vm1411, %v9080, 0.0
      %9123 = vadd.xlane.f32.xlu0 %v9122
      %v9124 = vpop.xlane.xlu0 %9123
      %v9125 = vsel %vm1411, %v9081, 0.0
      %9126 = vadd.xlane.f32.xlu0 %v9125
      %v9127 = vpop.xlane.xlu0 %9126
      %v9128 = vsel %vm1411, %v9082, 0.0
      %9129 = vadd.xlane.f32.xlu0 %v9128
      %v9130 = vpop.xlane.xlu0 %9129
      %v9131 = vmul.f32 %v9085, %v5329
      %v9132 = vmul.f32 %v9088, %v5329
      %v9133 = vmul.f32 %v9091, %v5329
      %v9134 = vmul.f32 %v9094, %v5329
      %v9135 = vmul.f32 %v9097, %v5329
      %v9136 = vmul.f32 %v9100, %v5329
      %v9137 = vmul.f32 %v9103, %v5329
      %v9138 = vmul.f32 %v9106, %v5329
      %v9139 = vmul.f32 %v9109, %v5329
      %v9140 = vmul.f32 %v9112, %v5329
      %v9141 = vmul.f32 %v9115, %v5329
      %v9142 = vmul.f32 %v9118, %v5329
      %v9143 = vmul.f32 %v9121, %v5329
      %v9144 = vmul.f32 %v9124, %v5329
      %v9145 = vmul.f32 %v9127, %v5329
      %v9146 = vmul.f32 %v9130, %v5329
      %v9147 = vadd.f32 %v9131, 1e-05
      %v9148 = vadd.f32 %v9132, 1e-05
      %v9149 = vadd.f32 %v9133, 1e-05
      %v9150 = vadd.f32 %v9134, 1e-05
      %v9151 = vadd.f32 %v9135, 1e-05
      %v9152 = vadd.f32 %v9136, 1e-05
      %v9153 = vadd.f32 %v9137, 1e-05
      %v9154 = vadd.f32 %v9138, 1e-05
      %v9155 = vadd.f32 %v9139, 1e-05
      %v9156 = vadd.f32 %v9140, 1e-05
      %v9157 = vadd.f32 %v9141, 1e-05
      %v9158 = vadd.f32 %v9142, 1e-05
      %v9159 = vadd.f32 %v9143, 1e-05
      %v9160 = vadd.f32 %v9144, 1e-05
      %v9161 = vadd.f32 %v9145, 1e-05
      %v9162 = vadd.f32 %v9146, 1e-05
      %v9163 = vrsqrt.pop %v9147
      %v9164 = vrsqrt.pop %v9148
      %v9165 = vrsqrt.pop %v9149
      %v9166 = vrsqrt.pop %v9150
      %v9167 = vrsqrt.pop %v9151
      %v9168 = vrsqrt.pop %v9152
      %v9169 = vrsqrt.pop %v9153
      %v9170 = vrsqrt.pop %v9154
      %v9171 = vrsqrt.pop %v9155
      %v9172 = vrsqrt.pop %v9156
      %v9173 = vrsqrt.pop %v9157
      %v9174 = vrsqrt.pop %v9158
      %v9175 = vrsqrt.pop %v9159
      %v9176 = vrsqrt.pop %v9160
      %v9177 = vrsqrt.pop %v9161
      %v9178 = vrsqrt.pop %v9162
      %v9179 = vmul.f32 %v9051, %v9163
      %v9180 = vmul.f32 %v9052, %v9164
      %v9181 = vmul.f32 %v9053, %v9165
      %v9182 = vmul.f32 %v9054, %v9166
      %v9183 = vmul.f32 %v9055, %v9167
      %v9184 = vmul.f32 %v9056, %v9168
      %v9185 = vmul.f32 %v9057, %v9169
      %v9186 = vmul.f32 %v9058, %v9170
      %v9187 = vmul.f32 %v9059, %v9171
      %v9188 = vmul.f32 %v9060, %v9172
      %v9189 = vmul.f32 %v9061, %v9173
      %v9190 = vmul.f32 %v9062, %v9174
      %v9191 = vmul.f32 %v9063, %v9175
      %v9192 = vmul.f32 %v9064, %v9176
      %v9193 = vmul.f32 %v9065, %v9177
      %v9194 = vmul.f32 %v9066, %v9178
      %v9196 = vlaneseq
      %v9197 = vshrl.u32 %v9196, 7
      %v9198 = vsub.s32 0, %v9197
      %v9199 = vrot.slane %v8985, %v9198
      %v9201 = vmul.f32 %v9179, %v9199
      %v9202 = vmul.f32 %v9180, %v9199
      %v9203 = vmul.f32 %v9181, %v9199
      %v9204 = vmul.f32 %v9182, %v9199
      %v9205 = vmul.f32 %v9183, %v9199
      %v9206 = vmul.f32 %v9184, %v9199
      %v9207 = vmul.f32 %v9185, %v9199
      %v9208 = vmul.f32 %v9186, %v9199
      %v9209 = vmul.f32 %v9187, %v9199
      %v9210 = vmul.f32 %v9188, %v9199
      %v9211 = vmul.f32 %v9189, %v9199
      %v9212 = vmul.f32 %v9190, %v9199
      %v9213 = vmul.f32 %v9191, %v9199
      %v9214 = vmul.f32 %v9192, %v9199
      %v9215 = vmul.f32 %v9193, %v9199
      %v9216 = vmul.f32 %v9194, %v9199
      %v9218 = vlaneseq
      %v9219 = vshrl.u32 %v9218, 7
      %v9220 = vsub.s32 0, %v9219
      %v9221 = vrot.slane %v8986, %v9220
      %v9223 = vadd.f32 %v9201, %v9221
      %v9224 = vadd.f32 %v9202, %v9221
      %v9225 = vadd.f32 %v9203, %v9221
      %v9226 = vadd.f32 %v9204, %v9221
      %v9227 = vadd.f32 %v9205, %v9221
      %v9228 = vadd.f32 %v9206, %v9221
      %v9229 = vadd.f32 %v9207, %v9221
      %v9230 = vadd.f32 %v9208, %v9221
      %v9231 = vadd.f32 %v9209, %v9221
      %v9232 = vadd.f32 %v9210, %v9221
      %v9233 = vadd.f32 %v9211, %v9221
      %v9234 = vadd.f32 %v9212, %v9221
      %v9235 = vadd.f32 %v9213, %v9221
      %v9236 = vadd.f32 %v9214, %v9221
      %v9237 = vadd.f32 %v9215, %v9221
      %v9238 = vadd.f32 %v9216, %v9221
      %9239 = vst.msk [vmem:[#allocation2] sm:$0xff] %vm1411, %v9223
      %9240 = vst.msk [vmem:[#allocation2 + $0x8] sm:$0xff] %vm1411, %v9224
      %9241 = vst.msk [vmem:[#allocation2 + $0x10] sm:$0xff] %vm1411, %v9225
      %9242 = vst.msk [vmem:[#allocation2 + $0x18] sm:$0xff] %vm1411, %v9226
      %9243 = vst.msk [vmem:[#allocation2 + $0x20] sm:$0xff] %vm1411, %v9227
      %9244 = vst.msk [vmem:[#allocation2 + $0x28] sm:$0xff] %vm1411, %v9228
      %9245 = vst.msk [vmem:[#allocation2 + $0x30] sm:$0xff] %vm1411, %v9229
      %9246 = vst.msk [vmem:[#allocation2 + $0x38] sm:$0xff] %vm1411, %v9230
      %9247 = vst.msk [vmem:[#allocation2 + $0x40] sm:$0xff] %vm1411, %v9231
      %9248 = vst.msk [vmem:[#allocation2 + $0x48] sm:$0xff] %vm1411, %v9232
      %9249 = vst.msk [vmem:[#allocation2 + $0x50] sm:$0xff] %vm1411, %v9233
      %9250 = vst.msk [vmem:[#allocation2 + $0x58] sm:$0xff] %vm1411, %v9234
      %9251 = vst.msk [vmem:[#allocation2 + $0x60] sm:$0xff] %vm1411, %v9235
      %9252 = vst.msk [vmem:[#allocation2 + $0x68] sm:$0xff] %vm1411, %v9236
      %9253 = vst.msk [vmem:[#allocation2 + $0x70] sm:$0xff] %vm1411, %v9237
      %9254 = vst.msk [vmem:[#allocation2 + $0x78] sm:$0xff] %vm1411, %v9238
      %p9255 = scmp.eq.s32.totalorder %s32, 11
      // Predicated region
      $region109: #{attention_net_forward.2} parent=103 // pred_check
        %p9256 = pneg %p9255
      $region110: #{attention_net_forward.2} parent=103 // pred_check_branch
        %9258 = sbr.rel (%p9256) target = $region112
      $region111: #{attention_net_forward.2} parent=103 // pred_region
        %v9259 = vld [vmem:[#allocation2] sm:$0xff]
        %v9260 = vld [vmem:[#allocation2 + $0x8] sm:$0xff]
        %v9261 = vld [vmem:[#allocation2 + $0x10] sm:$0xff]
        %v9262 = vld [vmem:[#allocation2 + $0x18] sm:$0xff]
        %v9263 = vld [vmem:[#allocation2 + $0x20] sm:$0xff]
        %v9264 = vld [vmem:[#allocation2 + $0x28] sm:$0xff]
        %v9265 = vld [vmem:[#allocation2 + $0x30] sm:$0xff]
        %v9266 = vld [vmem:[#allocation2 + $0x38] sm:$0xff]
        %v9267 = vld [vmem:[#allocation2 + $0x40] sm:$0xff]
        %v9268 = vld [vmem:[#allocation2 + $0x48] sm:$0xff]
        %v9269 = vld [vmem:[#allocation2 + $0x50] sm:$0xff]
        %v9270 = vld [vmem:[#allocation2 + $0x58] sm:$0xff]
        %v9271 = vld [vmem:[#allocation2 + $0x60] sm:$0xff]
        %v9272 = vld [vmem:[#allocation2 + $0x68] sm:$0xff]
        %v9273 = vld [vmem:[#allocation2 + $0x70] sm:$0xff]
        %v9274 = vld [vmem:[#allocation2 + $0x78] sm:$0xff]
        %v9275 = vld [vmem:[%s19] sm:$0x1]
        %v9276 = vld [vmem:[%s20] sm:$0x1]
        %v9277 = vsel %vm1411, %v9259, 0.0
        %9278 = vadd.xlane.f32.xlu0 %v9277
        %v9279 = vpop.xlane.xlu0 %9278
        %v9280 = vsel %vm1411, %v9260, 0.0
        %9281 = vadd.xlane.f32.xlu0 %v9280
        %v9282 = vpop.xlane.xlu0 %9281
        %v9283 = vsel %vm1411, %v9261, 0.0
        %9284 = vadd.xlane.f32.xlu0 %v9283
        %v9285 = vpop.xlane.xlu0 %9284
        %v9286 = vsel %vm1411, %v9262, 0.0
        %9287 = vadd.xlane.f32.xlu0 %v9286
        %v9288 = vpop.xlane.xlu0 %9287
        %v9289 = vsel %vm1411, %v9263, 0.0
        %9290 = vadd.xlane.f32.xlu0 %v9289
        %v9291 = vpop.xlane.xlu0 %9290
        %v9292 = vsel %vm1411, %v9264, 0.0
        %9293 = vadd.xlane.f32.xlu0 %v9292
        %v9294 = vpop.xlane.xlu0 %9293
        %v9295 = vsel %vm1411, %v9265, 0.0
        %9296 = vadd.xlane.f32.xlu0 %v9295
        %v9297 = vpop.xlane.xlu0 %9296
        %v9298 = vsel %vm1411, %v9266, 0.0
        %9299 = vadd.xlane.f32.xlu0 %v9298
        %v9300 = vpop.xlane.xlu0 %9299
        %v9301 = vsel %vm1411, %v9267, 0.0
        %9302 = vadd.xlane.f32.xlu0 %v9301
        %v9303 = vpop.xlane.xlu0 %9302
        %v9304 = vsel %vm1411, %v9268, 0.0
        %9305 = vadd.xlane.f32.xlu0 %v9304
        %v9306 = vpop.xlane.xlu0 %9305
        %v9307 = vsel %vm1411, %v9269, 0.0
        %9308 = vadd.xlane.f32.xlu0 %v9307
        %v9309 = vpop.xlane.xlu0 %9308
        %v9310 = vsel %vm1411, %v9270, 0.0
        %9311 = vadd.xlane.f32.xlu0 %v9310
        %v9312 = vpop.xlane.xlu0 %9311
        %v9313 = vsel %vm1411, %v9271, 0.0
        %9314 = vadd.xlane.f32.xlu0 %v9313
        %v9315 = vpop.xlane.xlu0 %9314
        %v9316 = vsel %vm1411, %v9272, 0.0
        %9317 = vadd.xlane.f32.xlu0 %v9316
        %v9318 = vpop.xlane.xlu0 %9317
        %v9319 = vsel %vm1411, %v9273, 0.0
        %9320 = vadd.xlane.f32.xlu0 %v9319
        %v9321 = vpop.xlane.xlu0 %9320
        %v9322 = vsel %vm1411, %v9274, 0.0
        %9323 = vadd.xlane.f32.xlu0 %v9322
        %v9324 = vpop.xlane.xlu0 %9323
        %v9325 = vmul.f32 %v9279, %v5329
        %v9326 = vmul.f32 %v9282, %v5329
        %v9327 = vmul.f32 %v9285, %v5329
        %v9328 = vmul.f32 %v9288, %v5329
        %v9329 = vmul.f32 %v9291, %v5329
        %v9330 = vmul.f32 %v9294, %v5329
        %v9331 = vmul.f32 %v9297, %v5329
        %v9332 = vmul.f32 %v9300, %v5329
        %v9333 = vmul.f32 %v9303, %v5329
        %v9334 = vmul.f32 %v9306, %v5329
        %v9335 = vmul.f32 %v9309, %v5329
        %v9336 = vmul.f32 %v9312, %v5329
        %v9337 = vmul.f32 %v9315, %v5329
        %v9338 = vmul.f32 %v9318, %v5329
        %v9339 = vmul.f32 %v9321, %v5329
        %v9340 = vmul.f32 %v9324, %v5329
        %v9341 = vsub.f32 %v9259, %v9325
        %v9342 = vsub.f32 %v9260, %v9326
        %v9343 = vsub.f32 %v9261, %v9327
        %v9344 = vsub.f32 %v9262, %v9328
        %v9345 = vsub.f32 %v9263, %v9329
        %v9346 = vsub.f32 %v9264, %v9330
        %v9347 = vsub.f32 %v9265, %v9331
        %v9348 = vsub.f32 %v9266, %v9332
        %v9349 = vsub.f32 %v9267, %v9333
        %v9350 = vsub.f32 %v9268, %v9334
        %v9351 = vsub.f32 %v9269, %v9335
        %v9352 = vsub.f32 %v9270, %v9336
        %v9353 = vsub.f32 %v9271, %v9337
        %v9354 = vsub.f32 %v9272, %v9338
        %v9355 = vsub.f32 %v9273, %v9339
        %v9356 = vsub.f32 %v9274, %v9340
        %v9357 = vmul.f32 %v9341, %v9341
        %v9358 = vmul.f32 %v9342, %v9342
        %v9359 = vmul.f32 %v9343, %v9343
        %v9360 = vmul.f32 %v9344, %v9344
        %v9361 = vmul.f32 %v9345, %v9345
        %v9362 = vmul.f32 %v9346, %v9346
        %v9363 = vmul.f32 %v9347, %v9347
        %v9364 = vmul.f32 %v9348, %v9348
        %v9365 = vmul.f32 %v9349, %v9349
        %v9366 = vmul.f32 %v9350, %v9350
        %v9367 = vmul.f32 %v9351, %v9351
        %v9368 = vmul.f32 %v9352, %v9352
        %v9369 = vmul.f32 %v9353, %v9353
        %v9370 = vmul.f32 %v9354, %v9354
        %v9371 = vmul.f32 %v9355, %v9355
        %v9372 = vmul.f32 %v9356, %v9356
        %v9373 = vsel %vm1411, %v9357, 0.0
        %9374 = vadd.xlane.f32.xlu0 %v9373
        %v9375 = vpop.xlane.xlu0 %9374
        %v9376 = vsel %vm1411, %v9358, 0.0
        %9377 = vadd.xlane.f32.xlu0 %v9376
        %v9378 = vpop.xlane.xlu0 %9377
        %v9379 = vsel %vm1411, %v9359, 0.0
        %9380 = vadd.xlane.f32.xlu0 %v9379
        %v9381 = vpop.xlane.xlu0 %9380
        %v9382 = vsel %vm1411, %v9360, 0.0
        %9383 = vadd.xlane.f32.xlu0 %v9382
        %v9384 = vpop.xlane.xlu0 %9383
        %v9385 = vsel %vm1411, %v9361, 0.0
        %9386 = vadd.xlane.f32.xlu0 %v9385
        %v9387 = vpop.xlane.xlu0 %9386
        %v9388 = vsel %vm1411, %v9362, 0.0
        %9389 = vadd.xlane.f32.xlu0 %v9388
        %v9390 = vpop.xlane.xlu0 %9389
        %v9391 = vsel %vm1411, %v9363, 0.0
        %9392 = vadd.xlane.f32.xlu0 %v9391
        %v9393 = vpop.xlane.xlu0 %9392
        %v9394 = vsel %vm1411, %v9364, 0.0
        %9395 = vadd.xlane.f32.xlu0 %v9394
        %v9396 = vpop.xlane.xlu0 %9395
        %v9397 = vsel %vm1411, %v9365, 0.0
        %9398 = vadd.xlane.f32.xlu0 %v9397
        %v9399 = vpop.xlane.xlu0 %9398
        %v9400 = vsel %vm1411, %v9366, 0.0
        %9401 = vadd.xlane.f32.xlu0 %v9400
        %v9402 = vpop.xlane.xlu0 %9401
        %v9403 = vsel %vm1411, %v9367, 0.0
        %9404 = vadd.xlane.f32.xlu0 %v9403
        %v9405 = vpop.xlane.xlu0 %9404
        %v9406 = vsel %vm1411, %v9368, 0.0
        %9407 = vadd.xlane.f32.xlu0 %v9406
        %v9408 = vpop.xlane.xlu0 %9407
        %v9409 = vsel %vm1411, %v9369, 0.0
        %9410 = vadd.xlane.f32.xlu0 %v9409
        %v9411 = vpop.xlane.xlu0 %9410
        %v9412 = vsel %vm1411, %v9370, 0.0
        %9413 = vadd.xlane.f32.xlu0 %v9412
        %v9414 = vpop.xlane.xlu0 %9413
        %v9415 = vsel %vm1411, %v9371, 0.0
        %9416 = vadd.xlane.f32.xlu0 %v9415
        %v9417 = vpop.xlane.xlu0 %9416
        %v9418 = vsel %vm1411, %v9372, 0.0
        %9419 = vadd.xlane.f32.xlu0 %v9418
        %v9420 = vpop.xlane.xlu0 %9419
        %v9421 = vmul.f32 %v9375, %v5329
        %v9422 = vmul.f32 %v9378, %v5329
        %v9423 = vmul.f32 %v9381, %v5329
        %v9424 = vmul.f32 %v9384, %v5329
        %v9425 = vmul.f32 %v9387, %v5329
        %v9426 = vmul.f32 %v9390, %v5329
        %v9427 = vmul.f32 %v9393, %v5329
        %v9428 = vmul.f32 %v9396, %v5329
        %v9429 = vmul.f32 %v9399, %v5329
        %v9430 = vmul.f32 %v9402, %v5329
        %v9431 = vmul.f32 %v9405, %v5329
        %v9432 = vmul.f32 %v9408, %v5329
        %v9433 = vmul.f32 %v9411, %v5329
        %v9434 = vmul.f32 %v9414, %v5329
        %v9435 = vmul.f32 %v9417, %v5329
        %v9436 = vmul.f32 %v9420, %v5329
        %v9437 = vadd.f32 %v9421, 1e-05
        %v9438 = vadd.f32 %v9422, 1e-05
        %v9439 = vadd.f32 %v9423, 1e-05
        %v9440 = vadd.f32 %v9424, 1e-05
        %v9441 = vadd.f32 %v9425, 1e-05
        %v9442 = vadd.f32 %v9426, 1e-05
        %v9443 = vadd.f32 %v9427, 1e-05
        %v9444 = vadd.f32 %v9428, 1e-05
        %v9445 = vadd.f32 %v9429, 1e-05
        %v9446 = vadd.f32 %v9430, 1e-05
        %v9447 = vadd.f32 %v9431, 1e-05
        %v9448 = vadd.f32 %v9432, 1e-05
        %v9449 = vadd.f32 %v9433, 1e-05
        %v9450 = vadd.f32 %v9434, 1e-05
        %v9451 = vadd.f32 %v9435, 1e-05
        %v9452 = vadd.f32 %v9436, 1e-05
        %v9453 = vrsqrt.pop %v9437
        %v9454 = vrsqrt.pop %v9438
        %v9455 = vrsqrt.pop %v9439
        %v9456 = vrsqrt.pop %v9440
        %v9457 = vrsqrt.pop %v9441
        %v9458 = vrsqrt.pop %v9442
        %v9459 = vrsqrt.pop %v9443
        %v9460 = vrsqrt.pop %v9444
        %v9461 = vrsqrt.pop %v9445
        %v9462 = vrsqrt.pop %v9446
        %v9463 = vrsqrt.pop %v9447
        %v9464 = vrsqrt.pop %v9448
        %v9465 = vrsqrt.pop %v9449
        %v9466 = vrsqrt.pop %v9450
        %v9467 = vrsqrt.pop %v9451
        %v9468 = vrsqrt.pop %v9452
        %v9469 = vmul.f32 %v9341, %v9453
        %v9470 = vmul.f32 %v9342, %v9454
        %v9471 = vmul.f32 %v9343, %v9455
        %v9472 = vmul.f32 %v9344, %v9456
        %v9473 = vmul.f32 %v9345, %v9457
        %v9474 = vmul.f32 %v9346, %v9458
        %v9475 = vmul.f32 %v9347, %v9459
        %v9476 = vmul.f32 %v9348, %v9460
        %v9477 = vmul.f32 %v9349, %v9461
        %v9478 = vmul.f32 %v9350, %v9462
        %v9479 = vmul.f32 %v9351, %v9463
        %v9480 = vmul.f32 %v9352, %v9464
        %v9481 = vmul.f32 %v9353, %v9465
        %v9482 = vmul.f32 %v9354, %v9466
        %v9483 = vmul.f32 %v9355, %v9467
        %v9484 = vmul.f32 %v9356, %v9468
        %v9486 = vlaneseq
        %v9487 = vshrl.u32 %v9486, 7
        %v9488 = vsub.s32 0, %v9487
        %v9489 = vrot.slane %v9275, %v9488
        %v9491 = vmul.f32 %v9469, %v9489
        %v9492 = vmul.f32 %v9470, %v9489
        %v9493 = vmul.f32 %v9471, %v9489
        %v9494 = vmul.f32 %v9472, %v9489
        %v9495 = vmul.f32 %v9473, %v9489
        %v9496 = vmul.f32 %v9474, %v9489
        %v9497 = vmul.f32 %v9475, %v9489
        %v9498 = vmul.f32 %v9476, %v9489
        %v9499 = vmul.f32 %v9477, %v9489
        %v9500 = vmul.f32 %v9478, %v9489
        %v9501 = vmul.f32 %v9479, %v9489
        %v9502 = vmul.f32 %v9480, %v9489
        %v9503 = vmul.f32 %v9481, %v9489
        %v9504 = vmul.f32 %v9482, %v9489
        %v9505 = vmul.f32 %v9483, %v9489
        %v9506 = vmul.f32 %v9484, %v9489
        %v9508 = vlaneseq
        %v9509 = vshrl.u32 %v9508, 7
        %v9510 = vsub.s32 0, %v9509
        %v9511 = vrot.slane %v9276, %v9510
        %v9513 = vadd.f32 %v9491, %v9511
        %v9514 = vadd.f32 %v9492, %v9511
        %v9515 = vadd.f32 %v9493, %v9511
        %v9516 = vadd.f32 %v9494, %v9511
        %v9517 = vadd.f32 %v9495, %v9511
        %v9518 = vadd.f32 %v9496, %v9511
        %v9519 = vadd.f32 %v9497, %v9511
        %v9520 = vadd.f32 %v9498, %v9511
        %v9521 = vadd.f32 %v9499, %v9511
        %v9522 = vadd.f32 %v9500, %v9511
        %v9523 = vadd.f32 %v9501, %v9511
        %v9524 = vadd.f32 %v9502, %v9511
        %v9525 = vadd.f32 %v9503, %v9511
        %v9526 = vadd.f32 %v9504, %v9511
        %v9527 = vadd.f32 %v9505, %v9511
        %v9528 = vadd.f32 %v9506, %v9511
        %9529 = vst.msk [vmem:[%s21] sm:$0xff] %vm1411, %v9513
        %9530 = vst.msk [vmem:[%s21 + $0x8] sm:$0xff] %vm1411, %v9514
        %9531 = vst.msk [vmem:[%s21 + $0x10] sm:$0xff] %vm1411, %v9515
        %9532 = vst.msk [vmem:[%s21 + $0x18] sm:$0xff] %vm1411, %v9516
        %9533 = vst.msk [vmem:[%s21 + $0x20] sm:$0xff] %vm1411, %v9517
        %9534 = vst.msk [vmem:[%s21 + $0x28] sm:$0xff] %vm1411, %v9518
        %9535 = vst.msk [vmem:[%s21 + $0x30] sm:$0xff] %vm1411, %v9519
        %9536 = vst.msk [vmem:[%s21 + $0x38] sm:$0xff] %vm1411, %v9520
        %9537 = vst.msk [vmem:[%s21 + $0x40] sm:$0xff] %vm1411, %v9521
        %9538 = vst.msk [vmem:[%s21 + $0x48] sm:$0xff] %vm1411, %v9522
        %9539 = vst.msk [vmem:[%s21 + $0x50] sm:$0xff] %vm1411, %v9523
        %9540 = vst.msk [vmem:[%s21 + $0x58] sm:$0xff] %vm1411, %v9524
        %9541 = vst.msk [vmem:[%s21 + $0x60] sm:$0xff] %vm1411, %v9525
        %9542 = vst.msk [vmem:[%s21 + $0x68] sm:$0xff] %vm1411, %v9526
        %9543 = vst.msk [vmem:[%s21 + $0x70] sm:$0xff] %vm1411, %v9527
        %9544 = vst.msk [vmem:[%s21 + $0x78] sm:$0xff] %vm1411, %v9528
      $region112: #{attention_net_forward.2} parent=103 // pred_fallthru
        _
      // Predicated region
      $region113: #{attention_net_forward.2} parent=103 // pred_check
        %p9545 = pneg %p566
      $region114: #{attention_net_forward.2} parent=103 // pred_check_branch
        %9547 = sbr.rel (%p9545) target = $region116
      $region115: #{attention_net_forward.2} parent=103 // pred_region
        _
      $region116: #{attention_net_forward.2} parent=103 // pred_fallthru
        _
      // Predicated region
      $region117: #{attention_net_forward.2} parent=103 // pred_check
        %p9548 = pneg %p566
      $region118: #{attention_net_forward.2} parent=103 // pred_check_branch
        %9550 = sbr.rel (%p9548) target = $region120
      $region119: #{attention_net_forward.2} parent=103 // pred_region
        _
      $region120: #{attention_net_forward.2} parent=103 // pred_fallthru
        _
    $region104: #{attention_net_forward.2} parent=5 // pred_fallthru
      _
    %p9551 = scmp.le.s32.totalorder 2, %s27
    // Predicated region
    $region121: #{attention_net_forward.2} parent=5 // pred_check
      %p9552 = pneg %p9551
    $region122: #{attention_net_forward.2} parent=5 // pred_check_branch
      %9554 = sbr.rel (%p9552) target = $region124
    $region123: #{attention_net_forward.2} parent=5 // pred_region
      %s9555 = ssub.s32 %s27, 2
    $region124: #{attention_net_forward.2} parent=5 // pred_fallthru
      _
  $region6: #{attention_net_forward.2} parent=0 // loop_footer
    %s31 = sadd.s32 1, %s27
  $region7: #{attention_net_forward.2} parent=0 // loop_footer_branch
    %26 = sbr.rel target = $region3
  $region8: #{attention_net_forward.2} parent=0 // loop_exit
    _

</llo_original>
